<compile_context>
chip_gen: v6e
topology: v6e:2x2x1
jax: 0.10.0
libtpu: 0.0.40
codegen_flags: <defaults>
</compile_context>

<pallas_src>
import jax
import jax.numpy as jnp
from jax import lax
from jax.experimental import pallas as pl
from jax.experimental.pallas import tpu as pltpu


def block1_kernel(x_ref, w1_ref, bn1b_ref, w2_ref, bn2b_ref,
                  ca1_ref, ca2_ref, kxw_ref, out_ref,
                  pad_s, xsh_s, acc_s, sp2_s):
    _, H, W, C = x_ref.shape
    HW = H * W
    WP = W + 6

    # ---- zero only the 1-wide border of the conv padding scratch.  Done every step
    #      (not @pl.when(pid==0)) so it stays correct when the "parallel" batch axis is
    #      sharded across TensorCores, each with its own scratch instance. ----
    pad_s[0:1, :, :] = jnp.zeros((1, W + 2, C), jnp.float32)
    pad_s[H + 1:H + 2, :, :] = jnp.zeros((1, W + 2, C), jnp.float32)
    pad_s[:, 0:1, :] = jnp.zeros((H + 2, 1, C), jnp.float32)
    pad_s[:, W + 1:W + 2, :] = jnp.zeros((H + 2, 1, C), jnp.float32)

    def conv3x3(w_ref):
        # dx-stacked im2col (bf16): xsh_s[r, x, dx*C + ci] = pad_s[r, x + dx, ci]
        for dx in range(3):
            xsh_s[:, :, dx * C:(dx + 1) * C] = (
                pad_s[:, dx:dx + W, :].astype(jnp.bfloat16))
        # 3 deep (K = 3*C) bf16 MXU matmuls accumulated in the f32 VMEM scratch.
        for dy in range(3):
            patch = xsh_s[dy:dy + H].reshape(HW, 3 * C)
            contrib = jnp.dot(patch, w_ref[dy],
                              preferred_element_type=jnp.float32)
            if dy == 0:
                acc_s[...] = contrib
            else:
                acc_s[...] += contrib

    # ---- conv1 (BN1 scale pre-folded into the weights) + shift + relu ----
    pad_s[1:H + 1, 1:W + 1, :] = x_ref[0]
    conv3x3(w1_ref)
    pad_s[1:H + 1, 1:W + 1, :] = jnp.maximum(
        acc_s[...] + bn1b_ref[...], 0.0).reshape(H, W, C)

    # ---- conv2 (BN2 scale pre-folded) + shift; result stays in the f32 VMEM scratch ----
    conv3x3(w2_ref)
    acc_s[...] = acc_s[...] + bn2b_ref[...]

    # ---- channel attention: batched [avg; max] through the shared 2-layer MLP ----
    avg_c = jnp.mean(acc_s[...], axis=0, keepdims=True)                 # (1, C)
    max_c = jnp.max(acc_s[...], axis=0, keepdims=True)                  # (1, C)
    row = lax.broadcasted_iota(jnp.int32, (2, C), 0)
    pooled = jnp.where(row == 0, avg_c, max_c)                          # (2, C)
    hid = jnp.maximum(jnp.dot(pooled, ca1_ref[...],
                              preferred_element_type=jnp.float32), 0.0)  # (2, Cr)
    mlp = jnp.dot(hid, ca2_ref[...], preferred_element_type=jnp.float32)  # (2, C)
    ca = jax.nn.sigmoid(mlp[0:1] + mlp[1:2])                            # (1, C)
    acc_s[...] = acc_s[...] * ca          # channel-attended activations stay in VMEM

    # ---- spatial attention: channel mean/max -> 7x7 conv (pad=3) as 7 banded matmuls ----
    a_hwc = acc_s[...].reshape(H, W, C)
    avg_sp = jnp.mean(a_hwc, axis=-1)                                   # (H, W)
    max_sp = jnp.max(a_hwc, axis=-1)                                    # (H, W)
    sp2_s[...] = jnp.zeros(sp2_s.shape, jnp.float32)                    # tiny (H+6, 2*WP)
    sp2_s[3:3 + H, 3:3 + W] = avg_sp
    sp2_s[3:3 + H, WP + 3:WP + 3 + W] = max_sp
    sa_acc = jnp.dot(sp2_s[0:H, :], kxw_ref[0],
                     preferred_element_type=jnp.float32)                # (H, W)
    for ky in range(1, 7):
        sa_acc = sa_acc + jnp.dot(sp2_s[ky:ky + H, :], kxw_ref[ky],
                                  preferred_element_type=jnp.float32)
    sa = jax.nn.sigmoid(sa_acc)

    # ---- residual + relu ----
    out_ref[0] = jnp.maximum(acc_s[...].reshape(H, W, C) * sa[:, :, None]
                             + x_ref[0], 0.0)


def _build_sa_row_weight(saw, W):
    """Banded weights kxw (7, 2*(W+6), W) so the 7x7, 2-in-channel 'same' conv becomes
    sa_pre = sum_ky  sp2[ky:ky+H, :] @ kxw[ky],
    where sp2[r, c*(W+6)+xp] = zero-padded map of channel c at row r, column xp."""
    WP = W + 6
    xp = jnp.arange(WP)[:, None]                  # (WP, 1)
    x = jnp.arange(W)[None, :]                    # (1, W)
    kx = xp - x                                   # (WP, W)
    valid = (kx >= 0) & (kx < 7)
    vals = saw[:, jnp.clip(kx, 0, 6), :]          # (7, WP, W, 2) indexed [ky, xp, x, c]
    vals = jnp.where(valid[None, :, :, None], vals, 0.0)
    kxw = jnp.transpose(vals, (0, 3, 1, 2)).reshape(7, 2 * WP, W)
    return kxw.astype(jnp.float32)


def block1_forward(x, params):
    w1, bn1s, bn1b, w2, bn2s, bn2b, ca1, ca2, saw = params
    B, H, W, C = x.shape
    Cr = ca1.shape[1]
    WP = W + 6

    # Fold the BN scales into the conv output channels (shift stays as an in-kernel add);
    # reshape to (3, 3*C, C) for the deep-K matmuls and cast to bf16 for the MXU.
    w1f = (w1 * bn1s.reshape(1, 1, 1, C)).reshape(3, 3 * C, C).astype(jnp.bfloat16)
    w2f = (w2 * bn2s.reshape(1, 1, 1, C)).reshape(3, 3 * C, C).astype(jnp.bfloat16)
    kxw = _build_sa_row_weight(saw, W)            # (7, 2*WP, W)

    return pl.pallas_call(
        block1_kernel,
        out_shape=jax.ShapeDtypeStruct((B, H, W, C), jnp.float32),
        grid=(B,),
        in_specs=[
            pl.BlockSpec((1, H, W, C), lambda b: (b, 0, 0, 0)),     # x (also the residual)
            pl.BlockSpec((3, 3 * C, C), lambda b: (0, 0, 0)),       # conv1 w (BN1-scaled, bf16)
            pl.BlockSpec((1, C), lambda b: (0, 0)),                 # bn1 shift
            pl.BlockSpec((3, 3 * C, C), lambda b: (0, 0, 0)),       # conv2 w (BN2-scaled, bf16)
            pl.BlockSpec((1, C), lambda b: (0, 0)),                 # bn2 shift
            pl.BlockSpec((C, Cr), lambda b: (0, 0)),                # CA fc1
            pl.BlockSpec((Cr, C), lambda b: (0, 0)),                # CA fc2
            pl.BlockSpec((7, 2 * WP, W), lambda b: (0, 0, 0)),      # SA banded row weights
        ],
        out_specs=pl.BlockSpec((1, H, W, C), lambda b: (b, 0, 0, 0)),
        scratch_shapes=[
            pltpu.VMEM((H + 2, W + 2, C), jnp.float32),     # shared zero-padded conv input
            pltpu.VMEM((H + 2, W, 3 * C), jnp.bfloat16),    # dx-stacked im2col bands (bf16)
            pltpu.VMEM((H * W, C), jnp.float32),            # f32 conv accumulator / out2
            pltpu.VMEM((H + 6, 2 * WP), jnp.float32),       # padded [avg | max] SA maps
        ],
        compiler_params=pltpu.CompilerParams(
            dimension_semantics=("parallel",)),             # v7x: shard batch over 2 TCs
    )(x, w1f, bn1b, w2f, bn2b, ca1, ca2, kxw)


def block1_reference(x, params):
    """Pure-JAX NHWC reference (same folded-BN parameters, unfused f32 weights)."""
    w1, bn1s, bn1b, w2, bn2s, bn2b, ca1, ca2, saw = params
    dn = ('NHWC', 'HWIO', 'NHWC')
    hp = lax.Precision.HIGHEST
    out = lax.conv_general_dilated(x, w1, (1, 1), ((1, 1), (1, 1)),
                                   dimension_numbers=dn, precision=hp)
    out = jnp.maximum(out * bn1s + bn1b, 0.0)
    out = lax.conv_general_dilated(out, w2, (1, 1), ((1, 1), (1, 1)),
                                   dimension_numbers=dn, precision=hp)
    out = out * bn2s + bn2b
    avg_c = jnp.mean(out, axis=(1, 2), keepdims=True)
    max_c = jnp.max(out, axis=(1, 2), keepdims=True)

    def mlp(v):
        h = jnp.maximum(jnp.matmul(v, ca1, precision=hp), 0.0)
        return jnp.matmul(h, ca2, precision=hp)

    ca = jax.nn.sigmoid(mlp(avg_c) + mlp(max_c))
    out = out * ca
    avg_sp = jnp.mean(out, axis=-1, keepdims=True)
    max_sp = jnp.max(out, axis=-1, keepdims=True)
    sp = jnp.concatenate([avg_sp, max_sp], axis=-1)
    sa = jax.nn.sigmoid(lax.conv_general_dilated(
        sp, saw.reshape(7, 7, 2, 1), (1, 1), ((3, 3), (3, 3)),
        dimension_numbers=dn, precision=hp))
    out = out * sa
    return jnp.maximum(out + x, 0.0)


if __name__ == "__main__":
    B, H, W, C = 2, 16, 16, 64          # NCHW equivalent input: (2, 64, 16, 16)
    ratio = 8
    Cr = C // ratio

    key = jax.random.PRNGKey(0)
    ks = jax.random.split(key, 12)
    x = jax.random.normal(ks[0], (B, H, W, C), jnp.float32)

    w1 = jax.random.normal(ks[1], (3, 3, C, C), jnp.float32) / jnp.sqrt(9.0 * C)
    w2 = jax.random.normal(ks[2], (3, 3, C, C), jnp.float32) / jnp.sqrt(9.0 * C)

    def bn_affine(kg, kb, km, kv):
        gamma = 1.0 + 0.1 * jax.random.normal(kg, (1, C), jnp.float32)
        beta = 0.1 * jax.random.normal(kb, (1, C), jnp.float32)
        mean = 0.1 * jax.random.normal(km, (1, C), jnp.float32)
        var = 1.0 + 0.1 * jnp.abs(jax.random.normal(kv, (1, C), jnp.float32))
        scale = gamma * lax.rsqrt(var + 1e-5)
        shift = beta - mean * scale
        return scale, shift

    bn1s, bn1b = bn_affine(ks[3], ks[4], ks[5], ks[6])
    bn2s, bn2b = bn_affine(ks[7], ks[8], ks[9], ks[10])

    kk = jax.random.split(ks[11], 3)
    ca1 = jax.random.normal(kk[0], (C, Cr), jnp.float32) / jnp.sqrt(1.0 * C)
    ca2 = jax.random.normal(kk[1], (Cr, C), jnp.float32) / jnp.sqrt(1.0 * Cr)
    saw = jax.random.normal(kk[2], (7, 7, 2), jnp.float32) / jnp.sqrt(98.0)

    params = (w1, bn1s, bn1b, w2, bn2s, bn2b, ca1, ca2, saw)

    out = jax.jit(block1_forward)(x, params)
    out = jax.block_until_ready(out)

    ref = block1_reference(x, params)
    assert out.shape == (B, H, W, C) and out.dtype == jnp.float32
    max_err = float(jnp.max(jnp.abs(out - ref)))
    # bf16 conv operands (f32 accumulation) vs. an f32/HIGHEST reference.
    assert jnp.allclose(out, ref, rtol=5e-2, atol=5e-2), f"max_err={max_err}"

    print("KERNEL_OK")
</pallas_src>

<mosaic_0001>
module attributes {stable_mosaic.version = 11 : i64} {
  func.func @block1_kernel(%arg0: i32, %arg1: memref<1x16x16x64xf32, #tpu.memory_space<vmem>>, %arg2: memref<3x192x64xbf16, #tpu.memory_space<vmem>>, %arg3: memref<1x64xf32, #tpu.memory_space<vmem>>, %arg4: memref<3x192x64xbf16, #tpu.memory_space<vmem>>, %arg5: memref<1x64xf32, #tpu.memory_space<vmem>>, %arg6: memref<64x8xf32, #tpu.memory_space<vmem>>, %arg7: memref<8x64xf32, #tpu.memory_space<vmem>>, %arg8: memref<7x44x16xf32, #tpu.memory_space<vmem>>, %arg9: memref<1x16x16x64xf32, #tpu.memory_space<vmem>>, %arg10: memref<18x18x64xf32, #tpu.memory_space<vmem>>, %arg11: memref<18x16x192xbf16, #tpu.memory_space<vmem>>, %arg12: memref<256x64xf32, #tpu.memory_space<vmem>>, %arg13: memref<22x44xf32, #tpu.memory_space<vmem>>) attributes {dimension_semantics = [#tpu.dimension_semantics<parallel>], iteration_bounds = array<i64: 2>, scalar_prefetch = 0 : i64, scratch_operands = 4 : i64, tpu.core_type = #tpu.core_type<tc>, window_params = [{transform_indices = @transform_0, window_bounds = array<i64: 1, 16, 16, 64>}, {pipeline_mode = #tpu.pipeline_mode<synchronous>, transform_indices = @transform_1, window_bounds = array<i64: 3, 192, 64>}, {pipeline_mode = #tpu.pipeline_mode<synchronous>, transform_indices = @transform_2, window_bounds = array<i64: 1, 64>}, {pipeline_mode = #tpu.pipeline_mode<synchronous>, transform_indices = @transform_3, window_bounds = array<i64: 3, 192, 64>}, {pipeline_mode = #tpu.pipeline_mode<synchronous>, transform_indices = @transform_4, window_bounds = array<i64: 1, 64>}, {pipeline_mode = #tpu.pipeline_mode<synchronous>, transform_indices = @transform_5, window_bounds = array<i64: 64, 8>}, {pipeline_mode = #tpu.pipeline_mode<synchronous>, transform_indices = @transform_6, window_bounds = array<i64: 8, 64>}, {pipeline_mode = #tpu.pipeline_mode<synchronous>, transform_indices = @transform_7, window_bounds = array<i64: 7, 44, 16>}, {transform_indices = @transform_8, window_bounds = array<i64: 1, 16, 16, 64>}]} {
    %cst = arith.constant 0.000000e+00 : f32
    %0 = vector.broadcast %cst : f32 to vector<1x18x64xf32>
    %c0 = arith.constant 0 : index
    %c0_0 = arith.constant 0 : index
    %c0_1 = arith.constant 0 : index
    %1 = vector.load %arg10[%c0, %c0_0, %c0_1] : memref<18x18x64xf32, #tpu.memory_space<vmem>>, vector<1x18x64xf32>
    tpu.vector_store %arg10[%c0, %c0_0, %c0_1], %0 {strides = array<i32>} : memref<18x18x64xf32, #tpu.memory_space<vmem>>, vector<1x18x64xf32>,
    %cst_2 = arith.constant 0.000000e+00 : f32
    %2 = vector.broadcast %cst_2 : f32 to vector<1x18x64xf32>
    %c17 = arith.constant 17 : index
    %c0_3 = arith.constant 0 : index
    %c0_4 = arith.constant 0 : index
    %3 = vector.load %arg10[%c17, %c0_3, %c0_4] : memref<18x18x64xf32, #tpu.memory_space<vmem>>, vector<1x18x64xf32>
    tpu.vector_store %arg10[%c17, %c0_3, %c0_4], %2 {strides = array<i32>} : memref<18x18x64xf32, #tpu.memory_space<vmem>>, vector<1x18x64xf32>,
    %cst_5 = arith.constant 0.000000e+00 : f32
    %4 = vector.broadcast %cst_5 : f32 to vector<18x1x64xf32>
    %c0_6 = arith.constant 0 : index
    %c0_7 = arith.constant 0 : index
    %c0_8 = arith.constant 0 : index
    %5 = vector.load %arg10[%c0_6, %c0_7, %c0_8] : memref<18x18x64xf32, #tpu.memory_space<vmem>>, vector<18x1x64xf32>
    tpu.vector_store %arg10[%c0_6, %c0_7, %c0_8], %4 {strides = array<i32>} : memref<18x18x64xf32, #tpu.memory_space<vmem>>, vector<18x1x64xf32>,
    %cst_9 = arith.constant 0.000000e+00 : f32
    %6 = vector.broadcast %cst_9 : f32 to vector<18x1x64xf32>
    %c0_10 = arith.constant 0 : index
    %c17_11 = arith.constant 17 : index
    %c0_12 = arith.constant 0 : index
    %7 = vector.load %arg10[%c0_10, %c17_11, %c0_12] : memref<18x18x64xf32, #tpu.memory_space<vmem>>, vector<18x1x64xf32>
    tpu.vector_store %arg10[%c0_10, %c17_11, %c0_12], %6 {strides = array<i32>} : memref<18x18x64xf32, #tpu.memory_space<vmem>>, vector<18x1x64xf32>,
    %c0_13 = arith.constant 0 : index
    %c0_14 = arith.constant 0 : index
    %c0_15 = arith.constant 0 : index
    %c0_16 = arith.constant 0 : index
    %8 = vector.load %arg1[%c0_13, %c0_14, %c0_15, %c0_16] : memref<1x16x16x64xf32, #tpu.memory_space<vmem>>, vector<1x16x16x64xf32>
    %9 = vector.shape_cast %8 : vector<1x16x16x64xf32> to vector<16x16x64xf32>
    %c1 = arith.constant 1 : index
    %c1_17 = arith.constant 1 : index
    %c0_18 = arith.constant 0 : index
    %10 = vector.load %arg10[%c1, %c1_17, %c0_18] : memref<18x18x64xf32, #tpu.memory_space<vmem>>, vector<16x16x64xf32>
    tpu.vector_store %arg10[%c1, %c1_17, %c0_18], %9 {strides = array<i32>} : memref<18x18x64xf32, #tpu.memory_space<vmem>>, vector<16x16x64xf32>,
    %c0_19 = arith.constant 0 : index
    %c0_20 = arith.constant 0 : index
    %c0_21 = arith.constant 0 : index
    %11 = vector.load %arg10[%c0_19, %c0_20, %c0_21] : memref<18x18x64xf32, #tpu.memory_space<vmem>>, vector<18x16x64xf32>
    %12 = arith.truncf %11 : vector<18x16x64xf32> to vector<18x16x64xbf16>
    %c0_22 = arith.constant 0 : index
    %c0_23 = arith.constant 0 : index
    %c0_24 = arith.constant 0 : index
    %13 = vector.load %arg11[%c0_22, %c0_23, %c0_24] : memref<18x16x192xbf16, #tpu.memory_space<vmem>>, vector<18x16x64xbf16>
    tpu.vector_store %arg11[%c0_22, %c0_23, %c0_24], %12 {strides = array<i32>} : memref<18x16x192xbf16, #tpu.memory_space<vmem>>, vector<18x16x64xbf16>,
    %c0_25 = arith.constant 0 : index
    %c1_26 = arith.constant 1 : index
    %c0_27 = arith.constant 0 : index
    %14 = vector.load %arg10[%c0_25, %c1_26, %c0_27] : memref<18x18x64xf32, #tpu.memory_space<vmem>>, vector<18x16x64xf32>
    %15 = arith.truncf %14 : vector<18x16x64xf32> to vector<18x16x64xbf16>
    %c0_28 = arith.constant 0 : index
    %c0_29 = arith.constant 0 : index
    %c64 = arith.constant 64 : index
    %16 = vector.load %arg11[%c0_28, %c0_29, %c64] : memref<18x16x192xbf16, #tpu.memory_space<vmem>>, vector<18x16x64xbf16>
    tpu.vector_store %arg11[%c0_28, %c0_29, %c64], %15 {strides = array<i32>} : memref<18x16x192xbf16, #tpu.memory_space<vmem>>, vector<18x16x64xbf16>,
    %c0_30 = arith.constant 0 : index
    %c2 = arith.constant 2 : index
    %c0_31 = arith.constant 0 : index
    %17 = vector.load %arg10[%c0_30, %c2, %c0_31] : memref<18x18x64xf32, #tpu.memory_space<vmem>>, vector<18x16x64xf32>
    %18 = arith.truncf %17 : vector<18x16x64xf32> to vector<18x16x64xbf16>
    %c0_32 = arith.constant 0 : index
    %c0_33 = arith.constant 0 : index
    %c128 = arith.constant 128 : index
    %19 = vector.load %arg11[%c0_32, %c0_33, %c128] : memref<18x16x192xbf16, #tpu.memory_space<vmem>>, vector<18x16x64xbf16>
    tpu.vector_store %arg11[%c0_32, %c0_33, %c128], %18 {strides = array<i32>} : memref<18x16x192xbf16, #tpu.memory_space<vmem>>, vector<18x16x64xbf16>,
    %c0_34 = arith.constant 0 : index
    %c0_35 = arith.constant 0 : index
    %c0_36 = arith.constant 0 : index
    %20 = vector.load %arg11[%c0_34, %c0_35, %c0_36] : memref<18x16x192xbf16, #tpu.memory_space<vmem>>, vector<16x16x192xbf16>
    %21 = vector.shape_cast %20 : vector<16x16x192xbf16> to vector<256x192xbf16>
    %c0_37 = arith.constant 0 : index
    %c0_38 = arith.constant 0 : index
    %c0_39 = arith.constant 0 : index
    %22 = vector.load %arg2[%c0_37, %c0_38, %c0_39] : memref<3x192x64xbf16, #tpu.memory_space<vmem>>, vector<1x192x64xbf16>
    %23 = vector.shape_cast %22 : vector<1x192x64xbf16> to vector<192x64xbf16>
    %cst_40 = arith.constant dense<0.000000e+00> : vector<256x64xf32>
    %24 = tpu.matmul %21, %23, %cst_40 {dimension_numbers = #tpu.dot_dimension_numbers<[1], [0], [0], [1], [0, 0, 1, 1], [], []>} : vector<256x192xbf16>, vector<192x64xbf16>, vector<256x64xf32> -> vector<256x64xf32>
    %c0_41 = arith.constant 0 : index
    %c0_42 = arith.constant 0 : index
    %25 = vector.load %arg12[%c0_41, %c0_42] : memref<256x64xf32, #tpu.memory_space<vmem>>, vector<256x64xf32>
    tpu.vector_store %arg12[%c0_41, %c0_42], %24 {strides = array<i32>} : memref<256x64xf32, #tpu.memory_space<vmem>>, vector<256x64xf32>,
    %c1_43 = arith.constant 1 : index
    %c0_44 = arith.constant 0 : index
    %c0_45 = arith.constant 0 : index
    %26 = vector.load %arg11[%c1_43, %c0_44, %c0_45] : memref<18x16x192xbf16, #tpu.memory_space<vmem>>, vector<16x16x192xbf16>
    %27 = vector.shape_cast %26 : vector<16x16x192xbf16> to vector<256x192xbf16>
    %c1_46 = arith.constant 1 : index
    %c0_47 = arith.constant 0 : index
    %c0_48 = arith.constant 0 : index
    %28 = vector.load %arg2[%c1_46, %c0_47, %c0_48] : memref<3x192x64xbf16, #tpu.memory_space<vmem>>, vector<1x192x64xbf16>
    %29 = vector.shape_cast %28 : vector<1x192x64xbf16> to vector<192x64xbf16>
    %cst_49 = arith.constant dense<0.000000e+00> : vector<256x64xf32>
    %30 = tpu.matmul %27, %29, %cst_49 {dimension_numbers = #tpu.dot_dimension_numbers<[1], [0], [0], [1], [0, 0, 1, 1], [], []>} : vector<256x192xbf16>, vector<192x64xbf16>, vector<256x64xf32> -> vector<256x64xf32>
    %c0_50 = arith.constant 0 : index
    %c0_51 = arith.constant 0 : index
    %31 = vector.load %arg12[%c0_50, %c0_51] : memref<256x64xf32, #tpu.memory_space<vmem>>, vector<256x64xf32>
    %32 = arith.addf %31, %30 : vector<256x64xf32>
    %c0_52 = arith.constant 0 : index
    %c0_53 = arith.constant 0 : index
    %33 = vector.load %arg12[%c0_52, %c0_53] : memref<256x64xf32, #tpu.memory_space<vmem>>, vector<256x64xf32>
    tpu.vector_store %arg12[%c0_52, %c0_53], %32 {strides = array<i32>} : memref<256x64xf32, #tpu.memory_space<vmem>>, vector<256x64xf32>,
    %c2_54 = arith.constant 2 : index
    %c0_55 = arith.constant 0 : index
    %c0_56 = arith.constant 0 : index
    %34 = vector.load %arg11[%c2_54, %c0_55, %c0_56] : memref<18x16x192xbf16, #tpu.memory_space<vmem>>, vector<16x16x192xbf16>
    %35 = vector.shape_cast %34 : vector<16x16x192xbf16> to vector<256x192xbf16>
    %c2_57 = arith.constant 2 : index
    %c0_58 = arith.constant 0 : index
    %c0_59 = arith.constant 0 : index
    %36 = vector.load %arg2[%c2_57, %c0_58, %c0_59] : memref<3x192x64xbf16, #tpu.memory_space<vmem>>, vector<1x192x64xbf16>
    %37 = vector.shape_cast %36 : vector<1x192x64xbf16> to vector<192x64xbf16>
    %cst_60 = arith.constant dense<0.000000e+00> : vector<256x64xf32>
    %38 = tpu.matmul %35, %37, %cst_60 {dimension_numbers = #tpu.dot_dimension_numbers<[1], [0], [0], [1], [0, 0, 1, 1], [], []>} : vector<256x192xbf16>, vector<192x64xbf16>, vector<256x64xf32> -> vector<256x64xf32>
    %c0_61 = arith.constant 0 : index
    %c0_62 = arith.constant 0 : index
    %39 = vector.load %arg12[%c0_61, %c0_62] : memref<256x64xf32, #tpu.memory_space<vmem>>, vector<256x64xf32>
    %40 = arith.addf %39, %38 : vector<256x64xf32>
    %c0_63 = arith.constant 0 : index
    %c0_64 = arith.constant 0 : index
    %41 = vector.load %arg12[%c0_63, %c0_64] : memref<256x64xf32, #tpu.memory_space<vmem>>, vector<256x64xf32>
    tpu.vector_store %arg12[%c0_63, %c0_64], %40 {strides = array<i32>} : memref<256x64xf32, #tpu.memory_space<vmem>>, vector<256x64xf32>,
    %c0_65 = arith.constant 0 : index
    %c0_66 = arith.constant 0 : index
    %42 = vector.load %arg12[%c0_65, %c0_66] : memref<256x64xf32, #tpu.memory_space<vmem>>, vector<256x64xf32>
    %c0_67 = arith.constant 0 : index
    %c0_68 = arith.constant 0 : index
    %43 = vector.load %arg3[%c0_67, %c0_68] : memref<1x64xf32, #tpu.memory_space<vmem>>, vector<1x64xf32>
    %44 = vector.broadcast %43 : vector<1x64xf32> to vector<256x64xf32>
    %45 = arith.addf %42, %44 : vector<256x64xf32>
    %cst_69 = arith.constant 0.000000e+00 : f32
    %46 = vector.broadcast %cst_69 : f32 to vector<256x64xf32>
    %47 = arith.maximumf %45, %46 : vector<256x64xf32>
    %48 = vector.shape_cast %47 : vector<256x64xf32> to vector<16x16x64xf32>
    %c1_70 = arith.constant 1 : index
    %c1_71 = arith.constant 1 : index
    %c0_72 = arith.constant 0 : index
    %49 = vector.load %arg10[%c1_70, %c1_71, %c0_72] : memref<18x18x64xf32, #tpu.memory_space<vmem>>, vector<16x16x64xf32>
    tpu.vector_store %arg10[%c1_70, %c1_71, %c0_72], %48 {strides = array<i32>} : memref<18x18x64xf32, #tpu.memory_space<vmem>>, vector<16x16x64xf32>,
    %c0_73 = arith.constant 0 : index
    %c0_74 = arith.constant 0 : index
    %c0_75 = arith.constant 0 : index
    %50 = vector.load %arg10[%c0_73, %c0_74, %c0_75] : memref<18x18x64xf32, #tpu.memory_space<vmem>>, vector<18x16x64xf32>
    %51 = arith.truncf %50 : vector<18x16x64xf32> to vector<18x16x64xbf16>
    %c0_76 = arith.constant 0 : index
    %c0_77 = arith.constant 0 : index
    %c0_78 = arith.constant 0 : index
    %52 = vector.load %arg11[%c0_76, %c0_77, %c0_78] : memref<18x16x192xbf16, #tpu.memory_space<vmem>>, vector<18x16x64xbf16>
    tpu.vector_store %arg11[%c0_76, %c0_77, %c0_78], %51 {strides = array<i32>} : memref<18x16x192xbf16, #tpu.memory_space<vmem>>, vector<18x16x64xbf16>,
    %c0_79 = arith.constant 0 : index
    %c1_80 = arith.constant 1 : index
    %c0_81 = arith.constant 0 : index
    %53 = vector.load %arg10[%c0_79, %c1_80, %c0_81] : memref<18x18x64xf32, #tpu.memory_space<vmem>>, vector<18x16x64xf32>
    %54 = arith.truncf %53 : vector<18x16x64xf32> to vector<18x16x64xbf16>
    %c0_82 = arith.constant 0 : index
    %c0_83 = arith.constant 0 : index
    %c64_84 = arith.constant 64 : index
    %55 = vector.load %arg11[%c0_82, %c0_83, %c64_84] : memref<18x16x192xbf16, #tpu.memory_space<vmem>>, vector<18x16x64xbf16>
    tpu.vector_store %arg11[%c0_82, %c0_83, %c64_84], %54 {strides = array<i32>} : memref<18x16x192xbf16, #tpu.memory_space<vmem>>, vector<18x16x64xbf16>,
    %c0_85 = arith.constant 0 : index
    %c2_86 = arith.constant 2 : index
    %c0_87 = arith.constant 0 : index
    %56 = vector.load %arg10[%c0_85, %c2_86, %c0_87] : memref<18x18x64xf32, #tpu.memory_space<vmem>>, vector<18x16x64xf32>
    %57 = arith.truncf %56 : vector<18x16x64xf32> to vector<18x16x64xbf16>
    %c0_88 = arith.constant 0 : index
    %c0_89 = arith.constant 0 : index
    %c128_90 = arith.constant 128 : index
    %58 = vector.load %arg11[%c0_88, %c0_89, %c128_90] : memref<18x16x192xbf16, #tpu.memory_space<vmem>>, vector<18x16x64xbf16>
    tpu.vector_store %arg11[%c0_88, %c0_89, %c128_90], %57 {strides = array<i32>} : memref<18x16x192xbf16, #tpu.memory_space<vmem>>, vector<18x16x64xbf16>,
    %c0_91 = arith.constant 0 : index
    %c0_92 = arith.constant 0 : index
    %c0_93 = arith.constant 0 : index
    %59 = vector.load %arg11[%c0_91, %c0_92, %c0_93] : memref<18x16x192xbf16, #tpu.memory_space<vmem>>, vector<16x16x192xbf16>
    %60 = vector.shape_cast %59 : vector<16x16x192xbf16> to vector<256x192xbf16>
    %c0_94 = arith.constant 0 : index
    %c0_95 = arith.constant 0 : index
    %c0_96 = arith.constant 0 : index
    %61 = vector.load %arg4[%c0_94, %c0_95, %c0_96] : memref<3x192x64xbf16, #tpu.memory_space<vmem>>, vector<1x192x64xbf16>
    %62 = vector.shape_cast %61 : vector<1x192x64xbf16> to vector<192x64xbf16>
    %cst_97 = arith.constant dense<0.000000e+00> : vector<256x64xf32>
    %63 = tpu.matmul %60, %62, %cst_97 {dimension_numbers = #tpu.dot_dimension_numbers<[1], [0], [0], [1], [0, 0, 1, 1], [], []>} : vector<256x192xbf16>, vector<192x64xbf16>, vector<256x64xf32> -> vector<256x64xf32>
    %c0_98 = arith.constant 0 : index
    %c0_99 = arith.constant 0 : index
    %64 = vector.load %arg12[%c0_98, %c0_99] : memref<256x64xf32, #tpu.memory_space<vmem>>, vector<256x64xf32>
    tpu.vector_store %arg12[%c0_98, %c0_99], %63 {strides = array<i32>} : memref<256x64xf32, #tpu.memory_space<vmem>>, vector<256x64xf32>,
    %c1_100 = arith.constant 1 : index
    %c0_101 = arith.constant 0 : index
    %c0_102 = arith.constant 0 : index
    %65 = vector.load %arg11[%c1_100, %c0_101, %c0_102] : memref<18x16x192xbf16, #tpu.memory_space<vmem>>, vector<16x16x192xbf16>
    %66 = vector.shape_cast %65 : vector<16x16x192xbf16> to vector<256x192xbf16>
    %c1_103 = arith.constant 1 : index
    %c0_104 = arith.constant 0 : index
    %c0_105 = arith.constant 0 : index
    %67 = vector.load %arg4[%c1_103, %c0_104, %c0_105] : memref<3x192x64xbf16, #tpu.memory_space<vmem>>, vector<1x192x64xbf16>
    %68 = vector.shape_cast %67 : vector<1x192x64xbf16> to vector<192x64xbf16>
    %cst_106 = arith.constant dense<0.000000e+00> : vector<256x64xf32>
    %69 = tpu.matmul %66, %68, %cst_106 {dimension_numbers = #tpu.dot_dimension_numbers<[1], [0], [0], [1], [0, 0, 1, 1], [], []>} : vector<256x192xbf16>, vector<192x64xbf16>, vector<256x64xf32> -> vector<256x64xf32>
    %c0_107 = arith.constant 0 : index
    %c0_108 = arith.constant 0 : index
    %70 = vector.load %arg12[%c0_107, %c0_108] : memref<256x64xf32, #tpu.memory_space<vmem>>, vector<256x64xf32>
    %71 = arith.addf %70, %69 : vector<256x64xf32>
    %c0_109 = arith.constant 0 : index
    %c0_110 = arith.constant 0 : index
    %72 = vector.load %arg12[%c0_109, %c0_110] : memref<256x64xf32, #tpu.memory_space<vmem>>, vector<256x64xf32>
    tpu.vector_store %arg12[%c0_109, %c0_110], %71 {strides = array<i32>} : memref<256x64xf32, #tpu.memory_space<vmem>>, vector<256x64xf32>,
    %c2_111 = arith.constant 2 : index
    %c0_112 = arith.constant 0 : index
    %c0_113 = arith.constant 0 : index
    %73 = vector.load %arg11[%c2_111, %c0_112, %c0_113] : memref<18x16x192xbf16, #tpu.memory_space<vmem>>, vector<16x16x192xbf16>
    %74 = vector.shape_cast %73 : vector<16x16x192xbf16> to vector<256x192xbf16>
    %c2_114 = arith.constant 2 : index
    %c0_115 = arith.constant 0 : index
    %c0_116 = arith.constant 0 : index
    %75 = vector.load %arg4[%c2_114, %c0_115, %c0_116] : memref<3x192x64xbf16, #tpu.memory_space<vmem>>, vector<1x192x64xbf16>
    %76 = vector.shape_cast %75 : vector<1x192x64xbf16> to vector<192x64xbf16>
    %cst_117 = arith.constant dense<0.000000e+00> : vector<256x64xf32>
    %77 = tpu.matmul %74, %76, %cst_117 {dimension_numbers = #tpu.dot_dimension_numbers<[1], [0], [0], [1], [0, 0, 1, 1], [], []>} : vector<256x192xbf16>, vector<192x64xbf16>, vector<256x64xf32> -> vector<256x64xf32>
    %c0_118 = arith.constant 0 : index
    %c0_119 = arith.constant 0 : index
    %78 = vector.load %arg12[%c0_118, %c0_119] : memref<256x64xf32, #tpu.memory_space<vmem>>, vector<256x64xf32>
    %79 = arith.addf %78, %77 : vector<256x64xf32>
    %c0_120 = arith.constant 0 : index
    %c0_121 = arith.constant 0 : index
    %80 = vector.load %arg12[%c0_120, %c0_121] : memref<256x64xf32, #tpu.memory_space<vmem>>, vector<256x64xf32>
    tpu.vector_store %arg12[%c0_120, %c0_121], %79 {strides = array<i32>} : memref<256x64xf32, #tpu.memory_space<vmem>>, vector<256x64xf32>,
    %c0_122 = arith.constant 0 : index
    %c0_123 = arith.constant 0 : index
    %81 = vector.load %arg12[%c0_122, %c0_123] : memref<256x64xf32, #tpu.memory_space<vmem>>, vector<256x64xf32>
    %c0_124 = arith.constant 0 : index
    %c0_125 = arith.constant 0 : index
    %82 = vector.load %arg5[%c0_124, %c0_125] : memref<1x64xf32, #tpu.memory_space<vmem>>, vector<1x64xf32>
    %83 = vector.broadcast %82 : vector<1x64xf32> to vector<256x64xf32>
    %84 = arith.addf %81, %83 : vector<256x64xf32>
    %c0_126 = arith.constant 0 : index
    %c0_127 = arith.constant 0 : index
    %85 = vector.load %arg12[%c0_126, %c0_127] : memref<256x64xf32, #tpu.memory_space<vmem>>, vector<256x64xf32>
    tpu.vector_store %arg12[%c0_126, %c0_127], %84 {strides = array<i32>} : memref<256x64xf32, #tpu.memory_space<vmem>>, vector<256x64xf32>,
    %c0_128 = arith.constant 0 : index
    %c0_129 = arith.constant 0 : index
    %86 = vector.load %arg12[%c0_128, %c0_129] : memref<256x64xf32, #tpu.memory_space<vmem>>, vector<256x64xf32>
    %cst_130 = arith.constant dense<0.000000e+00> : vector<64xf32>
    %87 = vector.multi_reduction <add>, %86, %cst_130 [0] : vector<256x64xf32> to vector<64xf32>
    %88 = vector.shape_cast %87 : vector<64xf32> to vector<1x64xf32>
    %cst_131 = arith.constant 2.560000e+02 : f32
    %89 = vector.broadcast %cst_131 : f32 to vector<1x64xf32>
    %90 = arith.divf %88, %89 : vector<1x64xf32>
    %c0_132 = arith.constant 0 : index
    %c0_133 = arith.constant 0 : index
    %91 = vector.load %arg12[%c0_132, %c0_133] : memref<256x64xf32, #tpu.memory_space<vmem>>, vector<256x64xf32>
    %cst_134 = arith.constant dense<0xFF800000> : vector<64xf32>
    %92 = vector.multi_reduction <maximumf>, %91, %cst_134 [0] : vector<256x64xf32> to vector<64xf32>
    %93 = vector.shape_cast %92 : vector<64xf32> to vector<1x64xf32>
    %94 = tpu.iota {dimensions = array<i32: 0>} : vector<2x64xi32>
    %c0_i32 = arith.constant 0 : i32
    %95 = vector.broadcast %c0_i32 : i32 to vector<2x64xi32>
    %96 = arith.cmpi eq, %94, %95 : vector<2x64xi32>
    %97 = vector.shape_cast %90 : vector<1x64xf32> to vector<1x64xf32>
    %98 = vector.broadcast %97 : vector<1x64xf32> to vector<2x64xf32>
    %99 = vector.shape_cast %93 : vector<1x64xf32> to vector<1x64xf32>
    %100 = vector.broadcast %99 : vector<1x64xf32> to vector<2x64xf32>
    %101 = arith.select %96, %98, %100 : vector<2x64xi1>, vector<2x64xf32>
    %c0_135 = arith.constant 0 : index
    %c0_136 = arith.constant 0 : index
    %102 = vector.load %arg6[%c0_135, %c0_136] : memref<64x8xf32, #tpu.memory_space<vmem>>, vector<64x8xf32>
    %cst_137 = arith.constant dense<0.000000e+00> : vector<2x8xf32>
    %103 = tpu.matmul %101, %102, %cst_137 {dimension_numbers = #tpu.dot_dimension_numbers<[1], [0], [0], [1], [0, 0, 1, 1], [], []>} : vector<2x64xf32>, vector<64x8xf32>, vector<2x8xf32> -> vector<2x8xf32>
    %cst_138 = arith.constant 0.000000e+00 : f32
    %104 = vector.broadcast %cst_138 : f32 to vector<2x8xf32>
    %105 = arith.maximumf %103, %104 : vector<2x8xf32>
    %c0_139 = arith.constant 0 : index
    %c0_140 = arith.constant 0 : index
    %106 = vector.load %arg7[%c0_139, %c0_140] : memref<8x64xf32, #tpu.memory_space<vmem>>, vector<8x64xf32>
    %cst_141 = arith.constant dense<0.000000e+00> : vector<2x64xf32>
    %107 = tpu.matmul %105, %106, %cst_141 {dimension_numbers = #tpu.dot_dimension_numbers<[1], [0], [0], [1], [0, 0, 1, 1], [], []>} : vector<2x8xf32>, vector<8x64xf32>, vector<2x64xf32> -> vector<2x64xf32>
    %108 = vector.extract_strided_slice %107 {offsets = [0, 0], sizes = [1, 64], strides = [1, 1]} : vector<2x64xf32> to vector<1x64xf32>
    %109 = vector.extract_strided_slice %107 {offsets = [1, 0], sizes = [1, 64], strides = [1, 1]} : vector<2x64xf32> to vector<1x64xf32>
    %110 = arith.addf %108, %109 : vector<1x64xf32>
    %111 = arith.negf %110 : vector<1x64xf32>
    %112 = math.exp %111 : vector<1x64xf32>
    %cst_142 = arith.constant 1.000000e+00 : f32
    %113 = vector.broadcast %cst_142 : f32 to vector<1x64xf32>
    %114 = arith.addf %113, %112 : vector<1x64xf32>
    %115 = arith.divf %113, %114 : vector<1x64xf32>
    %c0_143 = arith.constant 0 : index
    %c0_144 = arith.constant 0 : index
    %116 = vector.load %arg12[%c0_143, %c0_144] : memref<256x64xf32, #tpu.memory_space<vmem>>, vector<256x64xf32>
    %117 = vector.broadcast %115 : vector<1x64xf32> to vector<256x64xf32>
    %118 = arith.mulf %116, %117 : vector<256x64xf32>
    %c0_145 = arith.constant 0 : index
    %c0_146 = arith.constant 0 : index
    %119 = vector.load %arg12[%c0_145, %c0_146] : memref<256x64xf32, #tpu.memory_space<vmem>>, vector<256x64xf32>
    tpu.vector_store %arg12[%c0_145, %c0_146], %118 {strides = array<i32>} : memref<256x64xf32, #tpu.memory_space<vmem>>, vector<256x64xf32>,
    %c0_147 = arith.constant 0 : index
    %c0_148 = arith.constant 0 : index
    %120 = vector.load %arg12[%c0_147, %c0_148] : memref<256x64xf32, #tpu.memory_space<vmem>>, vector<256x64xf32>
    %121 = vector.shape_cast %120 : vector<256x64xf32> to vector<16x16x64xf32>
    %cst_149 = arith.constant dense<0.000000e+00> : vector<16x16xf32>
    %122 = vector.multi_reduction <add>, %121, %cst_149 [2] : vector<16x16x64xf32> to vector<16x16xf32>
    %cst_150 = arith.constant 6.400000e+01 : f32
    %123 = vector.broadcast %cst_150 : f32 to vector<16x16xf32>
    %124 = arith.divf %122, %123 : vector<16x16xf32>
    %cst_151 = arith.constant dense<0xFF800000> : vector<16x16xf32>
    %125 = vector.multi_reduction <maximumf>, %121, %cst_151 [2] : vector<16x16x64xf32> to vector<16x16xf32>
    %cst_152 = arith.constant 0.000000e+00 : f32
    %126 = vector.broadcast %cst_152 : f32 to vector<22x44xf32>
    %c0_153 = arith.constant 0 : index
    %c0_154 = arith.constant 0 : index
    %127 = vector.load %arg13[%c0_153, %c0_154] : memref<22x44xf32, #tpu.memory_space<vmem>>, vector<22x44xf32>
    tpu.vector_store %arg13[%c0_153, %c0_154], %126 {strides = array<i32>} : memref<22x44xf32, #tpu.memory_space<vmem>>, vector<22x44xf32>,
    %c3 = arith.constant 3 : index
    %c3_155 = arith.constant 3 : index
    %128 = vector.load %arg13[%c3, %c3_155] : memref<22x44xf32, #tpu.memory_space<vmem>>, vector<16x16xf32>
    tpu.vector_store %arg13[%c3, %c3_155], %124 {strides = array<i32>} : memref<22x44xf32, #tpu.memory_space<vmem>>, vector<16x16xf32>,
    %c3_156 = arith.constant 3 : index
    %c25 = arith.constant 25 : index
    %129 = vector.load %arg13[%c3_156, %c25] : memref<22x44xf32, #tpu.memory_space<vmem>>, vector<16x16xf32>
    tpu.vector_store %arg13[%c3_156, %c25], %125 {strides = array<i32>} : memref<22x44xf32, #tpu.memory_space<vmem>>, vector<16x16xf32>,
    %c0_157 = arith.constant 0 : index
    %c0_158 = arith.constant 0 : index
    %130 = vector.load %arg13[%c0_157, %c0_158] : memref<22x44xf32, #tpu.memory_space<vmem>>, vector<16x44xf32>
    %c0_159 = arith.constant 0 : index
    %c0_160 = arith.constant 0 : index
    %c0_161 = arith.constant 0 : index
    %131 = vector.load %arg8[%c0_159, %c0_160, %c0_161] : memref<7x44x16xf32, #tpu.memory_space<vmem>>, vector<1x44x16xf32>
    %132 = vector.shape_cast %131 : vector<1x44x16xf32> to vector<44x16xf32>
    %cst_162 = arith.constant dense<0.000000e+00> : vector<16x16xf32>
    %133 = tpu.matmul %130, %132, %cst_162 {dimension_numbers = #tpu.dot_dimension_numbers<[1], [0], [0], [1], [0, 0, 1, 1], [], []>} : vector<16x44xf32>, vector<44x16xf32>, vector<16x16xf32> -> vector<16x16xf32>
    %c1_163 = arith.constant 1 : index
    %c0_164 = arith.constant 0 : index
    %134 = vector.load %arg13[%c1_163, %c0_164] : memref<22x44xf32, #tpu.memory_space<vmem>>, vector<16x44xf32>
    %c1_165 = arith.constant 1 : index
    %c0_166 = arith.constant 0 : index
    %c0_167 = arith.constant 0 : index
    %135 = vector.load %arg8[%c1_165, %c0_166, %c0_167] : memref<7x44x16xf32, #tpu.memory_space<vmem>>, vector<1x44x16xf32>
    %136 = vector.shape_cast %135 : vector<1x44x16xf32> to vector<44x16xf32>
    %cst_168 = arith.constant dense<0.000000e+00> : vector<16x16xf32>
    %137 = tpu.matmul %134, %136, %cst_168 {dimension_numbers = #tpu.dot_dimension_numbers<[1], [0], [0], [1], [0, 0, 1, 1], [], []>} : vector<16x44xf32>, vector<44x16xf32>, vector<16x16xf32> -> vector<16x16xf32>
    %138 = arith.addf %133, %137 : vector<16x16xf32>
    %c2_169 = arith.constant 2 : index
    %c0_170 = arith.constant 0 : index
    %139 = vector.load %arg13[%c2_169, %c0_170] : memref<22x44xf32, #tpu.memory_space<vmem>>, vector<16x44xf32>
    %c2_171 = arith.constant 2 : index
    %c0_172 = arith.constant 0 : index
    %c0_173 = arith.constant 0 : index
    %140 = vector.load %arg8[%c2_171, %c0_172, %c0_173] : memref<7x44x16xf32, #tpu.memory_space<vmem>>, vector<1x44x16xf32>
    %141 = vector.shape_cast %140 : vector<1x44x16xf32> to vector<44x16xf32>
    %cst_174 = arith.constant dense<0.000000e+00> : vector<16x16xf32>
    %142 = tpu.matmul %139, %141, %cst_174 {dimension_numbers = #tpu.dot_dimension_numbers<[1], [0], [0], [1], [0, 0, 1, 1], [], []>} : vector<16x44xf32>, vector<44x16xf32>, vector<16x16xf32> -> vector<16x16xf32>
    %143 = arith.addf %138, %142 : vector<16x16xf32>
    %c3_175 = arith.constant 3 : index
    %c0_176 = arith.constant 0 : index
    %144 = vector.load %arg13[%c3_175, %c0_176] : memref<22x44xf32, #tpu.memory_space<vmem>>, vector<16x44xf32>
    %c3_177 = arith.constant 3 : index
    %c0_178 = arith.constant 0 : index
    %c0_179 = arith.constant 0 : index
    %145 = vector.load %arg8[%c3_177, %c0_178, %c0_179] : memref<7x44x16xf32, #tpu.memory_space<vmem>>, vector<1x44x16xf32>
    %146 = vector.shape_cast %145 : vector<1x44x16xf32> to vector<44x16xf32>
    %cst_180 = arith.constant dense<0.000000e+00> : vector<16x16xf32>
    %147 = tpu.matmul %144, %146, %cst_180 {dimension_numbers = #tpu.dot_dimension_numbers<[1], [0], [0], [1], [0, 0, 1, 1], [], []>} : vector<16x44xf32>, vector<44x16xf32>, vector<16x16xf32> -> vector<16x16xf32>
    %148 = arith.addf %143, %147 : vector<16x16xf32>
    %c4 = arith.constant 4 : index
    %c0_181 = arith.constant 0 : index
    %149 = vector.load %arg13[%c4, %c0_181] : memref<22x44xf32, #tpu.memory_space<vmem>>, vector<16x44xf32>
    %c4_182 = arith.constant 4 : index
    %c0_183 = arith.constant 0 : index
    %c0_184 = arith.constant 0 : index
    %150 = vector.load %arg8[%c4_182, %c0_183, %c0_184] : memref<7x44x16xf32, #tpu.memory_space<vmem>>, vector<1x44x16xf32>
    %151 = vector.shape_cast %150 : vector<1x44x16xf32> to vector<44x16xf32>
    %cst_185 = arith.constant dense<0.000000e+00> : vector<16x16xf32>
    %152 = tpu.matmul %149, %151, %cst_185 {dimension_numbers = #tpu.dot_dimension_numbers<[1], [0], [0], [1], [0, 0, 1, 1], [], []>} : vector<16x44xf32>, vector<44x16xf32>, vector<16x16xf32> -> vector<16x16xf32>
    %153 = arith.addf %148, %152 : vector<16x16xf32>
    %c5 = arith.constant 5 : index
    %c0_186 = arith.constant 0 : index
    %154 = vector.load %arg13[%c5, %c0_186] : memref<22x44xf32, #tpu.memory_space<vmem>>, vector<16x44xf32>
    %c5_187 = arith.constant 5 : index
    %c0_188 = arith.constant 0 : index
    %c0_189 = arith.constant 0 : index
    %155 = vector.load %arg8[%c5_187, %c0_188, %c0_189] : memref<7x44x16xf32, #tpu.memory_space<vmem>>, vector<1x44x16xf32>
    %156 = vector.shape_cast %155 : vector<1x44x16xf32> to vector<44x16xf32>
    %cst_190 = arith.constant dense<0.000000e+00> : vector<16x16xf32>
    %157 = tpu.matmul %154, %156, %cst_190 {dimension_numbers = #tpu.dot_dimension_numbers<[1], [0], [0], [1], [0, 0, 1, 1], [], []>} : vector<16x44xf32>, vector<44x16xf32>, vector<16x16xf32> -> vector<16x16xf32>
    %158 = arith.addf %153, %157 : vector<16x16xf32>
    %c6 = arith.constant 6 : index
    %c0_191 = arith.constant 0 : index
    %159 = vector.load %arg13[%c6, %c0_191] : memref<22x44xf32, #tpu.memory_space<vmem>>, vector<16x44xf32>
    %c6_192 = arith.constant 6 : index
    %c0_193 = arith.constant 0 : index
    %c0_194 = arith.constant 0 : index
    %160 = vector.load %arg8[%c6_192, %c0_193, %c0_194] : memref<7x44x16xf32, #tpu.memory_space<vmem>>, vector<1x44x16xf32>
    %161 = vector.shape_cast %160 : vector<1x44x16xf32> to vector<44x16xf32>
    %cst_195 = arith.constant dense<0.000000e+00> : vector<16x16xf32>
    %162 = tpu.matmul %159, %161, %cst_195 {dimension_numbers = #tpu.dot_dimension_numbers<[1], [0], [0], [1], [0, 0, 1, 1], [], []>} : vector<16x44xf32>, vector<44x16xf32>, vector<16x16xf32> -> vector<16x16xf32>
    %163 = arith.addf %158, %162 : vector<16x16xf32>
    %164 = arith.negf %163 : vector<16x16xf32>
    %165 = math.exp %164 : vector<16x16xf32>
    %cst_196 = arith.constant 1.000000e+00 : f32
    %166 = vector.broadcast %cst_196 : f32 to vector<16x16xf32>
    %167 = arith.addf %166, %165 : vector<16x16xf32>
    %168 = arith.divf %166, %167 : vector<16x16xf32>
    %c0_197 = arith.constant 0 : index
    %c0_198 = arith.constant 0 : index
    %169 = vector.load %arg12[%c0_197, %c0_198] : memref<256x64xf32, #tpu.memory_space<vmem>>, vector<256x64xf32>
    %170 = vector.shape_cast %169 : vector<256x64xf32> to vector<16x16x64xf32>
    %171 = vector.shape_cast %168 : vector<16x16xf32> to vector<16x16x1xf32>
    %172 = vector.broadcast %171 : vector<16x16x1xf32> to vector<16x16x64xf32>
    %173 = arith.mulf %170, %172 : vector<16x16x64xf32>
    %c0_199 = arith.constant 0 : index
    %c0_200 = arith.constant 0 : index
    %c0_201 = arith.constant 0 : index
    %c0_202 = arith.constant 0 : index
    %174 = vector.load %arg1[%c0_199, %c0_200, %c0_201, %c0_202] : memref<1x16x16x64xf32, #tpu.memory_space<vmem>>, vector<1x16x16x64xf32>
    %175 = vector.shape_cast %174 : vector<1x16x16x64xf32> to vector<16x16x64xf32>
    %176 = arith.addf %173, %175 : vector<16x16x64xf32>
    %cst_203 = arith.constant 0.000000e+00 : f32
    %177 = vector.broadcast %cst_203 : f32 to vector<16x16x64xf32>
    %178 = arith.maximumf %176, %177 : vector<16x16x64xf32>
    %c0_204 = arith.constant 0 : index
    %c0_205 = arith.constant 0 : index
    %c0_206 = arith.constant 0 : index
    %c0_207 = arith.constant 0 : index
    %179 = vector.load %arg9[%c0_204, %c0_205, %c0_206, %c0_207] : memref<1x16x16x64xf32, #tpu.memory_space<vmem>>, vector<1x16x16x64xf32>
    %180 = vector.shape_cast %179 : vector<1x16x16x64xf32> to vector<16x16x64xf32>
    %181 = vector.shape_cast %178 : vector<16x16x64xf32> to vector<1x16x16x64xf32>
    tpu.vector_store %arg9[%c0_204, %c0_205, %c0_206, %c0_207], %181 {strides = array<i32>} : memref<1x16x16x64xf32, #tpu.memory_space<vmem>>, vector<1x16x16x64xf32>,
    return
  }
  func.func @transform_0(%arg0: i32) -> (i32, i32, i32, i32) {
    %c0_i32 = arith.constant 0 : i32
    %c0_i32_0 = arith.constant 0 : i32
    %c0_i32_1 = arith.constant 0 : i32
    %c0_i32_2 = arith.constant 0 : i32
    return %arg0, %c0_i32, %c0_i32_0, %c0_i32_1 : i32, i32, i32, i32
  }
  func.func @transform_1(%arg0: i32) -> (i32, i32, i32) {
    %c0_i32 = arith.constant 0 : i32
    %c0_i32_0 = arith.constant 0 : i32
    %c0_i32_1 = arith.constant 0 : i32
    %c0_i32_2 = arith.constant 0 : i32
    return %c0_i32, %c0_i32_0, %c0_i32_1 : i32, i32, i32
  }
  func.func @transform_2(%arg0: i32) -> (i32, i32) {
    %c0_i32 = arith.constant 0 : i32
    %c0_i32_0 = arith.constant 0 : i32
    %c0_i32_1 = arith.constant 0 : i32
    return %c0_i32, %c0_i32_0 : i32, i32
  }
  func.func @transform_3(%arg0: i32) -> (i32, i32, i32) {
    %c0_i32 = arith.constant 0 : i32
    %c0_i32_0 = arith.constant 0 : i32
    %c0_i32_1 = arith.constant 0 : i32
    %c0_i32_2 = arith.constant 0 : i32
    return %c0_i32, %c0_i32_0, %c0_i32_1 : i32, i32, i32
  }
  func.func @transform_4(%arg0: i32) -> (i32, i32) {
    %c0_i32 = arith.constant 0 : i32
    %c0_i32_0 = arith.constant 0 : i32
    %c0_i32_1 = arith.constant 0 : i32
    return %c0_i32, %c0_i32_0 : i32, i32
  }
  func.func @transform_5(%arg0: i32) -> (i32, i32) {
    %c0_i32 = arith.constant 0 : i32
    %c0_i32_0 = arith.constant 0 : i32
    %c0_i32_1 = arith.constant 0 : i32
    return %c0_i32, %c0_i32_0 : i32, i32
  }
  func.func @transform_6(%arg0: i32) -> (i32, i32) {
    %c0_i32 = arith.constant 0 : i32
    %c0_i32_0 = arith.constant 0 : i32
    %c0_i32_1 = arith.constant 0 : i32
    return %c0_i32, %c0_i32_0 : i32, i32
  }
  func.func @transform_7(%arg0: i32) -> (i32, i32, i32) {
    %c0_i32 = arith.constant 0 : i32
    %c0_i32_0 = arith.constant 0 : i32
    %c0_i32_1 = arith.constant 0 : i32
    %c0_i32_2 = arith.constant 0 : i32
    return %c0_i32, %c0_i32_0, %c0_i32_1 : i32, i32, i32
  }
  func.func @transform_8(%arg0: i32) -> (i32, i32, i32, i32) {
    %c0_i32 = arith.constant 0 : i32
    %c0_i32_0 = arith.constant 0 : i32
    %c0_i32_1 = arith.constant 0 : i32
    %c0_i32_2 = arith.constant 0 : i32
    return %arg0, %c0_i32, %c0_i32_0, %c0_i32_1 : i32, i32, i32, i32
  }
}

</mosaic_0001>

<llo_original>
// kernel: block1_forward.1
$region0: #{block1_forward.1}
  #allocation0 [shape = 'u32[]', space=smem, size = 0x4, offset = 0x4, fixed_abs, tag = 'smem constant byte address 0x4 - core index']
  #allocation1 [shape = 'u32[144,128]{1,0:T(1,128)}', space=vmem, size = 0x12000, scoped, tag = 'internal scratch']
  #allocation2 [shape = 'f32[18,18,64]{2,1,0:T(8,128)}', space=vmem, size = 0x36000, scoped, tag = 'scratch operand']
  #allocation3 [shape = 'bf16[18,16,192]{2,1,0:T(8,128)(2,1)}', space=vmem, size = 0x24000, scoped, tag = 'scratch operand']
  #allocation4 [shape = 'f32[256,64]{1,0:T(8,128)}', space=vmem, size = 0x20000, scoped, tag = 'scratch operand']
  #allocation5 [shape = 'f32[22,44]{1,0:T(8,128)}', space=vmem, size = 0x3000, scoped, tag = 'scratch operand']
  %s0 = inlined_call_operand.vmem [shape: f32[2,16,16,64], index: 0, kind: input, shape index: {}]
  %s1 = inlined_call_operand.vmem [shape: bf16[3,192,64], index: 1, kind: input, shape index: {}]
  %s2 = inlined_call_operand.vmem [shape: f32[1,64], index: 2, kind: input, shape index: {}]
  %s3 = inlined_call_operand.vmem [shape: bf16[3,192,64], index: 3, kind: input, shape index: {}]
  %s4 = inlined_call_operand.vmem [shape: f32[1,64], index: 4, kind: input, shape index: {}]
  %s5 = inlined_call_operand.vmem [shape: f32[64,8], index: 5, kind: input, shape index: {}]
  %s6 = inlined_call_operand.vmem [shape: f32[8,64], index: 6, kind: input, shape index: {}]
  %s7 = inlined_call_operand.vmem [shape: f32[7,44,16], index: 7, kind: input, shape index: {}]
  %s8 = inlined_call_operand.hbm [shape: f32[2,16,16,64], index: 8, kind: output, shape index: {}]
  %s9 = sld [smem:[#allocation0]]
  $region65: #{block1_forward.1} parent=0
    _
  %s11 = ssub.s32 1, %s9
  %s12 = scalar_select 0, %s11, %s9
  $region1: #{block1_forward.1} parent=0
    #allocation6 [shape = 'u8[262144]{0}', space=vmem, size = 0x40000, scoped, tag = 'output window, operand 0']
    #allocation7 [shape = 's32[2]{0}', space=sflag, size = 0x8, scoped, tag = 'scoped memory for block1_forward.1']
    %13 = vsyncpa [#allocation7], 0
    %s14 = scalar_lea.sflag [#allocation7], 1
    %15 = vsyncpa %s14, 0
    loop: start=0, step=1, limit=4
    $region2: #{block1_forward.1} parent=1 // loop_pre_header
      _
    $region3: #{block1_forward.1} parent=1 // loop_header
      %s17 = sphi 0, %s21
      %p18 = scmp.ge.s32.totalorder %s17, 4
      %s27 = sphi 0, %s29
      %s30 = sphi 0, %s27
      %s31 = sphi 0, %s30
      %s47 = sphi 0, %s31
      %s51 = sphi 0, %s51
      %s53 = sphi 0, %s51
      %s54 = sphi 0, %s53
      %s68 = sphi 0, %s54
      %s72 = sphi 0, %s72
      %s74 = sphi 0, %s72
      %s75 = sphi 0, %s74
      %s89 = sphi 0, %s75
      %s93 = sphi 0, %s93
      %s95 = sphi 0, %s93
      %s96 = sphi 0, %s95
      %s110 = sphi 0, %s96
      %s114 = sphi 0, %s114
      %s116 = sphi 0, %s114
      %s117 = sphi 0, %s116
      %s131 = sphi 0, %s117
      %s135 = sphi 0, %s135
      %s137 = sphi 0, %s135
      %s138 = sphi 0, %s137
      %s152 = sphi 0, %s138
      %s156 = sphi 0, %s156
      %s158 = sphi 0, %s156
      %s159 = sphi 0, %s158
      %s173 = sphi 0, %s159
      %s177 = sphi 0, %s177
      %s179 = sphi 0, %s177
      %s180 = sphi 0, %s179
      %s194 = sphi 0, %s180
      %s200 = sphi 0, %s202
      %s203 = sphi 0, %s200
      %s204 = sphi 0, %s203
      %s220 = sphi 0, %s204
    $region4: #{block1_forward.1} parent=1 // loop_header_branch
      %20 = sbr.rel (%p18) target = $region8
    $region5: #{block1_forward.1} parent=1 // loop_body
      %s22 = ssub.s32 %s17, 1
      %s23 = ssub.s32 %s17, 2
      %s24 = sadd.s32 %s17, 1
      %s25 = ssub.s32 %s17, %s24
      %p26 = scmp.eq.s32.totalorder %s25, 0
      %s28 = sadd.s32 %s27, 1
      %s29 = scalar_select %p26, %s27, %s28
      %p32 = pneg %p26
      %p33 = scmp.eq.s32.totalorder %s17, 1
      %p34 = por %p32, %p33
      %p35 = scmp.ne.s32.totalorder %s27, %s30
      %p36 = scmp.eq.s32.totalorder %s17, 0
      %p37 = por %p35, %p36
      %p38 = scmp.ne.s32.totalorder %s27, %s30
      %p39 = scmp.eq.s32.totalorder %s22, 1
      %p40 = por %p38, %p39
      %p41 = scmp.ne.s32.totalorder %s30, %s31
      %p42 = scmp.eq.s32.totalorder %s22, 0
      %p43 = por %p41, %p42
      %p44 = scmp.ne.s32.totalorder %s30, %s31
      %p45 = scmp.eq.s32.totalorder %s23, 1
      %p46 = por %p44, %p45
      %p48 = scmp.ne.s32.totalorder %s31, %s47
      %p49 = scmp.eq.s32.totalorder %s23, 0
      %p50 = por %p48, %p49
      %s52 = sadd.s32 %s51, 1
      %p55 = scmp.eq.s32.totalorder %s17, 1
      %p56 = scmp.ne.s32.totalorder %s51, %s53
      %p57 = scmp.eq.s32.totalorder %s17, 0
      %p58 = por %p56, %p57
      %p59 = scmp.ne.s32.totalorder %s51, %s53
      %p60 = scmp.eq.s32.totalorder %s22, 1
      %p61 = por %p59, %p60
      %p62 = scmp.ne.s32.totalorder %s53, %s54
      %p63 = scmp.eq.s32.totalorder %s22, 0
      %p64 = por %p62, %p63
      %p65 = scmp.ne.s32.totalorder %s53, %s54
      %p66 = scmp.eq.s32.totalorder %s23, 1
      %p67 = por %p65, %p66
      %p69 = scmp.ne.s32.totalorder %s54, %s68
      %p70 = scmp.eq.s32.totalorder %s23, 0
      %p71 = por %p69, %p70
      %s73 = sadd.s32 %s72, 1
      %p76 = scmp.eq.s32.totalorder %s17, 1
      %p77 = scmp.ne.s32.totalorder %s72, %s74
      %p78 = scmp.eq.s32.totalorder %s17, 0
      %p79 = por %p77, %p78
      %p80 = scmp.ne.s32.totalorder %s72, %s74
      %p81 = scmp.eq.s32.totalorder %s22, 1
      %p82 = por %p80, %p81
      %p83 = scmp.ne.s32.totalorder %s74, %s75
      %p84 = scmp.eq.s32.totalorder %s22, 0
      %p85 = por %p83, %p84
      %p86 = scmp.ne.s32.totalorder %s74, %s75
      %p87 = scmp.eq.s32.totalorder %s23, 1
      %p88 = por %p86, %p87
      %p90 = scmp.ne.s32.totalorder %s75, %s89
      %p91 = scmp.eq.s32.totalorder %s23, 0
      %p92 = por %p90, %p91
      %s94 = sadd.s32 %s93, 1
      %p97 = scmp.eq.s32.totalorder %s17, 1
      %p98 = scmp.ne.s32.totalorder %s93, %s95
      %p99 = scmp.eq.s32.totalorder %s17, 0
      %p100 = por %p98, %p99
      %p101 = scmp.ne.s32.totalorder %s93, %s95
      %p102 = scmp.eq.s32.totalorder %s22, 1
      %p103 = por %p101, %p102
      %p104 = scmp.ne.s32.totalorder %s95, %s96
      %p105 = scmp.eq.s32.totalorder %s22, 0
      %p106 = por %p104, %p105
      %p107 = scmp.ne.s32.totalorder %s95, %s96
      %p108 = scmp.eq.s32.totalorder %s23, 1
      %p109 = por %p107, %p108
      %p111 = scmp.ne.s32.totalorder %s96, %s110
      %p112 = scmp.eq.s32.totalorder %s23, 0
      %p113 = por %p111, %p112
      %s115 = sadd.s32 %s114, 1
      %p118 = scmp.eq.s32.totalorder %s17, 1
      %p119 = scmp.ne.s32.totalorder %s114, %s116
      %p120 = scmp.eq.s32.totalorder %s17, 0
      %p121 = por %p119, %p120
      %p122 = scmp.ne.s32.totalorder %s114, %s116
      %p123 = scmp.eq.s32.totalorder %s22, 1
      %p124 = por %p122, %p123
      %p125 = scmp.ne.s32.totalorder %s116, %s117
      %p126 = scmp.eq.s32.totalorder %s22, 0
      %p127 = por %p125, %p126
      %p128 = scmp.ne.s32.totalorder %s116, %s117
      %p129 = scmp.eq.s32.totalorder %s23, 1
      %p130 = por %p128, %p129
      %p132 = scmp.ne.s32.totalorder %s117, %s131
      %p133 = scmp.eq.s32.totalorder %s23, 0
      %p134 = por %p132, %p133
      %s136 = sadd.s32 %s135, 1
      %p139 = scmp.eq.s32.totalorder %s17, 1
      %p140 = scmp.ne.s32.totalorder %s135, %s137
      %p141 = scmp.eq.s32.totalorder %s17, 0
      %p142 = por %p140, %p141
      %p143 = scmp.ne.s32.totalorder %s135, %s137
      %p144 = scmp.eq.s32.totalorder %s22, 1
      %p145 = por %p143, %p144
      %p146 = scmp.ne.s32.totalorder %s137, %s138
      %p147 = scmp.eq.s32.totalorder %s22, 0
      %p148 = por %p146, %p147
      %p149 = scmp.ne.s32.totalorder %s137, %s138
      %p150 = scmp.eq.s32.totalorder %s23, 1
      %p151 = por %p149, %p150
      %p153 = scmp.ne.s32.totalorder %s138, %s152
      %p154 = scmp.eq.s32.totalorder %s23, 0
      %p155 = por %p153, %p154
      %s157 = sadd.s32 %s156, 1
      %p160 = scmp.eq.s32.totalorder %s17, 1
      %p161 = scmp.ne.s32.totalorder %s156, %s158
      %p162 = scmp.eq.s32.totalorder %s17, 0
      %p163 = por %p161, %p162
      %p164 = scmp.ne.s32.totalorder %s156, %s158
      %p165 = scmp.eq.s32.totalorder %s22, 1
      %p166 = por %p164, %p165
      %p167 = scmp.ne.s32.totalorder %s158, %s159
      %p168 = scmp.eq.s32.totalorder %s22, 0
      %p169 = por %p167, %p168
      %p170 = scmp.ne.s32.totalorder %s158, %s159
      %p171 = scmp.eq.s32.totalorder %s23, 1
      %p172 = por %p170, %p171
      %p174 = scmp.ne.s32.totalorder %s159, %s173
      %p175 = scmp.eq.s32.totalorder %s23, 0
      %p176 = por %p174, %p175
      %s178 = sadd.s32 %s177, 1
      %p181 = scmp.eq.s32.totalorder %s17, 1
      %p182 = scmp.ne.s32.totalorder %s177, %s179
      %p183 = scmp.eq.s32.totalorder %s17, 0
      %p184 = por %p182, %p183
      %p185 = scmp.ne.s32.totalorder %s177, %s179
      %p186 = scmp.eq.s32.totalorder %s22, 1
      %p187 = por %p185, %p186
      %p188 = scmp.ne.s32.totalorder %s179, %s180
      %p189 = scmp.eq.s32.totalorder %s22, 0
      %p190 = por %p188, %p189
      %p191 = scmp.ne.s32.totalorder %s179, %s180
      %p192 = scmp.eq.s32.totalorder %s23, 1
      %p193 = por %p191, %p192
      %p195 = scmp.ne.s32.totalorder %s180, %s194
      %p196 = scmp.eq.s32.totalorder %s23, 0
      %p197 = por %p195, %p196
      %s198 = ssub.s32 %s17, %s24
      %p199 = scmp.eq.s32.totalorder %s198, 0
      %s201 = sadd.s32 %s200, 1
      %s202 = scalar_select %p199, %s200, %s201
      %p205 = pneg %p199
      %p206 = scmp.eq.s32.totalorder %s17, 1
      %p207 = por %p205, %p206
      %p208 = scmp.ne.s32.totalorder %s200, %s203
      %p209 = scmp.eq.s32.totalorder %s17, 0
      %p210 = por %p208, %p209
      %p211 = scmp.ne.s32.totalorder %s200, %s203
      %p212 = scmp.eq.s32.totalorder %s22, 1
      %p213 = por %p211, %p212
      %p214 = scmp.ne.s32.totalorder %s203, %s204
      %p215 = scmp.eq.s32.totalorder %s22, 0
      %p216 = por %p214, %p215
      %p217 = scmp.ne.s32.totalorder %s203, %s204
      %p218 = scmp.eq.s32.totalorder %s23, 1
      %p219 = por %p217, %p218
      %p221 = scmp.ne.s32.totalorder %s204, %s220
      %p222 = scmp.eq.s32.totalorder %s23, 0
      %p223 = por %p221, %p222
      %p224 = scmp.le.s32.totalorder 1, %s17
      %p225 = scmp.lt.s32.totalorder %s17, 3
      %p226 = pnand %p224, %p225
      %p227 = pneg %p226
      // Predicated region
      $region9: #{block1_forward.1} parent=5 // pred_check
        _
      $region10: #{block1_forward.1} parent=5 // pred_check_branch
        %229 = sbr.rel (%p226) target = $region12
      $region11: #{block1_forward.1} parent=5 // pred_region
        %s230 = ssub.s32 %s17, 1
        // Predicated region
        $region13: #{block1_forward.1} parent=11 // pred_check
          %p231 = pneg %p64
        $region14: #{block1_forward.1} parent=11 // pred_check_branch
          %233 = sbr.rel (%p231) target = $region16
        $region15: #{block1_forward.1} parent=11 // pred_region
          _
        $region16: #{block1_forward.1} parent=11 // pred_fallthru
          _
        // Predicated region
        $region17: #{block1_forward.1} parent=11 // pred_check
          %p234 = pneg %p85
        $region18: #{block1_forward.1} parent=11 // pred_check_branch
          %236 = sbr.rel (%p234) target = $region20
        $region19: #{block1_forward.1} parent=11 // pred_region
          _
        $region20: #{block1_forward.1} parent=11 // pred_fallthru
          _
        // Predicated region
        $region21: #{block1_forward.1} parent=11 // pred_check
          %p237 = pneg %p106
        $region22: #{block1_forward.1} parent=11 // pred_check_branch
          %239 = sbr.rel (%p237) target = $region24
        $region23: #{block1_forward.1} parent=11 // pred_region
          _
        $region24: #{block1_forward.1} parent=11 // pred_fallthru
          _
        // Predicated region
        $region25: #{block1_forward.1} parent=11 // pred_check
          %p240 = pneg %p127
        $region26: #{block1_forward.1} parent=11 // pred_check_branch
          %242 = sbr.rel (%p240) target = $region28
        $region27: #{block1_forward.1} parent=11 // pred_region
          _
        $region28: #{block1_forward.1} parent=11 // pred_fallthru
          _
        // Predicated region
        $region29: #{block1_forward.1} parent=11 // pred_check
          %p243 = pneg %p148
        $region30: #{block1_forward.1} parent=11 // pred_check_branch
          %245 = sbr.rel (%p243) target = $region32
        $region31: #{block1_forward.1} parent=11 // pred_region
          _
        $region32: #{block1_forward.1} parent=11 // pred_fallthru
          _
        // Predicated region
        $region33: #{block1_forward.1} parent=11 // pred_check
          %p246 = pneg %p169
        $region34: #{block1_forward.1} parent=11 // pred_check_branch
          %248 = sbr.rel (%p246) target = $region36
        $region35: #{block1_forward.1} parent=11 // pred_region
          _
        $region36: #{block1_forward.1} parent=11 // pred_fallthru
          _
        // Predicated region
        $region37: #{block1_forward.1} parent=11 // pred_check
          %p249 = pneg %p190
        $region38: #{block1_forward.1} parent=11 // pred_check_branch
          %251 = sbr.rel (%p249) target = $region40
        $region39: #{block1_forward.1} parent=11 // pred_region
          _
        $region40: #{block1_forward.1} parent=11 // pred_fallthru
          _
      $region12: #{block1_forward.1} parent=5 // pred_fallthru
        _
      %p252 = scmp.lt.s32.totalorder %s17, 2
      // Predicated region
      $region41: #{block1_forward.1} parent=5 // pred_check
        %p253 = pneg %p252
      $region42: #{block1_forward.1} parent=5 // pred_check_branch
        %255 = sbr.rel (%p253) target = $region44
      $region43: #{block1_forward.1} parent=5 // pred_region
        // Predicated region
        $region45: #{block1_forward.1} parent=43 // pred_check
          %p256 = pneg %p37
        $region46: #{block1_forward.1} parent=43 // pred_check_branch
          %258 = sbr.rel (%p256) target = $region48
        $region47: #{block1_forward.1} parent=43 // pred_region
          %p259 = scmp.lt.s32.totalorder %s17, 1
          %s260 = scalar_select %p259, %s17, 1
          %s261 = smul.addr %s260, 32
          %s262 = smul.addr %s261, 8
          %s263 = scalar_lea.vmem %s0, %s262
        $region48: #{block1_forward.1} parent=43 // pred_fallthru
          _
      $region44: #{block1_forward.1} parent=5 // pred_fallthru
        _
      %p264 = scmp.le.s32.totalorder 1, %s17
      %p265 = scmp.lt.s32.totalorder %s17, 3
      %p266 = pnand %p264, %p265
      %p267 = pneg %p266
      // Predicated region
      $region49: #{block1_forward.1} parent=5 // pred_check
        _
      $region50: #{block1_forward.1} parent=5 // pred_check_branch
        %269 = sbr.rel (%p266) target = $region52
      $region51: #{block1_forward.1} parent=5 // pred_region
        %s270 = ssub.s32 %s17, 1
        %p271 = scmp.lt.s32.totalorder %s22, 1
        %s272 = scalar_select %p271, %s22, 1
        %s273 = smul.addr %s272, 32
        %s274 = smul.addr %s273, 8
        %s275 = scalar_lea.vmem %s0, %s274
        %p276 = pneg %p43
        %p277 = pneg %p40
        %p278 = pneg %p64
        %p279 = pneg %p61
        %p280 = pneg %p85
        %p281 = pneg %p82
        %p282 = pneg %p106
        %p283 = pneg %p103
        %p284 = pneg %p127
        %p285 = pneg %p124
        %p286 = pneg %p148
        %p287 = pneg %p145
        %p288 = pneg %p169
        %p289 = pneg %p166
        %p290 = pneg %p190
        %p291 = pneg %p187
        %p292 = pneg %p216
        %p293 = pneg %p213
        %s294 = sand.u32 %s203, 1
        %s295 = scalar_lea.sflag [#allocation7], %s294
        %s296 = sand.u32 %s203, 1
        %s297 = smul.addr %s296, 256
        %s298 = scalar_lea.vmem [#allocation6], %s297
        %p299 = scmp.lt.s32.totalorder %s22, 1
        %s300 = scalar_select %p299, %s22, 1
        %s301 = smul.addr %s300, 32
        %s302 = smul.addr %s301, 8
        %s303 = scalar_lea.vmem %s0, %s302
        %vm305 = vcmask 523264
        %306 = vst.msk [vmem:[#allocation2] sm:$0xff] %vm305, 0.0
        %307 = vst.msk [vmem:[#allocation2 + $0x8] sm:$0xff] %vm305, 0.0
        %vm308 = vcmask 517120
        %309 = vst.msk [vmem:[#allocation2 + $0x10] sm:$0x3] %vm308, 0.0
        %s310 = scalar_lea.vmem [#allocation2], 408
        %311 = vst.msk [vmem:[%s310] sm:$0xff] %vm305, 0.0
        %312 = vst.msk [vmem:[%s310 + $0x8] sm:$0xff] %vm305, 0.0
        %313 = vst.msk [vmem:[%s310 + $0x10] sm:$0x3] %vm308, 0.0
        %vm314 = vcmask 516096
        %315 = vst.msk [vmem:[#allocation2] sm:$0x1] %vm314, 0.0
        %316 = vst.msk [vmem:[#allocation2 + $0x18] sm:$0x1] %vm314, 0.0
        %317 = vst.msk [vmem:[#allocation2 + $0x30] sm:$0x1] %vm314, 0.0
        %318 = vst.msk [vmem:[#allocation2 + $0x48] sm:$0x1] %vm314, 0.0
        %319 = vst.msk [vmem:[#allocation2 + $0x60] sm:$0x1] %vm314, 0.0
        %320 = vst.msk [vmem:[#allocation2 + $0x78] sm:$0x1] %vm314, 0.0
        %321 = vst.msk [vmem:[#allocation2 + $0x90] sm:$0x1] %vm314, 0.0
        %322 = vst.msk [vmem:[#allocation2 + $0xa8] sm:$0x1] %vm314, 0.0
        %323 = vst.msk [vmem:[#allocation2 + $0xc0] sm:$0x1] %vm314, 0.0
        %324 = vst.msk [vmem:[#allocation2 + $0xd8] sm:$0x1] %vm314, 0.0
        %325 = vst.msk [vmem:[#allocation2 + $0xf0] sm:$0x1] %vm314, 0.0
        %326 = vst.msk [vmem:[#allocation2 + $0x108] sm:$0x1] %vm314, 0.0
        %327 = vst.msk [vmem:[#allocation2 + $0x120] sm:$0x1] %vm314, 0.0
        %328 = vst.msk [vmem:[#allocation2 + $0x138] sm:$0x1] %vm314, 0.0
        %329 = vst.msk [vmem:[#allocation2 + $0x150] sm:$0x1] %vm314, 0.0
        %330 = vst.msk [vmem:[#allocation2 + $0x168] sm:$0x1] %vm314, 0.0
        %331 = vst.msk [vmem:[#allocation2 + $0x180] sm:$0x1] %vm314, 0.0
        %332 = vst.msk [vmem:[#allocation2 + $0x198] sm:$0x1] %vm314, 0.0
        %333 = vst.msk [vmem:[#allocation2 + $0x11] sm:$0x1] %vm314, 0.0
        %334 = vst.msk [vmem:[#allocation2 + $0x29] sm:$0x1] %vm314, 0.0
        %335 = vst.msk [vmem:[#allocation2 + $0x41] sm:$0x1] %vm314, 0.0
        %336 = vst.msk [vmem:[#allocation2 + $0x59] sm:$0x1] %vm314, 0.0
        %337 = vst.msk [vmem:[#allocation2 + $0x71] sm:$0x1] %vm314, 0.0
        %338 = vst.msk [vmem:[#allocation2 + $0x89] sm:$0x1] %vm314, 0.0
        %339 = vst.msk [vmem:[#allocation2 + $0xa1] sm:$0x1] %vm314, 0.0
        %340 = vst.msk [vmem:[#allocation2 + $0xb9] sm:$0x1] %vm314, 0.0
        %341 = vst.msk [vmem:[#allocation2 + $0xd1] sm:$0x1] %vm314, 0.0
        %342 = vst.msk [vmem:[#allocation2 + $0xe9] sm:$0x1] %vm314, 0.0
        %343 = vst.msk [vmem:[#allocation2 + $0x101] sm:$0x1] %vm314, 0.0
        %344 = vst.msk [vmem:[#allocation2 + $0x119] sm:$0x1] %vm314, 0.0
        %345 = vst.msk [vmem:[#allocation2 + $0x131] sm:$0x1] %vm314, 0.0
        %346 = vst.msk [vmem:[#allocation2 + $0x149] sm:$0x1] %vm314, 0.0
        %347 = vst.msk [vmem:[#allocation2 + $0x161] sm:$0x1] %vm314, 0.0
        %348 = vst.msk [vmem:[#allocation2 + $0x179] sm:$0x1] %vm314, 0.0
        %349 = vst.msk [vmem:[#allocation2 + $0x191] sm:$0x1] %vm314, 0.0
        %350 = vst.msk [vmem:[#allocation2 + $0x1a9] sm:$0x1] %vm314, 0.0
        %v351 = vld [vmem:[%s303] sm:$0xff]
        %v352 = vld [vmem:[%s303 + $0x8] sm:$0xff]
        %v353 = vld [vmem:[%s303 + $0x10] sm:$0xff]
        %v354 = vld [vmem:[%s303 + $0x18] sm:$0xff]
        %v355 = vld [vmem:[%s303 + $0x20] sm:$0xff]
        %v356 = vld [vmem:[%s303 + $0x28] sm:$0xff]
        %v357 = vld [vmem:[%s303 + $0x30] sm:$0xff]
        %v358 = vld [vmem:[%s303 + $0x38] sm:$0xff]
        %v359 = vld [vmem:[%s303 + $0x40] sm:$0xff]
        %v360 = vld [vmem:[%s303 + $0x48] sm:$0xff]
        %v361 = vld [vmem:[%s303 + $0x50] sm:$0xff]
        %v362 = vld [vmem:[%s303 + $0x58] sm:$0xff]
        %v363 = vld [vmem:[%s303 + $0x60] sm:$0xff]
        %v364 = vld [vmem:[%s303 + $0x68] sm:$0xff]
        %v365 = vld [vmem:[%s303 + $0x70] sm:$0xff]
        %v366 = vld [vmem:[%s303 + $0x78] sm:$0xff]
        %v367 = vld [vmem:[%s303 + $0x80] sm:$0xff]
        %v368 = vld [vmem:[%s303 + $0x88] sm:$0xff]
        %v369 = vld [vmem:[%s303 + $0x90] sm:$0xff]
        %v370 = vld [vmem:[%s303 + $0x98] sm:$0xff]
        %v371 = vld [vmem:[%s303 + $0xa0] sm:$0xff]
        %v372 = vld [vmem:[%s303 + $0xa8] sm:$0xff]
        %v373 = vld [vmem:[%s303 + $0xb0] sm:$0xff]
        %v374 = vld [vmem:[%s303 + $0xb8] sm:$0xff]
        %v375 = vld [vmem:[%s303 + $0xc0] sm:$0xff]
        %v376 = vld [vmem:[%s303 + $0xc8] sm:$0xff]
        %v377 = vld [vmem:[%s303 + $0xd0] sm:$0xff]
        %v378 = vld [vmem:[%s303 + $0xd8] sm:$0xff]
        %v379 = vld [vmem:[%s303 + $0xe0] sm:$0xff]
        %v380 = vld [vmem:[%s303 + $0xe8] sm:$0xff]
        %v381 = vld [vmem:[%s303 + $0xf0] sm:$0xff]
        %v382 = vld [vmem:[%s303 + $0xf8] sm:$0xff]
        %s383 = scalar_lea.vmem [#allocation2], 24
        %384 = vst.msk [vmem:[%s383 + $0x1] sm:$0xff] %vm305, %v351
        %385 = vst.msk [vmem:[%s383 + $0x9] sm:$0xff] %vm305, %v352
        %386 = vst.msk [vmem:[%s383 + $0x19] sm:$0xff] %vm305, %v353
        %387 = vst.msk [vmem:[%s383 + $0x21] sm:$0xff] %vm305, %v354
        %388 = vst.msk [vmem:[%s383 + $0x31] sm:$0xff] %vm305, %v355
        %389 = vst.msk [vmem:[%s383 + $0x39] sm:$0xff] %vm305, %v356
        %390 = vst.msk [vmem:[%s383 + $0x49] sm:$0xff] %vm305, %v357
        %391 = vst.msk [vmem:[%s383 + $0x51] sm:$0xff] %vm305, %v358
        %392 = vst.msk [vmem:[%s383 + $0x61] sm:$0xff] %vm305, %v359
        %393 = vst.msk [vmem:[%s383 + $0x69] sm:$0xff] %vm305, %v360
        %394 = vst.msk [vmem:[%s383 + $0x79] sm:$0xff] %vm305, %v361
        %395 = vst.msk [vmem:[%s383 + $0x81] sm:$0xff] %vm305, %v362
        %396 = vst.msk [vmem:[%s383 + $0x91] sm:$0xff] %vm305, %v363
        %397 = vst.msk [vmem:[%s383 + $0x99] sm:$0xff] %vm305, %v364
        %398 = vst.msk [vmem:[%s383 + $0xa9] sm:$0xff] %vm305, %v365
        %399 = vst.msk [vmem:[%s383 + $0xb1] sm:$0xff] %vm305, %v366
        %400 = vst.msk [vmem:[%s383 + $0xc1] sm:$0xff] %vm305, %v367
        %401 = vst.msk [vmem:[%s383 + $0xc9] sm:$0xff] %vm305, %v368
        %402 = vst.msk [vmem:[%s383 + $0xd9] sm:$0xff] %vm305, %v369
        %403 = vst.msk [vmem:[%s383 + $0xe1] sm:$0xff] %vm305, %v370
        %404 = vst.msk [vmem:[%s383 + $0xf1] sm:$0xff] %vm305, %v371
        %405 = vst.msk [vmem:[%s383 + $0xf9] sm:$0xff] %vm305, %v372
        %406 = vst.msk [vmem:[%s383 + $0x109] sm:$0xff] %vm305, %v373
        %407 = vst.msk [vmem:[%s383 + $0x111] sm:$0xff] %vm305, %v374
        %408 = vst.msk [vmem:[%s383 + $0x121] sm:$0xff] %vm305, %v375
        %409 = vst.msk [vmem:[%s383 + $0x129] sm:$0xff] %vm305, %v376
        %410 = vst.msk [vmem:[%s383 + $0x139] sm:$0xff] %vm305, %v377
        %411 = vst.msk [vmem:[%s383 + $0x141] sm:$0xff] %vm305, %v378
        %412 = vst.msk [vmem:[%s383 + $0x151] sm:$0xff] %vm305, %v379
        %413 = vst.msk [vmem:[%s383 + $0x159] sm:$0xff] %vm305, %v380
        %414 = vst.msk [vmem:[%s383 + $0x169] sm:$0xff] %vm305, %v381
        %415 = vst.msk [vmem:[%s383 + $0x171] sm:$0xff] %vm305, %v382
        %v416 = vld [vmem:[#allocation2] sm:$0xff]
        %v417 = vld [vmem:[#allocation2 + $0x8] sm:$0xff]
        %v418 = vld [vmem:[#allocation2 + $0x18] sm:$0xff]
        %v419 = vld [vmem:[#allocation2 + $0x20] sm:$0xff]
        %v420 = vld [vmem:[#allocation2 + $0x30] sm:$0xff]
        %v421 = vld [vmem:[#allocation2 + $0x38] sm:$0xff]
        %v422 = vld [vmem:[#allocation2 + $0x48] sm:$0xff]
        %v423 = vld [vmem:[#allocation2 + $0x50] sm:$0xff]
        %v424 = vld [vmem:[#allocation2 + $0x60] sm:$0xff]
        %v425 = vld [vmem:[#allocation2 + $0x68] sm:$0xff]
        %v426 = vld [vmem:[#allocation2 + $0x78] sm:$0xff]
        %v427 = vld [vmem:[#allocation2 + $0x80] sm:$0xff]
        %v428 = vld [vmem:[#allocation2 + $0x90] sm:$0xff]
        %v429 = vld [vmem:[#allocation2 + $0x98] sm:$0xff]
        %v430 = vld [vmem:[#allocation2 + $0xa8] sm:$0xff]
        %v431 = vld [vmem:[#allocation2 + $0xb0] sm:$0xff]
        %v432 = vld [vmem:[#allocation2 + $0xc0] sm:$0xff]
        %v433 = vld [vmem:[#allocation2 + $0xc8] sm:$0xff]
        %v434 = vld [vmem:[#allocation2 + $0xd8] sm:$0xff]
        %v435 = vld [vmem:[#allocation2 + $0xe0] sm:$0xff]
        %v436 = vld [vmem:[#allocation2 + $0xf0] sm:$0xff]
        %v437 = vld [vmem:[#allocation2 + $0xf8] sm:$0xff]
        %v438 = vld [vmem:[#allocation2 + $0x108] sm:$0xff]
        %v439 = vld [vmem:[#allocation2 + $0x110] sm:$0xff]
        %v440 = vld [vmem:[#allocation2 + $0x120] sm:$0xff]
        %v441 = vld [vmem:[#allocation2 + $0x128] sm:$0xff]
        %v442 = vld [vmem:[#allocation2 + $0x138] sm:$0xff]
        %v443 = vld [vmem:[#allocation2 + $0x140] sm:$0xff]
        %v444 = vld [vmem:[#allocation2 + $0x150] sm:$0xff]
        %v445 = vld [vmem:[#allocation2 + $0x158] sm:$0xff]
        %v446 = vld [vmem:[#allocation2 + $0x168] sm:$0xff]
        %v447 = vld [vmem:[#allocation2 + $0x170] sm:$0xff]
        %v448 = vld [vmem:[#allocation2 + $0x180] sm:$0xff]
        %v449 = vld [vmem:[#allocation2 + $0x188] sm:$0xff]
        %v450 = vld [vmem:[#allocation2 + $0x198] sm:$0xff]
        %v451 = vld [vmem:[#allocation2 + $0x1a0] sm:$0xff]
        %v452 = vpack.c.bf16 %v417, %v416
        %v453 = vpack.c.bf16 %v419, %v418
        %v454 = vpack.c.bf16 %v421, %v420
        %v455 = vpack.c.bf16 %v423, %v422
        %v456 = vpack.c.bf16 %v425, %v424
        %v457 = vpack.c.bf16 %v427, %v426
        %v458 = vpack.c.bf16 %v429, %v428
        %v459 = vpack.c.bf16 %v431, %v430
        %v460 = vpack.c.bf16 %v433, %v432
        %v461 = vpack.c.bf16 %v435, %v434
        %v462 = vpack.c.bf16 %v437, %v436
        %v463 = vpack.c.bf16 %v439, %v438
        %v464 = vpack.c.bf16 %v441, %v440
        %v465 = vpack.c.bf16 %v443, %v442
        %v466 = vpack.c.bf16 %v445, %v444
        %v467 = vpack.c.bf16 %v447, %v446
        %v468 = vpack.c.bf16 %v449, %v448
        %v469 = vpack.c.bf16 %v451, %v450
        %v488 = vunpack.c.l.b16 %v452
        %v489 = vunpack.c.h.b16 %v452
        %v490 = vunpack.c.l.b16 %v453
        %v491 = vunpack.c.h.b16 %v453
        %v492 = vunpack.c.l.b16 %v454
        %v493 = vunpack.c.h.b16 %v454
        %v494 = vunpack.c.l.b16 %v455
        %v495 = vunpack.c.h.b16 %v455
        %v496 = vunpack.c.l.b16 %v456
        %v497 = vunpack.c.h.b16 %v456
        %v498 = vunpack.c.l.b16 %v457
        %v499 = vunpack.c.h.b16 %v457
        %v500 = vunpack.c.l.b16 %v458
        %v501 = vunpack.c.h.b16 %v458
        %v502 = vunpack.c.l.b16 %v459
        %v503 = vunpack.c.h.b16 %v459
        %v504 = vunpack.c.l.b16 %v460
        %v505 = vunpack.c.h.b16 %v460
        %v506 = vunpack.c.l.b16 %v461
        %v507 = vunpack.c.h.b16 %v461
        %v508 = vunpack.c.l.b16 %v462
        %v509 = vunpack.c.h.b16 %v462
        %v510 = vunpack.c.l.b16 %v463
        %v511 = vunpack.c.h.b16 %v463
        %v512 = vunpack.c.l.b16 %v464
        %v513 = vunpack.c.h.b16 %v464
        %v514 = vunpack.c.l.b16 %v465
        %v515 = vunpack.c.h.b16 %v465
        %v516 = vunpack.c.l.b16 %v466
        %v517 = vunpack.c.h.b16 %v466
        %v518 = vunpack.c.l.b16 %v467
        %v519 = vunpack.c.h.b16 %v467
        %v520 = vunpack.c.l.b16 %v468
        %v521 = vunpack.c.h.b16 %v468
        %v522 = vunpack.c.l.b16 %v469
        %v523 = vunpack.c.h.b16 %v469
        %v524 = vpack.c.b16 %v488, %v488
        %v525 = vpack.c.b16 %v489, %v489
        %v526 = vpack.c.b16 %v490, %v490
        %v527 = vpack.c.b16 %v491, %v491
        %v528 = vpack.c.b16 %v492, %v492
        %v529 = vpack.c.b16 %v493, %v493
        %v530 = vpack.c.b16 %v494, %v494
        %v531 = vpack.c.b16 %v495, %v495
        %v532 = vpack.c.b16 %v496, %v496
        %v533 = vpack.c.b16 %v497, %v497
        %v534 = vpack.c.b16 %v498, %v498
        %v535 = vpack.c.b16 %v499, %v499
        %v536 = vpack.c.b16 %v500, %v500
        %v537 = vpack.c.b16 %v501, %v501
        %v538 = vpack.c.b16 %v502, %v502
        %v539 = vpack.c.b16 %v503, %v503
        %v540 = vpack.c.b16 %v504, %v504
        %v541 = vpack.c.b16 %v505, %v505
        %v542 = vpack.c.b16 %v506, %v506
        %v543 = vpack.c.b16 %v507, %v507
        %v544 = vpack.c.b16 %v508, %v508
        %v545 = vpack.c.b16 %v509, %v509
        %v546 = vpack.c.b16 %v510, %v510
        %v547 = vpack.c.b16 %v511, %v511
        %v548 = vpack.c.b16 %v512, %v512
        %v549 = vpack.c.b16 %v513, %v513
        %v550 = vpack.c.b16 %v514, %v514
        %v551 = vpack.c.b16 %v515, %v515
        %v552 = vpack.c.b16 %v516, %v516
        %v553 = vpack.c.b16 %v517, %v517
        %v554 = vpack.c.b16 %v518, %v518
        %v555 = vpack.c.b16 %v519, %v519
        %v556 = vpack.c.b16 %v520, %v520
        %v557 = vpack.c.b16 %v521, %v521
        %v558 = vpack.c.b16 %v522, %v522
        %v559 = vpack.c.b16 %v523, %v523
        %vm596 = vcmask 519168
        %597 = vst.msk [vmem:[#allocation3] sm:$0xf] %vm596, %v524
        %598 = vst.msk [vmem:[#allocation3 + $0x8] sm:$0xf] %vm596, %v525
        %599 = vst.msk [vmem:[#allocation3 + $0x10] sm:$0xf] %vm596, %v526
        %600 = vst.msk [vmem:[#allocation3 + $0x18] sm:$0xf] %vm596, %v527
        %601 = vst.msk [vmem:[#allocation3 + $0x20] sm:$0xf] %vm596, %v528
        %602 = vst.msk [vmem:[#allocation3 + $0x28] sm:$0xf] %vm596, %v529
        %603 = vst.msk [vmem:[#allocation3 + $0x30] sm:$0xf] %vm596, %v530
        %604 = vst.msk [vmem:[#allocation3 + $0x38] sm:$0xf] %vm596, %v531
        %605 = vst.msk [vmem:[#allocation3 + $0x40] sm:$0xf] %vm596, %v532
        %606 = vst.msk [vmem:[#allocation3 + $0x48] sm:$0xf] %vm596, %v533
        %607 = vst.msk [vmem:[#allocation3 + $0x50] sm:$0xf] %vm596, %v534
        %608 = vst.msk [vmem:[#allocation3 + $0x58] sm:$0xf] %vm596, %v535
        %609 = vst.msk [vmem:[#allocation3 + $0x60] sm:$0xf] %vm596, %v536
        %610 = vst.msk [vmem:[#allocation3 + $0x68] sm:$0xf] %vm596, %v537
        %611 = vst.msk [vmem:[#allocation3 + $0x70] sm:$0xf] %vm596, %v538
        %612 = vst.msk [vmem:[#allocation3 + $0x78] sm:$0xf] %vm596, %v539
        %613 = vst.msk [vmem:[#allocation3 + $0x80] sm:$0xf] %vm596, %v540
        %614 = vst.msk [vmem:[#allocation3 + $0x88] sm:$0xf] %vm596, %v541
        %615 = vst.msk [vmem:[#allocation3 + $0x90] sm:$0xf] %vm596, %v542
        %616 = vst.msk [vmem:[#allocation3 + $0x98] sm:$0xf] %vm596, %v543
        %617 = vst.msk [vmem:[#allocation3 + $0xa0] sm:$0xf] %vm596, %v544
        %618 = vst.msk [vmem:[#allocation3 + $0xa8] sm:$0xf] %vm596, %v545
        %619 = vst.msk [vmem:[#allocation3 + $0xb0] sm:$0xf] %vm596, %v546
        %620 = vst.msk [vmem:[#allocation3 + $0xb8] sm:$0xf] %vm596, %v547
        %621 = vst.msk [vmem:[#allocation3 + $0xc0] sm:$0xf] %vm596, %v548
        %622 = vst.msk [vmem:[#allocation3 + $0xc8] sm:$0xf] %vm596, %v549
        %623 = vst.msk [vmem:[#allocation3 + $0xd0] sm:$0xf] %vm596, %v550
        %624 = vst.msk [vmem:[#allocation3 + $0xd8] sm:$0xf] %vm596, %v551
        %625 = vst.msk [vmem:[#allocation3 + $0xe0] sm:$0xf] %vm596, %v552
        %626 = vst.msk [vmem:[#allocation3 + $0xe8] sm:$0xf] %vm596, %v553
        %627 = vst.msk [vmem:[#allocation3 + $0xf0] sm:$0xf] %vm596, %v554
        %628 = vst.msk [vmem:[#allocation3 + $0xf8] sm:$0xf] %vm596, %v555
        %629 = vst.msk [vmem:[#allocation3 + $0x100] sm:$0xf] %vm596, %v556
        %630 = vst.msk [vmem:[#allocation3 + $0x108] sm:$0xf] %vm596, %v557
        %631 = vst.msk [vmem:[#allocation3 + $0x110] sm:$0xf] %vm596, %v558
        %632 = vst.msk [vmem:[#allocation3 + $0x118] sm:$0xf] %vm596, %v559
        %v633 = vld [vmem:[#allocation2 + $0x1] sm:$0xff]
        %v634 = vld [vmem:[#allocation2 + $0x9] sm:$0xff]
        %v635 = vld [vmem:[#allocation2 + $0x19] sm:$0xff]
        %v636 = vld [vmem:[#allocation2 + $0x21] sm:$0xff]
        %v637 = vld [vmem:[#allocation2 + $0x31] sm:$0xff]
        %v638 = vld [vmem:[#allocation2 + $0x39] sm:$0xff]
        %v639 = vld [vmem:[#allocation2 + $0x49] sm:$0xff]
        %v640 = vld [vmem:[#allocation2 + $0x51] sm:$0xff]
        %v641 = vld [vmem:[#allocation2 + $0x61] sm:$0xff]
        %v642 = vld [vmem:[#allocation2 + $0x69] sm:$0xff]
        %v643 = vld [vmem:[#allocation2 + $0x79] sm:$0xff]
        %v644 = vld [vmem:[#allocation2 + $0x81] sm:$0xff]
        %v645 = vld [vmem:[#allocation2 + $0x91] sm:$0xff]
        %v646 = vld [vmem:[#allocation2 + $0x99] sm:$0xff]
        %v647 = vld [vmem:[#allocation2 + $0xa9] sm:$0xff]
        %v648 = vld [vmem:[#allocation2 + $0xb1] sm:$0xff]
        %v649 = vld [vmem:[#allocation2 + $0xc1] sm:$0xff]
        %v650 = vld [vmem:[#allocation2 + $0xc9] sm:$0xff]
        %v651 = vld [vmem:[#allocation2 + $0xd9] sm:$0xff]
        %v652 = vld [vmem:[#allocation2 + $0xe1] sm:$0xff]
        %v653 = vld [vmem:[#allocation2 + $0xf1] sm:$0xff]
        %v654 = vld [vmem:[#allocation2 + $0xf9] sm:$0xff]
        %v655 = vld [vmem:[#allocation2 + $0x109] sm:$0xff]
        %v656 = vld [vmem:[#allocation2 + $0x111] sm:$0xff]
        %v657 = vld [vmem:[#allocation2 + $0x121] sm:$0xff]
        %v658 = vld [vmem:[#allocation2 + $0x129] sm:$0xff]
        %v659 = vld [vmem:[#allocation2 + $0x139] sm:$0xff]
        %v660 = vld [vmem:[#allocation2 + $0x141] sm:$0xff]
        %v661 = vld [vmem:[#allocation2 + $0x151] sm:$0xff]
        %v662 = vld [vmem:[#allocation2 + $0x159] sm:$0xff]
        %v663 = vld [vmem:[#allocation2 + $0x169] sm:$0xff]
        %v664 = vld [vmem:[#allocation2 + $0x171] sm:$0xff]
        %v665 = vld [vmem:[#allocation2 + $0x181] sm:$0xff]
        %v666 = vld [vmem:[#allocation2 + $0x189] sm:$0xff]
        %v667 = vld [vmem:[#allocation2 + $0x199] sm:$0xff]
        %v668 = vld [vmem:[#allocation2 + $0x1a1] sm:$0xff]
        %v669 = vpack.c.bf16 %v634, %v633
        %v670 = vpack.c.bf16 %v636, %v635
        %v671 = vpack.c.bf16 %v638, %v637
        %v672 = vpack.c.bf16 %v640, %v639
        %v673 = vpack.c.bf16 %v642, %v641
        %v674 = vpack.c.bf16 %v644, %v643
        %v675 = vpack.c.bf16 %v646, %v645
        %v676 = vpack.c.bf16 %v648, %v647
        %v677 = vpack.c.bf16 %v650, %v649
        %v678 = vpack.c.bf16 %v652, %v651
        %v679 = vpack.c.bf16 %v654, %v653
        %v680 = vpack.c.bf16 %v656, %v655
        %v681 = vpack.c.bf16 %v658, %v657
        %v682 = vpack.c.bf16 %v660, %v659
        %v683 = vpack.c.bf16 %v662, %v661
        %v684 = vpack.c.bf16 %v664, %v663
        %v685 = vpack.c.bf16 %v666, %v665
        %v686 = vpack.c.bf16 %v668, %v667
        %v705 = vunpack.c.l.b16 %v669
        %v706 = vunpack.c.h.b16 %v669
        %v707 = vunpack.c.l.b16 %v670
        %v708 = vunpack.c.h.b16 %v670
        %v709 = vunpack.c.l.b16 %v671
        %v710 = vunpack.c.h.b16 %v671
        %v711 = vunpack.c.l.b16 %v672
        %v712 = vunpack.c.h.b16 %v672
        %v713 = vunpack.c.l.b16 %v673
        %v714 = vunpack.c.h.b16 %v673
        %v715 = vunpack.c.l.b16 %v674
        %v716 = vunpack.c.h.b16 %v674
        %v717 = vunpack.c.l.b16 %v675
        %v718 = vunpack.c.h.b16 %v675
        %v719 = vunpack.c.l.b16 %v676
        %v720 = vunpack.c.h.b16 %v676
        %v721 = vunpack.c.l.b16 %v677
        %v722 = vunpack.c.h.b16 %v677
        %v723 = vunpack.c.l.b16 %v678
        %v724 = vunpack.c.h.b16 %v678
        %v725 = vunpack.c.l.b16 %v679
        %v726 = vunpack.c.h.b16 %v679
        %v727 = vunpack.c.l.b16 %v680
        %v728 = vunpack.c.h.b16 %v680
        %v729 = vunpack.c.l.b16 %v681
        %v730 = vunpack.c.h.b16 %v681
        %v731 = vunpack.c.l.b16 %v682
        %v732 = vunpack.c.h.b16 %v682
        %v733 = vunpack.c.l.b16 %v683
        %v734 = vunpack.c.h.b16 %v683
        %v735 = vunpack.c.l.b16 %v684
        %v736 = vunpack.c.h.b16 %v684
        %v737 = vunpack.c.l.b16 %v685
        %v738 = vunpack.c.h.b16 %v685
        %v739 = vunpack.c.l.b16 %v686
        %v740 = vunpack.c.h.b16 %v686
        %v741 = vpack.c.b16 %v705, %v705
        %v742 = vpack.c.b16 %v706, %v706
        %v743 = vpack.c.b16 %v707, %v707
        %v744 = vpack.c.b16 %v708, %v708
        %v745 = vpack.c.b16 %v709, %v709
        %v746 = vpack.c.b16 %v710, %v710
        %v747 = vpack.c.b16 %v711, %v711
        %v748 = vpack.c.b16 %v712, %v712
        %v749 = vpack.c.b16 %v713, %v713
        %v750 = vpack.c.b16 %v714, %v714
        %v751 = vpack.c.b16 %v715, %v715
        %v752 = vpack.c.b16 %v716, %v716
        %v753 = vpack.c.b16 %v717, %v717
        %v754 = vpack.c.b16 %v718, %v718
        %v755 = vpack.c.b16 %v719, %v719
        %v756 = vpack.c.b16 %v720, %v720
        %v757 = vpack.c.b16 %v721, %v721
        %v758 = vpack.c.b16 %v722, %v722
        %v759 = vpack.c.b16 %v723, %v723
        %v760 = vpack.c.b16 %v724, %v724
        %v761 = vpack.c.b16 %v725, %v725
        %v762 = vpack.c.b16 %v726, %v726
        %v763 = vpack.c.b16 %v727, %v727
        %v764 = vpack.c.b16 %v728, %v728
        %v765 = vpack.c.b16 %v729, %v729
        %v766 = vpack.c.b16 %v730, %v730
        %v767 = vpack.c.b16 %v731, %v731
        %v768 = vpack.c.b16 %v732, %v732
        %v769 = vpack.c.b16 %v733, %v733
        %v770 = vpack.c.b16 %v734, %v734
        %v771 = vpack.c.b16 %v735, %v735
        %v772 = vpack.c.b16 %v736, %v736
        %v773 = vpack.c.b16 %v737, %v737
        %v774 = vpack.c.b16 %v738, %v738
        %v775 = vpack.c.b16 %v739, %v739
        %v776 = vpack.c.b16 %v740, %v740
        %777 = vrot.lane.b32.xlu0 %v741, 64
        %v778 = vpop.permute.xlu0 %777
        %779 = vrot.lane.b32.xlu0 %v742, 64
        %v780 = vpop.permute.xlu0 %779
        %781 = vrot.lane.b32.xlu0 %v743, 64
        %v782 = vpop.permute.xlu0 %781
        %783 = vrot.lane.b32.xlu0 %v744, 64
        %v784 = vpop.permute.xlu0 %783
        %785 = vrot.lane.b32.xlu0 %v745, 64
        %v786 = vpop.permute.xlu0 %785
        %787 = vrot.lane.b32.xlu0 %v746, 64
        %v788 = vpop.permute.xlu0 %787
        %789 = vrot.lane.b32.xlu0 %v747, 64
        %v790 = vpop.permute.xlu0 %789
        %791 = vrot.lane.b32.xlu0 %v748, 64
        %v792 = vpop.permute.xlu0 %791
        %793 = vrot.lane.b32.xlu0 %v749, 64
        %v794 = vpop.permute.xlu0 %793
        %795 = vrot.lane.b32.xlu0 %v750, 64
        %v796 = vpop.permute.xlu0 %795
        %797 = vrot.lane.b32.xlu0 %v751, 64
        %v798 = vpop.permute.xlu0 %797
        %799 = vrot.lane.b32.xlu0 %v752, 64
        %v800 = vpop.permute.xlu0 %799
        %801 = vrot.lane.b32.xlu0 %v753, 64
        %v802 = vpop.permute.xlu0 %801
        %803 = vrot.lane.b32.xlu0 %v754, 64
        %v804 = vpop.permute.xlu0 %803
        %805 = vrot.lane.b32.xlu0 %v755, 64
        %v806 = vpop.permute.xlu0 %805
        %807 = vrot.lane.b32.xlu0 %v756, 64
        %v808 = vpop.permute.xlu0 %807
        %809 = vrot.lane.b32.xlu0 %v757, 64
        %v810 = vpop.permute.xlu0 %809
        %811 = vrot.lane.b32.xlu0 %v758, 64
        %v812 = vpop.permute.xlu0 %811
        %813 = vrot.lane.b32.xlu0 %v759, 64
        %v814 = vpop.permute.xlu0 %813
        %815 = vrot.lane.b32.xlu0 %v760, 64
        %v816 = vpop.permute.xlu0 %815
        %817 = vrot.lane.b32.xlu0 %v761, 64
        %v818 = vpop.permute.xlu0 %817
        %819 = vrot.lane.b32.xlu0 %v762, 64
        %v820 = vpop.permute.xlu0 %819
        %821 = vrot.lane.b32.xlu0 %v763, 64
        %v822 = vpop.permute.xlu0 %821
        %823 = vrot.lane.b32.xlu0 %v764, 64
        %v824 = vpop.permute.xlu0 %823
        %825 = vrot.lane.b32.xlu0 %v765, 64
        %v826 = vpop.permute.xlu0 %825
        %827 = vrot.lane.b32.xlu0 %v766, 64
        %v828 = vpop.permute.xlu0 %827
        %829 = vrot.lane.b32.xlu0 %v767, 64
        %v830 = vpop.permute.xlu0 %829
        %831 = vrot.lane.b32.xlu0 %v768, 64
        %v832 = vpop.permute.xlu0 %831
        %833 = vrot.lane.b32.xlu0 %v769, 64
        %v834 = vpop.permute.xlu0 %833
        %835 = vrot.lane.b32.xlu0 %v770, 64
        %v836 = vpop.permute.xlu0 %835
        %837 = vrot.lane.b32.xlu0 %v771, 64
        %v838 = vpop.permute.xlu0 %837
        %839 = vrot.lane.b32.xlu0 %v772, 64
        %v840 = vpop.permute.xlu0 %839
        %841 = vrot.lane.b32.xlu0 %v773, 64
        %v842 = vpop.permute.xlu0 %841
        %843 = vrot.lane.b32.xlu0 %v774, 64
        %v844 = vpop.permute.xlu0 %843
        %845 = vrot.lane.b32.xlu0 %v775, 64
        %v846 = vpop.permute.xlu0 %845
        %847 = vrot.lane.b32.xlu0 %v776, 64
        %v848 = vpop.permute.xlu0 %847
        %vm885 = vcmask 1043968
        %886 = vst.msk [vmem:[#allocation3] sm:$0xf] %vm885, %v778
        %887 = vst.msk [vmem:[#allocation3 + $0x8] sm:$0xf] %vm885, %v780
        %888 = vst.msk [vmem:[#allocation3 + $0x10] sm:$0xf] %vm885, %v782
        %889 = vst.msk [vmem:[#allocation3 + $0x18] sm:$0xf] %vm885, %v784
        %890 = vst.msk [vmem:[#allocation3 + $0x20] sm:$0xf] %vm885, %v786
        %891 = vst.msk [vmem:[#allocation3 + $0x28] sm:$0xf] %vm885, %v788
        %892 = vst.msk [vmem:[#allocation3 + $0x30] sm:$0xf] %vm885, %v790
        %893 = vst.msk [vmem:[#allocation3 + $0x38] sm:$0xf] %vm885, %v792
        %894 = vst.msk [vmem:[#allocation3 + $0x40] sm:$0xf] %vm885, %v794
        %895 = vst.msk [vmem:[#allocation3 + $0x48] sm:$0xf] %vm885, %v796
        %896 = vst.msk [vmem:[#allocation3 + $0x50] sm:$0xf] %vm885, %v798
        %897 = vst.msk [vmem:[#allocation3 + $0x58] sm:$0xf] %vm885, %v800
        %898 = vst.msk [vmem:[#allocation3 + $0x60] sm:$0xf] %vm885, %v802
        %899 = vst.msk [vmem:[#allocation3 + $0x68] sm:$0xf] %vm885, %v804
        %900 = vst.msk [vmem:[#allocation3 + $0x70] sm:$0xf] %vm885, %v806
        %901 = vst.msk [vmem:[#allocation3 + $0x78] sm:$0xf] %vm885, %v808
        %902 = vst.msk [vmem:[#allocation3 + $0x80] sm:$0xf] %vm885, %v810
        %903 = vst.msk [vmem:[#allocation3 + $0x88] sm:$0xf] %vm885, %v812
        %904 = vst.msk [vmem:[#allocation3 + $0x90] sm:$0xf] %vm885, %v814
        %905 = vst.msk [vmem:[#allocation3 + $0x98] sm:$0xf] %vm885, %v816
        %906 = vst.msk [vmem:[#allocation3 + $0xa0] sm:$0xf] %vm885, %v818
        %907 = vst.msk [vmem:[#allocation3 + $0xa8] sm:$0xf] %vm885, %v820
        %908 = vst.msk [vmem:[#allocation3 + $0xb0] sm:$0xf] %vm885, %v822
        %909 = vst.msk [vmem:[#allocation3 + $0xb8] sm:$0xf] %vm885, %v824
        %910 = vst.msk [vmem:[#allocation3 + $0xc0] sm:$0xf] %vm885, %v826
        %911 = vst.msk [vmem:[#allocation3 + $0xc8] sm:$0xf] %vm885, %v828
        %912 = vst.msk [vmem:[#allocation3 + $0xd0] sm:$0xf] %vm885, %v830
        %913 = vst.msk [vmem:[#allocation3 + $0xd8] sm:$0xf] %vm885, %v832
        %914 = vst.msk [vmem:[#allocation3 + $0xe0] sm:$0xf] %vm885, %v834
        %915 = vst.msk [vmem:[#allocation3 + $0xe8] sm:$0xf] %vm885, %v836
        %916 = vst.msk [vmem:[#allocation3 + $0xf0] sm:$0xf] %vm885, %v838
        %917 = vst.msk [vmem:[#allocation3 + $0xf8] sm:$0xf] %vm885, %v840
        %918 = vst.msk [vmem:[#allocation3 + $0x100] sm:$0xf] %vm885, %v842
        %919 = vst.msk [vmem:[#allocation3 + $0x108] sm:$0xf] %vm885, %v844
        %920 = vst.msk [vmem:[#allocation3 + $0x110] sm:$0xf] %vm885, %v846
        %921 = vst.msk [vmem:[#allocation3 + $0x118] sm:$0xf] %vm885, %v848
        %v922 = vld [vmem:[#allocation2 + $0x2] sm:$0xff]
        %v923 = vld [vmem:[#allocation2 + $0xa] sm:$0xff]
        %v924 = vld [vmem:[#allocation2 + $0x1a] sm:$0xff]
        %v925 = vld [vmem:[#allocation2 + $0x22] sm:$0xff]
        %v926 = vld [vmem:[#allocation2 + $0x32] sm:$0xff]
        %v927 = vld [vmem:[#allocation2 + $0x3a] sm:$0xff]
        %v928 = vld [vmem:[#allocation2 + $0x4a] sm:$0xff]
        %v929 = vld [vmem:[#allocation2 + $0x52] sm:$0xff]
        %v930 = vld [vmem:[#allocation2 + $0x62] sm:$0xff]
        %v931 = vld [vmem:[#allocation2 + $0x6a] sm:$0xff]
        %v932 = vld [vmem:[#allocation2 + $0x7a] sm:$0xff]
        %v933 = vld [vmem:[#allocation2 + $0x82] sm:$0xff]
        %v934 = vld [vmem:[#allocation2 + $0x92] sm:$0xff]
        %v935 = vld [vmem:[#allocation2 + $0x9a] sm:$0xff]
        %v936 = vld [vmem:[#allocation2 + $0xaa] sm:$0xff]
        %v937 = vld [vmem:[#allocation2 + $0xb2] sm:$0xff]
        %v938 = vld [vmem:[#allocation2 + $0xc2] sm:$0xff]
        %v939 = vld [vmem:[#allocation2 + $0xca] sm:$0xff]
        %v940 = vld [vmem:[#allocation2 + $0xda] sm:$0xff]
        %v941 = vld [vmem:[#allocation2 + $0xe2] sm:$0xff]
        %v942 = vld [vmem:[#allocation2 + $0xf2] sm:$0xff]
        %v943 = vld [vmem:[#allocation2 + $0xfa] sm:$0xff]
        %v944 = vld [vmem:[#allocation2 + $0x10a] sm:$0xff]
        %v945 = vld [vmem:[#allocation2 + $0x112] sm:$0xff]
        %v946 = vld [vmem:[#allocation2 + $0x122] sm:$0xff]
        %v947 = vld [vmem:[#allocation2 + $0x12a] sm:$0xff]
        %v948 = vld [vmem:[#allocation2 + $0x13a] sm:$0xff]
        %v949 = vld [vmem:[#allocation2 + $0x142] sm:$0xff]
        %v950 = vld [vmem:[#allocation2 + $0x152] sm:$0xff]
        %v951 = vld [vmem:[#allocation2 + $0x15a] sm:$0xff]
        %v952 = vld [vmem:[#allocation2 + $0x16a] sm:$0xff]
        %v953 = vld [vmem:[#allocation2 + $0x172] sm:$0xff]
        %v954 = vld [vmem:[#allocation2 + $0x182] sm:$0xff]
        %v955 = vld [vmem:[#allocation2 + $0x18a] sm:$0xff]
        %v956 = vld [vmem:[#allocation2 + $0x19a] sm:$0xff]
        %v957 = vld [vmem:[#allocation2 + $0x1a2] sm:$0xff]
        %v958 = vpack.c.bf16 %v923, %v922
        %v959 = vpack.c.bf16 %v925, %v924
        %v960 = vpack.c.bf16 %v927, %v926
        %v961 = vpack.c.bf16 %v929, %v928
        %v962 = vpack.c.bf16 %v931, %v930
        %v963 = vpack.c.bf16 %v933, %v932
        %v964 = vpack.c.bf16 %v935, %v934
        %v965 = vpack.c.bf16 %v937, %v936
        %v966 = vpack.c.bf16 %v939, %v938
        %v967 = vpack.c.bf16 %v941, %v940
        %v968 = vpack.c.bf16 %v943, %v942
        %v969 = vpack.c.bf16 %v945, %v944
        %v970 = vpack.c.bf16 %v947, %v946
        %v971 = vpack.c.bf16 %v949, %v948
        %v972 = vpack.c.bf16 %v951, %v950
        %v973 = vpack.c.bf16 %v953, %v952
        %v974 = vpack.c.bf16 %v955, %v954
        %v975 = vpack.c.bf16 %v957, %v956
        %v994 = vunpack.c.l.b16 %v958
        %v995 = vunpack.c.h.b16 %v958
        %v996 = vunpack.c.l.b16 %v959
        %v997 = vunpack.c.h.b16 %v959
        %v998 = vunpack.c.l.b16 %v960
        %v999 = vunpack.c.h.b16 %v960
        %v1000 = vunpack.c.l.b16 %v961
        %v1001 = vunpack.c.h.b16 %v961
        %v1002 = vunpack.c.l.b16 %v962
        %v1003 = vunpack.c.h.b16 %v962
        %v1004 = vunpack.c.l.b16 %v963
        %v1005 = vunpack.c.h.b16 %v963
        %v1006 = vunpack.c.l.b16 %v964
        %v1007 = vunpack.c.h.b16 %v964
        %v1008 = vunpack.c.l.b16 %v965
        %v1009 = vunpack.c.h.b16 %v965
        %v1010 = vunpack.c.l.b16 %v966
        %v1011 = vunpack.c.h.b16 %v966
        %v1012 = vunpack.c.l.b16 %v967
        %v1013 = vunpack.c.h.b16 %v967
        %v1014 = vunpack.c.l.b16 %v968
        %v1015 = vunpack.c.h.b16 %v968
        %v1016 = vunpack.c.l.b16 %v969
        %v1017 = vunpack.c.h.b16 %v969
        %v1018 = vunpack.c.l.b16 %v970
        %v1019 = vunpack.c.h.b16 %v970
        %v1020 = vunpack.c.l.b16 %v971
        %v1021 = vunpack.c.h.b16 %v971
        %v1022 = vunpack.c.l.b16 %v972
        %v1023 = vunpack.c.h.b16 %v972
        %v1024 = vunpack.c.l.b16 %v973
        %v1025 = vunpack.c.h.b16 %v973
        %v1026 = vunpack.c.l.b16 %v974
        %v1027 = vunpack.c.h.b16 %v974
        %v1028 = vunpack.c.l.b16 %v975
        %v1029 = vunpack.c.h.b16 %v975
        %v1030 = vpack.c.b16 %v994, %v994
        %v1031 = vpack.c.b16 %v995, %v995
        %v1032 = vpack.c.b16 %v996, %v996
        %v1033 = vpack.c.b16 %v997, %v997
        %v1034 = vpack.c.b16 %v998, %v998
        %v1035 = vpack.c.b16 %v999, %v999
        %v1036 = vpack.c.b16 %v1000, %v1000
        %v1037 = vpack.c.b16 %v1001, %v1001
        %v1038 = vpack.c.b16 %v1002, %v1002
        %v1039 = vpack.c.b16 %v1003, %v1003
        %v1040 = vpack.c.b16 %v1004, %v1004
        %v1041 = vpack.c.b16 %v1005, %v1005
        %v1042 = vpack.c.b16 %v1006, %v1006
        %v1043 = vpack.c.b16 %v1007, %v1007
        %v1044 = vpack.c.b16 %v1008, %v1008
        %v1045 = vpack.c.b16 %v1009, %v1009
        %v1046 = vpack.c.b16 %v1010, %v1010
        %v1047 = vpack.c.b16 %v1011, %v1011
        %v1048 = vpack.c.b16 %v1012, %v1012
        %v1049 = vpack.c.b16 %v1013, %v1013
        %v1050 = vpack.c.b16 %v1014, %v1014
        %v1051 = vpack.c.b16 %v1015, %v1015
        %v1052 = vpack.c.b16 %v1016, %v1016
        %v1053 = vpack.c.b16 %v1017, %v1017
        %v1054 = vpack.c.b16 %v1018, %v1018
        %v1055 = vpack.c.b16 %v1019, %v1019
        %v1056 = vpack.c.b16 %v1020, %v1020
        %v1057 = vpack.c.b16 %v1021, %v1021
        %v1058 = vpack.c.b16 %v1022, %v1022
        %v1059 = vpack.c.b16 %v1023, %v1023
        %v1060 = vpack.c.b16 %v1024, %v1024
        %v1061 = vpack.c.b16 %v1025, %v1025
        %v1062 = vpack.c.b16 %v1026, %v1026
        %v1063 = vpack.c.b16 %v1027, %v1027
        %v1064 = vpack.c.b16 %v1028, %v1028
        %v1065 = vpack.c.b16 %v1029, %v1029
        %1102 = vst.msk [vmem:[#allocation3 + $0x4] sm:$0xf] %vm596, %v1030
        %1103 = vst.msk [vmem:[#allocation3 + $0xc] sm:$0xf] %vm596, %v1031
        %1104 = vst.msk [vmem:[#allocation3 + $0x14] sm:$0xf] %vm596, %v1032
        %1105 = vst.msk [vmem:[#allocation3 + $0x1c] sm:$0xf] %vm596, %v1033
        %1106 = vst.msk [vmem:[#allocation3 + $0x24] sm:$0xf] %vm596, %v1034
        %1107 = vst.msk [vmem:[#allocation3 + $0x2c] sm:$0xf] %vm596, %v1035
        %1108 = vst.msk [vmem:[#allocation3 + $0x34] sm:$0xf] %vm596, %v1036
        %1109 = vst.msk [vmem:[#allocation3 + $0x3c] sm:$0xf] %vm596, %v1037
        %1110 = vst.msk [vmem:[#allocation3 + $0x44] sm:$0xf] %vm596, %v1038
        %1111 = vst.msk [vmem:[#allocation3 + $0x4c] sm:$0xf] %vm596, %v1039
        %1112 = vst.msk [vmem:[#allocation3 + $0x54] sm:$0xf] %vm596, %v1040
        %1113 = vst.msk [vmem:[#allocation3 + $0x5c] sm:$0xf] %vm596, %v1041
        %1114 = vst.msk [vmem:[#allocation3 + $0x64] sm:$0xf] %vm596, %v1042
        %1115 = vst.msk [vmem:[#allocation3 + $0x6c] sm:$0xf] %vm596, %v1043
        %1116 = vst.msk [vmem:[#allocation3 + $0x74] sm:$0xf] %vm596, %v1044
        %1117 = vst.msk [vmem:[#allocation3 + $0x7c] sm:$0xf] %vm596, %v1045
        %1118 = vst.msk [vmem:[#allocation3 + $0x84] sm:$0xf] %vm596, %v1046
        %1119 = vst.msk [vmem:[#allocation3 + $0x8c] sm:$0xf] %vm596, %v1047
        %1120 = vst.msk [vmem:[#allocation3 + $0x94] sm:$0xf] %vm596, %v1048
        %1121 = vst.msk [vmem:[#allocation3 + $0x9c] sm:$0xf] %vm596, %v1049
        %1122 = vst.msk [vmem:[#allocation3 + $0xa4] sm:$0xf] %vm596, %v1050
        %1123 = vst.msk [vmem:[#allocation3 + $0xac] sm:$0xf] %vm596, %v1051
        %1124 = vst.msk [vmem:[#allocation3 + $0xb4] sm:$0xf] %vm596, %v1052
        %1125 = vst.msk [vmem:[#allocation3 + $0xbc] sm:$0xf] %vm596, %v1053
        %1126 = vst.msk [vmem:[#allocation3 + $0xc4] sm:$0xf] %vm596, %v1054
        %1127 = vst.msk [vmem:[#allocation3 + $0xcc] sm:$0xf] %vm596, %v1055
        %1128 = vst.msk [vmem:[#allocation3 + $0xd4] sm:$0xf] %vm596, %v1056
        %1129 = vst.msk [vmem:[#allocation3 + $0xdc] sm:$0xf] %vm596, %v1057
        %1130 = vst.msk [vmem:[#allocation3 + $0xe4] sm:$0xf] %vm596, %v1058
        %1131 = vst.msk [vmem:[#allocation3 + $0xec] sm:$0xf] %vm596, %v1059
        %1132 = vst.msk [vmem:[#allocation3 + $0xf4] sm:$0xf] %vm596, %v1060
        %1133 = vst.msk [vmem:[#allocation3 + $0xfc] sm:$0xf] %vm596, %v1061
        %1134 = vst.msk [vmem:[#allocation3 + $0x104] sm:$0xf] %vm596, %v1062
        %1135 = vst.msk [vmem:[#allocation3 + $0x10c] sm:$0xf] %vm596, %v1063
        %1136 = vst.msk [vmem:[#allocation3 + $0x114] sm:$0xf] %vm596, %v1064
        %1137 = vst.msk [vmem:[#allocation3 + $0x11c] sm:$0xf] %vm596, %v1065
        %v1138 = vld [vmem:[#allocation3] sm:$0xff]
        %v1139 = vld [vmem:[#allocation3 + $0x8] sm:$0xff]
        %v1140 = vld [vmem:[#allocation3 + $0x10] sm:$0xff]
        %v1141 = vld [vmem:[#allocation3 + $0x18] sm:$0xff]
        %v1142 = vld [vmem:[#allocation3 + $0x20] sm:$0xff]
        %v1143 = vld [vmem:[#allocation3 + $0x28] sm:$0xff]
        %v1144 = vld [vmem:[#allocation3 + $0x30] sm:$0xff]
        %v1145 = vld [vmem:[#allocation3 + $0x38] sm:$0xff]
        %v1146 = vld [vmem:[#allocation3 + $0x40] sm:$0xff]
        %v1147 = vld [vmem:[#allocation3 + $0x48] sm:$0xff]
        %v1148 = vld [vmem:[#allocation3 + $0x50] sm:$0xff]
        %v1149 = vld [vmem:[#allocation3 + $0x58] sm:$0xff]
        %v1150 = vld [vmem:[#allocation3 + $0x60] sm:$0xff]
        %v1151 = vld [vmem:[#allocation3 + $0x68] sm:$0xff]
        %v1152 = vld [vmem:[#allocation3 + $0x70] sm:$0xff]
        %v1153 = vld [vmem:[#allocation3 + $0x78] sm:$0xff]
        %v1154 = vld [vmem:[#allocation3 + $0x80] sm:$0xff]
        %v1155 = vld [vmem:[#allocation3 + $0x88] sm:$0xff]
        %v1156 = vld [vmem:[#allocation3 + $0x90] sm:$0xff]
        %v1157 = vld [vmem:[#allocation3 + $0x98] sm:$0xff]
        %v1158 = vld [vmem:[#allocation3 + $0xa0] sm:$0xff]
        %v1159 = vld [vmem:[#allocation3 + $0xa8] sm:$0xff]
        %v1160 = vld [vmem:[#allocation3 + $0xb0] sm:$0xff]
        %v1161 = vld [vmem:[#allocation3 + $0xb8] sm:$0xff]
        %v1162 = vld [vmem:[#allocation3 + $0xc0] sm:$0xff]
        %v1163 = vld [vmem:[#allocation3 + $0xc8] sm:$0xff]
        %v1164 = vld [vmem:[#allocation3 + $0xd0] sm:$0xff]
        %v1165 = vld [vmem:[#allocation3 + $0xd8] sm:$0xff]
        %v1166 = vld [vmem:[#allocation3 + $0xe0] sm:$0xff]
        %v1167 = vld [vmem:[#allocation3 + $0xe8] sm:$0xff]
        %v1168 = vld [vmem:[#allocation3 + $0xf0] sm:$0xff]
        %v1169 = vld [vmem:[#allocation3 + $0xf8] sm:$0xff]
        %v1170 = vld [vmem:[%s1] sm:$0xf]
        %v1171 = vld [vmem:[%s1 + $0x4] sm:$0xf]
        %v1172 = vld [vmem:[%s1 + $0x8] sm:$0xf]
        %v1173 = vld [vmem:[%s1 + $0xc] sm:$0xf]
        %v1174 = vld [vmem:[%s1 + $0x10] sm:$0xf]
        %v1175 = vld [vmem:[%s1 + $0x14] sm:$0xf]
        %v1176 = vld [vmem:[%s1 + $0x18] sm:$0xf]
        %v1177 = vld [vmem:[%s1 + $0x1c] sm:$0xf]
        %v1178 = vld [vmem:[%s1 + $0x20] sm:$0xf]
        %v1179 = vld [vmem:[%s1 + $0x24] sm:$0xf]
        %v1180 = vld [vmem:[%s1 + $0x28] sm:$0xf]
        %v1181 = vld [vmem:[%s1 + $0x2c] sm:$0xf]
        %v1182 = vld [vmem:[%s1 + $0x30] sm:$0xf]
        %v1183 = vld [vmem:[%s1 + $0x34] sm:$0xf]
        %v1184 = vld [vmem:[%s1 + $0x38] sm:$0xf]
        %v1185 = vld [vmem:[%s1 + $0x3c] sm:$0xf]
        %v1186 = vld [vmem:[%s1 + $0x40] sm:$0xf]
        %v1187 = vld [vmem:[%s1 + $0x44] sm:$0xf]
        %v1188 = vld [vmem:[%s1 + $0x48] sm:$0xf]
        %v1189 = vld [vmem:[%s1 + $0x4c] sm:$0xf]
        %v1190 = vld [vmem:[%s1 + $0x50] sm:$0xf]
        %v1191 = vld [vmem:[%s1 + $0x54] sm:$0xf]
        %v1192 = vld [vmem:[%s1 + $0x58] sm:$0xf]
        %v1193 = vld [vmem:[%s1 + $0x5c] sm:$0xf]
        %v1226 = vunpack.c.l.b16 %v1138
        %v1227 = vunpack.c.h.b16 %v1138
        %v1228 = vunpack.c.l.b16 %v1139
        %v1229 = vunpack.c.h.b16 %v1139
        %v1230 = vunpack.c.l.b16 %v1140
        %v1231 = vunpack.c.h.b16 %v1140
        %v1232 = vunpack.c.l.b16 %v1141
        %v1233 = vunpack.c.h.b16 %v1141
        %v1234 = vunpack.c.l.b16 %v1142
        %v1235 = vunpack.c.h.b16 %v1142
        %v1236 = vunpack.c.l.b16 %v1143
        %v1237 = vunpack.c.h.b16 %v1143
        %v1238 = vunpack.c.l.b16 %v1144
        %v1239 = vunpack.c.h.b16 %v1144
        %v1240 = vunpack.c.l.b16 %v1145
        %v1241 = vunpack.c.h.b16 %v1145
        %v1242 = vunpack.c.l.b16 %v1146
        %v1243 = vunpack.c.h.b16 %v1146
        %v1244 = vunpack.c.l.b16 %v1147
        %v1245 = vunpack.c.h.b16 %v1147
        %v1246 = vunpack.c.l.b16 %v1148
        %v1247 = vunpack.c.h.b16 %v1148
        %v1248 = vunpack.c.l.b16 %v1149
        %v1249 = vunpack.c.h.b16 %v1149
        %v1250 = vunpack.c.l.b16 %v1150
        %v1251 = vunpack.c.h.b16 %v1150
        %v1252 = vunpack.c.l.b16 %v1151
        %v1253 = vunpack.c.h.b16 %v1151
        %v1254 = vunpack.c.l.b16 %v1152
        %v1255 = vunpack.c.h.b16 %v1152
        %v1256 = vunpack.c.l.b16 %v1153
        %v1257 = vunpack.c.h.b16 %v1153
        %v1258 = vunpack.c.l.b16 %v1154
        %v1259 = vunpack.c.h.b16 %v1154
        %v1260 = vunpack.c.l.b16 %v1155
        %v1261 = vunpack.c.h.b16 %v1155
        %v1262 = vunpack.c.l.b16 %v1156
        %v1263 = vunpack.c.h.b16 %v1156
        %v1264 = vunpack.c.l.b16 %v1157
        %v1265 = vunpack.c.h.b16 %v1157
        %v1266 = vunpack.c.l.b16 %v1158
        %v1267 = vunpack.c.h.b16 %v1158
        %v1268 = vunpack.c.l.b16 %v1159
        %v1269 = vunpack.c.h.b16 %v1159
        %v1270 = vunpack.c.l.b16 %v1160
        %v1271 = vunpack.c.h.b16 %v1160
        %v1272 = vunpack.c.l.b16 %v1161
        %v1273 = vunpack.c.h.b16 %v1161
        %v1274 = vunpack.c.l.b16 %v1162
        %v1275 = vunpack.c.h.b16 %v1162
        %v1276 = vunpack.c.l.b16 %v1163
        %v1277 = vunpack.c.h.b16 %v1163
        %v1278 = vunpack.c.l.b16 %v1164
        %v1279 = vunpack.c.h.b16 %v1164
        %v1280 = vunpack.c.l.b16 %v1165
        %v1281 = vunpack.c.h.b16 %v1165
        %v1282 = vunpack.c.l.b16 %v1166
        %v1283 = vunpack.c.h.b16 %v1166
        %v1284 = vunpack.c.l.b16 %v1167
        %v1285 = vunpack.c.h.b16 %v1167
        %v1286 = vunpack.c.l.b16 %v1168
        %v1287 = vunpack.c.h.b16 %v1168
        %v1288 = vunpack.c.l.b16 %v1169
        %v1289 = vunpack.c.h.b16 %v1169
        %v1290 = vpack.c.b16 %v1228, %v1226
        %v1291 = vpack.c.b16 %v1229, %v1227
        %v1292 = vpack.c.b16 %v1232, %v1230
        %v1293 = vpack.c.b16 %v1233, %v1231
        %v1294 = vpack.c.b16 %v1236, %v1234
        %v1295 = vpack.c.b16 %v1237, %v1235
        %v1296 = vpack.c.b16 %v1240, %v1238
        %v1297 = vpack.c.b16 %v1241, %v1239
        %v1298 = vpack.c.b16 %v1244, %v1242
        %v1299 = vpack.c.b16 %v1245, %v1243
        %v1300 = vpack.c.b16 %v1248, %v1246
        %v1301 = vpack.c.b16 %v1249, %v1247
        %v1302 = vpack.c.b16 %v1252, %v1250
        %v1303 = vpack.c.b16 %v1253, %v1251
        %v1304 = vpack.c.b16 %v1256, %v1254
        %v1305 = vpack.c.b16 %v1257, %v1255
        %v1306 = vpack.c.b16 %v1260, %v1258
        %v1307 = vpack.c.b16 %v1261, %v1259
        %v1308 = vpack.c.b16 %v1264, %v1262
        %v1309 = vpack.c.b16 %v1265, %v1263
        %v1310 = vpack.c.b16 %v1268, %v1266
        %v1311 = vpack.c.b16 %v1269, %v1267
        %v1312 = vpack.c.b16 %v1272, %v1270
        %v1313 = vpack.c.b16 %v1273, %v1271
        %v1314 = vpack.c.b16 %v1276, %v1274
        %v1315 = vpack.c.b16 %v1277, %v1275
        %v1316 = vpack.c.b16 %v1280, %v1278
        %v1317 = vpack.c.b16 %v1281, %v1279
        %v1318 = vpack.c.b16 %v1284, %v1282
        %v1319 = vpack.c.b16 %v1285, %v1283
        %v1320 = vpack.c.b16 %v1288, %v1286
        %v1321 = vpack.c.b16 %v1289, %v1287
        %v1362 = vunpack.c.l.b16 %v1170
        %v1363 = vunpack.c.l.b16 %v1171
        %v1364 = vunpack.c.l.b16 %v1172
        %v1365 = vunpack.c.l.b16 %v1173
        %v1366 = vunpack.c.l.b16 %v1174
        %v1367 = vunpack.c.l.b16 %v1175
        %v1368 = vunpack.c.l.b16 %v1176
        %v1369 = vunpack.c.l.b16 %v1177
        %v1370 = vunpack.c.l.b16 %v1178
        %v1371 = vunpack.c.l.b16 %v1179
        %v1372 = vunpack.c.l.b16 %v1180
        %v1373 = vunpack.c.l.b16 %v1181
        %v1374 = vunpack.c.l.b16 %v1182
        %v1375 = vunpack.c.l.b16 %v1183
        %v1376 = vunpack.c.l.b16 %v1184
        %v1377 = vunpack.c.l.b16 %v1185
        %v1378 = vunpack.c.l.b16 %v1186
        %v1379 = vunpack.c.l.b16 %v1187
        %v1380 = vunpack.c.l.b16 %v1188
        %v1381 = vunpack.c.l.b16 %v1189
        %v1382 = vunpack.c.l.b16 %v1190
        %v1383 = vunpack.c.l.b16 %v1191
        %v1384 = vunpack.c.l.b16 %v1192
        %v1385 = vunpack.c.l.b16 %v1193
        %v1386 = vpack.c.b16 %v1363, %v1362
        %v1387 = vpack.c.b16 %v1365, %v1364
        %v1388 = vpack.c.b16 %v1367, %v1366
        %v1389 = vpack.c.b16 %v1369, %v1368
        %v1390 = vpack.c.b16 %v1371, %v1370
        %v1391 = vpack.c.b16 %v1373, %v1372
        %v1392 = vpack.c.b16 %v1375, %v1374
        %v1393 = vpack.c.b16 %v1377, %v1376
        %v1394 = vpack.c.b16 %v1379, %v1378
        %v1395 = vpack.c.b16 %v1381, %v1380
        %v1396 = vpack.c.b16 %v1383, %v1382
        %v1397 = vpack.c.b16 %v1385, %v1384
        %v1411 = vsel %vm305, %v1291, 0
        %v1414 = vsel %vm305, %v1293, 0
        %v1417 = vsel %vm305, %v1295, 0
        %v1420 = vsel %vm305, %v1297, 0
        %v1423 = vsel %vm305, %v1299, 0
        %v1426 = vsel %vm305, %v1301, 0
        %v1429 = vsel %vm305, %v1303, 0
        %v1432 = vsel %vm305, %v1305, 0
        %v1435 = vsel %vm305, %v1307, 0
        %v1438 = vsel %vm305, %v1309, 0
        %v1441 = vsel %vm305, %v1311, 0
        %v1444 = vsel %vm305, %v1313, 0
        %v1447 = vsel %vm305, %v1315, 0
        %v1450 = vsel %vm305, %v1317, 0
        %v1453 = vsel %vm305, %v1319, 0
        %v1456 = vsel %vm305, %v1321, 0
        %1458 = vmatprep.subr.bf16.mxu0 0
        %1459 = vmatpush1.bf16.msra.mxu0 %v1393
        %1460 = vmatprep.subr.bf16.mxu0 0
        %1461 = vmatpush1.bf16.msra.mxu0 %v1392
        %1462 = vmatprep.subr.bf16.mxu0 0
        %1463 = vmatpush1.bf16.msra.mxu0 %v1391
        %1464 = vmatprep.subr.bf16.mxu0 0
        %1465 = vmatpush1.bf16.msra.mxu0 %v1390
        %1466 = vmatprep.subr.bf16.mxu0 0
        %1467 = vmatpush1.bf16.msra.mxu0 %v1389
        %1468 = vmatprep.subr.bf16.mxu0 0
        %1469 = vmatpush1.bf16.msra.mxu0 %v1388
        %1470 = vmatprep.subr.bf16.mxu0 0
        %1471 = vmatpush1.bf16.msra.mxu0 %v1387
        %1472 = vmatprep.subr.bf16.mxu0 0
        %1473 = vmatpush1.bf16.msra.mxu0 %v1386
        %1474 = vmatprep.subr.bf16.mxu0 0
        %1475 = vmatpush2.bf16.msra.mxu0 0
        %1476 = vmatprep.subr.bf16.mxu0 0
        %1477 = vmatpush2.bf16.msra.mxu0 0
        %1478 = vmatprep.subr.bf16.mxu0 0
        %1479 = vmatpush2.bf16.msra.mxu0 0
        %1480 = vmatprep.subr.bf16.mxu0 0
        %1481 = vmatpush2.bf16.msra.mxu0 0
        %1482 = vmatprep.subr.bf16.mxu0 0
        %1483 = vmatpush2.bf16.msra.mxu0 %v1397
        %1484 = vmatprep.subr.bf16.mxu0 0
        %1485 = vmatpush2.bf16.msra.mxu0 %v1396
        %1486 = vmatprep.subr.bf16.mxu0 0
        %1487 = vmatpush2.bf16.msra.mxu0 %v1395
        %1488 = vmatprep.subr.bf16.mxu0 0
        %1489 = vmatpush2.bf16.msra.mxu0 %v1394
        %1490 = vmatprep.mubr.bf16.mxu0 %v1411
        %1491 = vmatmul.mubr.bf16.gmra.mxu0 %v1290
        %v1492 = vpop.f32.mrf.mxu0
        %v1493 = vadd.f32 0.0, %v1492
        %v1494 = vpop.f32.mrf.mxu0
        %v1495 = vpop.f32.mrf.mxu0
        %v1496 = vadd.f32 0.0, %v1495
        %v1497 = vpop.f32.mrf.mxu0
        %1498 = vmatprep.mubr.bf16.mxu0 %v1414
        %1499 = vmatmul.mubr.bf16.gmra.mxu0 %v1292
        %v1500 = vpop.f32.mrf.mxu0
        %v1501 = vadd.f32 0.0, %v1500
        %v1502 = vpop.f32.mrf.mxu0
        %v1503 = vpop.f32.mrf.mxu0
        %v1504 = vadd.f32 0.0, %v1503
        %v1505 = vpop.f32.mrf.mxu0
        %1506 = vmatprep.mubr.bf16.mxu0 %v1417
        %1507 = vmatmul.mubr.bf16.gmra.mxu0 %v1294
        %v1508 = vpop.f32.mrf.mxu0
        %v1509 = vadd.f32 0.0, %v1508
        %v1510 = vpop.f32.mrf.mxu0
        %v1511 = vpop.f32.mrf.mxu0
        %v1512 = vadd.f32 0.0, %v1511
        %v1513 = vpop.f32.mrf.mxu0
        %1514 = vmatprep.mubr.bf16.mxu0 %v1420
        %1515 = vmatmul.mubr.bf16.gmra.mxu0 %v1296
        %v1516 = vpop.f32.mrf.mxu0
        %v1517 = vadd.f32 0.0, %v1516
        %v1518 = vpop.f32.mrf.mxu0
        %v1519 = vpop.f32.mrf.mxu0
        %v1520 = vadd.f32 0.0, %v1519
        %v1521 = vpop.f32.mrf.mxu0
        %1522 = vmatprep.mubr.bf16.mxu0 %v1423
        %1523 = vmatmul.mubr.bf16.gmra.mxu0 %v1298
        %v1524 = vpop.f32.mrf.mxu0
        %v1525 = vadd.f32 0.0, %v1524
        %v1526 = vpop.f32.mrf.mxu0
        %v1527 = vpop.f32.mrf.mxu0
        %v1528 = vadd.f32 0.0, %v1527
        %v1529 = vpop.f32.mrf.mxu0
        %1530 = vmatprep.mubr.bf16.mxu0 %v1426
        %1531 = vmatmul.mubr.bf16.gmra.mxu0 %v1300
        %v1532 = vpop.f32.mrf.mxu0
        %v1533 = vadd.f32 0.0, %v1532
        %v1534 = vpop.f32.mrf.mxu0
        %v1535 = vpop.f32.mrf.mxu0
        %v1536 = vadd.f32 0.0, %v1535
        %v1537 = vpop.f32.mrf.mxu0
        %1538 = vmatprep.mubr.bf16.mxu0 %v1429
        %1539 = vmatmul.mubr.bf16.gmra.mxu0 %v1302
        %v1540 = vpop.f32.mrf.mxu0
        %v1541 = vadd.f32 0.0, %v1540
        %v1542 = vpop.f32.mrf.mxu0
        %v1543 = vpop.f32.mrf.mxu0
        %v1544 = vadd.f32 0.0, %v1543
        %v1545 = vpop.f32.mrf.mxu0
        %1546 = vmatprep.mubr.bf16.mxu0 %v1432
        %1547 = vmatmul.mubr.bf16.gmra.mxu0 %v1304
        %v1548 = vpop.f32.mrf.mxu0
        %v1549 = vadd.f32 0.0, %v1548
        %v1550 = vpop.f32.mrf.mxu0
        %v1551 = vpop.f32.mrf.mxu0
        %v1552 = vadd.f32 0.0, %v1551
        %v1553 = vpop.f32.mrf.mxu0
        %1554 = vmatprep.mubr.bf16.mxu0 %v1435
        %1555 = vmatmul.mubr.bf16.gmra.mxu0 %v1306
        %v1556 = vpop.f32.mrf.mxu0
        %v1557 = vadd.f32 0.0, %v1556
        %v1558 = vpop.f32.mrf.mxu0
        %v1559 = vpop.f32.mrf.mxu0
        %v1560 = vadd.f32 0.0, %v1559
        %v1561 = vpop.f32.mrf.mxu0
        %1562 = vmatprep.mubr.bf16.mxu0 %v1438
        %1563 = vmatmul.mubr.bf16.gmra.mxu0 %v1308
        %v1564 = vpop.f32.mrf.mxu0
        %v1565 = vadd.f32 0.0, %v1564
        %v1566 = vpop.f32.mrf.mxu0
        %v1567 = vpop.f32.mrf.mxu0
        %v1568 = vadd.f32 0.0, %v1567
        %v1569 = vpop.f32.mrf.mxu0
        %1570 = vmatprep.mubr.bf16.mxu0 %v1441
        %1571 = vmatmul.mubr.bf16.gmra.mxu0 %v1310
        %v1572 = vpop.f32.mrf.mxu0
        %v1573 = vadd.f32 0.0, %v1572
        %v1574 = vpop.f32.mrf.mxu0
        %v1575 = vpop.f32.mrf.mxu0
        %v1576 = vadd.f32 0.0, %v1575
        %v1577 = vpop.f32.mrf.mxu0
        %1578 = vmatprep.mubr.bf16.mxu0 %v1444
        %1579 = vmatmul.mubr.bf16.gmra.mxu0 %v1312
        %v1580 = vpop.f32.mrf.mxu0
        %v1581 = vadd.f32 0.0, %v1580
        %v1582 = vpop.f32.mrf.mxu0
        %v1583 = vpop.f32.mrf.mxu0
        %v1584 = vadd.f32 0.0, %v1583
        %v1585 = vpop.f32.mrf.mxu0
        %1586 = vmatprep.mubr.bf16.mxu0 %v1447
        %1587 = vmatmul.mubr.bf16.gmra.mxu0 %v1314
        %v1588 = vpop.f32.mrf.mxu0
        %v1589 = vadd.f32 0.0, %v1588
        %v1590 = vpop.f32.mrf.mxu0
        %v1591 = vpop.f32.mrf.mxu0
        %v1592 = vadd.f32 0.0, %v1591
        %v1593 = vpop.f32.mrf.mxu0
        %1594 = vmatprep.mubr.bf16.mxu0 %v1450
        %1595 = vmatmul.mubr.bf16.gmra.mxu0 %v1316
        %v1596 = vpop.f32.mrf.mxu0
        %v1597 = vadd.f32 0.0, %v1596
        %v1598 = vpop.f32.mrf.mxu0
        %v1599 = vpop.f32.mrf.mxu0
        %v1600 = vadd.f32 0.0, %v1599
        %v1601 = vpop.f32.mrf.mxu0
        %1602 = vmatprep.mubr.bf16.mxu0 %v1453
        %1603 = vmatmul.mubr.bf16.gmra.mxu0 %v1318
        %v1604 = vpop.f32.mrf.mxu0
        %v1605 = vadd.f32 0.0, %v1604
        %v1606 = vpop.f32.mrf.mxu0
        %v1607 = vpop.f32.mrf.mxu0
        %v1608 = vadd.f32 0.0, %v1607
        %v1609 = vpop.f32.mrf.mxu0
        %1610 = vmatprep.mubr.bf16.mxu0 %v1456
        %1611 = vmatmul.mubr.bf16.gmra.mxu0 %v1320
        %v1612 = vpop.f32.mrf.mxu0
        %v1613 = vadd.f32 0.0, %v1612
        %v1614 = vpop.f32.mrf.mxu0
        %v1615 = vpop.f32.mrf.mxu0
        %v1616 = vadd.f32 0.0, %v1615
        %v1617 = vpop.f32.mrf.mxu0
        %1618 = vdwg.mxu0
        %1619 = vst.msk [vmem:[#allocation4] sm:$0xff] %vm305, %v1493
        %1620 = vst.msk [vmem:[#allocation4 + $0x8] sm:$0xff] %vm305, %v1496
        %1621 = vst.msk [vmem:[#allocation4 + $0x10] sm:$0xff] %vm305, %v1501
        %1622 = vst.msk [vmem:[#allocation4 + $0x18] sm:$0xff] %vm305, %v1504
        %1623 = vst.msk [vmem:[#allocation4 + $0x20] sm:$0xff] %vm305, %v1509
        %1624 = vst.msk [vmem:[#allocation4 + $0x28] sm:$0xff] %vm305, %v1512
        %1625 = vst.msk [vmem:[#allocation4 + $0x30] sm:$0xff] %vm305, %v1517
        %1626 = vst.msk [vmem:[#allocation4 + $0x38] sm:$0xff] %vm305, %v1520
        %1627 = vst.msk [vmem:[#allocation4 + $0x40] sm:$0xff] %vm305, %v1525
        %1628 = vst.msk [vmem:[#allocation4 + $0x48] sm:$0xff] %vm305, %v1528
        %1629 = vst.msk [vmem:[#allocation4 + $0x50] sm:$0xff] %vm305, %v1533
        %1630 = vst.msk [vmem:[#allocation4 + $0x58] sm:$0xff] %vm305, %v1536
        %1631 = vst.msk [vmem:[#allocation4 + $0x60] sm:$0xff] %vm305, %v1541
        %1632 = vst.msk [vmem:[#allocation4 + $0x68] sm:$0xff] %vm305, %v1544
        %1633 = vst.msk [vmem:[#allocation4 + $0x70] sm:$0xff] %vm305, %v1549
        %1634 = vst.msk [vmem:[#allocation4 + $0x78] sm:$0xff] %vm305, %v1552
        %1635 = vst.msk [vmem:[#allocation4 + $0x80] sm:$0xff] %vm305, %v1557
        %1636 = vst.msk [vmem:[#allocation4 + $0x88] sm:$0xff] %vm305, %v1560
        %1637 = vst.msk [vmem:[#allocation4 + $0x90] sm:$0xff] %vm305, %v1565
        %1638 = vst.msk [vmem:[#allocation4 + $0x98] sm:$0xff] %vm305, %v1568
        %1639 = vst.msk [vmem:[#allocation4 + $0xa0] sm:$0xff] %vm305, %v1573
        %1640 = vst.msk [vmem:[#allocation4 + $0xa8] sm:$0xff] %vm305, %v1576
        %1641 = vst.msk [vmem:[#allocation4 + $0xb0] sm:$0xff] %vm305, %v1581
        %1642 = vst.msk [vmem:[#allocation4 + $0xb8] sm:$0xff] %vm305, %v1584
        %1643 = vst.msk [vmem:[#allocation4 + $0xc0] sm:$0xff] %vm305, %v1589
        %1644 = vst.msk [vmem:[#allocation4 + $0xc8] sm:$0xff] %vm305, %v1592
        %1645 = vst.msk [vmem:[#allocation4 + $0xd0] sm:$0xff] %vm305, %v1597
        %1646 = vst.msk [vmem:[#allocation4 + $0xd8] sm:$0xff] %vm305, %v1600
        %1647 = vst.msk [vmem:[#allocation4 + $0xe0] sm:$0xff] %vm305, %v1605
        %1648 = vst.msk [vmem:[#allocation4 + $0xe8] sm:$0xff] %vm305, %v1608
        %1649 = vst.msk [vmem:[#allocation4 + $0xf0] sm:$0xff] %vm305, %v1613
        %1650 = vst.msk [vmem:[#allocation4 + $0xf8] sm:$0xff] %vm305, %v1616
        %s1651 = scalar_lea.vmem [#allocation3], 16
        %v1652 = vld [vmem:[%s1651] sm:$0xff]
        %v1653 = vld [vmem:[%s1651 + $0x8] sm:$0xff]
        %v1654 = vld [vmem:[%s1651 + $0x10] sm:$0xff]
        %v1655 = vld [vmem:[%s1651 + $0x18] sm:$0xff]
        %v1656 = vld [vmem:[%s1651 + $0x20] sm:$0xff]
        %v1657 = vld [vmem:[%s1651 + $0x28] sm:$0xff]
        %v1658 = vld [vmem:[%s1651 + $0x30] sm:$0xff]
        %v1659 = vld [vmem:[%s1651 + $0x38] sm:$0xff]
        %v1660 = vld [vmem:[%s1651 + $0x40] sm:$0xff]
        %v1661 = vld [vmem:[%s1651 + $0x48] sm:$0xff]
        %v1662 = vld [vmem:[%s1651 + $0x50] sm:$0xff]
        %v1663 = vld [vmem:[%s1651 + $0x58] sm:$0xff]
        %v1664 = vld [vmem:[%s1651 + $0x60] sm:$0xff]
        %v1665 = vld [vmem:[%s1651 + $0x68] sm:$0xff]
        %v1666 = vld [vmem:[%s1651 + $0x70] sm:$0xff]
        %v1667 = vld [vmem:[%s1651 + $0x78] sm:$0xff]
        %v1668 = vld [vmem:[%s1651 + $0x80] sm:$0xff]
        %v1669 = vld [vmem:[%s1651 + $0x88] sm:$0xff]
        %v1670 = vld [vmem:[%s1651 + $0x90] sm:$0xff]
        %v1671 = vld [vmem:[%s1651 + $0x98] sm:$0xff]
        %v1672 = vld [vmem:[%s1651 + $0xa0] sm:$0xff]
        %v1673 = vld [vmem:[%s1651 + $0xa8] sm:$0xff]
        %v1674 = vld [vmem:[%s1651 + $0xb0] sm:$0xff]
        %v1675 = vld [vmem:[%s1651 + $0xb8] sm:$0xff]
        %v1676 = vld [vmem:[%s1651 + $0xc0] sm:$0xff]
        %v1677 = vld [vmem:[%s1651 + $0xc8] sm:$0xff]
        %v1678 = vld [vmem:[%s1651 + $0xd0] sm:$0xff]
        %v1679 = vld [vmem:[%s1651 + $0xd8] sm:$0xff]
        %v1680 = vld [vmem:[%s1651 + $0xe0] sm:$0xff]
        %v1681 = vld [vmem:[%s1651 + $0xe8] sm:$0xff]
        %v1682 = vld [vmem:[%s1651 + $0xf0] sm:$0xff]
        %v1683 = vld [vmem:[%s1651 + $0xf8] sm:$0xff]
        %s1684 = scalar_lea.vmem %s1, 96
        %v1685 = vld [vmem:[%s1684] sm:$0xf]
        %v1686 = vld [vmem:[%s1684 + $0x4] sm:$0xf]
        %v1687 = vld [vmem:[%s1684 + $0x8] sm:$0xf]
        %v1688 = vld [vmem:[%s1684 + $0xc] sm:$0xf]
        %v1689 = vld [vmem:[%s1684 + $0x10] sm:$0xf]
        %v1690 = vld [vmem:[%s1684 + $0x14] sm:$0xf]
        %v1691 = vld [vmem:[%s1684 + $0x18] sm:$0xf]
        %v1692 = vld [vmem:[%s1684 + $0x1c] sm:$0xf]
        %v1693 = vld [vmem:[%s1684 + $0x20] sm:$0xf]
        %v1694 = vld [vmem:[%s1684 + $0x24] sm:$0xf]
        %v1695 = vld [vmem:[%s1684 + $0x28] sm:$0xf]
        %v1696 = vld [vmem:[%s1684 + $0x2c] sm:$0xf]
        %v1697 = vld [vmem:[%s1684 + $0x30] sm:$0xf]
        %v1698 = vld [vmem:[%s1684 + $0x34] sm:$0xf]
        %v1699 = vld [vmem:[%s1684 + $0x38] sm:$0xf]
        %v1700 = vld [vmem:[%s1684 + $0x3c] sm:$0xf]
        %v1701 = vld [vmem:[%s1684 + $0x40] sm:$0xf]
        %v1702 = vld [vmem:[%s1684 + $0x44] sm:$0xf]
        %v1703 = vld [vmem:[%s1684 + $0x48] sm:$0xf]
        %v1704 = vld [vmem:[%s1684 + $0x4c] sm:$0xf]
        %v1705 = vld [vmem:[%s1684 + $0x50] sm:$0xf]
        %v1706 = vld [vmem:[%s1684 + $0x54] sm:$0xf]
        %v1707 = vld [vmem:[%s1684 + $0x58] sm:$0xf]
        %v1708 = vld [vmem:[%s1684 + $0x5c] sm:$0xf]
        %v1741 = vunpack.c.l.b16 %v1652
        %v1742 = vunpack.c.h.b16 %v1652
        %v1743 = vunpack.c.l.b16 %v1653
        %v1744 = vunpack.c.h.b16 %v1653
        %v1745 = vunpack.c.l.b16 %v1654
        %v1746 = vunpack.c.h.b16 %v1654
        %v1747 = vunpack.c.l.b16 %v1655
        %v1748 = vunpack.c.h.b16 %v1655
        %v1749 = vunpack.c.l.b16 %v1656
        %v1750 = vunpack.c.h.b16 %v1656
        %v1751 = vunpack.c.l.b16 %v1657
        %v1752 = vunpack.c.h.b16 %v1657
        %v1753 = vunpack.c.l.b16 %v1658
        %v1754 = vunpack.c.h.b16 %v1658
        %v1755 = vunpack.c.l.b16 %v1659
        %v1756 = vunpack.c.h.b16 %v1659
        %v1757 = vunpack.c.l.b16 %v1660
        %v1758 = vunpack.c.h.b16 %v1660
        %v1759 = vunpack.c.l.b16 %v1661
        %v1760 = vunpack.c.h.b16 %v1661
        %v1761 = vunpack.c.l.b16 %v1662
        %v1762 = vunpack.c.h.b16 %v1662
        %v1763 = vunpack.c.l.b16 %v1663
        %v1764 = vunpack.c.h.b16 %v1663
        %v1765 = vunpack.c.l.b16 %v1664
        %v1766 = vunpack.c.h.b16 %v1664
        %v1767 = vunpack.c.l.b16 %v1665
        %v1768 = vunpack.c.h.b16 %v1665
        %v1769 = vunpack.c.l.b16 %v1666
        %v1770 = vunpack.c.h.b16 %v1666
        %v1771 = vunpack.c.l.b16 %v1667
        %v1772 = vunpack.c.h.b16 %v1667
        %v1773 = vunpack.c.l.b16 %v1668
        %v1774 = vunpack.c.h.b16 %v1668
        %v1775 = vunpack.c.l.b16 %v1669
        %v1776 = vunpack.c.h.b16 %v1669
        %v1777 = vunpack.c.l.b16 %v1670
        %v1778 = vunpack.c.h.b16 %v1670
        %v1779 = vunpack.c.l.b16 %v1671
        %v1780 = vunpack.c.h.b16 %v1671
        %v1781 = vunpack.c.l.b16 %v1672
        %v1782 = vunpack.c.h.b16 %v1672
        %v1783 = vunpack.c.l.b16 %v1673
        %v1784 = vunpack.c.h.b16 %v1673
        %v1785 = vunpack.c.l.b16 %v1674
        %v1786 = vunpack.c.h.b16 %v1674
        %v1787 = vunpack.c.l.b16 %v1675
        %v1788 = vunpack.c.h.b16 %v1675
        %v1789 = vunpack.c.l.b16 %v1676
        %v1790 = vunpack.c.h.b16 %v1676
        %v1791 = vunpack.c.l.b16 %v1677
        %v1792 = vunpack.c.h.b16 %v1677
        %v1793 = vunpack.c.l.b16 %v1678
        %v1794 = vunpack.c.h.b16 %v1678
        %v1795 = vunpack.c.l.b16 %v1679
        %v1796 = vunpack.c.h.b16 %v1679
        %v1797 = vunpack.c.l.b16 %v1680
        %v1798 = vunpack.c.h.b16 %v1680
        %v1799 = vunpack.c.l.b16 %v1681
        %v1800 = vunpack.c.h.b16 %v1681
        %v1801 = vunpack.c.l.b16 %v1682
        %v1802 = vunpack.c.h.b16 %v1682
        %v1803 = vunpack.c.l.b16 %v1683
        %v1804 = vunpack.c.h.b16 %v1683
        %v1805 = vpack.c.b16 %v1743, %v1741
        %v1806 = vpack.c.b16 %v1744, %v1742
        %v1807 = vpack.c.b16 %v1747, %v1745
        %v1808 = vpack.c.b16 %v1748, %v1746
        %v1809 = vpack.c.b16 %v1751, %v1749
        %v1810 = vpack.c.b16 %v1752, %v1750
        %v1811 = vpack.c.b16 %v1755, %v1753
        %v1812 = vpack.c.b16 %v1756, %v1754
        %v1813 = vpack.c.b16 %v1759, %v1757
        %v1814 = vpack.c.b16 %v1760, %v1758
        %v1815 = vpack.c.b16 %v1763, %v1761
        %v1816 = vpack.c.b16 %v1764, %v1762
        %v1817 = vpack.c.b16 %v1767, %v1765
        %v1818 = vpack.c.b16 %v1768, %v1766
        %v1819 = vpack.c.b16 %v1771, %v1769
        %v1820 = vpack.c.b16 %v1772, %v1770
        %v1821 = vpack.c.b16 %v1775, %v1773
        %v1822 = vpack.c.b16 %v1776, %v1774
        %v1823 = vpack.c.b16 %v1779, %v1777
        %v1824 = vpack.c.b16 %v1780, %v1778
        %v1825 = vpack.c.b16 %v1783, %v1781
        %v1826 = vpack.c.b16 %v1784, %v1782
        %v1827 = vpack.c.b16 %v1787, %v1785
        %v1828 = vpack.c.b16 %v1788, %v1786
        %v1829 = vpack.c.b16 %v1791, %v1789
        %v1830 = vpack.c.b16 %v1792, %v1790
        %v1831 = vpack.c.b16 %v1795, %v1793
        %v1832 = vpack.c.b16 %v1796, %v1794
        %v1833 = vpack.c.b16 %v1799, %v1797
        %v1834 = vpack.c.b16 %v1800, %v1798
        %v1835 = vpack.c.b16 %v1803, %v1801
        %v1836 = vpack.c.b16 %v1804, %v1802
        %v1877 = vunpack.c.l.b16 %v1685
        %v1878 = vunpack.c.l.b16 %v1686
        %v1879 = vunpack.c.l.b16 %v1687
        %v1880 = vunpack.c.l.b16 %v1688
        %v1881 = vunpack.c.l.b16 %v1689
        %v1882 = vunpack.c.l.b16 %v1690
        %v1883 = vunpack.c.l.b16 %v1691
        %v1884 = vunpack.c.l.b16 %v1692
        %v1885 = vunpack.c.l.b16 %v1693
        %v1886 = vunpack.c.l.b16 %v1694
        %v1887 = vunpack.c.l.b16 %v1695
        %v1888 = vunpack.c.l.b16 %v1696
        %v1889 = vunpack.c.l.b16 %v1697
        %v1890 = vunpack.c.l.b16 %v1698
        %v1891 = vunpack.c.l.b16 %v1699
        %v1892 = vunpack.c.l.b16 %v1700
        %v1893 = vunpack.c.l.b16 %v1701
        %v1894 = vunpack.c.l.b16 %v1702
        %v1895 = vunpack.c.l.b16 %v1703
        %v1896 = vunpack.c.l.b16 %v1704
        %v1897 = vunpack.c.l.b16 %v1705
        %v1898 = vunpack.c.l.b16 %v1706
        %v1899 = vunpack.c.l.b16 %v1707
        %v1900 = vunpack.c.l.b16 %v1708
        %v1901 = vpack.c.b16 %v1878, %v1877
        %v1902 = vpack.c.b16 %v1880, %v1879
        %v1903 = vpack.c.b16 %v1882, %v1881
        %v1904 = vpack.c.b16 %v1884, %v1883
        %v1905 = vpack.c.b16 %v1886, %v1885
        %v1906 = vpack.c.b16 %v1888, %v1887
        %v1907 = vpack.c.b16 %v1890, %v1889
        %v1908 = vpack.c.b16 %v1892, %v1891
        %v1909 = vpack.c.b16 %v1894, %v1893
        %v1910 = vpack.c.b16 %v1896, %v1895
        %v1911 = vpack.c.b16 %v1898, %v1897
        %v1912 = vpack.c.b16 %v1900, %v1899
        %v1926 = vsel %vm305, %v1806, 0
        %v1929 = vsel %vm305, %v1808, 0
        %v1932 = vsel %vm305, %v1810, 0
        %v1935 = vsel %vm305, %v1812, 0
        %v1938 = vsel %vm305, %v1814, 0
        %v1941 = vsel %vm305, %v1816, 0
        %v1944 = vsel %vm305, %v1818, 0
        %v1947 = vsel %vm305, %v1820, 0
        %v1950 = vsel %vm305, %v1822, 0
        %v1953 = vsel %vm305, %v1824, 0
        %v1956 = vsel %vm305, %v1826, 0
        %v1959 = vsel %vm305, %v1828, 0
        %v1962 = vsel %vm305, %v1830, 0
        %v1965 = vsel %vm305, %v1832, 0
        %v1968 = vsel %vm305, %v1834, 0
        %v1971 = vsel %vm305, %v1836, 0
        %1973 = vmatprep.subr.bf16.mxu0 0
        %1974 = vmatpush1.bf16.msra.mxu0 %v1908
        %1975 = vmatprep.subr.bf16.mxu0 0
        %1976 = vmatpush1.bf16.msra.mxu0 %v1907
        %1977 = vmatprep.subr.bf16.mxu0 0
        %1978 = vmatpush1.bf16.msra.mxu0 %v1906
        %1979 = vmatprep.subr.bf16.mxu0 0
        %1980 = vmatpush1.bf16.msra.mxu0 %v1905
        %1981 = vmatprep.subr.bf16.mxu0 0
        %1982 = vmatpush1.bf16.msra.mxu0 %v1904
        %1983 = vmatprep.subr.bf16.mxu0 0
        %1984 = vmatpush1.bf16.msra.mxu0 %v1903
        %1985 = vmatprep.subr.bf16.mxu0 0
        %1986 = vmatpush1.bf16.msra.mxu0 %v1902
        %1987 = vmatprep.subr.bf16.mxu0 0
        %1988 = vmatpush1.bf16.msra.mxu0 %v1901
        %1989 = vmatprep.subr.bf16.mxu0 0
        %1990 = vmatpush2.bf16.msra.mxu0 0
        %1991 = vmatprep.subr.bf16.mxu0 0
        %1992 = vmatpush2.bf16.msra.mxu0 0
        %1993 = vmatprep.subr.bf16.mxu0 0
        %1994 = vmatpush2.bf16.msra.mxu0 0
        %1995 = vmatprep.subr.bf16.mxu0 0
        %1996 = vmatpush2.bf16.msra.mxu0 0
        %1997 = vmatprep.subr.bf16.mxu0 0
        %1998 = vmatpush2.bf16.msra.mxu0 %v1912
        %1999 = vmatprep.subr.bf16.mxu0 0
        %2000 = vmatpush2.bf16.msra.mxu0 %v1911
        %2001 = vmatprep.subr.bf16.mxu0 0
        %2002 = vmatpush2.bf16.msra.mxu0 %v1910
        %2003 = vmatprep.subr.bf16.mxu0 0
        %2004 = vmatpush2.bf16.msra.mxu0 %v1909
        %2005 = vmatprep.mubr.bf16.mxu0 %v1926
        %2006 = vmatmul.mubr.bf16.gmra.mxu0 %v1805
        %v2007 = vpop.f32.mrf.mxu0
        %v2008 = vadd.f32 0.0, %v2007
        %v2009 = vpop.f32.mrf.mxu0
        %v2010 = vpop.f32.mrf.mxu0
        %v2011 = vadd.f32 0.0, %v2010
        %v2012 = vpop.f32.mrf.mxu0
        %2013 = vmatprep.mubr.bf16.mxu0 %v1929
        %2014 = vmatmul.mubr.bf16.gmra.mxu0 %v1807
        %v2015 = vpop.f32.mrf.mxu0
        %v2016 = vadd.f32 0.0, %v2015
        %v2017 = vpop.f32.mrf.mxu0
        %v2018 = vpop.f32.mrf.mxu0
        %v2019 = vadd.f32 0.0, %v2018
        %v2020 = vpop.f32.mrf.mxu0
        %2021 = vmatprep.mubr.bf16.mxu0 %v1932
        %2022 = vmatmul.mubr.bf16.gmra.mxu0 %v1809
        %v2023 = vpop.f32.mrf.mxu0
        %v2024 = vadd.f32 0.0, %v2023
        %v2025 = vpop.f32.mrf.mxu0
        %v2026 = vpop.f32.mrf.mxu0
        %v2027 = vadd.f32 0.0, %v2026
        %v2028 = vpop.f32.mrf.mxu0
        %2029 = vmatprep.mubr.bf16.mxu0 %v1935
        %2030 = vmatmul.mubr.bf16.gmra.mxu0 %v1811
        %v2031 = vpop.f32.mrf.mxu0
        %v2032 = vadd.f32 0.0, %v2031
        %v2033 = vpop.f32.mrf.mxu0
        %v2034 = vpop.f32.mrf.mxu0
        %v2035 = vadd.f32 0.0, %v2034
        %v2036 = vpop.f32.mrf.mxu0
        %2037 = vmatprep.mubr.bf16.mxu0 %v1938
        %2038 = vmatmul.mubr.bf16.gmra.mxu0 %v1813
        %v2039 = vpop.f32.mrf.mxu0
        %v2040 = vadd.f32 0.0, %v2039
        %v2041 = vpop.f32.mrf.mxu0
        %v2042 = vpop.f32.mrf.mxu0
        %v2043 = vadd.f32 0.0, %v2042
        %v2044 = vpop.f32.mrf.mxu0
        %2045 = vmatprep.mubr.bf16.mxu0 %v1941
        %2046 = vmatmul.mubr.bf16.gmra.mxu0 %v1815
        %v2047 = vpop.f32.mrf.mxu0
        %v2048 = vadd.f32 0.0, %v2047
        %v2049 = vpop.f32.mrf.mxu0
        %v2050 = vpop.f32.mrf.mxu0
        %v2051 = vadd.f32 0.0, %v2050
        %v2052 = vpop.f32.mrf.mxu0
        %2053 = vmatprep.mubr.bf16.mxu0 %v1944
        %2054 = vmatmul.mubr.bf16.gmra.mxu0 %v1817
        %v2055 = vpop.f32.mrf.mxu0
        %v2056 = vadd.f32 0.0, %v2055
        %v2057 = vpop.f32.mrf.mxu0
        %v2058 = vpop.f32.mrf.mxu0
        %v2059 = vadd.f32 0.0, %v2058
        %v2060 = vpop.f32.mrf.mxu0
        %2061 = vmatprep.mubr.bf16.mxu0 %v1947
        %2062 = vmatmul.mubr.bf16.gmra.mxu0 %v1819
        %v2063 = vpop.f32.mrf.mxu0
        %v2064 = vadd.f32 0.0, %v2063
        %v2065 = vpop.f32.mrf.mxu0
        %v2066 = vpop.f32.mrf.mxu0
        %v2067 = vadd.f32 0.0, %v2066
        %v2068 = vpop.f32.mrf.mxu0
        %2069 = vmatprep.mubr.bf16.mxu0 %v1950
        %2070 = vmatmul.mubr.bf16.gmra.mxu0 %v1821
        %v2071 = vpop.f32.mrf.mxu0
        %v2072 = vadd.f32 0.0, %v2071
        %v2073 = vpop.f32.mrf.mxu0
        %v2074 = vpop.f32.mrf.mxu0
        %v2075 = vadd.f32 0.0, %v2074
        %v2076 = vpop.f32.mrf.mxu0
        %2077 = vmatprep.mubr.bf16.mxu0 %v1953
        %2078 = vmatmul.mubr.bf16.gmra.mxu0 %v1823
        %v2079 = vpop.f32.mrf.mxu0
        %v2080 = vadd.f32 0.0, %v2079
        %v2081 = vpop.f32.mrf.mxu0
        %v2082 = vpop.f32.mrf.mxu0
        %v2083 = vadd.f32 0.0, %v2082
        %v2084 = vpop.f32.mrf.mxu0
        %2085 = vmatprep.mubr.bf16.mxu0 %v1956
        %2086 = vmatmul.mubr.bf16.gmra.mxu0 %v1825
        %v2087 = vpop.f32.mrf.mxu0
        %v2088 = vadd.f32 0.0, %v2087
        %v2089 = vpop.f32.mrf.mxu0
        %v2090 = vpop.f32.mrf.mxu0
        %v2091 = vadd.f32 0.0, %v2090
        %v2092 = vpop.f32.mrf.mxu0
        %2093 = vmatprep.mubr.bf16.mxu0 %v1959
        %2094 = vmatmul.mubr.bf16.gmra.mxu0 %v1827
        %v2095 = vpop.f32.mrf.mxu0
        %v2096 = vadd.f32 0.0, %v2095
        %v2097 = vpop.f32.mrf.mxu0
        %v2098 = vpop.f32.mrf.mxu0
        %v2099 = vadd.f32 0.0, %v2098
        %v2100 = vpop.f32.mrf.mxu0
        %2101 = vmatprep.mubr.bf16.mxu0 %v1962
        %2102 = vmatmul.mubr.bf16.gmra.mxu0 %v1829
        %v2103 = vpop.f32.mrf.mxu0
        %v2104 = vadd.f32 0.0, %v2103
        %v2105 = vpop.f32.mrf.mxu0
        %v2106 = vpop.f32.mrf.mxu0
        %v2107 = vadd.f32 0.0, %v2106
        %v2108 = vpop.f32.mrf.mxu0
        %2109 = vmatprep.mubr.bf16.mxu0 %v1965
        %2110 = vmatmul.mubr.bf16.gmra.mxu0 %v1831
        %v2111 = vpop.f32.mrf.mxu0
        %v2112 = vadd.f32 0.0, %v2111
        %v2113 = vpop.f32.mrf.mxu0
        %v2114 = vpop.f32.mrf.mxu0
        %v2115 = vadd.f32 0.0, %v2114
        %v2116 = vpop.f32.mrf.mxu0
        %2117 = vmatprep.mubr.bf16.mxu0 %v1968
        %2118 = vmatmul.mubr.bf16.gmra.mxu0 %v1833
        %v2119 = vpop.f32.mrf.mxu0
        %v2120 = vadd.f32 0.0, %v2119
        %v2121 = vpop.f32.mrf.mxu0
        %v2122 = vpop.f32.mrf.mxu0
        %v2123 = vadd.f32 0.0, %v2122
        %v2124 = vpop.f32.mrf.mxu0
        %2125 = vmatprep.mubr.bf16.mxu0 %v1971
        %2126 = vmatmul.mubr.bf16.gmra.mxu0 %v1835
        %v2127 = vpop.f32.mrf.mxu0
        %v2128 = vadd.f32 0.0, %v2127
        %v2129 = vpop.f32.mrf.mxu0
        %v2130 = vpop.f32.mrf.mxu0
        %v2131 = vadd.f32 0.0, %v2130
        %v2132 = vpop.f32.mrf.mxu0
        %2133 = vdwg.mxu0
        %v2134 = vld [vmem:[#allocation4] sm:$0xff]
        %v2135 = vld [vmem:[#allocation4 + $0x8] sm:$0xff]
        %v2136 = vld [vmem:[#allocation4 + $0x10] sm:$0xff]
        %v2137 = vld [vmem:[#allocation4 + $0x18] sm:$0xff]
        %v2138 = vld [vmem:[#allocation4 + $0x20] sm:$0xff]
        %v2139 = vld [vmem:[#allocation4 + $0x28] sm:$0xff]
        %v2140 = vld [vmem:[#allocation4 + $0x30] sm:$0xff]
        %v2141 = vld [vmem:[#allocation4 + $0x38] sm:$0xff]
        %v2142 = vld [vmem:[#allocation4 + $0x40] sm:$0xff]
        %v2143 = vld [vmem:[#allocation4 + $0x48] sm:$0xff]
        %v2144 = vld [vmem:[#allocation4 + $0x50] sm:$0xff]
        %v2145 = vld [vmem:[#allocation4 + $0x58] sm:$0xff]
        %v2146 = vld [vmem:[#allocation4 + $0x60] sm:$0xff]
        %v2147 = vld [vmem:[#allocation4 + $0x68] sm:$0xff]
        %v2148 = vld [vmem:[#allocation4 + $0x70] sm:$0xff]
        %v2149 = vld [vmem:[#allocation4 + $0x78] sm:$0xff]
        %v2150 = vld [vmem:[#allocation4 + $0x80] sm:$0xff]
        %v2151 = vld [vmem:[#allocation4 + $0x88] sm:$0xff]
        %v2152 = vld [vmem:[#allocation4 + $0x90] sm:$0xff]
        %v2153 = vld [vmem:[#allocation4 + $0x98] sm:$0xff]
        %v2154 = vld [vmem:[#allocation4 + $0xa0] sm:$0xff]
        %v2155 = vld [vmem:[#allocation4 + $0xa8] sm:$0xff]
        %v2156 = vld [vmem:[#allocation4 + $0xb0] sm:$0xff]
        %v2157 = vld [vmem:[#allocation4 + $0xb8] sm:$0xff]
        %v2158 = vld [vmem:[#allocation4 + $0xc0] sm:$0xff]
        %v2159 = vld [vmem:[#allocation4 + $0xc8] sm:$0xff]
        %v2160 = vld [vmem:[#allocation4 + $0xd0] sm:$0xff]
        %v2161 = vld [vmem:[#allocation4 + $0xd8] sm:$0xff]
        %v2162 = vld [vmem:[#allocation4 + $0xe0] sm:$0xff]
        %v2163 = vld [vmem:[#allocation4 + $0xe8] sm:$0xff]
        %v2164 = vld [vmem:[#allocation4 + $0xf0] sm:$0xff]
        %v2165 = vld [vmem:[#allocation4 + $0xf8] sm:$0xff]
        %v2166 = vadd.f32 %v2134, %v2008
        %v2167 = vadd.f32 %v2135, %v2011
        %v2168 = vadd.f32 %v2136, %v2016
        %v2169 = vadd.f32 %v2137, %v2019
        %v2170 = vadd.f32 %v2138, %v2024
        %v2171 = vadd.f32 %v2139, %v2027
        %v2172 = vadd.f32 %v2140, %v2032
        %v2173 = vadd.f32 %v2141, %v2035
        %v2174 = vadd.f32 %v2142, %v2040
        %v2175 = vadd.f32 %v2143, %v2043
        %v2176 = vadd.f32 %v2144, %v2048
        %v2177 = vadd.f32 %v2145, %v2051
        %v2178 = vadd.f32 %v2146, %v2056
        %v2179 = vadd.f32 %v2147, %v2059
        %v2180 = vadd.f32 %v2148, %v2064
        %v2181 = vadd.f32 %v2149, %v2067
        %v2182 = vadd.f32 %v2150, %v2072
        %v2183 = vadd.f32 %v2151, %v2075
        %v2184 = vadd.f32 %v2152, %v2080
        %v2185 = vadd.f32 %v2153, %v2083
        %v2186 = vadd.f32 %v2154, %v2088
        %v2187 = vadd.f32 %v2155, %v2091
        %v2188 = vadd.f32 %v2156, %v2096
        %v2189 = vadd.f32 %v2157, %v2099
        %v2190 = vadd.f32 %v2158, %v2104
        %v2191 = vadd.f32 %v2159, %v2107
        %v2192 = vadd.f32 %v2160, %v2112
        %v2193 = vadd.f32 %v2161, %v2115
        %v2194 = vadd.f32 %v2162, %v2120
        %v2195 = vadd.f32 %v2163, %v2123
        %v2196 = vadd.f32 %v2164, %v2128
        %v2197 = vadd.f32 %v2165, %v2131
        %2198 = vst.msk [vmem:[#allocation4] sm:$0xff] %vm305, %v2166
        %2199 = vst.msk [vmem:[#allocation4 + $0x8] sm:$0xff] %vm305, %v2167
        %2200 = vst.msk [vmem:[#allocation4 + $0x10] sm:$0xff] %vm305, %v2168
        %2201 = vst.msk [vmem:[#allocation4 + $0x18] sm:$0xff] %vm305, %v2169
        %2202 = vst.msk [vmem:[#allocation4 + $0x20] sm:$0xff] %vm305, %v2170
        %2203 = vst.msk [vmem:[#allocation4 + $0x28] sm:$0xff] %vm305, %v2171
        %2204 = vst.msk [vmem:[#allocation4 + $0x30] sm:$0xff] %vm305, %v2172
        %2205 = vst.msk [vmem:[#allocation4 + $0x38] sm:$0xff] %vm305, %v2173
        %2206 = vst.msk [vmem:[#allocation4 + $0x40] sm:$0xff] %vm305, %v2174
        %2207 = vst.msk [vmem:[#allocation4 + $0x48] sm:$0xff] %vm305, %v2175
        %2208 = vst.msk [vmem:[#allocation4 + $0x50] sm:$0xff] %vm305, %v2176
        %2209 = vst.msk [vmem:[#allocation4 + $0x58] sm:$0xff] %vm305, %v2177
        %2210 = vst.msk [vmem:[#allocation4 + $0x60] sm:$0xff] %vm305, %v2178
        %2211 = vst.msk [vmem:[#allocation4 + $0x68] sm:$0xff] %vm305, %v2179
        %2212 = vst.msk [vmem:[#allocation4 + $0x70] sm:$0xff] %vm305, %v2180
        %2213 = vst.msk [vmem:[#allocation4 + $0x78] sm:$0xff] %vm305, %v2181
        %2214 = vst.msk [vmem:[#allocation4 + $0x80] sm:$0xff] %vm305, %v2182
        %2215 = vst.msk [vmem:[#allocation4 + $0x88] sm:$0xff] %vm305, %v2183
        %2216 = vst.msk [vmem:[#allocation4 + $0x90] sm:$0xff] %vm305, %v2184
        %2217 = vst.msk [vmem:[#allocation4 + $0x98] sm:$0xff] %vm305, %v2185
        %2218 = vst.msk [vmem:[#allocation4 + $0xa0] sm:$0xff] %vm305, %v2186
        %2219 = vst.msk [vmem:[#allocation4 + $0xa8] sm:$0xff] %vm305, %v2187
        %2220 = vst.msk [vmem:[#allocation4 + $0xb0] sm:$0xff] %vm305, %v2188
        %2221 = vst.msk [vmem:[#allocation4 + $0xb8] sm:$0xff] %vm305, %v2189
        %2222 = vst.msk [vmem:[#allocation4 + $0xc0] sm:$0xff] %vm305, %v2190
        %2223 = vst.msk [vmem:[#allocation4 + $0xc8] sm:$0xff] %vm305, %v2191
        %2224 = vst.msk [vmem:[#allocation4 + $0xd0] sm:$0xff] %vm305, %v2192
        %2225 = vst.msk [vmem:[#allocation4 + $0xd8] sm:$0xff] %vm305, %v2193
        %2226 = vst.msk [vmem:[#allocation4 + $0xe0] sm:$0xff] %vm305, %v2194
        %2227 = vst.msk [vmem:[#allocation4 + $0xe8] sm:$0xff] %vm305, %v2195
        %2228 = vst.msk [vmem:[#allocation4 + $0xf0] sm:$0xff] %vm305, %v2196
        %2229 = vst.msk [vmem:[#allocation4 + $0xf8] sm:$0xff] %vm305, %v2197
        %s2230 = scalar_lea.vmem [#allocation3], 32
        %v2231 = vld [vmem:[%s2230] sm:$0xff]
        %v2232 = vld [vmem:[%s2230 + $0x8] sm:$0xff]
        %v2233 = vld [vmem:[%s2230 + $0x10] sm:$0xff]
        %v2234 = vld [vmem:[%s2230 + $0x18] sm:$0xff]
        %v2235 = vld [vmem:[%s2230 + $0x20] sm:$0xff]
        %v2236 = vld [vmem:[%s2230 + $0x28] sm:$0xff]
        %v2237 = vld [vmem:[%s2230 + $0x30] sm:$0xff]
        %v2238 = vld [vmem:[%s2230 + $0x38] sm:$0xff]
        %v2239 = vld [vmem:[%s2230 + $0x40] sm:$0xff]
        %v2240 = vld [vmem:[%s2230 + $0x48] sm:$0xff]
        %v2241 = vld [vmem:[%s2230 + $0x50] sm:$0xff]
        %v2242 = vld [vmem:[%s2230 + $0x58] sm:$0xff]
        %v2243 = vld [vmem:[%s2230 + $0x60] sm:$0xff]
        %v2244 = vld [vmem:[%s2230 + $0x68] sm:$0xff]
        %v2245 = vld [vmem:[%s2230 + $0x70] sm:$0xff]
        %v2246 = vld [vmem:[%s2230 + $0x78] sm:$0xff]
        %v2247 = vld [vmem:[%s2230 + $0x80] sm:$0xff]
        %v2248 = vld [vmem:[%s2230 + $0x88] sm:$0xff]
        %v2249 = vld [vmem:[%s2230 + $0x90] sm:$0xff]
        %v2250 = vld [vmem:[%s2230 + $0x98] sm:$0xff]
        %v2251 = vld [vmem:[%s2230 + $0xa0] sm:$0xff]
        %v2252 = vld [vmem:[%s2230 + $0xa8] sm:$0xff]
        %v2253 = vld [vmem:[%s2230 + $0xb0] sm:$0xff]
        %v2254 = vld [vmem:[%s2230 + $0xb8] sm:$0xff]
        %v2255 = vld [vmem:[%s2230 + $0xc0] sm:$0xff]
        %v2256 = vld [vmem:[%s2230 + $0xc8] sm:$0xff]
        %v2257 = vld [vmem:[%s2230 + $0xd0] sm:$0xff]
        %v2258 = vld [vmem:[%s2230 + $0xd8] sm:$0xff]
        %v2259 = vld [vmem:[%s2230 + $0xe0] sm:$0xff]
        %v2260 = vld [vmem:[%s2230 + $0xe8] sm:$0xff]
        %v2261 = vld [vmem:[%s2230 + $0xf0] sm:$0xff]
        %v2262 = vld [vmem:[%s2230 + $0xf8] sm:$0xff]
        %s2263 = scalar_lea.vmem %s1, 192
        %v2264 = vld [vmem:[%s2263] sm:$0xf]
        %v2265 = vld [vmem:[%s2263 + $0x4] sm:$0xf]
        %v2266 = vld [vmem:[%s2263 + $0x8] sm:$0xf]
        %v2267 = vld [vmem:[%s2263 + $0xc] sm:$0xf]
        %v2268 = vld [vmem:[%s2263 + $0x10] sm:$0xf]
        %v2269 = vld [vmem:[%s2263 + $0x14] sm:$0xf]
        %v2270 = vld [vmem:[%s2263 + $0x18] sm:$0xf]
        %v2271 = vld [vmem:[%s2263 + $0x1c] sm:$0xf]
        %v2272 = vld [vmem:[%s2263 + $0x20] sm:$0xf]
        %v2273 = vld [vmem:[%s2263 + $0x24] sm:$0xf]
        %v2274 = vld [vmem:[%s2263 + $0x28] sm:$0xf]
        %v2275 = vld [vmem:[%s2263 + $0x2c] sm:$0xf]
        %v2276 = vld [vmem:[%s2263 + $0x30] sm:$0xf]
        %v2277 = vld [vmem:[%s2263 + $0x34] sm:$0xf]
        %v2278 = vld [vmem:[%s2263 + $0x38] sm:$0xf]
        %v2279 = vld [vmem:[%s2263 + $0x3c] sm:$0xf]
        %v2280 = vld [vmem:[%s2263 + $0x40] sm:$0xf]
        %v2281 = vld [vmem:[%s2263 + $0x44] sm:$0xf]
        %v2282 = vld [vmem:[%s2263 + $0x48] sm:$0xf]
        %v2283 = vld [vmem:[%s2263 + $0x4c] sm:$0xf]
        %v2284 = vld [vmem:[%s2263 + $0x50] sm:$0xf]
        %v2285 = vld [vmem:[%s2263 + $0x54] sm:$0xf]
        %v2286 = vld [vmem:[%s2263 + $0x58] sm:$0xf]
        %v2287 = vld [vmem:[%s2263 + $0x5c] sm:$0xf]
        %v2320 = vunpack.c.l.b16 %v2231
        %v2321 = vunpack.c.h.b16 %v2231
        %v2322 = vunpack.c.l.b16 %v2232
        %v2323 = vunpack.c.h.b16 %v2232
        %v2324 = vunpack.c.l.b16 %v2233
        %v2325 = vunpack.c.h.b16 %v2233
        %v2326 = vunpack.c.l.b16 %v2234
        %v2327 = vunpack.c.h.b16 %v2234
        %v2328 = vunpack.c.l.b16 %v2235
        %v2329 = vunpack.c.h.b16 %v2235
        %v2330 = vunpack.c.l.b16 %v2236
        %v2331 = vunpack.c.h.b16 %v2236
        %v2332 = vunpack.c.l.b16 %v2237
        %v2333 = vunpack.c.h.b16 %v2237
        %v2334 = vunpack.c.l.b16 %v2238
        %v2335 = vunpack.c.h.b16 %v2238
        %v2336 = vunpack.c.l.b16 %v2239
        %v2337 = vunpack.c.h.b16 %v2239
        %v2338 = vunpack.c.l.b16 %v2240
        %v2339 = vunpack.c.h.b16 %v2240
        %v2340 = vunpack.c.l.b16 %v2241
        %v2341 = vunpack.c.h.b16 %v2241
        %v2342 = vunpack.c.l.b16 %v2242
        %v2343 = vunpack.c.h.b16 %v2242
        %v2344 = vunpack.c.l.b16 %v2243
        %v2345 = vunpack.c.h.b16 %v2243
        %v2346 = vunpack.c.l.b16 %v2244
        %v2347 = vunpack.c.h.b16 %v2244
        %v2348 = vunpack.c.l.b16 %v2245
        %v2349 = vunpack.c.h.b16 %v2245
        %v2350 = vunpack.c.l.b16 %v2246
        %v2351 = vunpack.c.h.b16 %v2246
        %v2352 = vunpack.c.l.b16 %v2247
        %v2353 = vunpack.c.h.b16 %v2247
        %v2354 = vunpack.c.l.b16 %v2248
        %v2355 = vunpack.c.h.b16 %v2248
        %v2356 = vunpack.c.l.b16 %v2249
        %v2357 = vunpack.c.h.b16 %v2249
        %v2358 = vunpack.c.l.b16 %v2250
        %v2359 = vunpack.c.h.b16 %v2250
        %v2360 = vunpack.c.l.b16 %v2251
        %v2361 = vunpack.c.h.b16 %v2251
        %v2362 = vunpack.c.l.b16 %v2252
        %v2363 = vunpack.c.h.b16 %v2252
        %v2364 = vunpack.c.l.b16 %v2253
        %v2365 = vunpack.c.h.b16 %v2253
        %v2366 = vunpack.c.l.b16 %v2254
        %v2367 = vunpack.c.h.b16 %v2254
        %v2368 = vunpack.c.l.b16 %v2255
        %v2369 = vunpack.c.h.b16 %v2255
        %v2370 = vunpack.c.l.b16 %v2256
        %v2371 = vunpack.c.h.b16 %v2256
        %v2372 = vunpack.c.l.b16 %v2257
        %v2373 = vunpack.c.h.b16 %v2257
        %v2374 = vunpack.c.l.b16 %v2258
        %v2375 = vunpack.c.h.b16 %v2258
        %v2376 = vunpack.c.l.b16 %v2259
        %v2377 = vunpack.c.h.b16 %v2259
        %v2378 = vunpack.c.l.b16 %v2260
        %v2379 = vunpack.c.h.b16 %v2260
        %v2380 = vunpack.c.l.b16 %v2261
        %v2381 = vunpack.c.h.b16 %v2261
        %v2382 = vunpack.c.l.b16 %v2262
        %v2383 = vunpack.c.h.b16 %v2262
        %v2384 = vpack.c.b16 %v2322, %v2320
        %v2385 = vpack.c.b16 %v2323, %v2321
        %v2386 = vpack.c.b16 %v2326, %v2324
        %v2387 = vpack.c.b16 %v2327, %v2325
        %v2388 = vpack.c.b16 %v2330, %v2328
        %v2389 = vpack.c.b16 %v2331, %v2329
        %v2390 = vpack.c.b16 %v2334, %v2332
        %v2391 = vpack.c.b16 %v2335, %v2333
        %v2392 = vpack.c.b16 %v2338, %v2336
        %v2393 = vpack.c.b16 %v2339, %v2337
        %v2394 = vpack.c.b16 %v2342, %v2340
        %v2395 = vpack.c.b16 %v2343, %v2341
        %v2396 = vpack.c.b16 %v2346, %v2344
        %v2397 = vpack.c.b16 %v2347, %v2345
        %v2398 = vpack.c.b16 %v2350, %v2348
        %v2399 = vpack.c.b16 %v2351, %v2349
        %v2400 = vpack.c.b16 %v2354, %v2352
        %v2401 = vpack.c.b16 %v2355, %v2353
        %v2402 = vpack.c.b16 %v2358, %v2356
        %v2403 = vpack.c.b16 %v2359, %v2357
        %v2404 = vpack.c.b16 %v2362, %v2360
        %v2405 = vpack.c.b16 %v2363, %v2361
        %v2406 = vpack.c.b16 %v2366, %v2364
        %v2407 = vpack.c.b16 %v2367, %v2365
        %v2408 = vpack.c.b16 %v2370, %v2368
        %v2409 = vpack.c.b16 %v2371, %v2369
        %v2410 = vpack.c.b16 %v2374, %v2372
        %v2411 = vpack.c.b16 %v2375, %v2373
        %v2412 = vpack.c.b16 %v2378, %v2376
        %v2413 = vpack.c.b16 %v2379, %v2377
        %v2414 = vpack.c.b16 %v2382, %v2380
        %v2415 = vpack.c.b16 %v2383, %v2381
        %v2456 = vunpack.c.l.b16 %v2264
        %v2457 = vunpack.c.l.b16 %v2265
        %v2458 = vunpack.c.l.b16 %v2266
        %v2459 = vunpack.c.l.b16 %v2267
        %v2460 = vunpack.c.l.b16 %v2268
        %v2461 = vunpack.c.l.b16 %v2269
        %v2462 = vunpack.c.l.b16 %v2270
        %v2463 = vunpack.c.l.b16 %v2271
        %v2464 = vunpack.c.l.b16 %v2272
        %v2465 = vunpack.c.l.b16 %v2273
        %v2466 = vunpack.c.l.b16 %v2274
        %v2467 = vunpack.c.l.b16 %v2275
        %v2468 = vunpack.c.l.b16 %v2276
        %v2469 = vunpack.c.l.b16 %v2277
        %v2470 = vunpack.c.l.b16 %v2278
        %v2471 = vunpack.c.l.b16 %v2279
        %v2472 = vunpack.c.l.b16 %v2280
        %v2473 = vunpack.c.l.b16 %v2281
        %v2474 = vunpack.c.l.b16 %v2282
        %v2475 = vunpack.c.l.b16 %v2283
        %v2476 = vunpack.c.l.b16 %v2284
        %v2477 = vunpack.c.l.b16 %v2285
        %v2478 = vunpack.c.l.b16 %v2286
        %v2479 = vunpack.c.l.b16 %v2287
        %v2480 = vpack.c.b16 %v2457, %v2456
        %v2481 = vpack.c.b16 %v2459, %v2458
        %v2482 = vpack.c.b16 %v2461, %v2460
        %v2483 = vpack.c.b16 %v2463, %v2462
        %v2484 = vpack.c.b16 %v2465, %v2464
        %v2485 = vpack.c.b16 %v2467, %v2466
        %v2486 = vpack.c.b16 %v2469, %v2468
        %v2487 = vpack.c.b16 %v2471, %v2470
        %v2488 = vpack.c.b16 %v2473, %v2472
        %v2489 = vpack.c.b16 %v2475, %v2474
        %v2490 = vpack.c.b16 %v2477, %v2476
        %v2491 = vpack.c.b16 %v2479, %v2478
        %v2505 = vsel %vm305, %v2385, 0
        %v2508 = vsel %vm305, %v2387, 0
        %v2511 = vsel %vm305, %v2389, 0
        %v2514 = vsel %vm305, %v2391, 0
        %v2517 = vsel %vm305, %v2393, 0
        %v2520 = vsel %vm305, %v2395, 0
        %v2523 = vsel %vm305, %v2397, 0
        %v2526 = vsel %vm305, %v2399, 0
        %v2529 = vsel %vm305, %v2401, 0
        %v2532 = vsel %vm305, %v2403, 0
        %v2535 = vsel %vm305, %v2405, 0
        %v2538 = vsel %vm305, %v2407, 0
        %v2541 = vsel %vm305, %v2409, 0
        %v2544 = vsel %vm305, %v2411, 0
        %v2547 = vsel %vm305, %v2413, 0
        %v2550 = vsel %vm305, %v2415, 0
        %2552 = vmatprep.subr.bf16.mxu0 0
        %2553 = vmatpush1.bf16.msra.mxu0 %v2487
        %2554 = vmatprep.subr.bf16.mxu0 0
        %2555 = vmatpush1.bf16.msra.mxu0 %v2486
        %2556 = vmatprep.subr.bf16.mxu0 0
        %2557 = vmatpush1.bf16.msra.mxu0 %v2485
        %2558 = vmatprep.subr.bf16.mxu0 0
        %2559 = vmatpush1.bf16.msra.mxu0 %v2484
        %2560 = vmatprep.subr.bf16.mxu0 0
        %2561 = vmatpush1.bf16.msra.mxu0 %v2483
        %2562 = vmatprep.subr.bf16.mxu0 0
        %2563 = vmatpush1.bf16.msra.mxu0 %v2482
        %2564 = vmatprep.subr.bf16.mxu0 0
        %2565 = vmatpush1.bf16.msra.mxu0 %v2481
        %2566 = vmatprep.subr.bf16.mxu0 0
        %2567 = vmatpush1.bf16.msra.mxu0 %v2480
        %2568 = vmatprep.subr.bf16.mxu0 0
        %2569 = vmatpush2.bf16.msra.mxu0 0
        %2570 = vmatprep.subr.bf16.mxu0 0
        %2571 = vmatpush2.bf16.msra.mxu0 0
        %2572 = vmatprep.subr.bf16.mxu0 0
        %2573 = vmatpush2.bf16.msra.mxu0 0
        %2574 = vmatprep.subr.bf16.mxu0 0
        %2575 = vmatpush2.bf16.msra.mxu0 0
        %2576 = vmatprep.subr.bf16.mxu0 0
        %2577 = vmatpush2.bf16.msra.mxu0 %v2491
        %2578 = vmatprep.subr.bf16.mxu0 0
        %2579 = vmatpush2.bf16.msra.mxu0 %v2490
        %2580 = vmatprep.subr.bf16.mxu0 0
        %2581 = vmatpush2.bf16.msra.mxu0 %v2489
        %2582 = vmatprep.subr.bf16.mxu0 0
        %2583 = vmatpush2.bf16.msra.mxu0 %v2488
        %2584 = vmatprep.mubr.bf16.mxu0 %v2505
        %2585 = vmatmul.mubr.bf16.gmra.mxu0 %v2384
        %v2586 = vpop.f32.mrf.mxu0
        %v2587 = vadd.f32 0.0, %v2586
        %v2588 = vpop.f32.mrf.mxu0
        %v2589 = vpop.f32.mrf.mxu0
        %v2590 = vadd.f32 0.0, %v2589
        %v2591 = vpop.f32.mrf.mxu0
        %2592 = vmatprep.mubr.bf16.mxu0 %v2508
        %2593 = vmatmul.mubr.bf16.gmra.mxu0 %v2386
        %v2594 = vpop.f32.mrf.mxu0
        %v2595 = vadd.f32 0.0, %v2594
        %v2596 = vpop.f32.mrf.mxu0
        %v2597 = vpop.f32.mrf.mxu0
        %v2598 = vadd.f32 0.0, %v2597
        %v2599 = vpop.f32.mrf.mxu0
        %2600 = vmatprep.mubr.bf16.mxu0 %v2511
        %2601 = vmatmul.mubr.bf16.gmra.mxu0 %v2388
        %v2602 = vpop.f32.mrf.mxu0
        %v2603 = vadd.f32 0.0, %v2602
        %v2604 = vpop.f32.mrf.mxu0
        %v2605 = vpop.f32.mrf.mxu0
        %v2606 = vadd.f32 0.0, %v2605
        %v2607 = vpop.f32.mrf.mxu0
        %2608 = vmatprep.mubr.bf16.mxu0 %v2514
        %2609 = vmatmul.mubr.bf16.gmra.mxu0 %v2390
        %v2610 = vpop.f32.mrf.mxu0
        %v2611 = vadd.f32 0.0, %v2610
        %v2612 = vpop.f32.mrf.mxu0
        %v2613 = vpop.f32.mrf.mxu0
        %v2614 = vadd.f32 0.0, %v2613
        %v2615 = vpop.f32.mrf.mxu0
        %2616 = vmatprep.mubr.bf16.mxu0 %v2517
        %2617 = vmatmul.mubr.bf16.gmra.mxu0 %v2392
        %v2618 = vpop.f32.mrf.mxu0
        %v2619 = vadd.f32 0.0, %v2618
        %v2620 = vpop.f32.mrf.mxu0
        %v2621 = vpop.f32.mrf.mxu0
        %v2622 = vadd.f32 0.0, %v2621
        %v2623 = vpop.f32.mrf.mxu0
        %2624 = vmatprep.mubr.bf16.mxu0 %v2520
        %2625 = vmatmul.mubr.bf16.gmra.mxu0 %v2394
        %v2626 = vpop.f32.mrf.mxu0
        %v2627 = vadd.f32 0.0, %v2626
        %v2628 = vpop.f32.mrf.mxu0
        %v2629 = vpop.f32.mrf.mxu0
        %v2630 = vadd.f32 0.0, %v2629
        %v2631 = vpop.f32.mrf.mxu0
        %2632 = vmatprep.mubr.bf16.mxu0 %v2523
        %2633 = vmatmul.mubr.bf16.gmra.mxu0 %v2396
        %v2634 = vpop.f32.mrf.mxu0
        %v2635 = vadd.f32 0.0, %v2634
        %v2636 = vpop.f32.mrf.mxu0
        %v2637 = vpop.f32.mrf.mxu0
        %v2638 = vadd.f32 0.0, %v2637
        %v2639 = vpop.f32.mrf.mxu0
        %2640 = vmatprep.mubr.bf16.mxu0 %v2526
        %2641 = vmatmul.mubr.bf16.gmra.mxu0 %v2398
        %v2642 = vpop.f32.mrf.mxu0
        %v2643 = vadd.f32 0.0, %v2642
        %v2644 = vpop.f32.mrf.mxu0
        %v2645 = vpop.f32.mrf.mxu0
        %v2646 = vadd.f32 0.0, %v2645
        %v2647 = vpop.f32.mrf.mxu0
        %2648 = vmatprep.mubr.bf16.mxu0 %v2529
        %2649 = vmatmul.mubr.bf16.gmra.mxu0 %v2400
        %v2650 = vpop.f32.mrf.mxu0
        %v2651 = vadd.f32 0.0, %v2650
        %v2652 = vpop.f32.mrf.mxu0
        %v2653 = vpop.f32.mrf.mxu0
        %v2654 = vadd.f32 0.0, %v2653
        %v2655 = vpop.f32.mrf.mxu0
        %2656 = vmatprep.mubr.bf16.mxu0 %v2532
        %2657 = vmatmul.mubr.bf16.gmra.mxu0 %v2402
        %v2658 = vpop.f32.mrf.mxu0
        %v2659 = vadd.f32 0.0, %v2658
        %v2660 = vpop.f32.mrf.mxu0
        %v2661 = vpop.f32.mrf.mxu0
        %v2662 = vadd.f32 0.0, %v2661
        %v2663 = vpop.f32.mrf.mxu0
        %2664 = vmatprep.mubr.bf16.mxu0 %v2535
        %2665 = vmatmul.mubr.bf16.gmra.mxu0 %v2404
        %v2666 = vpop.f32.mrf.mxu0
        %v2667 = vadd.f32 0.0, %v2666
        %v2668 = vpop.f32.mrf.mxu0
        %v2669 = vpop.f32.mrf.mxu0
        %v2670 = vadd.f32 0.0, %v2669
        %v2671 = vpop.f32.mrf.mxu0
        %2672 = vmatprep.mubr.bf16.mxu0 %v2538
        %2673 = vmatmul.mubr.bf16.gmra.mxu0 %v2406
        %v2674 = vpop.f32.mrf.mxu0
        %v2675 = vadd.f32 0.0, %v2674
        %v2676 = vpop.f32.mrf.mxu0
        %v2677 = vpop.f32.mrf.mxu0
        %v2678 = vadd.f32 0.0, %v2677
        %v2679 = vpop.f32.mrf.mxu0
        %2680 = vmatprep.mubr.bf16.mxu0 %v2541
        %2681 = vmatmul.mubr.bf16.gmra.mxu0 %v2408
        %v2682 = vpop.f32.mrf.mxu0
        %v2683 = vadd.f32 0.0, %v2682
        %v2684 = vpop.f32.mrf.mxu0
        %v2685 = vpop.f32.mrf.mxu0
        %v2686 = vadd.f32 0.0, %v2685
        %v2687 = vpop.f32.mrf.mxu0
        %2688 = vmatprep.mubr.bf16.mxu0 %v2544
        %2689 = vmatmul.mubr.bf16.gmra.mxu0 %v2410
        %v2690 = vpop.f32.mrf.mxu0
        %v2691 = vadd.f32 0.0, %v2690
        %v2692 = vpop.f32.mrf.mxu0
        %v2693 = vpop.f32.mrf.mxu0
        %v2694 = vadd.f32 0.0, %v2693
        %v2695 = vpop.f32.mrf.mxu0
        %2696 = vmatprep.mubr.bf16.mxu0 %v2547
        %2697 = vmatmul.mubr.bf16.gmra.mxu0 %v2412
        %v2698 = vpop.f32.mrf.mxu0
        %v2699 = vadd.f32 0.0, %v2698
        %v2700 = vpop.f32.mrf.mxu0
        %v2701 = vpop.f32.mrf.mxu0
        %v2702 = vadd.f32 0.0, %v2701
        %v2703 = vpop.f32.mrf.mxu0
        %2704 = vmatprep.mubr.bf16.mxu0 %v2550
        %2705 = vmatmul.mubr.bf16.gmra.mxu0 %v2414
        %v2706 = vpop.f32.mrf.mxu0
        %v2707 = vadd.f32 0.0, %v2706
        %v2708 = vpop.f32.mrf.mxu0
        %v2709 = vpop.f32.mrf.mxu0
        %v2710 = vadd.f32 0.0, %v2709
        %v2711 = vpop.f32.mrf.mxu0
        %2712 = vdwg.mxu0
        %v2713 = vld [vmem:[#allocation4] sm:$0xff]
        %v2714 = vld [vmem:[#allocation4 + $0x8] sm:$0xff]
        %v2715 = vld [vmem:[#allocation4 + $0x10] sm:$0xff]
        %v2716 = vld [vmem:[#allocation4 + $0x18] sm:$0xff]
        %v2717 = vld [vmem:[#allocation4 + $0x20] sm:$0xff]
        %v2718 = vld [vmem:[#allocation4 + $0x28] sm:$0xff]
        %v2719 = vld [vmem:[#allocation4 + $0x30] sm:$0xff]
        %v2720 = vld [vmem:[#allocation4 + $0x38] sm:$0xff]
        %v2721 = vld [vmem:[#allocation4 + $0x40] sm:$0xff]
        %v2722 = vld [vmem:[#allocation4 + $0x48] sm:$0xff]
        %v2723 = vld [vmem:[#allocation4 + $0x50] sm:$0xff]
        %v2724 = vld [vmem:[#allocation4 + $0x58] sm:$0xff]
        %v2725 = vld [vmem:[#allocation4 + $0x60] sm:$0xff]
        %v2726 = vld [vmem:[#allocation4 + $0x68] sm:$0xff]
        %v2727 = vld [vmem:[#allocation4 + $0x70] sm:$0xff]
        %v2728 = vld [vmem:[#allocation4 + $0x78] sm:$0xff]
        %v2729 = vld [vmem:[#allocation4 + $0x80] sm:$0xff]
        %v2730 = vld [vmem:[#allocation4 + $0x88] sm:$0xff]
        %v2731 = vld [vmem:[#allocation4 + $0x90] sm:$0xff]
        %v2732 = vld [vmem:[#allocation4 + $0x98] sm:$0xff]
        %v2733 = vld [vmem:[#allocation4 + $0xa0] sm:$0xff]
        %v2734 = vld [vmem:[#allocation4 + $0xa8] sm:$0xff]
        %v2735 = vld [vmem:[#allocation4 + $0xb0] sm:$0xff]
        %v2736 = vld [vmem:[#allocation4 + $0xb8] sm:$0xff]
        %v2737 = vld [vmem:[#allocation4 + $0xc0] sm:$0xff]
        %v2738 = vld [vmem:[#allocation4 + $0xc8] sm:$0xff]
        %v2739 = vld [vmem:[#allocation4 + $0xd0] sm:$0xff]
        %v2740 = vld [vmem:[#allocation4 + $0xd8] sm:$0xff]
        %v2741 = vld [vmem:[#allocation4 + $0xe0] sm:$0xff]
        %v2742 = vld [vmem:[#allocation4 + $0xe8] sm:$0xff]
        %v2743 = vld [vmem:[#allocation4 + $0xf0] sm:$0xff]
        %v2744 = vld [vmem:[#allocation4 + $0xf8] sm:$0xff]
        %v2745 = vadd.f32 %v2713, %v2587
        %v2746 = vadd.f32 %v2714, %v2590
        %v2747 = vadd.f32 %v2715, %v2595
        %v2748 = vadd.f32 %v2716, %v2598
        %v2749 = vadd.f32 %v2717, %v2603
        %v2750 = vadd.f32 %v2718, %v2606
        %v2751 = vadd.f32 %v2719, %v2611
        %v2752 = vadd.f32 %v2720, %v2614
        %v2753 = vadd.f32 %v2721, %v2619
        %v2754 = vadd.f32 %v2722, %v2622
        %v2755 = vadd.f32 %v2723, %v2627
        %v2756 = vadd.f32 %v2724, %v2630
        %v2757 = vadd.f32 %v2725, %v2635
        %v2758 = vadd.f32 %v2726, %v2638
        %v2759 = vadd.f32 %v2727, %v2643
        %v2760 = vadd.f32 %v2728, %v2646
        %v2761 = vadd.f32 %v2729, %v2651
        %v2762 = vadd.f32 %v2730, %v2654
        %v2763 = vadd.f32 %v2731, %v2659
        %v2764 = vadd.f32 %v2732, %v2662
        %v2765 = vadd.f32 %v2733, %v2667
        %v2766 = vadd.f32 %v2734, %v2670
        %v2767 = vadd.f32 %v2735, %v2675
        %v2768 = vadd.f32 %v2736, %v2678
        %v2769 = vadd.f32 %v2737, %v2683
        %v2770 = vadd.f32 %v2738, %v2686
        %v2771 = vadd.f32 %v2739, %v2691
        %v2772 = vadd.f32 %v2740, %v2694
        %v2773 = vadd.f32 %v2741, %v2699
        %v2774 = vadd.f32 %v2742, %v2702
        %v2775 = vadd.f32 %v2743, %v2707
        %v2776 = vadd.f32 %v2744, %v2710
        %2777 = vst.msk [vmem:[#allocation4] sm:$0xff] %vm305, %v2745
        %2778 = vst.msk [vmem:[#allocation4 + $0x8] sm:$0xff] %vm305, %v2746
        %2779 = vst.msk [vmem:[#allocation4 + $0x10] sm:$0xff] %vm305, %v2747
        %2780 = vst.msk [vmem:[#allocation4 + $0x18] sm:$0xff] %vm305, %v2748
        %2781 = vst.msk [vmem:[#allocation4 + $0x20] sm:$0xff] %vm305, %v2749
        %2782 = vst.msk [vmem:[#allocation4 + $0x28] sm:$0xff] %vm305, %v2750
        %2783 = vst.msk [vmem:[#allocation4 + $0x30] sm:$0xff] %vm305, %v2751
        %2784 = vst.msk [vmem:[#allocation4 + $0x38] sm:$0xff] %vm305, %v2752
        %2785 = vst.msk [vmem:[#allocation4 + $0x40] sm:$0xff] %vm305, %v2753
        %2786 = vst.msk [vmem:[#allocation4 + $0x48] sm:$0xff] %vm305, %v2754
        %2787 = vst.msk [vmem:[#allocation4 + $0x50] sm:$0xff] %vm305, %v2755
        %2788 = vst.msk [vmem:[#allocation4 + $0x58] sm:$0xff] %vm305, %v2756
        %2789 = vst.msk [vmem:[#allocation4 + $0x60] sm:$0xff] %vm305, %v2757
        %2790 = vst.msk [vmem:[#allocation4 + $0x68] sm:$0xff] %vm305, %v2758
        %2791 = vst.msk [vmem:[#allocation4 + $0x70] sm:$0xff] %vm305, %v2759
        %2792 = vst.msk [vmem:[#allocation4 + $0x78] sm:$0xff] %vm305, %v2760
        %2793 = vst.msk [vmem:[#allocation4 + $0x80] sm:$0xff] %vm305, %v2761
        %2794 = vst.msk [vmem:[#allocation4 + $0x88] sm:$0xff] %vm305, %v2762
        %2795 = vst.msk [vmem:[#allocation4 + $0x90] sm:$0xff] %vm305, %v2763
        %2796 = vst.msk [vmem:[#allocation4 + $0x98] sm:$0xff] %vm305, %v2764
        %2797 = vst.msk [vmem:[#allocation4 + $0xa0] sm:$0xff] %vm305, %v2765
        %2798 = vst.msk [vmem:[#allocation4 + $0xa8] sm:$0xff] %vm305, %v2766
        %2799 = vst.msk [vmem:[#allocation4 + $0xb0] sm:$0xff] %vm305, %v2767
        %2800 = vst.msk [vmem:[#allocation4 + $0xb8] sm:$0xff] %vm305, %v2768
        %2801 = vst.msk [vmem:[#allocation4 + $0xc0] sm:$0xff] %vm305, %v2769
        %2802 = vst.msk [vmem:[#allocation4 + $0xc8] sm:$0xff] %vm305, %v2770
        %2803 = vst.msk [vmem:[#allocation4 + $0xd0] sm:$0xff] %vm305, %v2771
        %2804 = vst.msk [vmem:[#allocation4 + $0xd8] sm:$0xff] %vm305, %v2772
        %2805 = vst.msk [vmem:[#allocation4 + $0xe0] sm:$0xff] %vm305, %v2773
        %2806 = vst.msk [vmem:[#allocation4 + $0xe8] sm:$0xff] %vm305, %v2774
        %2807 = vst.msk [vmem:[#allocation4 + $0xf0] sm:$0xff] %vm305, %v2775
        %2808 = vst.msk [vmem:[#allocation4 + $0xf8] sm:$0xff] %vm305, %v2776
        %v2809 = vld [vmem:[#allocation4] sm:$0xff]
        %v2810 = vld [vmem:[#allocation4 + $0x8] sm:$0xff]
        %v2811 = vld [vmem:[#allocation4 + $0x10] sm:$0xff]
        %v2812 = vld [vmem:[#allocation4 + $0x18] sm:$0xff]
        %v2813 = vld [vmem:[#allocation4 + $0x20] sm:$0xff]
        %v2814 = vld [vmem:[#allocation4 + $0x28] sm:$0xff]
        %v2815 = vld [vmem:[#allocation4 + $0x30] sm:$0xff]
        %v2816 = vld [vmem:[#allocation4 + $0x38] sm:$0xff]
        %v2817 = vld [vmem:[#allocation4 + $0x40] sm:$0xff]
        %v2818 = vld [vmem:[#allocation4 + $0x48] sm:$0xff]
        %v2819 = vld [vmem:[#allocation4 + $0x50] sm:$0xff]
        %v2820 = vld [vmem:[#allocation4 + $0x58] sm:$0xff]
        %v2821 = vld [vmem:[#allocation4 + $0x60] sm:$0xff]
        %v2822 = vld [vmem:[#allocation4 + $0x68] sm:$0xff]
        %v2823 = vld [vmem:[#allocation4 + $0x70] sm:$0xff]
        %v2824 = vld [vmem:[#allocation4 + $0x78] sm:$0xff]
        %v2825 = vld [vmem:[#allocation4 + $0x80] sm:$0xff]
        %v2826 = vld [vmem:[#allocation4 + $0x88] sm:$0xff]
        %v2827 = vld [vmem:[#allocation4 + $0x90] sm:$0xff]
        %v2828 = vld [vmem:[#allocation4 + $0x98] sm:$0xff]
        %v2829 = vld [vmem:[#allocation4 + $0xa0] sm:$0xff]
        %v2830 = vld [vmem:[#allocation4 + $0xa8] sm:$0xff]
        %v2831 = vld [vmem:[#allocation4 + $0xb0] sm:$0xff]
        %v2832 = vld [vmem:[#allocation4 + $0xb8] sm:$0xff]
        %v2833 = vld [vmem:[#allocation4 + $0xc0] sm:$0xff]
        %v2834 = vld [vmem:[#allocation4 + $0xc8] sm:$0xff]
        %v2835 = vld [vmem:[#allocation4 + $0xd0] sm:$0xff]
        %v2836 = vld [vmem:[#allocation4 + $0xd8] sm:$0xff]
        %v2837 = vld [vmem:[#allocation4 + $0xe0] sm:$0xff]
        %v2838 = vld [vmem:[#allocation4 + $0xe8] sm:$0xff]
        %v2839 = vld [vmem:[#allocation4 + $0xf0] sm:$0xff]
        %v2840 = vld [vmem:[#allocation4 + $0xf8] sm:$0xff]
        %v2841 = vld [vmem:[%s2] sm:$0x1]
        %v2843 = vlaneseq
        %v2844 = vshrl.u32 %v2843, 7
        %v2845 = vsub.s32 0, %v2844
        %v2846 = vrot.slane %v2841, %v2845
        %v2848 = vadd.f32 %v2809, %v2846
        %v2849 = vadd.f32 %v2810, %v2846
        %v2850 = vadd.f32 %v2811, %v2846
        %v2851 = vadd.f32 %v2812, %v2846
        %v2852 = vadd.f32 %v2813, %v2846
        %v2853 = vadd.f32 %v2814, %v2846
        %v2854 = vadd.f32 %v2815, %v2846
        %v2855 = vadd.f32 %v2816, %v2846
        %v2856 = vadd.f32 %v2817, %v2846
        %v2857 = vadd.f32 %v2818, %v2846
        %v2858 = vadd.f32 %v2819, %v2846
        %v2859 = vadd.f32 %v2820, %v2846
        %v2860 = vadd.f32 %v2821, %v2846
        %v2861 = vadd.f32 %v2822, %v2846
        %v2862 = vadd.f32 %v2823, %v2846
        %v2863 = vadd.f32 %v2824, %v2846
        %v2864 = vadd.f32 %v2825, %v2846
        %v2865 = vadd.f32 %v2826, %v2846
        %v2866 = vadd.f32 %v2827, %v2846
        %v2867 = vadd.f32 %v2828, %v2846
        %v2868 = vadd.f32 %v2829, %v2846
        %v2869 = vadd.f32 %v2830, %v2846
        %v2870 = vadd.f32 %v2831, %v2846
        %v2871 = vadd.f32 %v2832, %v2846
        %v2872 = vadd.f32 %v2833, %v2846
        %v2873 = vadd.f32 %v2834, %v2846
        %v2874 = vadd.f32 %v2835, %v2846
        %v2875 = vadd.f32 %v2836, %v2846
        %v2876 = vadd.f32 %v2837, %v2846
        %v2877 = vadd.f32 %v2838, %v2846
        %v2878 = vadd.f32 %v2839, %v2846
        %v2879 = vadd.f32 %v2840, %v2846
        %v2880 = vmax.f32 %v2848, 0.0
        %v2881 = vmax.f32 %v2849, 0.0
        %v2882 = vmax.f32 %v2850, 0.0
        %v2883 = vmax.f32 %v2851, 0.0
        %v2884 = vmax.f32 %v2852, 0.0
        %v2885 = vmax.f32 %v2853, 0.0
        %v2886 = vmax.f32 %v2854, 0.0
        %v2887 = vmax.f32 %v2855, 0.0
        %v2888 = vmax.f32 %v2856, 0.0
        %v2889 = vmax.f32 %v2857, 0.0
        %v2890 = vmax.f32 %v2858, 0.0
        %v2891 = vmax.f32 %v2859, 0.0
        %v2892 = vmax.f32 %v2860, 0.0
        %v2893 = vmax.f32 %v2861, 0.0
        %v2894 = vmax.f32 %v2862, 0.0
        %v2895 = vmax.f32 %v2863, 0.0
        %v2896 = vmax.f32 %v2864, 0.0
        %v2897 = vmax.f32 %v2865, 0.0
        %v2898 = vmax.f32 %v2866, 0.0
        %v2899 = vmax.f32 %v2867, 0.0
        %v2900 = vmax.f32 %v2868, 0.0
        %v2901 = vmax.f32 %v2869, 0.0
        %v2902 = vmax.f32 %v2870, 0.0
        %v2903 = vmax.f32 %v2871, 0.0
        %v2904 = vmax.f32 %v2872, 0.0
        %v2905 = vmax.f32 %v2873, 0.0
        %v2906 = vmax.f32 %v2874, 0.0
        %v2907 = vmax.f32 %v2875, 0.0
        %v2908 = vmax.f32 %v2876, 0.0
        %v2909 = vmax.f32 %v2877, 0.0
        %v2910 = vmax.f32 %v2878, 0.0
        %v2911 = vmax.f32 %v2879, 0.0
        %2912 = vst.msk [vmem:[%s383 + $0x1] sm:$0xff] %vm305, %v2880
        %2913 = vst.msk [vmem:[%s383 + $0x9] sm:$0xff] %vm305, %v2881
        %2914 = vst.msk [vmem:[%s383 + $0x19] sm:$0xff] %vm305, %v2882
        %2915 = vst.msk [vmem:[%s383 + $0x21] sm:$0xff] %vm305, %v2883
        %2916 = vst.msk [vmem:[%s383 + $0x31] sm:$0xff] %vm305, %v2884
        %2917 = vst.msk [vmem:[%s383 + $0x39] sm:$0xff] %vm305, %v2885
        %2918 = vst.msk [vmem:[%s383 + $0x49] sm:$0xff] %vm305, %v2886
        %2919 = vst.msk [vmem:[%s383 + $0x51] sm:$0xff] %vm305, %v2887
        %2920 = vst.msk [vmem:[%s383 + $0x61] sm:$0xff] %vm305, %v2888
        %2921 = vst.msk [vmem:[%s383 + $0x69] sm:$0xff] %vm305, %v2889
        %2922 = vst.msk [vmem:[%s383 + $0x79] sm:$0xff] %vm305, %v2890
        %2923 = vst.msk [vmem:[%s383 + $0x81] sm:$0xff] %vm305, %v2891
        %2924 = vst.msk [vmem:[%s383 + $0x91] sm:$0xff] %vm305, %v2892
        %2925 = vst.msk [vmem:[%s383 + $0x99] sm:$0xff] %vm305, %v2893
        %2926 = vst.msk [vmem:[%s383 + $0xa9] sm:$0xff] %vm305, %v2894
        %2927 = vst.msk [vmem:[%s383 + $0xb1] sm:$0xff] %vm305, %v2895
        %2928 = vst.msk [vmem:[%s383 + $0xc1] sm:$0xff] %vm305, %v2896
        %2929 = vst.msk [vmem:[%s383 + $0xc9] sm:$0xff] %vm305, %v2897
        %2930 = vst.msk [vmem:[%s383 + $0xd9] sm:$0xff] %vm305, %v2898
        %2931 = vst.msk [vmem:[%s383 + $0xe1] sm:$0xff] %vm305, %v2899
        %2932 = vst.msk [vmem:[%s383 + $0xf1] sm:$0xff] %vm305, %v2900
        %2933 = vst.msk [vmem:[%s383 + $0xf9] sm:$0xff] %vm305, %v2901
        %2934 = vst.msk [vmem:[%s383 + $0x109] sm:$0xff] %vm305, %v2902
        %2935 = vst.msk [vmem:[%s383 + $0x111] sm:$0xff] %vm305, %v2903
        %2936 = vst.msk [vmem:[%s383 + $0x121] sm:$0xff] %vm305, %v2904
        %2937 = vst.msk [vmem:[%s383 + $0x129] sm:$0xff] %vm305, %v2905
        %2938 = vst.msk [vmem:[%s383 + $0x139] sm:$0xff] %vm305, %v2906
        %2939 = vst.msk [vmem:[%s383 + $0x141] sm:$0xff] %vm305, %v2907
        %2940 = vst.msk [vmem:[%s383 + $0x151] sm:$0xff] %vm305, %v2908
        %2941 = vst.msk [vmem:[%s383 + $0x159] sm:$0xff] %vm305, %v2909
        %2942 = vst.msk [vmem:[%s383 + $0x169] sm:$0xff] %vm305, %v2910
        %2943 = vst.msk [vmem:[%s383 + $0x171] sm:$0xff] %vm305, %v2911
        %v2944 = vld [vmem:[#allocation2] sm:$0xff]
        %v2945 = vld [vmem:[#allocation2 + $0x8] sm:$0xff]
        %v2946 = vld [vmem:[#allocation2 + $0x18] sm:$0xff]
        %v2947 = vld [vmem:[#allocation2 + $0x20] sm:$0xff]
        %v2948 = vld [vmem:[#allocation2 + $0x30] sm:$0xff]
        %v2949 = vld [vmem:[#allocation2 + $0x38] sm:$0xff]
        %v2950 = vld [vmem:[#allocation2 + $0x48] sm:$0xff]
        %v2951 = vld [vmem:[#allocation2 + $0x50] sm:$0xff]
        %v2952 = vld [vmem:[#allocation2 + $0x60] sm:$0xff]
        %v2953 = vld [vmem:[#allocation2 + $0x68] sm:$0xff]
        %v2954 = vld [vmem:[#allocation2 + $0x78] sm:$0xff]
        %v2955 = vld [vmem:[#allocation2 + $0x80] sm:$0xff]
        %v2956 = vld [vmem:[#allocation2 + $0x90] sm:$0xff]
        %v2957 = vld [vmem:[#allocation2 + $0x98] sm:$0xff]
        %v2958 = vld [vmem:[#allocation2 + $0xa8] sm:$0xff]
        %v2959 = vld [vmem:[#allocation2 + $0xb0] sm:$0xff]
        %v2960 = vld [vmem:[#allocation2 + $0xc0] sm:$0xff]
        %v2961 = vld [vmem:[#allocation2 + $0xc8] sm:$0xff]
        %v2962 = vld [vmem:[#allocation2 + $0xd8] sm:$0xff]
        %v2963 = vld [vmem:[#allocation2 + $0xe0] sm:$0xff]
        %v2964 = vld [vmem:[#allocation2 + $0xf0] sm:$0xff]
        %v2965 = vld [vmem:[#allocation2 + $0xf8] sm:$0xff]
        %v2966 = vld [vmem:[#allocation2 + $0x108] sm:$0xff]
        %v2967 = vld [vmem:[#allocation2 + $0x110] sm:$0xff]
        %v2968 = vld [vmem:[#allocation2 + $0x120] sm:$0xff]
        %v2969 = vld [vmem:[#allocation2 + $0x128] sm:$0xff]
        %v2970 = vld [vmem:[#allocation2 + $0x138] sm:$0xff]
        %v2971 = vld [vmem:[#allocation2 + $0x140] sm:$0xff]
        %v2972 = vld [vmem:[#allocation2 + $0x150] sm:$0xff]
        %v2973 = vld [vmem:[#allocation2 + $0x158] sm:$0xff]
        %v2974 = vld [vmem:[#allocation2 + $0x168] sm:$0xff]
        %v2975 = vld [vmem:[#allocation2 + $0x170] sm:$0xff]
        %v2976 = vld [vmem:[#allocation2 + $0x180] sm:$0xff]
        %v2977 = vld [vmem:[#allocation2 + $0x188] sm:$0xff]
        %v2978 = vld [vmem:[#allocation2 + $0x198] sm:$0xff]
        %v2979 = vld [vmem:[#allocation2 + $0x1a0] sm:$0xff]
        %v2980 = vpack.c.bf16 %v2945, %v2944
        %v2981 = vpack.c.bf16 %v2947, %v2946
        %v2982 = vpack.c.bf16 %v2949, %v2948
        %v2983 = vpack.c.bf16 %v2951, %v2950
        %v2984 = vpack.c.bf16 %v2953, %v2952
        %v2985 = vpack.c.bf16 %v2955, %v2954
        %v2986 = vpack.c.bf16 %v2957, %v2956
        %v2987 = vpack.c.bf16 %v2959, %v2958
        %v2988 = vpack.c.bf16 %v2961, %v2960
        %v2989 = vpack.c.bf16 %v2963, %v2962
        %v2990 = vpack.c.bf16 %v2965, %v2964
        %v2991 = vpack.c.bf16 %v2967, %v2966
        %v2992 = vpack.c.bf16 %v2969, %v2968
        %v2993 = vpack.c.bf16 %v2971, %v2970
        %v2994 = vpack.c.bf16 %v2973, %v2972
        %v2995 = vpack.c.bf16 %v2975, %v2974
        %v2996 = vpack.c.bf16 %v2977, %v2976
        %v2997 = vpack.c.bf16 %v2979, %v2978
        %v3016 = vunpack.c.l.b16 %v2980
        %v3017 = vunpack.c.h.b16 %v2980
        %v3018 = vunpack.c.l.b16 %v2981
        %v3019 = vunpack.c.h.b16 %v2981
        %v3020 = vunpack.c.l.b16 %v2982
        %v3021 = vunpack.c.h.b16 %v2982
        %v3022 = vunpack.c.l.b16 %v2983
        %v3023 = vunpack.c.h.b16 %v2983
        %v3024 = vunpack.c.l.b16 %v2984
        %v3025 = vunpack.c.h.b16 %v2984
        %v3026 = vunpack.c.l.b16 %v2985
        %v3027 = vunpack.c.h.b16 %v2985
        %v3028 = vunpack.c.l.b16 %v2986
        %v3029 = vunpack.c.h.b16 %v2986
        %v3030 = vunpack.c.l.b16 %v2987
        %v3031 = vunpack.c.h.b16 %v2987
        %v3032 = vunpack.c.l.b16 %v2988
        %v3033 = vunpack.c.h.b16 %v2988
        %v3034 = vunpack.c.l.b16 %v2989
        %v3035 = vunpack.c.h.b16 %v2989
        %v3036 = vunpack.c.l.b16 %v2990
        %v3037 = vunpack.c.h.b16 %v2990
        %v3038 = vunpack.c.l.b16 %v2991
        %v3039 = vunpack.c.h.b16 %v2991
        %v3040 = vunpack.c.l.b16 %v2992
        %v3041 = vunpack.c.h.b16 %v2992
        %v3042 = vunpack.c.l.b16 %v2993
        %v3043 = vunpack.c.h.b16 %v2993
        %v3044 = vunpack.c.l.b16 %v2994
        %v3045 = vunpack.c.h.b16 %v2994
        %v3046 = vunpack.c.l.b16 %v2995
        %v3047 = vunpack.c.h.b16 %v2995
        %v3048 = vunpack.c.l.b16 %v2996
        %v3049 = vunpack.c.h.b16 %v2996
        %v3050 = vunpack.c.l.b16 %v2997
        %v3051 = vunpack.c.h.b16 %v2997
        %v3052 = vpack.c.b16 %v3016, %v3016
        %v3053 = vpack.c.b16 %v3017, %v3017
        %v3054 = vpack.c.b16 %v3018, %v3018
        %v3055 = vpack.c.b16 %v3019, %v3019
        %v3056 = vpack.c.b16 %v3020, %v3020
        %v3057 = vpack.c.b16 %v3021, %v3021
        %v3058 = vpack.c.b16 %v3022, %v3022
        %v3059 = vpack.c.b16 %v3023, %v3023
        %v3060 = vpack.c.b16 %v3024, %v3024
        %v3061 = vpack.c.b16 %v3025, %v3025
        %v3062 = vpack.c.b16 %v3026, %v3026
        %v3063 = vpack.c.b16 %v3027, %v3027
        %v3064 = vpack.c.b16 %v3028, %v3028
        %v3065 = vpack.c.b16 %v3029, %v3029
        %v3066 = vpack.c.b16 %v3030, %v3030
        %v3067 = vpack.c.b16 %v3031, %v3031
        %v3068 = vpack.c.b16 %v3032, %v3032
        %v3069 = vpack.c.b16 %v3033, %v3033
        %v3070 = vpack.c.b16 %v3034, %v3034
        %v3071 = vpack.c.b16 %v3035, %v3035
        %v3072 = vpack.c.b16 %v3036, %v3036
        %v3073 = vpack.c.b16 %v3037, %v3037
        %v3074 = vpack.c.b16 %v3038, %v3038
        %v3075 = vpack.c.b16 %v3039, %v3039
        %v3076 = vpack.c.b16 %v3040, %v3040
        %v3077 = vpack.c.b16 %v3041, %v3041
        %v3078 = vpack.c.b16 %v3042, %v3042
        %v3079 = vpack.c.b16 %v3043, %v3043
        %v3080 = vpack.c.b16 %v3044, %v3044
        %v3081 = vpack.c.b16 %v3045, %v3045
        %v3082 = vpack.c.b16 %v3046, %v3046
        %v3083 = vpack.c.b16 %v3047, %v3047
        %v3084 = vpack.c.b16 %v3048, %v3048
        %v3085 = vpack.c.b16 %v3049, %v3049
        %v3086 = vpack.c.b16 %v3050, %v3050
        %v3087 = vpack.c.b16 %v3051, %v3051
        %3124 = vst.msk [vmem:[#allocation3] sm:$0xf] %vm596, %v3052
        %3125 = vst.msk [vmem:[#allocation3 + $0x8] sm:$0xf] %vm596, %v3053
        %3126 = vst.msk [vmem:[#allocation3 + $0x10] sm:$0xf] %vm596, %v3054
        %3127 = vst.msk [vmem:[#allocation3 + $0x18] sm:$0xf] %vm596, %v3055
        %3128 = vst.msk [vmem:[#allocation3 + $0x20] sm:$0xf] %vm596, %v3056
        %3129 = vst.msk [vmem:[#allocation3 + $0x28] sm:$0xf] %vm596, %v3057
        %3130 = vst.msk [vmem:[#allocation3 + $0x30] sm:$0xf] %vm596, %v3058
        %3131 = vst.msk [vmem:[#allocation3 + $0x38] sm:$0xf] %vm596, %v3059
        %3132 = vst.msk [vmem:[#allocation3 + $0x40] sm:$0xf] %vm596, %v3060
        %3133 = vst.msk [vmem:[#allocation3 + $0x48] sm:$0xf] %vm596, %v3061
        %3134 = vst.msk [vmem:[#allocation3 + $0x50] sm:$0xf] %vm596, %v3062
        %3135 = vst.msk [vmem:[#allocation3 + $0x58] sm:$0xf] %vm596, %v3063
        %3136 = vst.msk [vmem:[#allocation3 + $0x60] sm:$0xf] %vm596, %v3064
        %3137 = vst.msk [vmem:[#allocation3 + $0x68] sm:$0xf] %vm596, %v3065
        %3138 = vst.msk [vmem:[#allocation3 + $0x70] sm:$0xf] %vm596, %v3066
        %3139 = vst.msk [vmem:[#allocation3 + $0x78] sm:$0xf] %vm596, %v3067
        %3140 = vst.msk [vmem:[#allocation3 + $0x80] sm:$0xf] %vm596, %v3068
        %3141 = vst.msk [vmem:[#allocation3 + $0x88] sm:$0xf] %vm596, %v3069
        %3142 = vst.msk [vmem:[#allocation3 + $0x90] sm:$0xf] %vm596, %v3070
        %3143 = vst.msk [vmem:[#allocation3 + $0x98] sm:$0xf] %vm596, %v3071
        %3144 = vst.msk [vmem:[#allocation3 + $0xa0] sm:$0xf] %vm596, %v3072
        %3145 = vst.msk [vmem:[#allocation3 + $0xa8] sm:$0xf] %vm596, %v3073
        %3146 = vst.msk [vmem:[#allocation3 + $0xb0] sm:$0xf] %vm596, %v3074
        %3147 = vst.msk [vmem:[#allocation3 + $0xb8] sm:$0xf] %vm596, %v3075
        %3148 = vst.msk [vmem:[#allocation3 + $0xc0] sm:$0xf] %vm596, %v3076
        %3149 = vst.msk [vmem:[#allocation3 + $0xc8] sm:$0xf] %vm596, %v3077
        %3150 = vst.msk [vmem:[#allocation3 + $0xd0] sm:$0xf] %vm596, %v3078
        %3151 = vst.msk [vmem:[#allocation3 + $0xd8] sm:$0xf] %vm596, %v3079
        %3152 = vst.msk [vmem:[#allocation3 + $0xe0] sm:$0xf] %vm596, %v3080
        %3153 = vst.msk [vmem:[#allocation3 + $0xe8] sm:$0xf] %vm596, %v3081
        %3154 = vst.msk [vmem:[#allocation3 + $0xf0] sm:$0xf] %vm596, %v3082
        %3155 = vst.msk [vmem:[#allocation3 + $0xf8] sm:$0xf] %vm596, %v3083
        %3156 = vst.msk [vmem:[#allocation3 + $0x100] sm:$0xf] %vm596, %v3084
        %3157 = vst.msk [vmem:[#allocation3 + $0x108] sm:$0xf] %vm596, %v3085
        %3158 = vst.msk [vmem:[#allocation3 + $0x110] sm:$0xf] %vm596, %v3086
        %3159 = vst.msk [vmem:[#allocation3 + $0x118] sm:$0xf] %vm596, %v3087
        %v3160 = vld [vmem:[#allocation2 + $0x1] sm:$0xff]
        %v3161 = vld [vmem:[#allocation2 + $0x9] sm:$0xff]
        %v3162 = vld [vmem:[#allocation2 + $0x19] sm:$0xff]
        %v3163 = vld [vmem:[#allocation2 + $0x21] sm:$0xff]
        %v3164 = vld [vmem:[#allocation2 + $0x31] sm:$0xff]
        %v3165 = vld [vmem:[#allocation2 + $0x39] sm:$0xff]
        %v3166 = vld [vmem:[#allocation2 + $0x49] sm:$0xff]
        %v3167 = vld [vmem:[#allocation2 + $0x51] sm:$0xff]
        %v3168 = vld [vmem:[#allocation2 + $0x61] sm:$0xff]
        %v3169 = vld [vmem:[#allocation2 + $0x69] sm:$0xff]
        %v3170 = vld [vmem:[#allocation2 + $0x79] sm:$0xff]
        %v3171 = vld [vmem:[#allocation2 + $0x81] sm:$0xff]
        %v3172 = vld [vmem:[#allocation2 + $0x91] sm:$0xff]
        %v3173 = vld [vmem:[#allocation2 + $0x99] sm:$0xff]
        %v3174 = vld [vmem:[#allocation2 + $0xa9] sm:$0xff]
        %v3175 = vld [vmem:[#allocation2 + $0xb1] sm:$0xff]
        %v3176 = vld [vmem:[#allocation2 + $0xc1] sm:$0xff]
        %v3177 = vld [vmem:[#allocation2 + $0xc9] sm:$0xff]
        %v3178 = vld [vmem:[#allocation2 + $0xd9] sm:$0xff]
        %v3179 = vld [vmem:[#allocation2 + $0xe1] sm:$0xff]
        %v3180 = vld [vmem:[#allocation2 + $0xf1] sm:$0xff]
        %v3181 = vld [vmem:[#allocation2 + $0xf9] sm:$0xff]
        %v3182 = vld [vmem:[#allocation2 + $0x109] sm:$0xff]
        %v3183 = vld [vmem:[#allocation2 + $0x111] sm:$0xff]
        %v3184 = vld [vmem:[#allocation2 + $0x121] sm:$0xff]
        %v3185 = vld [vmem:[#allocation2 + $0x129] sm:$0xff]
        %v3186 = vld [vmem:[#allocation2 + $0x139] sm:$0xff]
        %v3187 = vld [vmem:[#allocation2 + $0x141] sm:$0xff]
        %v3188 = vld [vmem:[#allocation2 + $0x151] sm:$0xff]
        %v3189 = vld [vmem:[#allocation2 + $0x159] sm:$0xff]
        %v3190 = vld [vmem:[#allocation2 + $0x169] sm:$0xff]
        %v3191 = vld [vmem:[#allocation2 + $0x171] sm:$0xff]
        %v3192 = vld [vmem:[#allocation2 + $0x181] sm:$0xff]
        %v3193 = vld [vmem:[#allocation2 + $0x189] sm:$0xff]
        %v3194 = vld [vmem:[#allocation2 + $0x199] sm:$0xff]
        %v3195 = vld [vmem:[#allocation2 + $0x1a1] sm:$0xff]
        %v3196 = vpack.c.bf16 %v3161, %v3160
        %v3197 = vpack.c.bf16 %v3163, %v3162
        %v3198 = vpack.c.bf16 %v3165, %v3164
        %v3199 = vpack.c.bf16 %v3167, %v3166
        %v3200 = vpack.c.bf16 %v3169, %v3168
        %v3201 = vpack.c.bf16 %v3171, %v3170
        %v3202 = vpack.c.bf16 %v3173, %v3172
        %v3203 = vpack.c.bf16 %v3175, %v3174
        %v3204 = vpack.c.bf16 %v3177, %v3176
        %v3205 = vpack.c.bf16 %v3179, %v3178
        %v3206 = vpack.c.bf16 %v3181, %v3180
        %v3207 = vpack.c.bf16 %v3183, %v3182
        %v3208 = vpack.c.bf16 %v3185, %v3184
        %v3209 = vpack.c.bf16 %v3187, %v3186
        %v3210 = vpack.c.bf16 %v3189, %v3188
        %v3211 = vpack.c.bf16 %v3191, %v3190
        %v3212 = vpack.c.bf16 %v3193, %v3192
        %v3213 = vpack.c.bf16 %v3195, %v3194
        %v3232 = vunpack.c.l.b16 %v3196
        %v3233 = vunpack.c.h.b16 %v3196
        %v3234 = vunpack.c.l.b16 %v3197
        %v3235 = vunpack.c.h.b16 %v3197
        %v3236 = vunpack.c.l.b16 %v3198
        %v3237 = vunpack.c.h.b16 %v3198
        %v3238 = vunpack.c.l.b16 %v3199
        %v3239 = vunpack.c.h.b16 %v3199
        %v3240 = vunpack.c.l.b16 %v3200
        %v3241 = vunpack.c.h.b16 %v3200
        %v3242 = vunpack.c.l.b16 %v3201
        %v3243 = vunpack.c.h.b16 %v3201
        %v3244 = vunpack.c.l.b16 %v3202
        %v3245 = vunpack.c.h.b16 %v3202
        %v3246 = vunpack.c.l.b16 %v3203
        %v3247 = vunpack.c.h.b16 %v3203
        %v3248 = vunpack.c.l.b16 %v3204
        %v3249 = vunpack.c.h.b16 %v3204
        %v3250 = vunpack.c.l.b16 %v3205
        %v3251 = vunpack.c.h.b16 %v3205
        %v3252 = vunpack.c.l.b16 %v3206
        %v3253 = vunpack.c.h.b16 %v3206
        %v3254 = vunpack.c.l.b16 %v3207
        %v3255 = vunpack.c.h.b16 %v3207
        %v3256 = vunpack.c.l.b16 %v3208
        %v3257 = vunpack.c.h.b16 %v3208
        %v3258 = vunpack.c.l.b16 %v3209
        %v3259 = vunpack.c.h.b16 %v3209
        %v3260 = vunpack.c.l.b16 %v3210
        %v3261 = vunpack.c.h.b16 %v3210
        %v3262 = vunpack.c.l.b16 %v3211
        %v3263 = vunpack.c.h.b16 %v3211
        %v3264 = vunpack.c.l.b16 %v3212
        %v3265 = vunpack.c.h.b16 %v3212
        %v3266 = vunpack.c.l.b16 %v3213
        %v3267 = vunpack.c.h.b16 %v3213
        %v3268 = vpack.c.b16 %v3232, %v3232
        %v3269 = vpack.c.b16 %v3233, %v3233
        %v3270 = vpack.c.b16 %v3234, %v3234
        %v3271 = vpack.c.b16 %v3235, %v3235
        %v3272 = vpack.c.b16 %v3236, %v3236
        %v3273 = vpack.c.b16 %v3237, %v3237
        %v3274 = vpack.c.b16 %v3238, %v3238
        %v3275 = vpack.c.b16 %v3239, %v3239
        %v3276 = vpack.c.b16 %v3240, %v3240
        %v3277 = vpack.c.b16 %v3241, %v3241
        %v3278 = vpack.c.b16 %v3242, %v3242
        %v3279 = vpack.c.b16 %v3243, %v3243
        %v3280 = vpack.c.b16 %v3244, %v3244
        %v3281 = vpack.c.b16 %v3245, %v3245
        %v3282 = vpack.c.b16 %v3246, %v3246
        %v3283 = vpack.c.b16 %v3247, %v3247
        %v3284 = vpack.c.b16 %v3248, %v3248
        %v3285 = vpack.c.b16 %v3249, %v3249
        %v3286 = vpack.c.b16 %v3250, %v3250
        %v3287 = vpack.c.b16 %v3251, %v3251
        %v3288 = vpack.c.b16 %v3252, %v3252
        %v3289 = vpack.c.b16 %v3253, %v3253
        %v3290 = vpack.c.b16 %v3254, %v3254
        %v3291 = vpack.c.b16 %v3255, %v3255
        %v3292 = vpack.c.b16 %v3256, %v3256
        %v3293 = vpack.c.b16 %v3257, %v3257
        %v3294 = vpack.c.b16 %v3258, %v3258
        %v3295 = vpack.c.b16 %v3259, %v3259
        %v3296 = vpack.c.b16 %v3260, %v3260
        %v3297 = vpack.c.b16 %v3261, %v3261
        %v3298 = vpack.c.b16 %v3262, %v3262
        %v3299 = vpack.c.b16 %v3263, %v3263
        %v3300 = vpack.c.b16 %v3264, %v3264
        %v3301 = vpack.c.b16 %v3265, %v3265
        %v3302 = vpack.c.b16 %v3266, %v3266
        %v3303 = vpack.c.b16 %v3267, %v3267
        %3304 = vrot.lane.b32.xlu0 %v3268, 64
        %v3305 = vpop.permute.xlu0 %3304
        %3306 = vrot.lane.b32.xlu0 %v3269, 64
        %v3307 = vpop.permute.xlu0 %3306
        %3308 = vrot.lane.b32.xlu0 %v3270, 64
        %v3309 = vpop.permute.xlu0 %3308
        %3310 = vrot.lane.b32.xlu0 %v3271, 64
        %v3311 = vpop.permute.xlu0 %3310
        %3312 = vrot.lane.b32.xlu0 %v3272, 64
        %v3313 = vpop.permute.xlu0 %3312
        %3314 = vrot.lane.b32.xlu0 %v3273, 64
        %v3315 = vpop.permute.xlu0 %3314
        %3316 = vrot.lane.b32.xlu0 %v3274, 64
        %v3317 = vpop.permute.xlu0 %3316
        %3318 = vrot.lane.b32.xlu0 %v3275, 64
        %v3319 = vpop.permute.xlu0 %3318
        %3320 = vrot.lane.b32.xlu0 %v3276, 64
        %v3321 = vpop.permute.xlu0 %3320
        %3322 = vrot.lane.b32.xlu0 %v3277, 64
        %v3323 = vpop.permute.xlu0 %3322
        %3324 = vrot.lane.b32.xlu0 %v3278, 64
        %v3325 = vpop.permute.xlu0 %3324
        %3326 = vrot.lane.b32.xlu0 %v3279, 64
        %v3327 = vpop.permute.xlu0 %3326
        %3328 = vrot.lane.b32.xlu0 %v3280, 64
        %v3329 = vpop.permute.xlu0 %3328
        %3330 = vrot.lane.b32.xlu0 %v3281, 64
        %v3331 = vpop.permute.xlu0 %3330
        %3332 = vrot.lane.b32.xlu0 %v3282, 64
        %v3333 = vpop.permute.xlu0 %3332
        %3334 = vrot.lane.b32.xlu0 %v3283, 64
        %v3335 = vpop.permute.xlu0 %3334
        %3336 = vrot.lane.b32.xlu0 %v3284, 64
        %v3337 = vpop.permute.xlu0 %3336
        %3338 = vrot.lane.b32.xlu0 %v3285, 64
        %v3339 = vpop.permute.xlu0 %3338
        %3340 = vrot.lane.b32.xlu0 %v3286, 64
        %v3341 = vpop.permute.xlu0 %3340
        %3342 = vrot.lane.b32.xlu0 %v3287, 64
        %v3343 = vpop.permute.xlu0 %3342
        %3344 = vrot.lane.b32.xlu0 %v3288, 64
        %v3345 = vpop.permute.xlu0 %3344
        %3346 = vrot.lane.b32.xlu0 %v3289, 64
        %v3347 = vpop.permute.xlu0 %3346
        %3348 = vrot.lane.b32.xlu0 %v3290, 64
        %v3349 = vpop.permute.xlu0 %3348
        %3350 = vrot.lane.b32.xlu0 %v3291, 64
        %v3351 = vpop.permute.xlu0 %3350
        %3352 = vrot.lane.b32.xlu0 %v3292, 64
        %v3353 = vpop.permute.xlu0 %3352
        %3354 = vrot.lane.b32.xlu0 %v3293, 64
        %v3355 = vpop.permute.xlu0 %3354
        %3356 = vrot.lane.b32.xlu0 %v3294, 64
        %v3357 = vpop.permute.xlu0 %3356
        %3358 = vrot.lane.b32.xlu0 %v3295, 64
        %v3359 = vpop.permute.xlu0 %3358
        %3360 = vrot.lane.b32.xlu0 %v3296, 64
        %v3361 = vpop.permute.xlu0 %3360
        %3362 = vrot.lane.b32.xlu0 %v3297, 64
        %v3363 = vpop.permute.xlu0 %3362
        %3364 = vrot.lane.b32.xlu0 %v3298, 64
        %v3365 = vpop.permute.xlu0 %3364
        %3366 = vrot.lane.b32.xlu0 %v3299, 64
        %v3367 = vpop.permute.xlu0 %3366
        %3368 = vrot.lane.b32.xlu0 %v3300, 64
        %v3369 = vpop.permute.xlu0 %3368
        %3370 = vrot.lane.b32.xlu0 %v3301, 64
        %v3371 = vpop.permute.xlu0 %3370
        %3372 = vrot.lane.b32.xlu0 %v3302, 64
        %v3373 = vpop.permute.xlu0 %3372
        %3374 = vrot.lane.b32.xlu0 %v3303, 64
        %v3375 = vpop.permute.xlu0 %3374
        %3412 = vst.msk [vmem:[#allocation3] sm:$0xf] %vm885, %v3305
        %3413 = vst.msk [vmem:[#allocation3 + $0x8] sm:$0xf] %vm885, %v3307
        %3414 = vst.msk [vmem:[#allocation3 + $0x10] sm:$0xf] %vm885, %v3309
        %3415 = vst.msk [vmem:[#allocation3 + $0x18] sm:$0xf] %vm885, %v3311
        %3416 = vst.msk [vmem:[#allocation3 + $0x20] sm:$0xf] %vm885, %v3313
        %3417 = vst.msk [vmem:[#allocation3 + $0x28] sm:$0xf] %vm885, %v3315
        %3418 = vst.msk [vmem:[#allocation3 + $0x30] sm:$0xf] %vm885, %v3317
        %3419 = vst.msk [vmem:[#allocation3 + $0x38] sm:$0xf] %vm885, %v3319
        %3420 = vst.msk [vmem:[#allocation3 + $0x40] sm:$0xf] %vm885, %v3321
        %3421 = vst.msk [vmem:[#allocation3 + $0x48] sm:$0xf] %vm885, %v3323
        %3422 = vst.msk [vmem:[#allocation3 + $0x50] sm:$0xf] %vm885, %v3325
        %3423 = vst.msk [vmem:[#allocation3 + $0x58] sm:$0xf] %vm885, %v3327
        %3424 = vst.msk [vmem:[#allocation3 + $0x60] sm:$0xf] %vm885, %v3329
        %3425 = vst.msk [vmem:[#allocation3 + $0x68] sm:$0xf] %vm885, %v3331
        %3426 = vst.msk [vmem:[#allocation3 + $0x70] sm:$0xf] %vm885, %v3333
        %3427 = vst.msk [vmem:[#allocation3 + $0x78] sm:$0xf] %vm885, %v3335
        %3428 = vst.msk [vmem:[#allocation3 + $0x80] sm:$0xf] %vm885, %v3337
        %3429 = vst.msk [vmem:[#allocation3 + $0x88] sm:$0xf] %vm885, %v3339
        %3430 = vst.msk [vmem:[#allocation3 + $0x90] sm:$0xf] %vm885, %v3341
        %3431 = vst.msk [vmem:[#allocation3 + $0x98] sm:$0xf] %vm885, %v3343
        %3432 = vst.msk [vmem:[#allocation3 + $0xa0] sm:$0xf] %vm885, %v3345
        %3433 = vst.msk [vmem:[#allocation3 + $0xa8] sm:$0xf] %vm885, %v3347
        %3434 = vst.msk [vmem:[#allocation3 + $0xb0] sm:$0xf] %vm885, %v3349
        %3435 = vst.msk [vmem:[#allocation3 + $0xb8] sm:$0xf] %vm885, %v3351
        %3436 = vst.msk [vmem:[#allocation3 + $0xc0] sm:$0xf] %vm885, %v3353
        %3437 = vst.msk [vmem:[#allocation3 + $0xc8] sm:$0xf] %vm885, %v3355
        %3438 = vst.msk [vmem:[#allocation3 + $0xd0] sm:$0xf] %vm885, %v3357
        %3439 = vst.msk [vmem:[#allocation3 + $0xd8] sm:$0xf] %vm885, %v3359
        %3440 = vst.msk [vmem:[#allocation3 + $0xe0] sm:$0xf] %vm885, %v3361
        %3441 = vst.msk [vmem:[#allocation3 + $0xe8] sm:$0xf] %vm885, %v3363
        %3442 = vst.msk [vmem:[#allocation3 + $0xf0] sm:$0xf] %vm885, %v3365
        %3443 = vst.msk [vmem:[#allocation3 + $0xf8] sm:$0xf] %vm885, %v3367
        %3444 = vst.msk [vmem:[#allocation3 + $0x100] sm:$0xf] %vm885, %v3369
        %3445 = vst.msk [vmem:[#allocation3 + $0x108] sm:$0xf] %vm885, %v3371
        %3446 = vst.msk [vmem:[#allocation3 + $0x110] sm:$0xf] %vm885, %v3373
        %3447 = vst.msk [vmem:[#allocation3 + $0x118] sm:$0xf] %vm885, %v3375
        %v3448 = vld [vmem:[#allocation2 + $0x2] sm:$0xff]
        %v3449 = vld [vmem:[#allocation2 + $0xa] sm:$0xff]
        %v3450 = vld [vmem:[#allocation2 + $0x1a] sm:$0xff]
        %v3451 = vld [vmem:[#allocation2 + $0x22] sm:$0xff]
        %v3452 = vld [vmem:[#allocation2 + $0x32] sm:$0xff]
        %v3453 = vld [vmem:[#allocation2 + $0x3a] sm:$0xff]
        %v3454 = vld [vmem:[#allocation2 + $0x4a] sm:$0xff]
        %v3455 = vld [vmem:[#allocation2 + $0x52] sm:$0xff]
        %v3456 = vld [vmem:[#allocation2 + $0x62] sm:$0xff]
        %v3457 = vld [vmem:[#allocation2 + $0x6a] sm:$0xff]
        %v3458 = vld [vmem:[#allocation2 + $0x7a] sm:$0xff]
        %v3459 = vld [vmem:[#allocation2 + $0x82] sm:$0xff]
        %v3460 = vld [vmem:[#allocation2 + $0x92] sm:$0xff]
        %v3461 = vld [vmem:[#allocation2 + $0x9a] sm:$0xff]
        %v3462 = vld [vmem:[#allocation2 + $0xaa] sm:$0xff]
        %v3463 = vld [vmem:[#allocation2 + $0xb2] sm:$0xff]
        %v3464 = vld [vmem:[#allocation2 + $0xc2] sm:$0xff]
        %v3465 = vld [vmem:[#allocation2 + $0xca] sm:$0xff]
        %v3466 = vld [vmem:[#allocation2 + $0xda] sm:$0xff]
        %v3467 = vld [vmem:[#allocation2 + $0xe2] sm:$0xff]
        %v3468 = vld [vmem:[#allocation2 + $0xf2] sm:$0xff]
        %v3469 = vld [vmem:[#allocation2 + $0xfa] sm:$0xff]
        %v3470 = vld [vmem:[#allocation2 + $0x10a] sm:$0xff]
        %v3471 = vld [vmem:[#allocation2 + $0x112] sm:$0xff]
        %v3472 = vld [vmem:[#allocation2 + $0x122] sm:$0xff]
        %v3473 = vld [vmem:[#allocation2 + $0x12a] sm:$0xff]
        %v3474 = vld [vmem:[#allocation2 + $0x13a] sm:$0xff]
        %v3475 = vld [vmem:[#allocation2 + $0x142] sm:$0xff]
        %v3476 = vld [vmem:[#allocation2 + $0x152] sm:$0xff]
        %v3477 = vld [vmem:[#allocation2 + $0x15a] sm:$0xff]
        %v3478 = vld [vmem:[#allocation2 + $0x16a] sm:$0xff]
        %v3479 = vld [vmem:[#allocation2 + $0x172] sm:$0xff]
        %v3480 = vld [vmem:[#allocation2 + $0x182] sm:$0xff]
        %v3481 = vld [vmem:[#allocation2 + $0x18a] sm:$0xff]
        %v3482 = vld [vmem:[#allocation2 + $0x19a] sm:$0xff]
        %v3483 = vld [vmem:[#allocation2 + $0x1a2] sm:$0xff]
        %v3484 = vpack.c.bf16 %v3449, %v3448
        %v3485 = vpack.c.bf16 %v3451, %v3450
        %v3486 = vpack.c.bf16 %v3453, %v3452
        %v3487 = vpack.c.bf16 %v3455, %v3454
        %v3488 = vpack.c.bf16 %v3457, %v3456
        %v3489 = vpack.c.bf16 %v3459, %v3458
        %v3490 = vpack.c.bf16 %v3461, %v3460
        %v3491 = vpack.c.bf16 %v3463, %v3462
        %v3492 = vpack.c.bf16 %v3465, %v3464
        %v3493 = vpack.c.bf16 %v3467, %v3466
        %v3494 = vpack.c.bf16 %v3469, %v3468
        %v3495 = vpack.c.bf16 %v3471, %v3470
        %v3496 = vpack.c.bf16 %v3473, %v3472
        %v3497 = vpack.c.bf16 %v3475, %v3474
        %v3498 = vpack.c.bf16 %v3477, %v3476
        %v3499 = vpack.c.bf16 %v3479, %v3478
        %v3500 = vpack.c.bf16 %v3481, %v3480
        %v3501 = vpack.c.bf16 %v3483, %v3482
        %v3520 = vunpack.c.l.b16 %v3484
        %v3521 = vunpack.c.h.b16 %v3484
        %v3522 = vunpack.c.l.b16 %v3485
        %v3523 = vunpack.c.h.b16 %v3485
        %v3524 = vunpack.c.l.b16 %v3486
        %v3525 = vunpack.c.h.b16 %v3486
        %v3526 = vunpack.c.l.b16 %v3487
        %v3527 = vunpack.c.h.b16 %v3487
        %v3528 = vunpack.c.l.b16 %v3488
        %v3529 = vunpack.c.h.b16 %v3488
        %v3530 = vunpack.c.l.b16 %v3489
        %v3531 = vunpack.c.h.b16 %v3489
        %v3532 = vunpack.c.l.b16 %v3490
        %v3533 = vunpack.c.h.b16 %v3490
        %v3534 = vunpack.c.l.b16 %v3491
        %v3535 = vunpack.c.h.b16 %v3491
        %v3536 = vunpack.c.l.b16 %v3492
        %v3537 = vunpack.c.h.b16 %v3492
        %v3538 = vunpack.c.l.b16 %v3493
        %v3539 = vunpack.c.h.b16 %v3493
        %v3540 = vunpack.c.l.b16 %v3494
        %v3541 = vunpack.c.h.b16 %v3494
        %v3542 = vunpack.c.l.b16 %v3495
        %v3543 = vunpack.c.h.b16 %v3495
        %v3544 = vunpack.c.l.b16 %v3496
        %v3545 = vunpack.c.h.b16 %v3496
        %v3546 = vunpack.c.l.b16 %v3497
        %v3547 = vunpack.c.h.b16 %v3497
        %v3548 = vunpack.c.l.b16 %v3498
        %v3549 = vunpack.c.h.b16 %v3498
        %v3550 = vunpack.c.l.b16 %v3499
        %v3551 = vunpack.c.h.b16 %v3499
        %v3552 = vunpack.c.l.b16 %v3500
        %v3553 = vunpack.c.h.b16 %v3500
        %v3554 = vunpack.c.l.b16 %v3501
        %v3555 = vunpack.c.h.b16 %v3501
        %v3556 = vpack.c.b16 %v3520, %v3520
        %v3557 = vpack.c.b16 %v3521, %v3521
        %v3558 = vpack.c.b16 %v3522, %v3522
        %v3559 = vpack.c.b16 %v3523, %v3523
        %v3560 = vpack.c.b16 %v3524, %v3524
        %v3561 = vpack.c.b16 %v3525, %v3525
        %v3562 = vpack.c.b16 %v3526, %v3526
        %v3563 = vpack.c.b16 %v3527, %v3527
        %v3564 = vpack.c.b16 %v3528, %v3528
        %v3565 = vpack.c.b16 %v3529, %v3529
        %v3566 = vpack.c.b16 %v3530, %v3530
        %v3567 = vpack.c.b16 %v3531, %v3531
        %v3568 = vpack.c.b16 %v3532, %v3532
        %v3569 = vpack.c.b16 %v3533, %v3533
        %v3570 = vpack.c.b16 %v3534, %v3534
        %v3571 = vpack.c.b16 %v3535, %v3535
        %v3572 = vpack.c.b16 %v3536, %v3536
        %v3573 = vpack.c.b16 %v3537, %v3537
        %v3574 = vpack.c.b16 %v3538, %v3538
        %v3575 = vpack.c.b16 %v3539, %v3539
        %v3576 = vpack.c.b16 %v3540, %v3540
        %v3577 = vpack.c.b16 %v3541, %v3541
        %v3578 = vpack.c.b16 %v3542, %v3542
        %v3579 = vpack.c.b16 %v3543, %v3543
        %v3580 = vpack.c.b16 %v3544, %v3544
        %v3581 = vpack.c.b16 %v3545, %v3545
        %v3582 = vpack.c.b16 %v3546, %v3546
        %v3583 = vpack.c.b16 %v3547, %v3547
        %v3584 = vpack.c.b16 %v3548, %v3548
        %v3585 = vpack.c.b16 %v3549, %v3549
        %v3586 = vpack.c.b16 %v3550, %v3550
        %v3587 = vpack.c.b16 %v3551, %v3551
        %v3588 = vpack.c.b16 %v3552, %v3552
        %v3589 = vpack.c.b16 %v3553, %v3553
        %v3590 = vpack.c.b16 %v3554, %v3554
        %v3591 = vpack.c.b16 %v3555, %v3555
        %3628 = vst.msk [vmem:[#allocation3 + $0x4] sm:$0xf] %vm596, %v3556
        %3629 = vst.msk [vmem:[#allocation3 + $0xc] sm:$0xf] %vm596, %v3557
        %3630 = vst.msk [vmem:[#allocation3 + $0x14] sm:$0xf] %vm596, %v3558
        %3631 = vst.msk [vmem:[#allocation3 + $0x1c] sm:$0xf] %vm596, %v3559
        %3632 = vst.msk [vmem:[#allocation3 + $0x24] sm:$0xf] %vm596, %v3560
        %3633 = vst.msk [vmem:[#allocation3 + $0x2c] sm:$0xf] %vm596, %v3561
        %3634 = vst.msk [vmem:[#allocation3 + $0x34] sm:$0xf] %vm596, %v3562
        %3635 = vst.msk [vmem:[#allocation3 + $0x3c] sm:$0xf] %vm596, %v3563
        %3636 = vst.msk [vmem:[#allocation3 + $0x44] sm:$0xf] %vm596, %v3564
        %3637 = vst.msk [vmem:[#allocation3 + $0x4c] sm:$0xf] %vm596, %v3565
        %3638 = vst.msk [vmem:[#allocation3 + $0x54] sm:$0xf] %vm596, %v3566
        %3639 = vst.msk [vmem:[#allocation3 + $0x5c] sm:$0xf] %vm596, %v3567
        %3640 = vst.msk [vmem:[#allocation3 + $0x64] sm:$0xf] %vm596, %v3568
        %3641 = vst.msk [vmem:[#allocation3 + $0x6c] sm:$0xf] %vm596, %v3569
        %3642 = vst.msk [vmem:[#allocation3 + $0x74] sm:$0xf] %vm596, %v3570
        %3643 = vst.msk [vmem:[#allocation3 + $0x7c] sm:$0xf] %vm596, %v3571
        %3644 = vst.msk [vmem:[#allocation3 + $0x84] sm:$0xf] %vm596, %v3572
        %3645 = vst.msk [vmem:[#allocation3 + $0x8c] sm:$0xf] %vm596, %v3573
        %3646 = vst.msk [vmem:[#allocation3 + $0x94] sm:$0xf] %vm596, %v3574
        %3647 = vst.msk [vmem:[#allocation3 + $0x9c] sm:$0xf] %vm596, %v3575
        %3648 = vst.msk [vmem:[#allocation3 + $0xa4] sm:$0xf] %vm596, %v3576
        %3649 = vst.msk [vmem:[#allocation3 + $0xac] sm:$0xf] %vm596, %v3577
        %3650 = vst.msk [vmem:[#allocation3 + $0xb4] sm:$0xf] %vm596, %v3578
        %3651 = vst.msk [vmem:[#allocation3 + $0xbc] sm:$0xf] %vm596, %v3579
        %3652 = vst.msk [vmem:[#allocation3 + $0xc4] sm:$0xf] %vm596, %v3580
        %3653 = vst.msk [vmem:[#allocation3 + $0xcc] sm:$0xf] %vm596, %v3581
        %3654 = vst.msk [vmem:[#allocation3 + $0xd4] sm:$0xf] %vm596, %v3582
        %3655 = vst.msk [vmem:[#allocation3 + $0xdc] sm:$0xf] %vm596, %v3583
        %3656 = vst.msk [vmem:[#allocation3 + $0xe4] sm:$0xf] %vm596, %v3584
        %3657 = vst.msk [vmem:[#allocation3 + $0xec] sm:$0xf] %vm596, %v3585
        %3658 = vst.msk [vmem:[#allocation3 + $0xf4] sm:$0xf] %vm596, %v3586
        %3659 = vst.msk [vmem:[#allocation3 + $0xfc] sm:$0xf] %vm596, %v3587
        %3660 = vst.msk [vmem:[#allocation3 + $0x104] sm:$0xf] %vm596, %v3588
        %3661 = vst.msk [vmem:[#allocation3 + $0x10c] sm:$0xf] %vm596, %v3589
        %3662 = vst.msk [vmem:[#allocation3 + $0x114] sm:$0xf] %vm596, %v3590
        %3663 = vst.msk [vmem:[#allocation3 + $0x11c] sm:$0xf] %vm596, %v3591
        %v3664 = vld [vmem:[#allocation3] sm:$0xff]
        %v3665 = vld [vmem:[#allocation3 + $0x8] sm:$0xff]
        %v3666 = vld [vmem:[#allocation3 + $0x10] sm:$0xff]
        %v3667 = vld [vmem:[#allocation3 + $0x18] sm:$0xff]
        %v3668 = vld [vmem:[#allocation3 + $0x20] sm:$0xff]
        %v3669 = vld [vmem:[#allocation3 + $0x28] sm:$0xff]
        %v3670 = vld [vmem:[#allocation3 + $0x30] sm:$0xff]
        %v3671 = vld [vmem:[#allocation3 + $0x38] sm:$0xff]
        %v3672 = vld [vmem:[#allocation3 + $0x40] sm:$0xff]
        %v3673 = vld [vmem:[#allocation3 + $0x48] sm:$0xff]
        %v3674 = vld [vmem:[#allocation3 + $0x50] sm:$0xff]
        %v3675 = vld [vmem:[#allocation3 + $0x58] sm:$0xff]
        %v3676 = vld [vmem:[#allocation3 + $0x60] sm:$0xff]
        %v3677 = vld [vmem:[#allocation3 + $0x68] sm:$0xff]
        %v3678 = vld [vmem:[#allocation3 + $0x70] sm:$0xff]
        %v3679 = vld [vmem:[#allocation3 + $0x78] sm:$0xff]
        %v3680 = vld [vmem:[#allocation3 + $0x80] sm:$0xff]
        %v3681 = vld [vmem:[#allocation3 + $0x88] sm:$0xff]
        %v3682 = vld [vmem:[#allocation3 + $0x90] sm:$0xff]
        %v3683 = vld [vmem:[#allocation3 + $0x98] sm:$0xff]
        %v3684 = vld [vmem:[#allocation3 + $0xa0] sm:$0xff]
        %v3685 = vld [vmem:[#allocation3 + $0xa8] sm:$0xff]
        %v3686 = vld [vmem:[#allocation3 + $0xb0] sm:$0xff]
        %v3687 = vld [vmem:[#allocation3 + $0xb8] sm:$0xff]
        %v3688 = vld [vmem:[#allocation3 + $0xc0] sm:$0xff]
        %v3689 = vld [vmem:[#allocation3 + $0xc8] sm:$0xff]
        %v3690 = vld [vmem:[#allocation3 + $0xd0] sm:$0xff]
        %v3691 = vld [vmem:[#allocation3 + $0xd8] sm:$0xff]
        %v3692 = vld [vmem:[#allocation3 + $0xe0] sm:$0xff]
        %v3693 = vld [vmem:[#allocation3 + $0xe8] sm:$0xff]
        %v3694 = vld [vmem:[#allocation3 + $0xf0] sm:$0xff]
        %v3695 = vld [vmem:[#allocation3 + $0xf8] sm:$0xff]
        %v3696 = vld [vmem:[%s3] sm:$0xf]
        %v3697 = vld [vmem:[%s3 + $0x4] sm:$0xf]
        %v3698 = vld [vmem:[%s3 + $0x8] sm:$0xf]
        %v3699 = vld [vmem:[%s3 + $0xc] sm:$0xf]
        %v3700 = vld [vmem:[%s3 + $0x10] sm:$0xf]
        %v3701 = vld [vmem:[%s3 + $0x14] sm:$0xf]
        %v3702 = vld [vmem:[%s3 + $0x18] sm:$0xf]
        %v3703 = vld [vmem:[%s3 + $0x1c] sm:$0xf]
        %v3704 = vld [vmem:[%s3 + $0x20] sm:$0xf]
        %v3705 = vld [vmem:[%s3 + $0x24] sm:$0xf]
        %v3706 = vld [vmem:[%s3 + $0x28] sm:$0xf]
        %v3707 = vld [vmem:[%s3 + $0x2c] sm:$0xf]
        %v3708 = vld [vmem:[%s3 + $0x30] sm:$0xf]
        %v3709 = vld [vmem:[%s3 + $0x34] sm:$0xf]
        %v3710 = vld [vmem:[%s3 + $0x38] sm:$0xf]
        %v3711 = vld [vmem:[%s3 + $0x3c] sm:$0xf]
        %v3712 = vld [vmem:[%s3 + $0x40] sm:$0xf]
        %v3713 = vld [vmem:[%s3 + $0x44] sm:$0xf]
        %v3714 = vld [vmem:[%s3 + $0x48] sm:$0xf]
        %v3715 = vld [vmem:[%s3 + $0x4c] sm:$0xf]
        %v3716 = vld [vmem:[%s3 + $0x50] sm:$0xf]
        %v3717 = vld [vmem:[%s3 + $0x54] sm:$0xf]
        %v3718 = vld [vmem:[%s3 + $0x58] sm:$0xf]
        %v3719 = vld [vmem:[%s3 + $0x5c] sm:$0xf]
        %v3752 = vunpack.c.l.b16 %v3664
        %v3753 = vunpack.c.h.b16 %v3664
        %v3754 = vunpack.c.l.b16 %v3665
        %v3755 = vunpack.c.h.b16 %v3665
        %v3756 = vunpack.c.l.b16 %v3666
        %v3757 = vunpack.c.h.b16 %v3666
        %v3758 = vunpack.c.l.b16 %v3667
        %v3759 = vunpack.c.h.b16 %v3667
        %v3760 = vunpack.c.l.b16 %v3668
        %v3761 = vunpack.c.h.b16 %v3668
        %v3762 = vunpack.c.l.b16 %v3669
        %v3763 = vunpack.c.h.b16 %v3669
        %v3764 = vunpack.c.l.b16 %v3670
        %v3765 = vunpack.c.h.b16 %v3670
        %v3766 = vunpack.c.l.b16 %v3671
        %v3767 = vunpack.c.h.b16 %v3671
        %v3768 = vunpack.c.l.b16 %v3672
        %v3769 = vunpack.c.h.b16 %v3672
        %v3770 = vunpack.c.l.b16 %v3673
        %v3771 = vunpack.c.h.b16 %v3673
        %v3772 = vunpack.c.l.b16 %v3674
        %v3773 = vunpack.c.h.b16 %v3674
        %v3774 = vunpack.c.l.b16 %v3675
        %v3775 = vunpack.c.h.b16 %v3675
        %v3776 = vunpack.c.l.b16 %v3676
        %v3777 = vunpack.c.h.b16 %v3676
        %v3778 = vunpack.c.l.b16 %v3677
        %v3779 = vunpack.c.h.b16 %v3677
        %v3780 = vunpack.c.l.b16 %v3678
        %v3781 = vunpack.c.h.b16 %v3678
        %v3782 = vunpack.c.l.b16 %v3679
        %v3783 = vunpack.c.h.b16 %v3679
        %v3784 = vunpack.c.l.b16 %v3680
        %v3785 = vunpack.c.h.b16 %v3680
        %v3786 = vunpack.c.l.b16 %v3681
        %v3787 = vunpack.c.h.b16 %v3681
        %v3788 = vunpack.c.l.b16 %v3682
        %v3789 = vunpack.c.h.b16 %v3682
        %v3790 = vunpack.c.l.b16 %v3683
        %v3791 = vunpack.c.h.b16 %v3683
        %v3792 = vunpack.c.l.b16 %v3684
        %v3793 = vunpack.c.h.b16 %v3684
        %v3794 = vunpack.c.l.b16 %v3685
        %v3795 = vunpack.c.h.b16 %v3685
        %v3796 = vunpack.c.l.b16 %v3686
        %v3797 = vunpack.c.h.b16 %v3686
        %v3798 = vunpack.c.l.b16 %v3687
        %v3799 = vunpack.c.h.b16 %v3687
        %v3800 = vunpack.c.l.b16 %v3688
        %v3801 = vunpack.c.h.b16 %v3688
        %v3802 = vunpack.c.l.b16 %v3689
        %v3803 = vunpack.c.h.b16 %v3689
        %v3804 = vunpack.c.l.b16 %v3690
        %v3805 = vunpack.c.h.b16 %v3690
        %v3806 = vunpack.c.l.b16 %v3691
        %v3807 = vunpack.c.h.b16 %v3691
        %v3808 = vunpack.c.l.b16 %v3692
        %v3809 = vunpack.c.h.b16 %v3692
        %v3810 = vunpack.c.l.b16 %v3693
        %v3811 = vunpack.c.h.b16 %v3693
        %v3812 = vunpack.c.l.b16 %v3694
        %v3813 = vunpack.c.h.b16 %v3694
        %v3814 = vunpack.c.l.b16 %v3695
        %v3815 = vunpack.c.h.b16 %v3695
        %v3816 = vpack.c.b16 %v3754, %v3752
        %v3817 = vpack.c.b16 %v3755, %v3753
        %v3818 = vpack.c.b16 %v3758, %v3756
        %v3819 = vpack.c.b16 %v3759, %v3757
        %v3820 = vpack.c.b16 %v3762, %v3760
        %v3821 = vpack.c.b16 %v3763, %v3761
        %v3822 = vpack.c.b16 %v3766, %v3764
        %v3823 = vpack.c.b16 %v3767, %v3765
        %v3824 = vpack.c.b16 %v3770, %v3768
        %v3825 = vpack.c.b16 %v3771, %v3769
        %v3826 = vpack.c.b16 %v3774, %v3772
        %v3827 = vpack.c.b16 %v3775, %v3773
        %v3828 = vpack.c.b16 %v3778, %v3776
        %v3829 = vpack.c.b16 %v3779, %v3777
        %v3830 = vpack.c.b16 %v3782, %v3780
        %v3831 = vpack.c.b16 %v3783, %v3781
        %v3832 = vpack.c.b16 %v3786, %v3784
        %v3833 = vpack.c.b16 %v3787, %v3785
        %v3834 = vpack.c.b16 %v3790, %v3788
        %v3835 = vpack.c.b16 %v3791, %v3789
        %v3836 = vpack.c.b16 %v3794, %v3792
        %v3837 = vpack.c.b16 %v3795, %v3793
        %v3838 = vpack.c.b16 %v3798, %v3796
        %v3839 = vpack.c.b16 %v3799, %v3797
        %v3840 = vpack.c.b16 %v3802, %v3800
        %v3841 = vpack.c.b16 %v3803, %v3801
        %v3842 = vpack.c.b16 %v3806, %v3804
        %v3843 = vpack.c.b16 %v3807, %v3805
        %v3844 = vpack.c.b16 %v3810, %v3808
        %v3845 = vpack.c.b16 %v3811, %v3809
        %v3846 = vpack.c.b16 %v3814, %v3812
        %v3847 = vpack.c.b16 %v3815, %v3813
        %v3888 = vunpack.c.l.b16 %v3696
        %v3889 = vunpack.c.l.b16 %v3697
        %v3890 = vunpack.c.l.b16 %v3698
        %v3891 = vunpack.c.l.b16 %v3699
        %v3892 = vunpack.c.l.b16 %v3700
        %v3893 = vunpack.c.l.b16 %v3701
        %v3894 = vunpack.c.l.b16 %v3702
        %v3895 = vunpack.c.l.b16 %v3703
        %v3896 = vunpack.c.l.b16 %v3704
        %v3897 = vunpack.c.l.b16 %v3705
        %v3898 = vunpack.c.l.b16 %v3706
        %v3899 = vunpack.c.l.b16 %v3707
        %v3900 = vunpack.c.l.b16 %v3708
        %v3901 = vunpack.c.l.b16 %v3709
        %v3902 = vunpack.c.l.b16 %v3710
        %v3903 = vunpack.c.l.b16 %v3711
        %v3904 = vunpack.c.l.b16 %v3712
        %v3905 = vunpack.c.l.b16 %v3713
        %v3906 = vunpack.c.l.b16 %v3714
        %v3907 = vunpack.c.l.b16 %v3715
        %v3908 = vunpack.c.l.b16 %v3716
        %v3909 = vunpack.c.l.b16 %v3717
        %v3910 = vunpack.c.l.b16 %v3718
        %v3911 = vunpack.c.l.b16 %v3719
        %v3912 = vpack.c.b16 %v3889, %v3888
        %v3913 = vpack.c.b16 %v3891, %v3890
        %v3914 = vpack.c.b16 %v3893, %v3892
        %v3915 = vpack.c.b16 %v3895, %v3894
        %v3916 = vpack.c.b16 %v3897, %v3896
        %v3917 = vpack.c.b16 %v3899, %v3898
        %v3918 = vpack.c.b16 %v3901, %v3900
        %v3919 = vpack.c.b16 %v3903, %v3902
        %v3920 = vpack.c.b16 %v3905, %v3904
        %v3921 = vpack.c.b16 %v3907, %v3906
        %v3922 = vpack.c.b16 %v3909, %v3908
        %v3923 = vpack.c.b16 %v3911, %v3910
        %v3937 = vsel %vm305, %v3817, 0
        %v3940 = vsel %vm305, %v3819, 0
        %v3943 = vsel %vm305, %v3821, 0
        %v3946 = vsel %vm305, %v3823, 0
        %v3949 = vsel %vm305, %v3825, 0
        %v3952 = vsel %vm305, %v3827, 0
        %v3955 = vsel %vm305, %v3829, 0
        %v3958 = vsel %vm305, %v3831, 0
        %v3961 = vsel %vm305, %v3833, 0
        %v3964 = vsel %vm305, %v3835, 0
        %v3967 = vsel %vm305, %v3837, 0
        %v3970 = vsel %vm305, %v3839, 0
        %v3973 = vsel %vm305, %v3841, 0
        %v3976 = vsel %vm305, %v3843, 0
        %v3979 = vsel %vm305, %v3845, 0
        %v3982 = vsel %vm305, %v3847, 0
        %3984 = vmatprep.subr.bf16.mxu0 0
        %3985 = vmatpush1.bf16.msra.mxu0 %v3919
        %3986 = vmatprep.subr.bf16.mxu0 0
        %3987 = vmatpush1.bf16.msra.mxu0 %v3918
        %3988 = vmatprep.subr.bf16.mxu0 0
        %3989 = vmatpush1.bf16.msra.mxu0 %v3917
        %3990 = vmatprep.subr.bf16.mxu0 0
        %3991 = vmatpush1.bf16.msra.mxu0 %v3916
        %3992 = vmatprep.subr.bf16.mxu0 0
        %3993 = vmatpush1.bf16.msra.mxu0 %v3915
        %3994 = vmatprep.subr.bf16.mxu0 0
        %3995 = vmatpush1.bf16.msra.mxu0 %v3914
        %3996 = vmatprep.subr.bf16.mxu0 0
        %3997 = vmatpush1.bf16.msra.mxu0 %v3913
        %3998 = vmatprep.subr.bf16.mxu0 0
        %3999 = vmatpush1.bf16.msra.mxu0 %v3912
        %4000 = vmatprep.subr.bf16.mxu0 0
        %4001 = vmatpush2.bf16.msra.mxu0 0
        %4002 = vmatprep.subr.bf16.mxu0 0
        %4003 = vmatpush2.bf16.msra.mxu0 0
        %4004 = vmatprep.subr.bf16.mxu0 0
        %4005 = vmatpush2.bf16.msra.mxu0 0
        %4006 = vmatprep.subr.bf16.mxu0 0
        %4007 = vmatpush2.bf16.msra.mxu0 0
        %4008 = vmatprep.subr.bf16.mxu0 0
        %4009 = vmatpush2.bf16.msra.mxu0 %v3923
        %4010 = vmatprep.subr.bf16.mxu0 0
        %4011 = vmatpush2.bf16.msra.mxu0 %v3922
        %4012 = vmatprep.subr.bf16.mxu0 0
        %4013 = vmatpush2.bf16.msra.mxu0 %v3921
        %4014 = vmatprep.subr.bf16.mxu0 0
        %4015 = vmatpush2.bf16.msra.mxu0 %v3920
        %4016 = vmatprep.mubr.bf16.mxu0 %v3937
        %4017 = vmatmul.mubr.bf16.gmra.mxu0 %v3816
        %v4018 = vpop.f32.mrf.mxu0
        %v4019 = vadd.f32 0.0, %v4018
        %v4020 = vpop.f32.mrf.mxu0
        %v4021 = vpop.f32.mrf.mxu0
        %v4022 = vadd.f32 0.0, %v4021
        %v4023 = vpop.f32.mrf.mxu0
        %4024 = vmatprep.mubr.bf16.mxu0 %v3940
        %4025 = vmatmul.mubr.bf16.gmra.mxu0 %v3818
        %v4026 = vpop.f32.mrf.mxu0
        %v4027 = vadd.f32 0.0, %v4026
        %v4028 = vpop.f32.mrf.mxu0
        %v4029 = vpop.f32.mrf.mxu0
        %v4030 = vadd.f32 0.0, %v4029
        %v4031 = vpop.f32.mrf.mxu0
        %4032 = vmatprep.mubr.bf16.mxu0 %v3943
        %4033 = vmatmul.mubr.bf16.gmra.mxu0 %v3820
        %v4034 = vpop.f32.mrf.mxu0
        %v4035 = vadd.f32 0.0, %v4034
        %v4036 = vpop.f32.mrf.mxu0
        %v4037 = vpop.f32.mrf.mxu0
        %v4038 = vadd.f32 0.0, %v4037
        %v4039 = vpop.f32.mrf.mxu0
        %4040 = vmatprep.mubr.bf16.mxu0 %v3946
        %4041 = vmatmul.mubr.bf16.gmra.mxu0 %v3822
        %v4042 = vpop.f32.mrf.mxu0
        %v4043 = vadd.f32 0.0, %v4042
        %v4044 = vpop.f32.mrf.mxu0
        %v4045 = vpop.f32.mrf.mxu0
        %v4046 = vadd.f32 0.0, %v4045
        %v4047 = vpop.f32.mrf.mxu0
        %4048 = vmatprep.mubr.bf16.mxu0 %v3949
        %4049 = vmatmul.mubr.bf16.gmra.mxu0 %v3824
        %v4050 = vpop.f32.mrf.mxu0
        %v4051 = vadd.f32 0.0, %v4050
        %v4052 = vpop.f32.mrf.mxu0
        %v4053 = vpop.f32.mrf.mxu0
        %v4054 = vadd.f32 0.0, %v4053
        %v4055 = vpop.f32.mrf.mxu0
        %4056 = vmatprep.mubr.bf16.mxu0 %v3952
        %4057 = vmatmul.mubr.bf16.gmra.mxu0 %v3826
        %v4058 = vpop.f32.mrf.mxu0
        %v4059 = vadd.f32 0.0, %v4058
        %v4060 = vpop.f32.mrf.mxu0
        %v4061 = vpop.f32.mrf.mxu0
        %v4062 = vadd.f32 0.0, %v4061
        %v4063 = vpop.f32.mrf.mxu0
        %4064 = vmatprep.mubr.bf16.mxu0 %v3955
        %4065 = vmatmul.mubr.bf16.gmra.mxu0 %v3828
        %v4066 = vpop.f32.mrf.mxu0
        %v4067 = vadd.f32 0.0, %v4066
        %v4068 = vpop.f32.mrf.mxu0
        %v4069 = vpop.f32.mrf.mxu0
        %v4070 = vadd.f32 0.0, %v4069
        %v4071 = vpop.f32.mrf.mxu0
        %4072 = vmatprep.mubr.bf16.mxu0 %v3958
        %4073 = vmatmul.mubr.bf16.gmra.mxu0 %v3830
        %v4074 = vpop.f32.mrf.mxu0
        %v4075 = vadd.f32 0.0, %v4074
        %v4076 = vpop.f32.mrf.mxu0
        %v4077 = vpop.f32.mrf.mxu0
        %v4078 = vadd.f32 0.0, %v4077
        %v4079 = vpop.f32.mrf.mxu0
        %4080 = vmatprep.mubr.bf16.mxu0 %v3961
        %4081 = vmatmul.mubr.bf16.gmra.mxu0 %v3832
        %v4082 = vpop.f32.mrf.mxu0
        %v4083 = vadd.f32 0.0, %v4082
        %v4084 = vpop.f32.mrf.mxu0
        %v4085 = vpop.f32.mrf.mxu0
        %v4086 = vadd.f32 0.0, %v4085
        %v4087 = vpop.f32.mrf.mxu0
        %4088 = vmatprep.mubr.bf16.mxu0 %v3964
        %4089 = vmatmul.mubr.bf16.gmra.mxu0 %v3834
        %v4090 = vpop.f32.mrf.mxu0
        %v4091 = vadd.f32 0.0, %v4090
        %v4092 = vpop.f32.mrf.mxu0
        %v4093 = vpop.f32.mrf.mxu0
        %v4094 = vadd.f32 0.0, %v4093
        %v4095 = vpop.f32.mrf.mxu0
        %4096 = vmatprep.mubr.bf16.mxu0 %v3967
        %4097 = vmatmul.mubr.bf16.gmra.mxu0 %v3836
        %v4098 = vpop.f32.mrf.mxu0
        %v4099 = vadd.f32 0.0, %v4098
        %v4100 = vpop.f32.mrf.mxu0
        %v4101 = vpop.f32.mrf.mxu0
        %v4102 = vadd.f32 0.0, %v4101
        %v4103 = vpop.f32.mrf.mxu0
        %4104 = vmatprep.mubr.bf16.mxu0 %v3970
        %4105 = vmatmul.mubr.bf16.gmra.mxu0 %v3838
        %v4106 = vpop.f32.mrf.mxu0
        %v4107 = vadd.f32 0.0, %v4106
        %v4108 = vpop.f32.mrf.mxu0
        %v4109 = vpop.f32.mrf.mxu0
        %v4110 = vadd.f32 0.0, %v4109
        %v4111 = vpop.f32.mrf.mxu0
        %4112 = vmatprep.mubr.bf16.mxu0 %v3973
        %4113 = vmatmul.mubr.bf16.gmra.mxu0 %v3840
        %v4114 = vpop.f32.mrf.mxu0
        %v4115 = vadd.f32 0.0, %v4114
        %v4116 = vpop.f32.mrf.mxu0
        %v4117 = vpop.f32.mrf.mxu0
        %v4118 = vadd.f32 0.0, %v4117
        %v4119 = vpop.f32.mrf.mxu0
        %4120 = vmatprep.mubr.bf16.mxu0 %v3976
        %4121 = vmatmul.mubr.bf16.gmra.mxu0 %v3842
        %v4122 = vpop.f32.mrf.mxu0
        %v4123 = vadd.f32 0.0, %v4122
        %v4124 = vpop.f32.mrf.mxu0
        %v4125 = vpop.f32.mrf.mxu0
        %v4126 = vadd.f32 0.0, %v4125
        %v4127 = vpop.f32.mrf.mxu0
        %4128 = vmatprep.mubr.bf16.mxu0 %v3979
        %4129 = vmatmul.mubr.bf16.gmra.mxu0 %v3844
        %v4130 = vpop.f32.mrf.mxu0
        %v4131 = vadd.f32 0.0, %v4130
        %v4132 = vpop.f32.mrf.mxu0
        %v4133 = vpop.f32.mrf.mxu0
        %v4134 = vadd.f32 0.0, %v4133
        %v4135 = vpop.f32.mrf.mxu0
        %4136 = vmatprep.mubr.bf16.mxu0 %v3982
        %4137 = vmatmul.mubr.bf16.gmra.mxu0 %v3846
        %v4138 = vpop.f32.mrf.mxu0
        %v4139 = vadd.f32 0.0, %v4138
        %v4140 = vpop.f32.mrf.mxu0
        %v4141 = vpop.f32.mrf.mxu0
        %v4142 = vadd.f32 0.0, %v4141
        %v4143 = vpop.f32.mrf.mxu0
        %4144 = vdwg.mxu0
        %4145 = vst.msk [vmem:[#allocation4] sm:$0xff] %vm305, %v4019
        %4146 = vst.msk [vmem:[#allocation4 + $0x8] sm:$0xff] %vm305, %v4022
        %4147 = vst.msk [vmem:[#allocation4 + $0x10] sm:$0xff] %vm305, %v4027
        %4148 = vst.msk [vmem:[#allocation4 + $0x18] sm:$0xff] %vm305, %v4030
        %4149 = vst.msk [vmem:[#allocation4 + $0x20] sm:$0xff] %vm305, %v4035
        %4150 = vst.msk [vmem:[#allocation4 + $0x28] sm:$0xff] %vm305, %v4038
        %4151 = vst.msk [vmem:[#allocation4 + $0x30] sm:$0xff] %vm305, %v4043
        %4152 = vst.msk [vmem:[#allocation4 + $0x38] sm:$0xff] %vm305, %v4046
        %4153 = vst.msk [vmem:[#allocation4 + $0x40] sm:$0xff] %vm305, %v4051
        %4154 = vst.msk [vmem:[#allocation4 + $0x48] sm:$0xff] %vm305, %v4054
        %4155 = vst.msk [vmem:[#allocation4 + $0x50] sm:$0xff] %vm305, %v4059
        %4156 = vst.msk [vmem:[#allocation4 + $0x58] sm:$0xff] %vm305, %v4062
        %4157 = vst.msk [vmem:[#allocation4 + $0x60] sm:$0xff] %vm305, %v4067
        %4158 = vst.msk [vmem:[#allocation4 + $0x68] sm:$0xff] %vm305, %v4070
        %4159 = vst.msk [vmem:[#allocation4 + $0x70] sm:$0xff] %vm305, %v4075
        %4160 = vst.msk [vmem:[#allocation4 + $0x78] sm:$0xff] %vm305, %v4078
        %4161 = vst.msk [vmem:[#allocation4 + $0x80] sm:$0xff] %vm305, %v4083
        %4162 = vst.msk [vmem:[#allocation4 + $0x88] sm:$0xff] %vm305, %v4086
        %4163 = vst.msk [vmem:[#allocation4 + $0x90] sm:$0xff] %vm305, %v4091
        %4164 = vst.msk [vmem:[#allocation4 + $0x98] sm:$0xff] %vm305, %v4094
        %4165 = vst.msk [vmem:[#allocation4 + $0xa0] sm:$0xff] %vm305, %v4099
        %4166 = vst.msk [vmem:[#allocation4 + $0xa8] sm:$0xff] %vm305, %v4102
        %4167 = vst.msk [vmem:[#allocation4 + $0xb0] sm:$0xff] %vm305, %v4107
        %4168 = vst.msk [vmem:[#allocation4 + $0xb8] sm:$0xff] %vm305, %v4110
        %4169 = vst.msk [vmem:[#allocation4 + $0xc0] sm:$0xff] %vm305, %v4115
        %4170 = vst.msk [vmem:[#allocation4 + $0xc8] sm:$0xff] %vm305, %v4118
        %4171 = vst.msk [vmem:[#allocation4 + $0xd0] sm:$0xff] %vm305, %v4123
        %4172 = vst.msk [vmem:[#allocation4 + $0xd8] sm:$0xff] %vm305, %v4126
        %4173 = vst.msk [vmem:[#allocation4 + $0xe0] sm:$0xff] %vm305, %v4131
        %4174 = vst.msk [vmem:[#allocation4 + $0xe8] sm:$0xff] %vm305, %v4134
        %4175 = vst.msk [vmem:[#allocation4 + $0xf0] sm:$0xff] %vm305, %v4139
        %4176 = vst.msk [vmem:[#allocation4 + $0xf8] sm:$0xff] %vm305, %v4142
        %v4177 = vld [vmem:[%s1651] sm:$0xff]
        %v4178 = vld [vmem:[%s1651 + $0x8] sm:$0xff]
        %v4179 = vld [vmem:[%s1651 + $0x10] sm:$0xff]
        %v4180 = vld [vmem:[%s1651 + $0x18] sm:$0xff]
        %v4181 = vld [vmem:[%s1651 + $0x20] sm:$0xff]
        %v4182 = vld [vmem:[%s1651 + $0x28] sm:$0xff]
        %v4183 = vld [vmem:[%s1651 + $0x30] sm:$0xff]
        %v4184 = vld [vmem:[%s1651 + $0x38] sm:$0xff]
        %v4185 = vld [vmem:[%s1651 + $0x40] sm:$0xff]
        %v4186 = vld [vmem:[%s1651 + $0x48] sm:$0xff]
        %v4187 = vld [vmem:[%s1651 + $0x50] sm:$0xff]
        %v4188 = vld [vmem:[%s1651 + $0x58] sm:$0xff]
        %v4189 = vld [vmem:[%s1651 + $0x60] sm:$0xff]
        %v4190 = vld [vmem:[%s1651 + $0x68] sm:$0xff]
        %v4191 = vld [vmem:[%s1651 + $0x70] sm:$0xff]
        %v4192 = vld [vmem:[%s1651 + $0x78] sm:$0xff]
        %v4193 = vld [vmem:[%s1651 + $0x80] sm:$0xff]
        %v4194 = vld [vmem:[%s1651 + $0x88] sm:$0xff]
        %v4195 = vld [vmem:[%s1651 + $0x90] sm:$0xff]
        %v4196 = vld [vmem:[%s1651 + $0x98] sm:$0xff]
        %v4197 = vld [vmem:[%s1651 + $0xa0] sm:$0xff]
        %v4198 = vld [vmem:[%s1651 + $0xa8] sm:$0xff]
        %v4199 = vld [vmem:[%s1651 + $0xb0] sm:$0xff]
        %v4200 = vld [vmem:[%s1651 + $0xb8] sm:$0xff]
        %v4201 = vld [vmem:[%s1651 + $0xc0] sm:$0xff]
        %v4202 = vld [vmem:[%s1651 + $0xc8] sm:$0xff]
        %v4203 = vld [vmem:[%s1651 + $0xd0] sm:$0xff]
        %v4204 = vld [vmem:[%s1651 + $0xd8] sm:$0xff]
        %v4205 = vld [vmem:[%s1651 + $0xe0] sm:$0xff]
        %v4206 = vld [vmem:[%s1651 + $0xe8] sm:$0xff]
        %v4207 = vld [vmem:[%s1651 + $0xf0] sm:$0xff]
        %v4208 = vld [vmem:[%s1651 + $0xf8] sm:$0xff]
        %s4209 = scalar_lea.vmem %s3, 96
        %v4210 = vld [vmem:[%s4209] sm:$0xf]
        %v4211 = vld [vmem:[%s4209 + $0x4] sm:$0xf]
        %v4212 = vld [vmem:[%s4209 + $0x8] sm:$0xf]
        %v4213 = vld [vmem:[%s4209 + $0xc] sm:$0xf]
        %v4214 = vld [vmem:[%s4209 + $0x10] sm:$0xf]
        %v4215 = vld [vmem:[%s4209 + $0x14] sm:$0xf]
        %v4216 = vld [vmem:[%s4209 + $0x18] sm:$0xf]
        %v4217 = vld [vmem:[%s4209 + $0x1c] sm:$0xf]
        %v4218 = vld [vmem:[%s4209 + $0x20] sm:$0xf]
        %v4219 = vld [vmem:[%s4209 + $0x24] sm:$0xf]
        %v4220 = vld [vmem:[%s4209 + $0x28] sm:$0xf]
        %v4221 = vld [vmem:[%s4209 + $0x2c] sm:$0xf]
        %v4222 = vld [vmem:[%s4209 + $0x30] sm:$0xf]
        %v4223 = vld [vmem:[%s4209 + $0x34] sm:$0xf]
        %v4224 = vld [vmem:[%s4209 + $0x38] sm:$0xf]
        %v4225 = vld [vmem:[%s4209 + $0x3c] sm:$0xf]
        %v4226 = vld [vmem:[%s4209 + $0x40] sm:$0xf]
        %v4227 = vld [vmem:[%s4209 + $0x44] sm:$0xf]
        %v4228 = vld [vmem:[%s4209 + $0x48] sm:$0xf]
        %v4229 = vld [vmem:[%s4209 + $0x4c] sm:$0xf]
        %v4230 = vld [vmem:[%s4209 + $0x50] sm:$0xf]
        %v4231 = vld [vmem:[%s4209 + $0x54] sm:$0xf]
        %v4232 = vld [vmem:[%s4209 + $0x58] sm:$0xf]
        %v4233 = vld [vmem:[%s4209 + $0x5c] sm:$0xf]
        %v4266 = vunpack.c.l.b16 %v4177
        %v4267 = vunpack.c.h.b16 %v4177
        %v4268 = vunpack.c.l.b16 %v4178
        %v4269 = vunpack.c.h.b16 %v4178
        %v4270 = vunpack.c.l.b16 %v4179
        %v4271 = vunpack.c.h.b16 %v4179
        %v4272 = vunpack.c.l.b16 %v4180
        %v4273 = vunpack.c.h.b16 %v4180
        %v4274 = vunpack.c.l.b16 %v4181
        %v4275 = vunpack.c.h.b16 %v4181
        %v4276 = vunpack.c.l.b16 %v4182
        %v4277 = vunpack.c.h.b16 %v4182
        %v4278 = vunpack.c.l.b16 %v4183
        %v4279 = vunpack.c.h.b16 %v4183
        %v4280 = vunpack.c.l.b16 %v4184
        %v4281 = vunpack.c.h.b16 %v4184
        %v4282 = vunpack.c.l.b16 %v4185
        %v4283 = vunpack.c.h.b16 %v4185
        %v4284 = vunpack.c.l.b16 %v4186
        %v4285 = vunpack.c.h.b16 %v4186
        %v4286 = vunpack.c.l.b16 %v4187
        %v4287 = vunpack.c.h.b16 %v4187
        %v4288 = vunpack.c.l.b16 %v4188
        %v4289 = vunpack.c.h.b16 %v4188
        %v4290 = vunpack.c.l.b16 %v4189
        %v4291 = vunpack.c.h.b16 %v4189
        %v4292 = vunpack.c.l.b16 %v4190
        %v4293 = vunpack.c.h.b16 %v4190
        %v4294 = vunpack.c.l.b16 %v4191
        %v4295 = vunpack.c.h.b16 %v4191
        %v4296 = vunpack.c.l.b16 %v4192
        %v4297 = vunpack.c.h.b16 %v4192
        %v4298 = vunpack.c.l.b16 %v4193
        %v4299 = vunpack.c.h.b16 %v4193
        %v4300 = vunpack.c.l.b16 %v4194
        %v4301 = vunpack.c.h.b16 %v4194
        %v4302 = vunpack.c.l.b16 %v4195
        %v4303 = vunpack.c.h.b16 %v4195
        %v4304 = vunpack.c.l.b16 %v4196
        %v4305 = vunpack.c.h.b16 %v4196
        %v4306 = vunpack.c.l.b16 %v4197
        %v4307 = vunpack.c.h.b16 %v4197
        %v4308 = vunpack.c.l.b16 %v4198
        %v4309 = vunpack.c.h.b16 %v4198
        %v4310 = vunpack.c.l.b16 %v4199
        %v4311 = vunpack.c.h.b16 %v4199
        %v4312 = vunpack.c.l.b16 %v4200
        %v4313 = vunpack.c.h.b16 %v4200
        %v4314 = vunpack.c.l.b16 %v4201
        %v4315 = vunpack.c.h.b16 %v4201
        %v4316 = vunpack.c.l.b16 %v4202
        %v4317 = vunpack.c.h.b16 %v4202
        %v4318 = vunpack.c.l.b16 %v4203
        %v4319 = vunpack.c.h.b16 %v4203
        %v4320 = vunpack.c.l.b16 %v4204
        %v4321 = vunpack.c.h.b16 %v4204
        %v4322 = vunpack.c.l.b16 %v4205
        %v4323 = vunpack.c.h.b16 %v4205
        %v4324 = vunpack.c.l.b16 %v4206
        %v4325 = vunpack.c.h.b16 %v4206
        %v4326 = vunpack.c.l.b16 %v4207
        %v4327 = vunpack.c.h.b16 %v4207
        %v4328 = vunpack.c.l.b16 %v4208
        %v4329 = vunpack.c.h.b16 %v4208
        %v4330 = vpack.c.b16 %v4268, %v4266
        %v4331 = vpack.c.b16 %v4269, %v4267
        %v4332 = vpack.c.b16 %v4272, %v4270
        %v4333 = vpack.c.b16 %v4273, %v4271
        %v4334 = vpack.c.b16 %v4276, %v4274
        %v4335 = vpack.c.b16 %v4277, %v4275
        %v4336 = vpack.c.b16 %v4280, %v4278
        %v4337 = vpack.c.b16 %v4281, %v4279
        %v4338 = vpack.c.b16 %v4284, %v4282
        %v4339 = vpack.c.b16 %v4285, %v4283
        %v4340 = vpack.c.b16 %v4288, %v4286
        %v4341 = vpack.c.b16 %v4289, %v4287
        %v4342 = vpack.c.b16 %v4292, %v4290
        %v4343 = vpack.c.b16 %v4293, %v4291
        %v4344 = vpack.c.b16 %v4296, %v4294
        %v4345 = vpack.c.b16 %v4297, %v4295
        %v4346 = vpack.c.b16 %v4300, %v4298
        %v4347 = vpack.c.b16 %v4301, %v4299
        %v4348 = vpack.c.b16 %v4304, %v4302
        %v4349 = vpack.c.b16 %v4305, %v4303
        %v4350 = vpack.c.b16 %v4308, %v4306
        %v4351 = vpack.c.b16 %v4309, %v4307
        %v4352 = vpack.c.b16 %v4312, %v4310
        %v4353 = vpack.c.b16 %v4313, %v4311
        %v4354 = vpack.c.b16 %v4316, %v4314
        %v4355 = vpack.c.b16 %v4317, %v4315
        %v4356 = vpack.c.b16 %v4320, %v4318
        %v4357 = vpack.c.b16 %v4321, %v4319
        %v4358 = vpack.c.b16 %v4324, %v4322
        %v4359 = vpack.c.b16 %v4325, %v4323
        %v4360 = vpack.c.b16 %v4328, %v4326
        %v4361 = vpack.c.b16 %v4329, %v4327
        %v4402 = vunpack.c.l.b16 %v4210
        %v4403 = vunpack.c.l.b16 %v4211
        %v4404 = vunpack.c.l.b16 %v4212
        %v4405 = vunpack.c.l.b16 %v4213
        %v4406 = vunpack.c.l.b16 %v4214
        %v4407 = vunpack.c.l.b16 %v4215
        %v4408 = vunpack.c.l.b16 %v4216
        %v4409 = vunpack.c.l.b16 %v4217
        %v4410 = vunpack.c.l.b16 %v4218
        %v4411 = vunpack.c.l.b16 %v4219
        %v4412 = vunpack.c.l.b16 %v4220
        %v4413 = vunpack.c.l.b16 %v4221
        %v4414 = vunpack.c.l.b16 %v4222
        %v4415 = vunpack.c.l.b16 %v4223
        %v4416 = vunpack.c.l.b16 %v4224
        %v4417 = vunpack.c.l.b16 %v4225
        %v4418 = vunpack.c.l.b16 %v4226
        %v4419 = vunpack.c.l.b16 %v4227
        %v4420 = vunpack.c.l.b16 %v4228
        %v4421 = vunpack.c.l.b16 %v4229
        %v4422 = vunpack.c.l.b16 %v4230
        %v4423 = vunpack.c.l.b16 %v4231
        %v4424 = vunpack.c.l.b16 %v4232
        %v4425 = vunpack.c.l.b16 %v4233
        %v4426 = vpack.c.b16 %v4403, %v4402
        %v4427 = vpack.c.b16 %v4405, %v4404
        %v4428 = vpack.c.b16 %v4407, %v4406
        %v4429 = vpack.c.b16 %v4409, %v4408
        %v4430 = vpack.c.b16 %v4411, %v4410
        %v4431 = vpack.c.b16 %v4413, %v4412
        %v4432 = vpack.c.b16 %v4415, %v4414
        %v4433 = vpack.c.b16 %v4417, %v4416
        %v4434 = vpack.c.b16 %v4419, %v4418
        %v4435 = vpack.c.b16 %v4421, %v4420
        %v4436 = vpack.c.b16 %v4423, %v4422
        %v4437 = vpack.c.b16 %v4425, %v4424
        %v4451 = vsel %vm305, %v4331, 0
        %v4454 = vsel %vm305, %v4333, 0
        %v4457 = vsel %vm305, %v4335, 0
        %v4460 = vsel %vm305, %v4337, 0
        %v4463 = vsel %vm305, %v4339, 0
        %v4466 = vsel %vm305, %v4341, 0
        %v4469 = vsel %vm305, %v4343, 0
        %v4472 = vsel %vm305, %v4345, 0
        %v4475 = vsel %vm305, %v4347, 0
        %v4478 = vsel %vm305, %v4349, 0
        %v4481 = vsel %vm305, %v4351, 0
        %v4484 = vsel %vm305, %v4353, 0
        %v4487 = vsel %vm305, %v4355, 0
        %v4490 = vsel %vm305, %v4357, 0
        %v4493 = vsel %vm305, %v4359, 0
        %v4496 = vsel %vm305, %v4361, 0
        %4498 = vmatprep.subr.bf16.mxu0 0
        %4499 = vmatpush1.bf16.msra.mxu0 %v4433
        %4500 = vmatprep.subr.bf16.mxu0 0
        %4501 = vmatpush1.bf16.msra.mxu0 %v4432
        %4502 = vmatprep.subr.bf16.mxu0 0
        %4503 = vmatpush1.bf16.msra.mxu0 %v4431
        %4504 = vmatprep.subr.bf16.mxu0 0
        %4505 = vmatpush1.bf16.msra.mxu0 %v4430
        %4506 = vmatprep.subr.bf16.mxu0 0
        %4507 = vmatpush1.bf16.msra.mxu0 %v4429
        %4508 = vmatprep.subr.bf16.mxu0 0
        %4509 = vmatpush1.bf16.msra.mxu0 %v4428
        %4510 = vmatprep.subr.bf16.mxu0 0
        %4511 = vmatpush1.bf16.msra.mxu0 %v4427
        %4512 = vmatprep.subr.bf16.mxu0 0
        %4513 = vmatpush1.bf16.msra.mxu0 %v4426
        %4514 = vmatprep.subr.bf16.mxu0 0
        %4515 = vmatpush2.bf16.msra.mxu0 0
        %4516 = vmatprep.subr.bf16.mxu0 0
        %4517 = vmatpush2.bf16.msra.mxu0 0
        %4518 = vmatprep.subr.bf16.mxu0 0
        %4519 = vmatpush2.bf16.msra.mxu0 0
        %4520 = vmatprep.subr.bf16.mxu0 0
        %4521 = vmatpush2.bf16.msra.mxu0 0
        %4522 = vmatprep.subr.bf16.mxu0 0
        %4523 = vmatpush2.bf16.msra.mxu0 %v4437
        %4524 = vmatprep.subr.bf16.mxu0 0
        %4525 = vmatpush2.bf16.msra.mxu0 %v4436
        %4526 = vmatprep.subr.bf16.mxu0 0
        %4527 = vmatpush2.bf16.msra.mxu0 %v4435
        %4528 = vmatprep.subr.bf16.mxu0 0
        %4529 = vmatpush2.bf16.msra.mxu0 %v4434
        %4530 = vmatprep.mubr.bf16.mxu0 %v4451
        %4531 = vmatmul.mubr.bf16.gmra.mxu0 %v4330
        %v4532 = vpop.f32.mrf.mxu0
        %v4533 = vadd.f32 0.0, %v4532
        %v4534 = vpop.f32.mrf.mxu0
        %v4535 = vpop.f32.mrf.mxu0
        %v4536 = vadd.f32 0.0, %v4535
        %v4537 = vpop.f32.mrf.mxu0
        %4538 = vmatprep.mubr.bf16.mxu0 %v4454
        %4539 = vmatmul.mubr.bf16.gmra.mxu0 %v4332
        %v4540 = vpop.f32.mrf.mxu0
        %v4541 = vadd.f32 0.0, %v4540
        %v4542 = vpop.f32.mrf.mxu0
        %v4543 = vpop.f32.mrf.mxu0
        %v4544 = vadd.f32 0.0, %v4543
        %v4545 = vpop.f32.mrf.mxu0
        %4546 = vmatprep.mubr.bf16.mxu0 %v4457
        %4547 = vmatmul.mubr.bf16.gmra.mxu0 %v4334
        %v4548 = vpop.f32.mrf.mxu0
        %v4549 = vadd.f32 0.0, %v4548
        %v4550 = vpop.f32.mrf.mxu0
        %v4551 = vpop.f32.mrf.mxu0
        %v4552 = vadd.f32 0.0, %v4551
        %v4553 = vpop.f32.mrf.mxu0
        %4554 = vmatprep.mubr.bf16.mxu0 %v4460
        %4555 = vmatmul.mubr.bf16.gmra.mxu0 %v4336
        %v4556 = vpop.f32.mrf.mxu0
        %v4557 = vadd.f32 0.0, %v4556
        %v4558 = vpop.f32.mrf.mxu0
        %v4559 = vpop.f32.mrf.mxu0
        %v4560 = vadd.f32 0.0, %v4559
        %v4561 = vpop.f32.mrf.mxu0
        %4562 = vmatprep.mubr.bf16.mxu0 %v4463
        %4563 = vmatmul.mubr.bf16.gmra.mxu0 %v4338
        %v4564 = vpop.f32.mrf.mxu0
        %v4565 = vadd.f32 0.0, %v4564
        %v4566 = vpop.f32.mrf.mxu0
        %v4567 = vpop.f32.mrf.mxu0
        %v4568 = vadd.f32 0.0, %v4567
        %v4569 = vpop.f32.mrf.mxu0
        %4570 = vmatprep.mubr.bf16.mxu0 %v4466
        %4571 = vmatmul.mubr.bf16.gmra.mxu0 %v4340
        %v4572 = vpop.f32.mrf.mxu0
        %v4573 = vadd.f32 0.0, %v4572
        %v4574 = vpop.f32.mrf.mxu0
        %v4575 = vpop.f32.mrf.mxu0
        %v4576 = vadd.f32 0.0, %v4575
        %v4577 = vpop.f32.mrf.mxu0
        %4578 = vmatprep.mubr.bf16.mxu0 %v4469
        %4579 = vmatmul.mubr.bf16.gmra.mxu0 %v4342
        %v4580 = vpop.f32.mrf.mxu0
        %v4581 = vadd.f32 0.0, %v4580
        %v4582 = vpop.f32.mrf.mxu0
        %v4583 = vpop.f32.mrf.mxu0
        %v4584 = vadd.f32 0.0, %v4583
        %v4585 = vpop.f32.mrf.mxu0
        %4586 = vmatprep.mubr.bf16.mxu0 %v4472
        %4587 = vmatmul.mubr.bf16.gmra.mxu0 %v4344
        %v4588 = vpop.f32.mrf.mxu0
        %v4589 = vadd.f32 0.0, %v4588
        %v4590 = vpop.f32.mrf.mxu0
        %v4591 = vpop.f32.mrf.mxu0
        %v4592 = vadd.f32 0.0, %v4591
        %v4593 = vpop.f32.mrf.mxu0
        %4594 = vmatprep.mubr.bf16.mxu0 %v4475
        %4595 = vmatmul.mubr.bf16.gmra.mxu0 %v4346
        %v4596 = vpop.f32.mrf.mxu0
        %v4597 = vadd.f32 0.0, %v4596
        %v4598 = vpop.f32.mrf.mxu0
        %v4599 = vpop.f32.mrf.mxu0
        %v4600 = vadd.f32 0.0, %v4599
        %v4601 = vpop.f32.mrf.mxu0
        %4602 = vmatprep.mubr.bf16.mxu0 %v4478
        %4603 = vmatmul.mubr.bf16.gmra.mxu0 %v4348
        %v4604 = vpop.f32.mrf.mxu0
        %v4605 = vadd.f32 0.0, %v4604
        %v4606 = vpop.f32.mrf.mxu0
        %v4607 = vpop.f32.mrf.mxu0
        %v4608 = vadd.f32 0.0, %v4607
        %v4609 = vpop.f32.mrf.mxu0
        %4610 = vmatprep.mubr.bf16.mxu0 %v4481
        %4611 = vmatmul.mubr.bf16.gmra.mxu0 %v4350
        %v4612 = vpop.f32.mrf.mxu0
        %v4613 = vadd.f32 0.0, %v4612
        %v4614 = vpop.f32.mrf.mxu0
        %v4615 = vpop.f32.mrf.mxu0
        %v4616 = vadd.f32 0.0, %v4615
        %v4617 = vpop.f32.mrf.mxu0
        %4618 = vmatprep.mubr.bf16.mxu0 %v4484
        %4619 = vmatmul.mubr.bf16.gmra.mxu0 %v4352
        %v4620 = vpop.f32.mrf.mxu0
        %v4621 = vadd.f32 0.0, %v4620
        %v4622 = vpop.f32.mrf.mxu0
        %v4623 = vpop.f32.mrf.mxu0
        %v4624 = vadd.f32 0.0, %v4623
        %v4625 = vpop.f32.mrf.mxu0
        %4626 = vmatprep.mubr.bf16.mxu0 %v4487
        %4627 = vmatmul.mubr.bf16.gmra.mxu0 %v4354
        %v4628 = vpop.f32.mrf.mxu0
        %v4629 = vadd.f32 0.0, %v4628
        %v4630 = vpop.f32.mrf.mxu0
        %v4631 = vpop.f32.mrf.mxu0
        %v4632 = vadd.f32 0.0, %v4631
        %v4633 = vpop.f32.mrf.mxu0
        %4634 = vmatprep.mubr.bf16.mxu0 %v4490
        %4635 = vmatmul.mubr.bf16.gmra.mxu0 %v4356
        %v4636 = vpop.f32.mrf.mxu0
        %v4637 = vadd.f32 0.0, %v4636
        %v4638 = vpop.f32.mrf.mxu0
        %v4639 = vpop.f32.mrf.mxu0
        %v4640 = vadd.f32 0.0, %v4639
        %v4641 = vpop.f32.mrf.mxu0
        %4642 = vmatprep.mubr.bf16.mxu0 %v4493
        %4643 = vmatmul.mubr.bf16.gmra.mxu0 %v4358
        %v4644 = vpop.f32.mrf.mxu0
        %v4645 = vadd.f32 0.0, %v4644
        %v4646 = vpop.f32.mrf.mxu0
        %v4647 = vpop.f32.mrf.mxu0
        %v4648 = vadd.f32 0.0, %v4647
        %v4649 = vpop.f32.mrf.mxu0
        %4650 = vmatprep.mubr.bf16.mxu0 %v4496
        %4651 = vmatmul.mubr.bf16.gmra.mxu0 %v4360
        %v4652 = vpop.f32.mrf.mxu0
        %v4653 = vadd.f32 0.0, %v4652
        %v4654 = vpop.f32.mrf.mxu0
        %v4655 = vpop.f32.mrf.mxu0
        %v4656 = vadd.f32 0.0, %v4655
        %v4657 = vpop.f32.mrf.mxu0
        %4658 = vdwg.mxu0
        %v4659 = vld [vmem:[#allocation4] sm:$0xff]
        %v4660 = vld [vmem:[#allocation4 + $0x8] sm:$0xff]
        %v4661 = vld [vmem:[#allocation4 + $0x10] sm:$0xff]
        %v4662 = vld [vmem:[#allocation4 + $0x18] sm:$0xff]
        %v4663 = vld [vmem:[#allocation4 + $0x20] sm:$0xff]
        %v4664 = vld [vmem:[#allocation4 + $0x28] sm:$0xff]
        %v4665 = vld [vmem:[#allocation4 + $0x30] sm:$0xff]
        %v4666 = vld [vmem:[#allocation4 + $0x38] sm:$0xff]
        %v4667 = vld [vmem:[#allocation4 + $0x40] sm:$0xff]
        %v4668 = vld [vmem:[#allocation4 + $0x48] sm:$0xff]
        %v4669 = vld [vmem:[#allocation4 + $0x50] sm:$0xff]
        %v4670 = vld [vmem:[#allocation4 + $0x58] sm:$0xff]
        %v4671 = vld [vmem:[#allocation4 + $0x60] sm:$0xff]
        %v4672 = vld [vmem:[#allocation4 + $0x68] sm:$0xff]
        %v4673 = vld [vmem:[#allocation4 + $0x70] sm:$0xff]
        %v4674 = vld [vmem:[#allocation4 + $0x78] sm:$0xff]
        %v4675 = vld [vmem:[#allocation4 + $0x80] sm:$0xff]
        %v4676 = vld [vmem:[#allocation4 + $0x88] sm:$0xff]
        %v4677 = vld [vmem:[#allocation4 + $0x90] sm:$0xff]
        %v4678 = vld [vmem:[#allocation4 + $0x98] sm:$0xff]
        %v4679 = vld [vmem:[#allocation4 + $0xa0] sm:$0xff]
        %v4680 = vld [vmem:[#allocation4 + $0xa8] sm:$0xff]
        %v4681 = vld [vmem:[#allocation4 + $0xb0] sm:$0xff]
        %v4682 = vld [vmem:[#allocation4 + $0xb8] sm:$0xff]
        %v4683 = vld [vmem:[#allocation4 + $0xc0] sm:$0xff]
        %v4684 = vld [vmem:[#allocation4 + $0xc8] sm:$0xff]
        %v4685 = vld [vmem:[#allocation4 + $0xd0] sm:$0xff]
        %v4686 = vld [vmem:[#allocation4 + $0xd8] sm:$0xff]
        %v4687 = vld [vmem:[#allocation4 + $0xe0] sm:$0xff]
        %v4688 = vld [vmem:[#allocation4 + $0xe8] sm:$0xff]
        %v4689 = vld [vmem:[#allocation4 + $0xf0] sm:$0xff]
        %v4690 = vld [vmem:[#allocation4 + $0xf8] sm:$0xff]
        %v4691 = vadd.f32 %v4659, %v4533
        %v4692 = vadd.f32 %v4660, %v4536
        %v4693 = vadd.f32 %v4661, %v4541
        %v4694 = vadd.f32 %v4662, %v4544
        %v4695 = vadd.f32 %v4663, %v4549
        %v4696 = vadd.f32 %v4664, %v4552
        %v4697 = vadd.f32 %v4665, %v4557
        %v4698 = vadd.f32 %v4666, %v4560
        %v4699 = vadd.f32 %v4667, %v4565
        %v4700 = vadd.f32 %v4668, %v4568
        %v4701 = vadd.f32 %v4669, %v4573
        %v4702 = vadd.f32 %v4670, %v4576
        %v4703 = vadd.f32 %v4671, %v4581
        %v4704 = vadd.f32 %v4672, %v4584
        %v4705 = vadd.f32 %v4673, %v4589
        %v4706 = vadd.f32 %v4674, %v4592
        %v4707 = vadd.f32 %v4675, %v4597
        %v4708 = vadd.f32 %v4676, %v4600
        %v4709 = vadd.f32 %v4677, %v4605
        %v4710 = vadd.f32 %v4678, %v4608
        %v4711 = vadd.f32 %v4679, %v4613
        %v4712 = vadd.f32 %v4680, %v4616
        %v4713 = vadd.f32 %v4681, %v4621
        %v4714 = vadd.f32 %v4682, %v4624
        %v4715 = vadd.f32 %v4683, %v4629
        %v4716 = vadd.f32 %v4684, %v4632
        %v4717 = vadd.f32 %v4685, %v4637
        %v4718 = vadd.f32 %v4686, %v4640
        %v4719 = vadd.f32 %v4687, %v4645
        %v4720 = vadd.f32 %v4688, %v4648
        %v4721 = vadd.f32 %v4689, %v4653
        %v4722 = vadd.f32 %v4690, %v4656
        %4723 = vst.msk [vmem:[#allocation4] sm:$0xff] %vm305, %v4691
        %4724 = vst.msk [vmem:[#allocation4 + $0x8] sm:$0xff] %vm305, %v4692
        %4725 = vst.msk [vmem:[#allocation4 + $0x10] sm:$0xff] %vm305, %v4693
        %4726 = vst.msk [vmem:[#allocation4 + $0x18] sm:$0xff] %vm305, %v4694
        %4727 = vst.msk [vmem:[#allocation4 + $0x20] sm:$0xff] %vm305, %v4695
        %4728 = vst.msk [vmem:[#allocation4 + $0x28] sm:$0xff] %vm305, %v4696
        %4729 = vst.msk [vmem:[#allocation4 + $0x30] sm:$0xff] %vm305, %v4697
        %4730 = vst.msk [vmem:[#allocation4 + $0x38] sm:$0xff] %vm305, %v4698
        %4731 = vst.msk [vmem:[#allocation4 + $0x40] sm:$0xff] %vm305, %v4699
        %4732 = vst.msk [vmem:[#allocation4 + $0x48] sm:$0xff] %vm305, %v4700
        %4733 = vst.msk [vmem:[#allocation4 + $0x50] sm:$0xff] %vm305, %v4701
        %4734 = vst.msk [vmem:[#allocation4 + $0x58] sm:$0xff] %vm305, %v4702
        %4735 = vst.msk [vmem:[#allocation4 + $0x60] sm:$0xff] %vm305, %v4703
        %4736 = vst.msk [vmem:[#allocation4 + $0x68] sm:$0xff] %vm305, %v4704
        %4737 = vst.msk [vmem:[#allocation4 + $0x70] sm:$0xff] %vm305, %v4705
        %4738 = vst.msk [vmem:[#allocation4 + $0x78] sm:$0xff] %vm305, %v4706
        %4739 = vst.msk [vmem:[#allocation4 + $0x80] sm:$0xff] %vm305, %v4707
        %4740 = vst.msk [vmem:[#allocation4 + $0x88] sm:$0xff] %vm305, %v4708
        %4741 = vst.msk [vmem:[#allocation4 + $0x90] sm:$0xff] %vm305, %v4709
        %4742 = vst.msk [vmem:[#allocation4 + $0x98] sm:$0xff] %vm305, %v4710
        %4743 = vst.msk [vmem:[#allocation4 + $0xa0] sm:$0xff] %vm305, %v4711
        %4744 = vst.msk [vmem:[#allocation4 + $0xa8] sm:$0xff] %vm305, %v4712
        %4745 = vst.msk [vmem:[#allocation4 + $0xb0] sm:$0xff] %vm305, %v4713
        %4746 = vst.msk [vmem:[#allocation4 + $0xb8] sm:$0xff] %vm305, %v4714
        %4747 = vst.msk [vmem:[#allocation4 + $0xc0] sm:$0xff] %vm305, %v4715
        %4748 = vst.msk [vmem:[#allocation4 + $0xc8] sm:$0xff] %vm305, %v4716
        %4749 = vst.msk [vmem:[#allocation4 + $0xd0] sm:$0xff] %vm305, %v4717
        %4750 = vst.msk [vmem:[#allocation4 + $0xd8] sm:$0xff] %vm305, %v4718
        %4751 = vst.msk [vmem:[#allocation4 + $0xe0] sm:$0xff] %vm305, %v4719
        %4752 = vst.msk [vmem:[#allocation4 + $0xe8] sm:$0xff] %vm305, %v4720
        %4753 = vst.msk [vmem:[#allocation4 + $0xf0] sm:$0xff] %vm305, %v4721
        %4754 = vst.msk [vmem:[#allocation4 + $0xf8] sm:$0xff] %vm305, %v4722
        %v4755 = vld [vmem:[%s2230] sm:$0xff]
        %v4756 = vld [vmem:[%s2230 + $0x8] sm:$0xff]
        %v4757 = vld [vmem:[%s2230 + $0x10] sm:$0xff]
        %v4758 = vld [vmem:[%s2230 + $0x18] sm:$0xff]
        %v4759 = vld [vmem:[%s2230 + $0x20] sm:$0xff]
        %v4760 = vld [vmem:[%s2230 + $0x28] sm:$0xff]
        %v4761 = vld [vmem:[%s2230 + $0x30] sm:$0xff]
        %v4762 = vld [vmem:[%s2230 + $0x38] sm:$0xff]
        %v4763 = vld [vmem:[%s2230 + $0x40] sm:$0xff]
        %v4764 = vld [vmem:[%s2230 + $0x48] sm:$0xff]
        %v4765 = vld [vmem:[%s2230 + $0x50] sm:$0xff]
        %v4766 = vld [vmem:[%s2230 + $0x58] sm:$0xff]
        %v4767 = vld [vmem:[%s2230 + $0x60] sm:$0xff]
        %v4768 = vld [vmem:[%s2230 + $0x68] sm:$0xff]
        %v4769 = vld [vmem:[%s2230 + $0x70] sm:$0xff]
        %v4770 = vld [vmem:[%s2230 + $0x78] sm:$0xff]
        %v4771 = vld [vmem:[%s2230 + $0x80] sm:$0xff]
        %v4772 = vld [vmem:[%s2230 + $0x88] sm:$0xff]
        %v4773 = vld [vmem:[%s2230 + $0x90] sm:$0xff]
        %v4774 = vld [vmem:[%s2230 + $0x98] sm:$0xff]
        %v4775 = vld [vmem:[%s2230 + $0xa0] sm:$0xff]
        %v4776 = vld [vmem:[%s2230 + $0xa8] sm:$0xff]
        %v4777 = vld [vmem:[%s2230 + $0xb0] sm:$0xff]
        %v4778 = vld [vmem:[%s2230 + $0xb8] sm:$0xff]
        %v4779 = vld [vmem:[%s2230 + $0xc0] sm:$0xff]
        %v4780 = vld [vmem:[%s2230 + $0xc8] sm:$0xff]
        %v4781 = vld [vmem:[%s2230 + $0xd0] sm:$0xff]
        %v4782 = vld [vmem:[%s2230 + $0xd8] sm:$0xff]
        %v4783 = vld [vmem:[%s2230 + $0xe0] sm:$0xff]
        %v4784 = vld [vmem:[%s2230 + $0xe8] sm:$0xff]
        %v4785 = vld [vmem:[%s2230 + $0xf0] sm:$0xff]
        %v4786 = vld [vmem:[%s2230 + $0xf8] sm:$0xff]
        %s4787 = scalar_lea.vmem %s3, 192
        %v4788 = vld [vmem:[%s4787] sm:$0xf]
        %v4789 = vld [vmem:[%s4787 + $0x4] sm:$0xf]
        %v4790 = vld [vmem:[%s4787 + $0x8] sm:$0xf]
        %v4791 = vld [vmem:[%s4787 + $0xc] sm:$0xf]
        %v4792 = vld [vmem:[%s4787 + $0x10] sm:$0xf]
        %v4793 = vld [vmem:[%s4787 + $0x14] sm:$0xf]
        %v4794 = vld [vmem:[%s4787 + $0x18] sm:$0xf]
        %v4795 = vld [vmem:[%s4787 + $0x1c] sm:$0xf]
        %v4796 = vld [vmem:[%s4787 + $0x20] sm:$0xf]
        %v4797 = vld [vmem:[%s4787 + $0x24] sm:$0xf]
        %v4798 = vld [vmem:[%s4787 + $0x28] sm:$0xf]
        %v4799 = vld [vmem:[%s4787 + $0x2c] sm:$0xf]
        %v4800 = vld [vmem:[%s4787 + $0x30] sm:$0xf]
        %v4801 = vld [vmem:[%s4787 + $0x34] sm:$0xf]
        %v4802 = vld [vmem:[%s4787 + $0x38] sm:$0xf]
        %v4803 = vld [vmem:[%s4787 + $0x3c] sm:$0xf]
        %v4804 = vld [vmem:[%s4787 + $0x40] sm:$0xf]
        %v4805 = vld [vmem:[%s4787 + $0x44] sm:$0xf]
        %v4806 = vld [vmem:[%s4787 + $0x48] sm:$0xf]
        %v4807 = vld [vmem:[%s4787 + $0x4c] sm:$0xf]
        %v4808 = vld [vmem:[%s4787 + $0x50] sm:$0xf]
        %v4809 = vld [vmem:[%s4787 + $0x54] sm:$0xf]
        %v4810 = vld [vmem:[%s4787 + $0x58] sm:$0xf]
        %v4811 = vld [vmem:[%s4787 + $0x5c] sm:$0xf]
        %v4844 = vunpack.c.l.b16 %v4755
        %v4845 = vunpack.c.h.b16 %v4755
        %v4846 = vunpack.c.l.b16 %v4756
        %v4847 = vunpack.c.h.b16 %v4756
        %v4848 = vunpack.c.l.b16 %v4757
        %v4849 = vunpack.c.h.b16 %v4757
        %v4850 = vunpack.c.l.b16 %v4758
        %v4851 = vunpack.c.h.b16 %v4758
        %v4852 = vunpack.c.l.b16 %v4759
        %v4853 = vunpack.c.h.b16 %v4759
        %v4854 = vunpack.c.l.b16 %v4760
        %v4855 = vunpack.c.h.b16 %v4760
        %v4856 = vunpack.c.l.b16 %v4761
        %v4857 = vunpack.c.h.b16 %v4761
        %v4858 = vunpack.c.l.b16 %v4762
        %v4859 = vunpack.c.h.b16 %v4762
        %v4860 = vunpack.c.l.b16 %v4763
        %v4861 = vunpack.c.h.b16 %v4763
        %v4862 = vunpack.c.l.b16 %v4764
        %v4863 = vunpack.c.h.b16 %v4764
        %v4864 = vunpack.c.l.b16 %v4765
        %v4865 = vunpack.c.h.b16 %v4765
        %v4866 = vunpack.c.l.b16 %v4766
        %v4867 = vunpack.c.h.b16 %v4766
        %v4868 = vunpack.c.l.b16 %v4767
        %v4869 = vunpack.c.h.b16 %v4767
        %v4870 = vunpack.c.l.b16 %v4768
        %v4871 = vunpack.c.h.b16 %v4768
        %v4872 = vunpack.c.l.b16 %v4769
        %v4873 = vunpack.c.h.b16 %v4769
        %v4874 = vunpack.c.l.b16 %v4770
        %v4875 = vunpack.c.h.b16 %v4770
        %v4876 = vunpack.c.l.b16 %v4771
        %v4877 = vunpack.c.h.b16 %v4771
        %v4878 = vunpack.c.l.b16 %v4772
        %v4879 = vunpack.c.h.b16 %v4772
        %v4880 = vunpack.c.l.b16 %v4773
        %v4881 = vunpack.c.h.b16 %v4773
        %v4882 = vunpack.c.l.b16 %v4774
        %v4883 = vunpack.c.h.b16 %v4774
        %v4884 = vunpack.c.l.b16 %v4775
        %v4885 = vunpack.c.h.b16 %v4775
        %v4886 = vunpack.c.l.b16 %v4776
        %v4887 = vunpack.c.h.b16 %v4776
        %v4888 = vunpack.c.l.b16 %v4777
        %v4889 = vunpack.c.h.b16 %v4777
        %v4890 = vunpack.c.l.b16 %v4778
        %v4891 = vunpack.c.h.b16 %v4778
        %v4892 = vunpack.c.l.b16 %v4779
        %v4893 = vunpack.c.h.b16 %v4779
        %v4894 = vunpack.c.l.b16 %v4780
        %v4895 = vunpack.c.h.b16 %v4780
        %v4896 = vunpack.c.l.b16 %v4781
        %v4897 = vunpack.c.h.b16 %v4781
        %v4898 = vunpack.c.l.b16 %v4782
        %v4899 = vunpack.c.h.b16 %v4782
        %v4900 = vunpack.c.l.b16 %v4783
        %v4901 = vunpack.c.h.b16 %v4783
        %v4902 = vunpack.c.l.b16 %v4784
        %v4903 = vunpack.c.h.b16 %v4784
        %v4904 = vunpack.c.l.b16 %v4785
        %v4905 = vunpack.c.h.b16 %v4785
        %v4906 = vunpack.c.l.b16 %v4786
        %v4907 = vunpack.c.h.b16 %v4786
        %v4908 = vpack.c.b16 %v4846, %v4844
        %v4909 = vpack.c.b16 %v4847, %v4845
        %v4910 = vpack.c.b16 %v4850, %v4848
        %v4911 = vpack.c.b16 %v4851, %v4849
        %v4912 = vpack.c.b16 %v4854, %v4852
        %v4913 = vpack.c.b16 %v4855, %v4853
        %v4914 = vpack.c.b16 %v4858, %v4856
        %v4915 = vpack.c.b16 %v4859, %v4857
        %v4916 = vpack.c.b16 %v4862, %v4860
        %v4917 = vpack.c.b16 %v4863, %v4861
        %v4918 = vpack.c.b16 %v4866, %v4864
        %v4919 = vpack.c.b16 %v4867, %v4865
        %v4920 = vpack.c.b16 %v4870, %v4868
        %v4921 = vpack.c.b16 %v4871, %v4869
        %v4922 = vpack.c.b16 %v4874, %v4872
        %v4923 = vpack.c.b16 %v4875, %v4873
        %v4924 = vpack.c.b16 %v4878, %v4876
        %v4925 = vpack.c.b16 %v4879, %v4877
        %v4926 = vpack.c.b16 %v4882, %v4880
        %v4927 = vpack.c.b16 %v4883, %v4881
        %v4928 = vpack.c.b16 %v4886, %v4884
        %v4929 = vpack.c.b16 %v4887, %v4885
        %v4930 = vpack.c.b16 %v4890, %v4888
        %v4931 = vpack.c.b16 %v4891, %v4889
        %v4932 = vpack.c.b16 %v4894, %v4892
        %v4933 = vpack.c.b16 %v4895, %v4893
        %v4934 = vpack.c.b16 %v4898, %v4896
        %v4935 = vpack.c.b16 %v4899, %v4897
        %v4936 = vpack.c.b16 %v4902, %v4900
        %v4937 = vpack.c.b16 %v4903, %v4901
        %v4938 = vpack.c.b16 %v4906, %v4904
        %v4939 = vpack.c.b16 %v4907, %v4905
        %v4980 = vunpack.c.l.b16 %v4788
        %v4981 = vunpack.c.l.b16 %v4789
        %v4982 = vunpack.c.l.b16 %v4790
        %v4983 = vunpack.c.l.b16 %v4791
        %v4984 = vunpack.c.l.b16 %v4792
        %v4985 = vunpack.c.l.b16 %v4793
        %v4986 = vunpack.c.l.b16 %v4794
        %v4987 = vunpack.c.l.b16 %v4795
        %v4988 = vunpack.c.l.b16 %v4796
        %v4989 = vunpack.c.l.b16 %v4797
        %v4990 = vunpack.c.l.b16 %v4798
        %v4991 = vunpack.c.l.b16 %v4799
        %v4992 = vunpack.c.l.b16 %v4800
        %v4993 = vunpack.c.l.b16 %v4801
        %v4994 = vunpack.c.l.b16 %v4802
        %v4995 = vunpack.c.l.b16 %v4803
        %v4996 = vunpack.c.l.b16 %v4804
        %v4997 = vunpack.c.l.b16 %v4805
        %v4998 = vunpack.c.l.b16 %v4806
        %v4999 = vunpack.c.l.b16 %v4807
        %v5000 = vunpack.c.l.b16 %v4808
        %v5001 = vunpack.c.l.b16 %v4809
        %v5002 = vunpack.c.l.b16 %v4810
        %v5003 = vunpack.c.l.b16 %v4811
        %v5004 = vpack.c.b16 %v4981, %v4980
        %v5005 = vpack.c.b16 %v4983, %v4982
        %v5006 = vpack.c.b16 %v4985, %v4984
        %v5007 = vpack.c.b16 %v4987, %v4986
        %v5008 = vpack.c.b16 %v4989, %v4988
        %v5009 = vpack.c.b16 %v4991, %v4990
        %v5010 = vpack.c.b16 %v4993, %v4992
        %v5011 = vpack.c.b16 %v4995, %v4994
        %v5012 = vpack.c.b16 %v4997, %v4996
        %v5013 = vpack.c.b16 %v4999, %v4998
        %v5014 = vpack.c.b16 %v5001, %v5000
        %v5015 = vpack.c.b16 %v5003, %v5002
        %v5029 = vsel %vm305, %v4909, 0
        %v5032 = vsel %vm305, %v4911, 0
        %v5035 = vsel %vm305, %v4913, 0
        %v5038 = vsel %vm305, %v4915, 0
        %v5041 = vsel %vm305, %v4917, 0
        %v5044 = vsel %vm305, %v4919, 0
        %v5047 = vsel %vm305, %v4921, 0
        %v5050 = vsel %vm305, %v4923, 0
        %v5053 = vsel %vm305, %v4925, 0
        %v5056 = vsel %vm305, %v4927, 0
        %v5059 = vsel %vm305, %v4929, 0
        %v5062 = vsel %vm305, %v4931, 0
        %v5065 = vsel %vm305, %v4933, 0
        %v5068 = vsel %vm305, %v4935, 0
        %v5071 = vsel %vm305, %v4937, 0
        %v5074 = vsel %vm305, %v4939, 0
        %5076 = vmatprep.subr.bf16.mxu0 0
        %5077 = vmatpush1.bf16.msra.mxu0 %v5011
        %5078 = vmatprep.subr.bf16.mxu0 0
        %5079 = vmatpush1.bf16.msra.mxu0 %v5010
        %5080 = vmatprep.subr.bf16.mxu0 0
        %5081 = vmatpush1.bf16.msra.mxu0 %v5009
        %5082 = vmatprep.subr.bf16.mxu0 0
        %5083 = vmatpush1.bf16.msra.mxu0 %v5008
        %5084 = vmatprep.subr.bf16.mxu0 0
        %5085 = vmatpush1.bf16.msra.mxu0 %v5007
        %5086 = vmatprep.subr.bf16.mxu0 0
        %5087 = vmatpush1.bf16.msra.mxu0 %v5006
        %5088 = vmatprep.subr.bf16.mxu0 0
        %5089 = vmatpush1.bf16.msra.mxu0 %v5005
        %5090 = vmatprep.subr.bf16.mxu0 0
        %5091 = vmatpush1.bf16.msra.mxu0 %v5004
        %5092 = vmatprep.subr.bf16.mxu0 0
        %5093 = vmatpush2.bf16.msra.mxu0 0
        %5094 = vmatprep.subr.bf16.mxu0 0
        %5095 = vmatpush2.bf16.msra.mxu0 0
        %5096 = vmatprep.subr.bf16.mxu0 0
        %5097 = vmatpush2.bf16.msra.mxu0 0
        %5098 = vmatprep.subr.bf16.mxu0 0
        %5099 = vmatpush2.bf16.msra.mxu0 0
        %5100 = vmatprep.subr.bf16.mxu0 0
        %5101 = vmatpush2.bf16.msra.mxu0 %v5015
        %5102 = vmatprep.subr.bf16.mxu0 0
        %5103 = vmatpush2.bf16.msra.mxu0 %v5014
        %5104 = vmatprep.subr.bf16.mxu0 0
        %5105 = vmatpush2.bf16.msra.mxu0 %v5013
        %5106 = vmatprep.subr.bf16.mxu0 0
        %5107 = vmatpush2.bf16.msra.mxu0 %v5012
        %5108 = vmatprep.mubr.bf16.mxu0 %v5029
        %5109 = vmatmul.mubr.bf16.gmra.mxu0 %v4908
        %v5110 = vpop.f32.mrf.mxu0
        %v5111 = vadd.f32 0.0, %v5110
        %v5112 = vpop.f32.mrf.mxu0
        %v5113 = vpop.f32.mrf.mxu0
        %v5114 = vadd.f32 0.0, %v5113
        %v5115 = vpop.f32.mrf.mxu0
        %5116 = vmatprep.mubr.bf16.mxu0 %v5032
        %5117 = vmatmul.mubr.bf16.gmra.mxu0 %v4910
        %v5118 = vpop.f32.mrf.mxu0
        %v5119 = vadd.f32 0.0, %v5118
        %v5120 = vpop.f32.mrf.mxu0
        %v5121 = vpop.f32.mrf.mxu0
        %v5122 = vadd.f32 0.0, %v5121
        %v5123 = vpop.f32.mrf.mxu0
        %5124 = vmatprep.mubr.bf16.mxu0 %v5035
        %5125 = vmatmul.mubr.bf16.gmra.mxu0 %v4912
        %v5126 = vpop.f32.mrf.mxu0
        %v5127 = vadd.f32 0.0, %v5126
        %v5128 = vpop.f32.mrf.mxu0
        %v5129 = vpop.f32.mrf.mxu0
        %v5130 = vadd.f32 0.0, %v5129
        %v5131 = vpop.f32.mrf.mxu0
        %5132 = vmatprep.mubr.bf16.mxu0 %v5038
        %5133 = vmatmul.mubr.bf16.gmra.mxu0 %v4914
        %v5134 = vpop.f32.mrf.mxu0
        %v5135 = vadd.f32 0.0, %v5134
        %v5136 = vpop.f32.mrf.mxu0
        %v5137 = vpop.f32.mrf.mxu0
        %v5138 = vadd.f32 0.0, %v5137
        %v5139 = vpop.f32.mrf.mxu0
        %5140 = vmatprep.mubr.bf16.mxu0 %v5041
        %5141 = vmatmul.mubr.bf16.gmra.mxu0 %v4916
        %v5142 = vpop.f32.mrf.mxu0
        %v5143 = vadd.f32 0.0, %v5142
        %v5144 = vpop.f32.mrf.mxu0
        %v5145 = vpop.f32.mrf.mxu0
        %v5146 = vadd.f32 0.0, %v5145
        %v5147 = vpop.f32.mrf.mxu0
        %5148 = vmatprep.mubr.bf16.mxu0 %v5044
        %5149 = vmatmul.mubr.bf16.gmra.mxu0 %v4918
        %v5150 = vpop.f32.mrf.mxu0
        %v5151 = vadd.f32 0.0, %v5150
        %v5152 = vpop.f32.mrf.mxu0
        %v5153 = vpop.f32.mrf.mxu0
        %v5154 = vadd.f32 0.0, %v5153
        %v5155 = vpop.f32.mrf.mxu0
        %5156 = vmatprep.mubr.bf16.mxu0 %v5047
        %5157 = vmatmul.mubr.bf16.gmra.mxu0 %v4920
        %v5158 = vpop.f32.mrf.mxu0
        %v5159 = vadd.f32 0.0, %v5158
        %v5160 = vpop.f32.mrf.mxu0
        %v5161 = vpop.f32.mrf.mxu0
        %v5162 = vadd.f32 0.0, %v5161
        %v5163 = vpop.f32.mrf.mxu0
        %5164 = vmatprep.mubr.bf16.mxu0 %v5050
        %5165 = vmatmul.mubr.bf16.gmra.mxu0 %v4922
        %v5166 = vpop.f32.mrf.mxu0
        %v5167 = vadd.f32 0.0, %v5166
        %v5168 = vpop.f32.mrf.mxu0
        %v5169 = vpop.f32.mrf.mxu0
        %v5170 = vadd.f32 0.0, %v5169
        %v5171 = vpop.f32.mrf.mxu0
        %5172 = vmatprep.mubr.bf16.mxu0 %v5053
        %5173 = vmatmul.mubr.bf16.gmra.mxu0 %v4924
        %v5174 = vpop.f32.mrf.mxu0
        %v5175 = vadd.f32 0.0, %v5174
        %v5176 = vpop.f32.mrf.mxu0
        %v5177 = vpop.f32.mrf.mxu0
        %v5178 = vadd.f32 0.0, %v5177
        %v5179 = vpop.f32.mrf.mxu0
        %5180 = vmatprep.mubr.bf16.mxu0 %v5056
        %5181 = vmatmul.mubr.bf16.gmra.mxu0 %v4926
        %v5182 = vpop.f32.mrf.mxu0
        %v5183 = vadd.f32 0.0, %v5182
        %v5184 = vpop.f32.mrf.mxu0
        %v5185 = vpop.f32.mrf.mxu0
        %v5186 = vadd.f32 0.0, %v5185
        %v5187 = vpop.f32.mrf.mxu0
        %5188 = vmatprep.mubr.bf16.mxu0 %v5059
        %5189 = vmatmul.mubr.bf16.gmra.mxu0 %v4928
        %v5190 = vpop.f32.mrf.mxu0
        %v5191 = vadd.f32 0.0, %v5190
        %v5192 = vpop.f32.mrf.mxu0
        %v5193 = vpop.f32.mrf.mxu0
        %v5194 = vadd.f32 0.0, %v5193
        %v5195 = vpop.f32.mrf.mxu0
        %5196 = vmatprep.mubr.bf16.mxu0 %v5062
        %5197 = vmatmul.mubr.bf16.gmra.mxu0 %v4930
        %v5198 = vpop.f32.mrf.mxu0
        %v5199 = vadd.f32 0.0, %v5198
        %v5200 = vpop.f32.mrf.mxu0
        %v5201 = vpop.f32.mrf.mxu0
        %v5202 = vadd.f32 0.0, %v5201
        %v5203 = vpop.f32.mrf.mxu0
        %5204 = vmatprep.mubr.bf16.mxu0 %v5065
        %5205 = vmatmul.mubr.bf16.gmra.mxu0 %v4932
        %v5206 = vpop.f32.mrf.mxu0
        %v5207 = vadd.f32 0.0, %v5206
        %v5208 = vpop.f32.mrf.mxu0
        %v5209 = vpop.f32.mrf.mxu0
        %v5210 = vadd.f32 0.0, %v5209
        %v5211 = vpop.f32.mrf.mxu0
        %5212 = vmatprep.mubr.bf16.mxu0 %v5068
        %5213 = vmatmul.mubr.bf16.gmra.mxu0 %v4934
        %v5214 = vpop.f32.mrf.mxu0
        %v5215 = vadd.f32 0.0, %v5214
        %v5216 = vpop.f32.mrf.mxu0
        %v5217 = vpop.f32.mrf.mxu0
        %v5218 = vadd.f32 0.0, %v5217
        %v5219 = vpop.f32.mrf.mxu0
        %5220 = vmatprep.mubr.bf16.mxu0 %v5071
        %5221 = vmatmul.mubr.bf16.gmra.mxu0 %v4936
        %v5222 = vpop.f32.mrf.mxu0
        %v5223 = vadd.f32 0.0, %v5222
        %v5224 = vpop.f32.mrf.mxu0
        %v5225 = vpop.f32.mrf.mxu0
        %v5226 = vadd.f32 0.0, %v5225
        %v5227 = vpop.f32.mrf.mxu0
        %5228 = vmatprep.mubr.bf16.mxu0 %v5074
        %5229 = vmatmul.mubr.bf16.gmra.mxu0 %v4938
        %v5230 = vpop.f32.mrf.mxu0
        %v5231 = vadd.f32 0.0, %v5230
        %v5232 = vpop.f32.mrf.mxu0
        %v5233 = vpop.f32.mrf.mxu0
        %v5234 = vadd.f32 0.0, %v5233
        %v5235 = vpop.f32.mrf.mxu0
        %5236 = vdwg.mxu0
        %v5237 = vld [vmem:[#allocation4] sm:$0xff]
        %v5238 = vld [vmem:[#allocation4 + $0x8] sm:$0xff]
        %v5239 = vld [vmem:[#allocation4 + $0x10] sm:$0xff]
        %v5240 = vld [vmem:[#allocation4 + $0x18] sm:$0xff]
        %v5241 = vld [vmem:[#allocation4 + $0x20] sm:$0xff]
        %v5242 = vld [vmem:[#allocation4 + $0x28] sm:$0xff]
        %v5243 = vld [vmem:[#allocation4 + $0x30] sm:$0xff]
        %v5244 = vld [vmem:[#allocation4 + $0x38] sm:$0xff]
        %v5245 = vld [vmem:[#allocation4 + $0x40] sm:$0xff]
        %v5246 = vld [vmem:[#allocation4 + $0x48] sm:$0xff]
        %v5247 = vld [vmem:[#allocation4 + $0x50] sm:$0xff]
        %v5248 = vld [vmem:[#allocation4 + $0x58] sm:$0xff]
        %v5249 = vld [vmem:[#allocation4 + $0x60] sm:$0xff]
        %v5250 = vld [vmem:[#allocation4 + $0x68] sm:$0xff]
        %v5251 = vld [vmem:[#allocation4 + $0x70] sm:$0xff]
        %v5252 = vld [vmem:[#allocation4 + $0x78] sm:$0xff]
        %v5253 = vld [vmem:[#allocation4 + $0x80] sm:$0xff]
        %v5254 = vld [vmem:[#allocation4 + $0x88] sm:$0xff]
        %v5255 = vld [vmem:[#allocation4 + $0x90] sm:$0xff]
        %v5256 = vld [vmem:[#allocation4 + $0x98] sm:$0xff]
        %v5257 = vld [vmem:[#allocation4 + $0xa0] sm:$0xff]
        %v5258 = vld [vmem:[#allocation4 + $0xa8] sm:$0xff]
        %v5259 = vld [vmem:[#allocation4 + $0xb0] sm:$0xff]
        %v5260 = vld [vmem:[#allocation4 + $0xb8] sm:$0xff]
        %v5261 = vld [vmem:[#allocation4 + $0xc0] sm:$0xff]
        %v5262 = vld [vmem:[#allocation4 + $0xc8] sm:$0xff]
        %v5263 = vld [vmem:[#allocation4 + $0xd0] sm:$0xff]
        %v5264 = vld [vmem:[#allocation4 + $0xd8] sm:$0xff]
        %v5265 = vld [vmem:[#allocation4 + $0xe0] sm:$0xff]
        %v5266 = vld [vmem:[#allocation4 + $0xe8] sm:$0xff]
        %v5267 = vld [vmem:[#allocation4 + $0xf0] sm:$0xff]
        %v5268 = vld [vmem:[#allocation4 + $0xf8] sm:$0xff]
        %v5269 = vadd.f32 %v5237, %v5111
        %v5270 = vadd.f32 %v5238, %v5114
        %v5271 = vadd.f32 %v5239, %v5119
        %v5272 = vadd.f32 %v5240, %v5122
        %v5273 = vadd.f32 %v5241, %v5127
        %v5274 = vadd.f32 %v5242, %v5130
        %v5275 = vadd.f32 %v5243, %v5135
        %v5276 = vadd.f32 %v5244, %v5138
        %v5277 = vadd.f32 %v5245, %v5143
        %v5278 = vadd.f32 %v5246, %v5146
        %v5279 = vadd.f32 %v5247, %v5151
        %v5280 = vadd.f32 %v5248, %v5154
        %v5281 = vadd.f32 %v5249, %v5159
        %v5282 = vadd.f32 %v5250, %v5162
        %v5283 = vadd.f32 %v5251, %v5167
        %v5284 = vadd.f32 %v5252, %v5170
        %v5285 = vadd.f32 %v5253, %v5175
        %v5286 = vadd.f32 %v5254, %v5178
        %v5287 = vadd.f32 %v5255, %v5183
        %v5288 = vadd.f32 %v5256, %v5186
        %v5289 = vadd.f32 %v5257, %v5191
        %v5290 = vadd.f32 %v5258, %v5194
        %v5291 = vadd.f32 %v5259, %v5199
        %v5292 = vadd.f32 %v5260, %v5202
        %v5293 = vadd.f32 %v5261, %v5207
        %v5294 = vadd.f32 %v5262, %v5210
        %v5295 = vadd.f32 %v5263, %v5215
        %v5296 = vadd.f32 %v5264, %v5218
        %v5297 = vadd.f32 %v5265, %v5223
        %v5298 = vadd.f32 %v5266, %v5226
        %v5299 = vadd.f32 %v5267, %v5231
        %v5300 = vadd.f32 %v5268, %v5234
        %5301 = vst.msk [vmem:[#allocation4] sm:$0xff] %vm305, %v5269
        %5302 = vst.msk [vmem:[#allocation4 + $0x8] sm:$0xff] %vm305, %v5270
        %5303 = vst.msk [vmem:[#allocation4 + $0x10] sm:$0xff] %vm305, %v5271
        %5304 = vst.msk [vmem:[#allocation4 + $0x18] sm:$0xff] %vm305, %v5272
        %5305 = vst.msk [vmem:[#allocation4 + $0x20] sm:$0xff] %vm305, %v5273
        %5306 = vst.msk [vmem:[#allocation4 + $0x28] sm:$0xff] %vm305, %v5274
        %5307 = vst.msk [vmem:[#allocation4 + $0x30] sm:$0xff] %vm305, %v5275
        %5308 = vst.msk [vmem:[#allocation4 + $0x38] sm:$0xff] %vm305, %v5276
        %5309 = vst.msk [vmem:[#allocation4 + $0x40] sm:$0xff] %vm305, %v5277
        %5310 = vst.msk [vmem:[#allocation4 + $0x48] sm:$0xff] %vm305, %v5278
        %5311 = vst.msk [vmem:[#allocation4 + $0x50] sm:$0xff] %vm305, %v5279
        %5312 = vst.msk [vmem:[#allocation4 + $0x58] sm:$0xff] %vm305, %v5280
        %5313 = vst.msk [vmem:[#allocation4 + $0x60] sm:$0xff] %vm305, %v5281
        %5314 = vst.msk [vmem:[#allocation4 + $0x68] sm:$0xff] %vm305, %v5282
        %5315 = vst.msk [vmem:[#allocation4 + $0x70] sm:$0xff] %vm305, %v5283
        %5316 = vst.msk [vmem:[#allocation4 + $0x78] sm:$0xff] %vm305, %v5284
        %5317 = vst.msk [vmem:[#allocation4 + $0x80] sm:$0xff] %vm305, %v5285
        %5318 = vst.msk [vmem:[#allocation4 + $0x88] sm:$0xff] %vm305, %v5286
        %5319 = vst.msk [vmem:[#allocation4 + $0x90] sm:$0xff] %vm305, %v5287
        %5320 = vst.msk [vmem:[#allocation4 + $0x98] sm:$0xff] %vm305, %v5288
        %5321 = vst.msk [vmem:[#allocation4 + $0xa0] sm:$0xff] %vm305, %v5289
        %5322 = vst.msk [vmem:[#allocation4 + $0xa8] sm:$0xff] %vm305, %v5290
        %5323 = vst.msk [vmem:[#allocation4 + $0xb0] sm:$0xff] %vm305, %v5291
        %5324 = vst.msk [vmem:[#allocation4 + $0xb8] sm:$0xff] %vm305, %v5292
        %5325 = vst.msk [vmem:[#allocation4 + $0xc0] sm:$0xff] %vm305, %v5293
        %5326 = vst.msk [vmem:[#allocation4 + $0xc8] sm:$0xff] %vm305, %v5294
        %5327 = vst.msk [vmem:[#allocation4 + $0xd0] sm:$0xff] %vm305, %v5295
        %5328 = vst.msk [vmem:[#allocation4 + $0xd8] sm:$0xff] %vm305, %v5296
        %5329 = vst.msk [vmem:[#allocation4 + $0xe0] sm:$0xff] %vm305, %v5297
        %5330 = vst.msk [vmem:[#allocation4 + $0xe8] sm:$0xff] %vm305, %v5298
        %5331 = vst.msk [vmem:[#allocation4 + $0xf0] sm:$0xff] %vm305, %v5299
        %5332 = vst.msk [vmem:[#allocation4 + $0xf8] sm:$0xff] %vm305, %v5300
        %v5333 = vld [vmem:[#allocation4] sm:$0xff]
        %v5334 = vld [vmem:[#allocation4 + $0x8] sm:$0xff]
        %v5335 = vld [vmem:[#allocation4 + $0x10] sm:$0xff]
        %v5336 = vld [vmem:[#allocation4 + $0x18] sm:$0xff]
        %v5337 = vld [vmem:[#allocation4 + $0x20] sm:$0xff]
        %v5338 = vld [vmem:[#allocation4 + $0x28] sm:$0xff]
        %v5339 = vld [vmem:[#allocation4 + $0x30] sm:$0xff]
        %v5340 = vld [vmem:[#allocation4 + $0x38] sm:$0xff]
        %v5341 = vld [vmem:[#allocation4 + $0x40] sm:$0xff]
        %v5342 = vld [vmem:[#allocation4 + $0x48] sm:$0xff]
        %v5343 = vld [vmem:[#allocation4 + $0x50] sm:$0xff]
        %v5344 = vld [vmem:[#allocation4 + $0x58] sm:$0xff]
        %v5345 = vld [vmem:[#allocation4 + $0x60] sm:$0xff]
        %v5346 = vld [vmem:[#allocation4 + $0x68] sm:$0xff]
        %v5347 = vld [vmem:[#allocation4 + $0x70] sm:$0xff]
        %v5348 = vld [vmem:[#allocation4 + $0x78] sm:$0xff]
        %v5349 = vld [vmem:[#allocation4 + $0x80] sm:$0xff]
        %v5350 = vld [vmem:[#allocation4 + $0x88] sm:$0xff]
        %v5351 = vld [vmem:[#allocation4 + $0x90] sm:$0xff]
        %v5352 = vld [vmem:[#allocation4 + $0x98] sm:$0xff]
        %v5353 = vld [vmem:[#allocation4 + $0xa0] sm:$0xff]
        %v5354 = vld [vmem:[#allocation4 + $0xa8] sm:$0xff]
        %v5355 = vld [vmem:[#allocation4 + $0xb0] sm:$0xff]
        %v5356 = vld [vmem:[#allocation4 + $0xb8] sm:$0xff]
        %v5357 = vld [vmem:[#allocation4 + $0xc0] sm:$0xff]
        %v5358 = vld [vmem:[#allocation4 + $0xc8] sm:$0xff]
        %v5359 = vld [vmem:[#allocation4 + $0xd0] sm:$0xff]
        %v5360 = vld [vmem:[#allocation4 + $0xd8] sm:$0xff]
        %v5361 = vld [vmem:[#allocation4 + $0xe0] sm:$0xff]
        %v5362 = vld [vmem:[#allocation4 + $0xe8] sm:$0xff]
        %v5363 = vld [vmem:[#allocation4 + $0xf0] sm:$0xff]
        %v5364 = vld [vmem:[#allocation4 + $0xf8] sm:$0xff]
        %v5365 = vld [vmem:[%s4] sm:$0x1]
        %v5367 = vlaneseq
        %v5368 = vshrl.u32 %v5367, 7
        %v5369 = vsub.s32 0, %v5368
        %v5370 = vrot.slane %v5365, %v5369
        %v5372 = vadd.f32 %v5333, %v5370
        %v5373 = vadd.f32 %v5334, %v5370
        %v5374 = vadd.f32 %v5335, %v5370
        %v5375 = vadd.f32 %v5336, %v5370
        %v5376 = vadd.f32 %v5337, %v5370
        %v5377 = vadd.f32 %v5338, %v5370
        %v5378 = vadd.f32 %v5339, %v5370
        %v5379 = vadd.f32 %v5340, %v5370
        %v5380 = vadd.f32 %v5341, %v5370
        %v5381 = vadd.f32 %v5342, %v5370
        %v5382 = vadd.f32 %v5343, %v5370
        %v5383 = vadd.f32 %v5344, %v5370
        %v5384 = vadd.f32 %v5345, %v5370
        %v5385 = vadd.f32 %v5346, %v5370
        %v5386 = vadd.f32 %v5347, %v5370
        %v5387 = vadd.f32 %v5348, %v5370
        %v5388 = vadd.f32 %v5349, %v5370
        %v5389 = vadd.f32 %v5350, %v5370
        %v5390 = vadd.f32 %v5351, %v5370
        %v5391 = vadd.f32 %v5352, %v5370
        %v5392 = vadd.f32 %v5353, %v5370
        %v5393 = vadd.f32 %v5354, %v5370
        %v5394 = vadd.f32 %v5355, %v5370
        %v5395 = vadd.f32 %v5356, %v5370
        %v5396 = vadd.f32 %v5357, %v5370
        %v5397 = vadd.f32 %v5358, %v5370
        %v5398 = vadd.f32 %v5359, %v5370
        %v5399 = vadd.f32 %v5360, %v5370
        %v5400 = vadd.f32 %v5361, %v5370
        %v5401 = vadd.f32 %v5362, %v5370
        %v5402 = vadd.f32 %v5363, %v5370
        %v5403 = vadd.f32 %v5364, %v5370
        %5404 = vst.msk [vmem:[#allocation4] sm:$0xff] %vm305, %v5372
        %5405 = vst.msk [vmem:[#allocation4 + $0x8] sm:$0xff] %vm305, %v5373
        %5406 = vst.msk [vmem:[#allocation4 + $0x10] sm:$0xff] %vm305, %v5374
        %5407 = vst.msk [vmem:[#allocation4 + $0x18] sm:$0xff] %vm305, %v5375
        %5408 = vst.msk [vmem:[#allocation4 + $0x20] sm:$0xff] %vm305, %v5376
        %5409 = vst.msk [vmem:[#allocation4 + $0x28] sm:$0xff] %vm305, %v5377
        %5410 = vst.msk [vmem:[#allocation4 + $0x30] sm:$0xff] %vm305, %v5378
        %5411 = vst.msk [vmem:[#allocation4 + $0x38] sm:$0xff] %vm305, %v5379
        %5412 = vst.msk [vmem:[#allocation4 + $0x40] sm:$0xff] %vm305, %v5380
        %5413 = vst.msk [vmem:[#allocation4 + $0x48] sm:$0xff] %vm305, %v5381
        %5414 = vst.msk [vmem:[#allocation4 + $0x50] sm:$0xff] %vm305, %v5382
        %5415 = vst.msk [vmem:[#allocation4 + $0x58] sm:$0xff] %vm305, %v5383
        %5416 = vst.msk [vmem:[#allocation4 + $0x60] sm:$0xff] %vm305, %v5384
        %5417 = vst.msk [vmem:[#allocation4 + $0x68] sm:$0xff] %vm305, %v5385
        %5418 = vst.msk [vmem:[#allocation4 + $0x70] sm:$0xff] %vm305, %v5386
        %5419 = vst.msk [vmem:[#allocation4 + $0x78] sm:$0xff] %vm305, %v5387
        %5420 = vst.msk [vmem:[#allocation4 + $0x80] sm:$0xff] %vm305, %v5388
        %5421 = vst.msk [vmem:[#allocation4 + $0x88] sm:$0xff] %vm305, %v5389
        %5422 = vst.msk [vmem:[#allocation4 + $0x90] sm:$0xff] %vm305, %v5390
        %5423 = vst.msk [vmem:[#allocation4 + $0x98] sm:$0xff] %vm305, %v5391
        %5424 = vst.msk [vmem:[#allocation4 + $0xa0] sm:$0xff] %vm305, %v5392
        %5425 = vst.msk [vmem:[#allocation4 + $0xa8] sm:$0xff] %vm305, %v5393
        %5426 = vst.msk [vmem:[#allocation4 + $0xb0] sm:$0xff] %vm305, %v5394
        %5427 = vst.msk [vmem:[#allocation4 + $0xb8] sm:$0xff] %vm305, %v5395
        %5428 = vst.msk [vmem:[#allocation4 + $0xc0] sm:$0xff] %vm305, %v5396
        %5429 = vst.msk [vmem:[#allocation4 + $0xc8] sm:$0xff] %vm305, %v5397
        %5430 = vst.msk [vmem:[#allocation4 + $0xd0] sm:$0xff] %vm305, %v5398
        %5431 = vst.msk [vmem:[#allocation4 + $0xd8] sm:$0xff] %vm305, %v5399
        %5432 = vst.msk [vmem:[#allocation4 + $0xe0] sm:$0xff] %vm305, %v5400
        %5433 = vst.msk [vmem:[#allocation4 + $0xe8] sm:$0xff] %vm305, %v5401
        %5434 = vst.msk [vmem:[#allocation4 + $0xf0] sm:$0xff] %vm305, %v5402
        %5435 = vst.msk [vmem:[#allocation4 + $0xf8] sm:$0xff] %vm305, %v5403
        %v5436 = vld [vmem:[#allocation4] sm:$0xff]
        %v5437 = vld [vmem:[#allocation4 + $0x8] sm:$0xff]
        %v5438 = vld [vmem:[#allocation4 + $0x10] sm:$0xff]
        %v5439 = vld [vmem:[#allocation4 + $0x18] sm:$0xff]
        %v5440 = vld [vmem:[#allocation4 + $0x20] sm:$0xff]
        %v5441 = vld [vmem:[#allocation4 + $0x28] sm:$0xff]
        %v5442 = vld [vmem:[#allocation4 + $0x30] sm:$0xff]
        %v5443 = vld [vmem:[#allocation4 + $0x38] sm:$0xff]
        %v5444 = vld [vmem:[#allocation4 + $0x40] sm:$0xff]
        %v5445 = vld [vmem:[#allocation4 + $0x48] sm:$0xff]
        %v5446 = vld [vmem:[#allocation4 + $0x50] sm:$0xff]
        %v5447 = vld [vmem:[#allocation4 + $0x58] sm:$0xff]
        %v5448 = vld [vmem:[#allocation4 + $0x60] sm:$0xff]
        %v5449 = vld [vmem:[#allocation4 + $0x68] sm:$0xff]
        %v5450 = vld [vmem:[#allocation4 + $0x70] sm:$0xff]
        %v5451 = vld [vmem:[#allocation4 + $0x78] sm:$0xff]
        %v5452 = vld [vmem:[#allocation4 + $0x80] sm:$0xff]
        %v5453 = vld [vmem:[#allocation4 + $0x88] sm:$0xff]
        %v5454 = vld [vmem:[#allocation4 + $0x90] sm:$0xff]
        %v5455 = vld [vmem:[#allocation4 + $0x98] sm:$0xff]
        %v5456 = vld [vmem:[#allocation4 + $0xa0] sm:$0xff]
        %v5457 = vld [vmem:[#allocation4 + $0xa8] sm:$0xff]
        %v5458 = vld [vmem:[#allocation4 + $0xb0] sm:$0xff]
        %v5459 = vld [vmem:[#allocation4 + $0xb8] sm:$0xff]
        %v5460 = vld [vmem:[#allocation4 + $0xc0] sm:$0xff]
        %v5461 = vld [vmem:[#allocation4 + $0xc8] sm:$0xff]
        %v5462 = vld [vmem:[#allocation4 + $0xd0] sm:$0xff]
        %v5463 = vld [vmem:[#allocation4 + $0xd8] sm:$0xff]
        %v5464 = vld [vmem:[#allocation4 + $0xe0] sm:$0xff]
        %v5465 = vld [vmem:[#allocation4 + $0xe8] sm:$0xff]
        %v5466 = vld [vmem:[#allocation4 + $0xf0] sm:$0xff]
        %v5467 = vld [vmem:[#allocation4 + $0xf8] sm:$0xff]
        %v5468 = vsel %vm305, %v5436, 0.0
        %v5469 = vsel %vm305, %v5437, 0.0
        %v5470 = vadd.f32 %v5468, %v5469
        %v5471 = vsel %vm305, %v5438, 0.0
        %v5472 = vadd.f32 %v5470, %v5471
        %v5473 = vsel %vm305, %v5439, 0.0
        %v5474 = vadd.f32 %v5472, %v5473
        %v5475 = vsel %vm305, %v5440, 0.0
        %v5476 = vadd.f32 %v5474, %v5475
        %v5477 = vsel %vm305, %v5441, 0.0
        %v5478 = vadd.f32 %v5476, %v5477
        %v5479 = vsel %vm305, %v5442, 0.0
        %v5480 = vadd.f32 %v5478, %v5479
        %v5481 = vsel %vm305, %v5443, 0.0
        %v5482 = vadd.f32 %v5480, %v5481
        %v5483 = vsel %vm305, %v5444, 0.0
        %v5484 = vadd.f32 %v5482, %v5483
        %v5485 = vsel %vm305, %v5445, 0.0
        %v5486 = vadd.f32 %v5484, %v5485
        %v5487 = vsel %vm305, %v5446, 0.0
        %v5488 = vadd.f32 %v5486, %v5487
        %v5489 = vsel %vm305, %v5447, 0.0
        %v5490 = vadd.f32 %v5488, %v5489
        %v5491 = vsel %vm305, %v5448, 0.0
        %v5492 = vadd.f32 %v5490, %v5491
        %v5493 = vsel %vm305, %v5449, 0.0
        %v5494 = vadd.f32 %v5492, %v5493
        %v5495 = vsel %vm305, %v5450, 0.0
        %v5496 = vadd.f32 %v5494, %v5495
        %v5497 = vsel %vm305, %v5451, 0.0
        %v5498 = vadd.f32 %v5496, %v5497
        %v5499 = vsel %vm305, %v5452, 0.0
        %v5500 = vadd.f32 %v5498, %v5499
        %v5501 = vsel %vm305, %v5453, 0.0
        %v5502 = vadd.f32 %v5500, %v5501
        %v5503 = vsel %vm305, %v5454, 0.0
        %v5504 = vadd.f32 %v5502, %v5503
        %v5505 = vsel %vm305, %v5455, 0.0
        %v5506 = vadd.f32 %v5504, %v5505
        %v5507 = vsel %vm305, %v5456, 0.0
        %v5508 = vadd.f32 %v5506, %v5507
        %v5509 = vsel %vm305, %v5457, 0.0
        %v5510 = vadd.f32 %v5508, %v5509
        %v5511 = vsel %vm305, %v5458, 0.0
        %v5512 = vadd.f32 %v5510, %v5511
        %v5513 = vsel %vm305, %v5459, 0.0
        %v5514 = vadd.f32 %v5512, %v5513
        %v5515 = vsel %vm305, %v5460, 0.0
        %v5516 = vadd.f32 %v5514, %v5515
        %v5517 = vsel %vm305, %v5461, 0.0
        %v5518 = vadd.f32 %v5516, %v5517
        %v5519 = vsel %vm305, %v5462, 0.0
        %v5520 = vadd.f32 %v5518, %v5519
        %v5521 = vsel %vm305, %v5463, 0.0
        %v5522 = vadd.f32 %v5520, %v5521
        %v5523 = vsel %vm305, %v5464, 0.0
        %v5524 = vadd.f32 %v5522, %v5523
        %v5525 = vsel %vm305, %v5465, 0.0
        %v5526 = vadd.f32 %v5524, %v5525
        %v5527 = vsel %vm305, %v5466, 0.0
        %v5528 = vadd.f32 %v5526, %v5527
        %v5529 = vsel %vm305, %v5467, 0.0
        %v5530 = vadd.f32 %v5528, %v5529
        %v5531 = vrot.slane %v5530, 4
        %v5532 = vadd.f32 %v5530, %v5531
        %v5533 = vrot.slane %v5532, 2
        %v5534 = vadd.f32 %v5532, %v5533
        %v5535 = vrot.slane %v5534, 1
        %v5536 = vadd.f32 %v5534, %v5535
        %v5537 = vrcp.pop 256.0
        %v5538 = vmul.f32 %v5536, %v5537
        %v5539 = vsel %vm305, %v5436, -inf
        %v5540 = vsel %vm305, %v5437, -inf
        %v5541 = vsel %vm305, %v5438, -inf
        %v5542 = vsel %vm305, %v5439, -inf
        %v5543 = vsel %vm305, %v5440, -inf
        %v5544 = vmax.f32 %v5539, %v5543
        %v5545 = vsel %vm305, %v5441, -inf
        %v5546 = vmax.f32 %v5540, %v5545
        %v5547 = vsel %vm305, %v5442, -inf
        %v5548 = vmax.f32 %v5541, %v5547
        %v5549 = vsel %vm305, %v5443, -inf
        %v5550 = vmax.f32 %v5542, %v5549
        %v5551 = vsel %vm305, %v5444, -inf
        %v5552 = vmax.f32 %v5544, %v5551
        %v5553 = vsel %vm305, %v5445, -inf
        %v5554 = vmax.f32 %v5546, %v5553
        %v5555 = vsel %vm305, %v5446, -inf
        %v5556 = vmax.f32 %v5548, %v5555
        %v5557 = vsel %vm305, %v5447, -inf
        %v5558 = vmax.f32 %v5550, %v5557
        %v5559 = vsel %vm305, %v5448, -inf
        %v5560 = vmax.f32 %v5552, %v5559
        %v5561 = vsel %vm305, %v5449, -inf
        %v5562 = vmax.f32 %v5554, %v5561
        %v5563 = vsel %vm305, %v5450, -inf
        %v5564 = vmax.f32 %v5556, %v5563
        %v5565 = vsel %vm305, %v5451, -inf
        %v5566 = vmax.f32 %v5558, %v5565
        %v5567 = vsel %vm305, %v5452, -inf
        %v5568 = vmax.f32 %v5560, %v5567
        %v5569 = vsel %vm305, %v5453, -inf
        %v5570 = vmax.f32 %v5562, %v5569
        %v5571 = vsel %vm305, %v5454, -inf
        %v5572 = vmax.f32 %v5564, %v5571
        %v5573 = vsel %vm305, %v5455, -inf
        %v5574 = vmax.f32 %v5566, %v5573
        %v5575 = vsel %vm305, %v5456, -inf
        %v5576 = vmax.f32 %v5568, %v5575
        %v5577 = vsel %vm305, %v5457, -inf
        %v5578 = vmax.f32 %v5570, %v5577
        %v5579 = vsel %vm305, %v5458, -inf
        %v5580 = vmax.f32 %v5572, %v5579
        %v5581 = vsel %vm305, %v5459, -inf
        %v5582 = vmax.f32 %v5574, %v5581
        %v5583 = vsel %vm305, %v5460, -inf
        %v5584 = vmax.f32 %v5576, %v5583
        %v5585 = vsel %vm305, %v5461, -inf
        %v5586 = vmax.f32 %v5578, %v5585
        %v5587 = vsel %vm305, %v5462, -inf
        %v5588 = vmax.f32 %v5580, %v5587
        %v5589 = vsel %vm305, %v5463, -inf
        %v5590 = vmax.f32 %v5582, %v5589
        %v5591 = vsel %vm305, %v5464, -inf
        %v5592 = vmax.f32 %v5584, %v5591
        %v5593 = vsel %vm305, %v5465, -inf
        %v5594 = vmax.f32 %v5586, %v5593
        %v5595 = vsel %vm305, %v5466, -inf
        %v5596 = vmax.f32 %v5588, %v5595
        %v5597 = vsel %vm305, %v5467, -inf
        %v5598 = vmax.f32 %v5590, %v5597
        %v5599 = vmax.f32 %v5592, %v5594
        %v5600 = vmax.f32 %v5596, %v5598
        %v5601 = vmax.f32 %v5599, %v5600
        %v5602 = vrot.slane %v5601, 4
        %v5603 = vmax.f32 %v5601, %v5602
        %v5604 = vrot.slane %v5603, 2
        %v5605 = vmax.f32 %v5603, %v5604
        %v5606 = vrot.slane %v5605, 1
        %v5607 = vmax.f32 %v5605, %v5606
        %v5608 = vlaneseq
        %v5609 = vshrl.u32 %v5608, 7
        %vm5610 = vcmp.eq.s32.totalorder %v5609, 0
        %v5611 = vsel %vm5610, %v5538, %v5607
        %v5612 = vld [vmem:[%s5] sm:$0xff]
        %v5613 = vld [vmem:[%s5 + $0x8] sm:$0xff]
        %v5614 = vld [vmem:[%s5 + $0x10] sm:$0xff]
        %v5615 = vld [vmem:[%s5 + $0x18] sm:$0xff]
        %v5616 = vld [vmem:[%s5 + $0x20] sm:$0xff]
        %v5617 = vld [vmem:[%s5 + $0x28] sm:$0xff]
        %v5618 = vld [vmem:[%s5 + $0x30] sm:$0xff]
        %v5619 = vld [vmem:[%s5 + $0x38] sm:$0xff]
        %v5621 = vsel %vm305, %v5611, 0
        %5623 = vmatprep.subr.mxu0 0.0
        %5624 = vmatpush1.msra.mxu0 0.0
        %5625 = vmatprep.subr.mxu0 0.0
        %5626 = vmatpush1.msra.mxu0 0.0
        %5627 = vmatprep.subr.mxu0 0.0
        %5628 = vmatpush1.msra.mxu0 0.0
        %5629 = vmatprep.subr.mxu0 0.0
        %5630 = vmatpush1.msra.mxu0 0.0
        %5631 = vmatprep.subr.mxu0 0.0
        %5632 = vmatpush1.msra.mxu0 0.0
        %5633 = vmatprep.subr.mxu0 0.0
        %5634 = vmatpush1.msra.mxu0 0.0
        %5635 = vmatprep.subr.mxu0 0.0
        %5636 = vmatpush1.msra.mxu0 0.0
        %5637 = vmatprep.subr.mxu0 0.0
        %5638 = vmatpush1.msra.mxu0 0.0
        %5639 = vmatprep.subr.mxu0 0.0
        %5640 = vmatpush1.msra.mxu0 %v5619
        %5641 = vmatprep.subr.mxu0 0.0
        %5642 = vmatpush1.msra.mxu0 %v5618
        %5643 = vmatprep.subr.mxu0 0.0
        %5644 = vmatpush1.msra.mxu0 %v5617
        %5645 = vmatprep.subr.mxu0 0.0
        %5646 = vmatpush1.msra.mxu0 %v5616
        %5647 = vmatprep.subr.mxu0 0.0
        %5648 = vmatpush1.msra.mxu0 %v5615
        %5649 = vmatprep.subr.mxu0 0.0
        %5650 = vmatpush1.msra.mxu0 %v5614
        %5651 = vmatprep.subr.mxu0 0.0
        %5652 = vmatpush1.msra.mxu0 %v5613
        %5653 = vmatprep.subr.mxu0 0.0
        %5654 = vmatpush1.msra.mxu0 %v5612
        %5655 = vmatprep.subr.mxu0 0.0
        %5656 = vmatpush2.msra.mxu0 0.0
        %5657 = vmatprep.subr.mxu0 0.0
        %5658 = vmatpush2.msra.mxu0 0.0
        %5659 = vmatprep.subr.mxu0 0.0
        %5660 = vmatpush2.msra.mxu0 0.0
        %5661 = vmatprep.subr.mxu0 0.0
        %5662 = vmatpush2.msra.mxu0 0.0
        %5663 = vmatprep.subr.mxu0 0.0
        %5664 = vmatpush2.msra.mxu0 0.0
        %5665 = vmatprep.subr.mxu0 0.0
        %5666 = vmatpush2.msra.mxu0 0.0
        %5667 = vmatprep.subr.mxu0 0.0
        %5668 = vmatpush2.msra.mxu0 0.0
        %5669 = vmatprep.subr.mxu0 0.0
        %5670 = vmatpush2.msra.mxu0 0.0
        %5671 = vmatprep.subr.mxu0 0.0
        %5672 = vmatpush2.msra.mxu0 0.0
        %5673 = vmatprep.subr.mxu0 0.0
        %5674 = vmatpush2.msra.mxu0 0.0
        %5675 = vmatprep.subr.mxu0 0.0
        %5676 = vmatpush2.msra.mxu0 0.0
        %5677 = vmatprep.subr.mxu0 0.0
        %5678 = vmatpush2.msra.mxu0 0.0
        %5679 = vmatprep.subr.mxu0 0.0
        %5680 = vmatpush2.msra.mxu0 0.0
        %5681 = vmatprep.subr.mxu0 0.0
        %5682 = vmatpush2.msra.mxu0 0.0
        %5683 = vmatprep.subr.mxu0 0.0
        %5684 = vmatpush2.msra.mxu0 0.0
        %5685 = vmatprep.subr.mxu0 0.0
        %5686 = vmatpush2.msra.mxu0 0.0
        %5687 = vmatprep.mubr.f32.mxu0 0.0
        %5688 = vmatmul.mubr.f32.gmra.mxu0 %v5621
        %v5689 = vpop.f32.mrf.mxu0
        %v5690 = vadd.f32 0.0, %v5689
        %v5691 = vpop.f32.mrf.mxu0
        %5692 = vdwg.mxu0
        %v5693 = vmax.f32 %v5690, 0.0
        %v5694 = vld [vmem:[%s6] sm:$0xff]
        %vm5695 = vcmask 64512
        %v5697 = vsel %vm5695, %v5693, 0
        %5699 = vmatprep.subr.mxu0 0.0
        %5700 = vmatpush1.msra.mxu0 0.0
        %5701 = vmatprep.subr.mxu0 0.0
        %5702 = vmatpush1.msra.mxu0 0.0
        %5703 = vmatprep.subr.mxu0 0.0
        %5704 = vmatpush1.msra.mxu0 0.0
        %5705 = vmatprep.subr.mxu0 0.0
        %5706 = vmatpush1.msra.mxu0 0.0
        %5707 = vmatprep.subr.mxu0 0.0
        %5708 = vmatpush1.msra.mxu0 0.0
        %5709 = vmatprep.subr.mxu0 0.0
        %5710 = vmatpush1.msra.mxu0 0.0
        %5711 = vmatprep.subr.mxu0 0.0
        %5712 = vmatpush1.msra.mxu0 0.0
        %5713 = vmatprep.subr.mxu0 0.0
        %5714 = vmatpush1.msra.mxu0 0.0
        %5715 = vmatprep.subr.mxu0 0.0
        %5716 = vmatpush1.msra.mxu0 0.0
        %5717 = vmatprep.subr.mxu0 0.0
        %5718 = vmatpush1.msra.mxu0 0.0
        %5719 = vmatprep.subr.mxu0 0.0
        %5720 = vmatpush1.msra.mxu0 0.0
        %5721 = vmatprep.subr.mxu0 0.0
        %5722 = vmatpush1.msra.mxu0 0.0
        %5723 = vmatprep.subr.mxu0 0.0
        %5724 = vmatpush1.msra.mxu0 0.0
        %5725 = vmatprep.subr.mxu0 0.0
        %5726 = vmatpush1.msra.mxu0 0.0
        %5727 = vmatprep.subr.mxu0 0.0
        %5728 = vmatpush1.msra.mxu0 0.0
        %5729 = vmatprep.subr.mxu0 0.0
        %5730 = vmatpush1.msra.mxu0 %v5694
        %5731 = vmatprep.subr.mxu0 0.0
        %5732 = vmatpush2.msra.mxu0 0.0
        %5733 = vmatprep.subr.mxu0 0.0
        %5734 = vmatpush2.msra.mxu0 0.0
        %5735 = vmatprep.subr.mxu0 0.0
        %5736 = vmatpush2.msra.mxu0 0.0
        %5737 = vmatprep.subr.mxu0 0.0
        %5738 = vmatpush2.msra.mxu0 0.0
        %5739 = vmatprep.subr.mxu0 0.0
        %5740 = vmatpush2.msra.mxu0 0.0
        %5741 = vmatprep.subr.mxu0 0.0
        %5742 = vmatpush2.msra.mxu0 0.0
        %5743 = vmatprep.subr.mxu0 0.0
        %5744 = vmatpush2.msra.mxu0 0.0
        %5745 = vmatprep.subr.mxu0 0.0
        %5746 = vmatpush2.msra.mxu0 0.0
        %5747 = vmatprep.subr.mxu0 0.0
        %5748 = vmatpush2.msra.mxu0 0.0
        %5749 = vmatprep.subr.mxu0 0.0
        %5750 = vmatpush2.msra.mxu0 0.0
        %5751 = vmatprep.subr.mxu0 0.0
        %5752 = vmatpush2.msra.mxu0 0.0
        %5753 = vmatprep.subr.mxu0 0.0
        %5754 = vmatpush2.msra.mxu0 0.0
        %5755 = vmatprep.subr.mxu0 0.0
        %5756 = vmatpush2.msra.mxu0 0.0
        %5757 = vmatprep.subr.mxu0 0.0
        %5758 = vmatpush2.msra.mxu0 0.0
        %5759 = vmatprep.subr.mxu0 0.0
        %5760 = vmatpush2.msra.mxu0 0.0
        %5761 = vmatprep.subr.mxu0 0.0
        %5762 = vmatpush2.msra.mxu0 0.0
        %5763 = vmatprep.mubr.f32.mxu0 0.0
        %5764 = vmatmul.mubr.f32.gmra.mxu0 %v5697
        %v5765 = vpop.f32.mrf.mxu0
        %v5766 = vadd.f32 0.0, %v5765
        %v5767 = vpop.f32.mrf.mxu0
        %5768 = vdwg.mxu0
        %v5770 = vrot.slane %v5766, 1
        %v5772 = vadd.f32 %v5766, %v5770
        %v5773 = vxor.u32 %v5772, 2147483648
        %v5774 = vmul.f32 %v5773, 1.442695
        %v5775 = vpow.pop %v5774
        %v5776 = vadd.f32 %v5775, 1.0
        %v5777 = vrcp.pop %v5776
        %v5778 = vmul.f32 1.0, %v5777
        %v5779 = vlaneseq
        %v5780 = vshrl.u32 %v5779, 7
        %v5781 = vsub.s32 0, %v5780
        %v5782 = vrot.slane %v5778, %v5781
        %v5783 = vmul.f32 %v5436, %v5782
        %v5784 = vmul.f32 %v5437, %v5782
        %v5785 = vmul.f32 %v5438, %v5782
        %v5786 = vmul.f32 %v5439, %v5782
        %v5787 = vmul.f32 %v5440, %v5782
        %v5788 = vmul.f32 %v5441, %v5782
        %v5789 = vmul.f32 %v5442, %v5782
        %v5790 = vmul.f32 %v5443, %v5782
        %v5791 = vmul.f32 %v5444, %v5782
        %v5792 = vmul.f32 %v5445, %v5782
        %v5793 = vmul.f32 %v5446, %v5782
        %v5794 = vmul.f32 %v5447, %v5782
        %v5795 = vmul.f32 %v5448, %v5782
        %v5796 = vmul.f32 %v5449, %v5782
        %v5797 = vmul.f32 %v5450, %v5782
        %v5798 = vmul.f32 %v5451, %v5782
        %v5799 = vmul.f32 %v5452, %v5782
        %v5800 = vmul.f32 %v5453, %v5782
        %v5801 = vmul.f32 %v5454, %v5782
        %v5802 = vmul.f32 %v5455, %v5782
        %v5803 = vmul.f32 %v5456, %v5782
        %v5804 = vmul.f32 %v5457, %v5782
        %v5805 = vmul.f32 %v5458, %v5782
        %v5806 = vmul.f32 %v5459, %v5782
        %v5807 = vmul.f32 %v5460, %v5782
        %v5808 = vmul.f32 %v5461, %v5782
        %v5809 = vmul.f32 %v5462, %v5782
        %v5810 = vmul.f32 %v5463, %v5782
        %v5811 = vmul.f32 %v5464, %v5782
        %v5812 = vmul.f32 %v5465, %v5782
        %v5813 = vmul.f32 %v5466, %v5782
        %v5814 = vmul.f32 %v5467, %v5782
        %5815 = vst.msk [vmem:[#allocation4] sm:$0xff] %vm305, %v5783
        %5816 = vst.msk [vmem:[#allocation4 + $0x8] sm:$0xff] %vm305, %v5784
        %5817 = vst.msk [vmem:[#allocation4 + $0x10] sm:$0xff] %vm305, %v5785
        %5818 = vst.msk [vmem:[#allocation4 + $0x18] sm:$0xff] %vm305, %v5786
        %5819 = vst.msk [vmem:[#allocation4 + $0x20] sm:$0xff] %vm305, %v5787
        %5820 = vst.msk [vmem:[#allocation4 + $0x28] sm:$0xff] %vm305, %v5788
        %5821 = vst.msk [vmem:[#allocation4 + $0x30] sm:$0xff] %vm305, %v5789
        %5822 = vst.msk [vmem:[#allocation4 + $0x38] sm:$0xff] %vm305, %v5790
        %5823 = vst.msk [vmem:[#allocation4 + $0x40] sm:$0xff] %vm305, %v5791
        %5824 = vst.msk [vmem:[#allocation4 + $0x48] sm:$0xff] %vm305, %v5792
        %5825 = vst.msk [vmem:[#allocation4 + $0x50] sm:$0xff] %vm305, %v5793
        %5826 = vst.msk [vmem:[#allocation4 + $0x58] sm:$0xff] %vm305, %v5794
        %5827 = vst.msk [vmem:[#allocation4 + $0x60] sm:$0xff] %vm305, %v5795
        %5828 = vst.msk [vmem:[#allocation4 + $0x68] sm:$0xff] %vm305, %v5796
        %5829 = vst.msk [vmem:[#allocation4 + $0x70] sm:$0xff] %vm305, %v5797
        %5830 = vst.msk [vmem:[#allocation4 + $0x78] sm:$0xff] %vm305, %v5798
        %5831 = vst.msk [vmem:[#allocation4 + $0x80] sm:$0xff] %vm305, %v5799
        %5832 = vst.msk [vmem:[#allocation4 + $0x88] sm:$0xff] %vm305, %v5800
        %5833 = vst.msk [vmem:[#allocation4 + $0x90] sm:$0xff] %vm305, %v5801
        %5834 = vst.msk [vmem:[#allocation4 + $0x98] sm:$0xff] %vm305, %v5802
        %5835 = vst.msk [vmem:[#allocation4 + $0xa0] sm:$0xff] %vm305, %v5803
        %5836 = vst.msk [vmem:[#allocation4 + $0xa8] sm:$0xff] %vm305, %v5804
        %5837 = vst.msk [vmem:[#allocation4 + $0xb0] sm:$0xff] %vm305, %v5805
        %5838 = vst.msk [vmem:[#allocation4 + $0xb8] sm:$0xff] %vm305, %v5806
        %5839 = vst.msk [vmem:[#allocation4 + $0xc0] sm:$0xff] %vm305, %v5807
        %5840 = vst.msk [vmem:[#allocation4 + $0xc8] sm:$0xff] %vm305, %v5808
        %5841 = vst.msk [vmem:[#allocation4 + $0xd0] sm:$0xff] %vm305, %v5809
        %5842 = vst.msk [vmem:[#allocation4 + $0xd8] sm:$0xff] %vm305, %v5810
        %5843 = vst.msk [vmem:[#allocation4 + $0xe0] sm:$0xff] %vm305, %v5811
        %5844 = vst.msk [vmem:[#allocation4 + $0xe8] sm:$0xff] %vm305, %v5812
        %5845 = vst.msk [vmem:[#allocation4 + $0xf0] sm:$0xff] %vm305, %v5813
        %5846 = vst.msk [vmem:[#allocation4 + $0xf8] sm:$0xff] %vm305, %v5814
        %v5847 = vld [vmem:[#allocation4] sm:$0xff]
        %v5848 = vld [vmem:[#allocation4 + $0x8] sm:$0xff]
        %v5849 = vld [vmem:[#allocation4 + $0x10] sm:$0xff]
        %v5850 = vld [vmem:[#allocation4 + $0x18] sm:$0xff]
        %v5851 = vld [vmem:[#allocation4 + $0x20] sm:$0xff]
        %v5852 = vld [vmem:[#allocation4 + $0x28] sm:$0xff]
        %v5853 = vld [vmem:[#allocation4 + $0x30] sm:$0xff]
        %v5854 = vld [vmem:[#allocation4 + $0x38] sm:$0xff]
        %v5855 = vld [vmem:[#allocation4 + $0x40] sm:$0xff]
        %v5856 = vld [vmem:[#allocation4 + $0x48] sm:$0xff]
        %v5857 = vld [vmem:[#allocation4 + $0x50] sm:$0xff]
        %v5858 = vld [vmem:[#allocation4 + $0x58] sm:$0xff]
        %v5859 = vld [vmem:[#allocation4 + $0x60] sm:$0xff]
        %v5860 = vld [vmem:[#allocation4 + $0x68] sm:$0xff]
        %v5861 = vld [vmem:[#allocation4 + $0x70] sm:$0xff]
        %v5862 = vld [vmem:[#allocation4 + $0x78] sm:$0xff]
        %v5863 = vld [vmem:[#allocation4 + $0x80] sm:$0xff]
        %v5864 = vld [vmem:[#allocation4 + $0x88] sm:$0xff]
        %v5865 = vld [vmem:[#allocation4 + $0x90] sm:$0xff]
        %v5866 = vld [vmem:[#allocation4 + $0x98] sm:$0xff]
        %v5867 = vld [vmem:[#allocation4 + $0xa0] sm:$0xff]
        %v5868 = vld [vmem:[#allocation4 + $0xa8] sm:$0xff]
        %v5869 = vld [vmem:[#allocation4 + $0xb0] sm:$0xff]
        %v5870 = vld [vmem:[#allocation4 + $0xb8] sm:$0xff]
        %v5871 = vld [vmem:[#allocation4 + $0xc0] sm:$0xff]
        %v5872 = vld [vmem:[#allocation4 + $0xc8] sm:$0xff]
        %v5873 = vld [vmem:[#allocation4 + $0xd0] sm:$0xff]
        %v5874 = vld [vmem:[#allocation4 + $0xd8] sm:$0xff]
        %v5875 = vld [vmem:[#allocation4 + $0xe0] sm:$0xff]
        %v5876 = vld [vmem:[#allocation4 + $0xe8] sm:$0xff]
        %v5877 = vld [vmem:[#allocation4 + $0xf0] sm:$0xff]
        %v5878 = vld [vmem:[#allocation4 + $0xf8] sm:$0xff]
        %v5879 = vsel %vm305, %v5847, 0.0
        %5880 = vadd.xlane.f32.xlu0 %v5879
        %v5881 = vpop.xlane.xlu0 %5880
        %v5882 = vsel %vm305, %v5848, 0.0
        %5883 = vadd.xlane.f32.xlu0 %v5882
        %v5884 = vpop.xlane.xlu0 %5883
        %v5885 = vsel %vm305, %v5849, 0.0
        %5886 = vadd.xlane.f32.xlu0 %v5885
        %v5887 = vpop.xlane.xlu0 %5886
        %v5888 = vsel %vm305, %v5850, 0.0
        %5889 = vadd.xlane.f32.xlu0 %v5888
        %v5890 = vpop.xlane.xlu0 %5889
        %v5891 = vsel %vm305, %v5851, 0.0
        %5892 = vadd.xlane.f32.xlu0 %v5891
        %v5893 = vpop.xlane.xlu0 %5892
        %v5894 = vsel %vm305, %v5852, 0.0
        %5895 = vadd.xlane.f32.xlu0 %v5894
        %v5896 = vpop.xlane.xlu0 %5895
        %v5897 = vsel %vm305, %v5853, 0.0
        %5898 = vadd.xlane.f32.xlu0 %v5897
        %v5899 = vpop.xlane.xlu0 %5898
        %v5900 = vsel %vm305, %v5854, 0.0
        %5901 = vadd.xlane.f32.xlu0 %v5900
        %v5902 = vpop.xlane.xlu0 %5901
        %v5903 = vsel %vm305, %v5855, 0.0
        %5904 = vadd.xlane.f32.xlu0 %v5903
        %v5905 = vpop.xlane.xlu0 %5904
        %v5906 = vsel %vm305, %v5856, 0.0
        %5907 = vadd.xlane.f32.xlu0 %v5906
        %v5908 = vpop.xlane.xlu0 %5907
        %v5909 = vsel %vm305, %v5857, 0.0
        %5910 = vadd.xlane.f32.xlu0 %v5909
        %v5911 = vpop.xlane.xlu0 %5910
        %v5912 = vsel %vm305, %v5858, 0.0
        %5913 = vadd.xlane.f32.xlu0 %v5912
        %v5914 = vpop.xlane.xlu0 %5913
        %v5915 = vsel %vm305, %v5859, 0.0
        %5916 = vadd.xlane.f32.xlu0 %v5915
        %v5917 = vpop.xlane.xlu0 %5916
        %v5918 = vsel %vm305, %v5860, 0.0
        %5919 = vadd.xlane.f32.xlu0 %v5918
        %v5920 = vpop.xlane.xlu0 %5919
        %v5921 = vsel %vm305, %v5861, 0.0
        %5922 = vadd.xlane.f32.xlu0 %v5921
        %v5923 = vpop.xlane.xlu0 %5922
        %v5924 = vsel %vm305, %v5862, 0.0
        %5925 = vadd.xlane.f32.xlu0 %v5924
        %v5926 = vpop.xlane.xlu0 %5925
        %v5927 = vsel %vm305, %v5863, 0.0
        %5928 = vadd.xlane.f32.xlu0 %v5927
        %v5929 = vpop.xlane.xlu0 %5928
        %v5930 = vsel %vm305, %v5864, 0.0
        %5931 = vadd.xlane.f32.xlu0 %v5930
        %v5932 = vpop.xlane.xlu0 %5931
        %v5933 = vsel %vm305, %v5865, 0.0
        %5934 = vadd.xlane.f32.xlu0 %v5933
        %v5935 = vpop.xlane.xlu0 %5934
        %v5936 = vsel %vm305, %v5866, 0.0
        %5937 = vadd.xlane.f32.xlu0 %v5936
        %v5938 = vpop.xlane.xlu0 %5937
        %v5939 = vsel %vm305, %v5867, 0.0
        %5940 = vadd.xlane.f32.xlu0 %v5939
        %v5941 = vpop.xlane.xlu0 %5940
        %v5942 = vsel %vm305, %v5868, 0.0
        %5943 = vadd.xlane.f32.xlu0 %v5942
        %v5944 = vpop.xlane.xlu0 %5943
        %v5945 = vsel %vm305, %v5869, 0.0
        %5946 = vadd.xlane.f32.xlu0 %v5945
        %v5947 = vpop.xlane.xlu0 %5946
        %v5948 = vsel %vm305, %v5870, 0.0
        %5949 = vadd.xlane.f32.xlu0 %v5948
        %v5950 = vpop.xlane.xlu0 %5949
        %v5951 = vsel %vm305, %v5871, 0.0
        %5952 = vadd.xlane.f32.xlu0 %v5951
        %v5953 = vpop.xlane.xlu0 %5952
        %v5954 = vsel %vm305, %v5872, 0.0
        %5955 = vadd.xlane.f32.xlu0 %v5954
        %v5956 = vpop.xlane.xlu0 %5955
        %v5957 = vsel %vm305, %v5873, 0.0
        %5958 = vadd.xlane.f32.xlu0 %v5957
        %v5959 = vpop.xlane.xlu0 %5958
        %v5960 = vsel %vm305, %v5874, 0.0
        %5961 = vadd.xlane.f32.xlu0 %v5960
        %v5962 = vpop.xlane.xlu0 %5961
        %v5963 = vsel %vm305, %v5875, 0.0
        %5964 = vadd.xlane.f32.xlu0 %v5963
        %v5965 = vpop.xlane.xlu0 %5964
        %v5966 = vsel %vm305, %v5876, 0.0
        %5967 = vadd.xlane.f32.xlu0 %v5966
        %v5968 = vpop.xlane.xlu0 %5967
        %v5969 = vsel %vm305, %v5877, 0.0
        %5970 = vadd.xlane.f32.xlu0 %v5969
        %v5971 = vpop.xlane.xlu0 %5970
        %v5972 = vsel %vm305, %v5878, 0.0
        %5973 = vadd.xlane.f32.xlu0 %v5972
        %v5974 = vpop.xlane.xlu0 %5973
        %v5975 = vrcp.pop 64.0
        %v5976 = vmul.f32 %v5881, %v5975
        %v5977 = vmul.f32 %v5884, %v5975
        %v5978 = vmul.f32 %v5887, %v5975
        %v5979 = vmul.f32 %v5890, %v5975
        %v5980 = vmul.f32 %v5893, %v5975
        %v5981 = vmul.f32 %v5896, %v5975
        %v5982 = vmul.f32 %v5899, %v5975
        %v5983 = vmul.f32 %v5902, %v5975
        %v5984 = vmul.f32 %v5905, %v5975
        %v5985 = vmul.f32 %v5908, %v5975
        %v5986 = vmul.f32 %v5911, %v5975
        %v5987 = vmul.f32 %v5914, %v5975
        %v5988 = vmul.f32 %v5917, %v5975
        %v5989 = vmul.f32 %v5920, %v5975
        %v5990 = vmul.f32 %v5923, %v5975
        %v5991 = vmul.f32 %v5926, %v5975
        %v5992 = vmul.f32 %v5929, %v5975
        %v5993 = vmul.f32 %v5932, %v5975
        %v5994 = vmul.f32 %v5935, %v5975
        %v5995 = vmul.f32 %v5938, %v5975
        %v5996 = vmul.f32 %v5941, %v5975
        %v5997 = vmul.f32 %v5944, %v5975
        %v5998 = vmul.f32 %v5947, %v5975
        %v5999 = vmul.f32 %v5950, %v5975
        %v6000 = vmul.f32 %v5953, %v5975
        %v6001 = vmul.f32 %v5956, %v5975
        %v6002 = vmul.f32 %v5959, %v5975
        %v6003 = vmul.f32 %v5962, %v5975
        %v6004 = vmul.f32 %v5965, %v5975
        %v6005 = vmul.f32 %v5968, %v5975
        %v6006 = vmul.f32 %v5971, %v5975
        %v6007 = vmul.f32 %v5974, %v5975
        %v6008 = vsel %vm305, %v5847, -inf
        %6009 = vmax.xlane.f32.xlu0 %v6008
        %v6010 = vpop.xlane.xlu0 %6009
        %v6011 = vsel %vm305, %v5848, -inf
        %6012 = vmax.xlane.f32.xlu0 %v6011
        %v6013 = vpop.xlane.xlu0 %6012
        %v6014 = vsel %vm305, %v5849, -inf
        %6015 = vmax.xlane.f32.xlu0 %v6014
        %v6016 = vpop.xlane.xlu0 %6015
        %v6017 = vsel %vm305, %v5850, -inf
        %6018 = vmax.xlane.f32.xlu0 %v6017
        %v6019 = vpop.xlane.xlu0 %6018
        %v6020 = vsel %vm305, %v5851, -inf
        %6021 = vmax.xlane.f32.xlu0 %v6020
        %v6022 = vpop.xlane.xlu0 %6021
        %v6023 = vsel %vm305, %v5852, -inf
        %6024 = vmax.xlane.f32.xlu0 %v6023
        %v6025 = vpop.xlane.xlu0 %6024
        %v6026 = vsel %vm305, %v5853, -inf
        %6027 = vmax.xlane.f32.xlu0 %v6026
        %v6028 = vpop.xlane.xlu0 %6027
        %v6029 = vsel %vm305, %v5854, -inf
        %6030 = vmax.xlane.f32.xlu0 %v6029
        %v6031 = vpop.xlane.xlu0 %6030
        %v6032 = vsel %vm305, %v5855, -inf
        %6033 = vmax.xlane.f32.xlu0 %v6032
        %v6034 = vpop.xlane.xlu0 %6033
        %v6035 = vsel %vm305, %v5856, -inf
        %6036 = vmax.xlane.f32.xlu0 %v6035
        %v6037 = vpop.xlane.xlu0 %6036
        %v6038 = vsel %vm305, %v5857, -inf
        %6039 = vmax.xlane.f32.xlu0 %v6038
        %v6040 = vpop.xlane.xlu0 %6039
        %v6041 = vsel %vm305, %v5858, -inf
        %6042 = vmax.xlane.f32.xlu0 %v6041
        %v6043 = vpop.xlane.xlu0 %6042
        %v6044 = vsel %vm305, %v5859, -inf
        %6045 = vmax.xlane.f32.xlu0 %v6044
        %v6046 = vpop.xlane.xlu0 %6045
        %v6047 = vsel %vm305, %v5860, -inf
        %6048 = vmax.xlane.f32.xlu0 %v6047
        %v6049 = vpop.xlane.xlu0 %6048
        %v6050 = vsel %vm305, %v5861, -inf
        %6051 = vmax.xlane.f32.xlu0 %v6050
        %v6052 = vpop.xlane.xlu0 %6051
        %v6053 = vsel %vm305, %v5862, -inf
        %6054 = vmax.xlane.f32.xlu0 %v6053
        %v6055 = vpop.xlane.xlu0 %6054
        %v6056 = vsel %vm305, %v5863, -inf
        %6057 = vmax.xlane.f32.xlu0 %v6056
        %v6058 = vpop.xlane.xlu0 %6057
        %v6059 = vsel %vm305, %v5864, -inf
        %6060 = vmax.xlane.f32.xlu0 %v6059
        %v6061 = vpop.xlane.xlu0 %6060
        %v6062 = vsel %vm305, %v5865, -inf
        %6063 = vmax.xlane.f32.xlu0 %v6062
        %v6064 = vpop.xlane.xlu0 %6063
        %v6065 = vsel %vm305, %v5866, -inf
        %6066 = vmax.xlane.f32.xlu0 %v6065
        %v6067 = vpop.xlane.xlu0 %6066
        %v6068 = vsel %vm305, %v5867, -inf
        %6069 = vmax.xlane.f32.xlu0 %v6068
        %v6070 = vpop.xlane.xlu0 %6069
        %v6071 = vsel %vm305, %v5868, -inf
        %6072 = vmax.xlane.f32.xlu0 %v6071
        %v6073 = vpop.xlane.xlu0 %6072
        %v6074 = vsel %vm305, %v5869, -inf
        %6075 = vmax.xlane.f32.xlu0 %v6074
        %v6076 = vpop.xlane.xlu0 %6075
        %v6077 = vsel %vm305, %v5870, -inf
        %6078 = vmax.xlane.f32.xlu0 %v6077
        %v6079 = vpop.xlane.xlu0 %6078
        %v6080 = vsel %vm305, %v5871, -inf
        %6081 = vmax.xlane.f32.xlu0 %v6080
        %v6082 = vpop.xlane.xlu0 %6081
        %v6083 = vsel %vm305, %v5872, -inf
        %6084 = vmax.xlane.f32.xlu0 %v6083
        %v6085 = vpop.xlane.xlu0 %6084
        %v6086 = vsel %vm305, %v5873, -inf
        %6087 = vmax.xlane.f32.xlu0 %v6086
        %v6088 = vpop.xlane.xlu0 %6087
        %v6089 = vsel %vm305, %v5874, -inf
        %6090 = vmax.xlane.f32.xlu0 %v6089
        %v6091 = vpop.xlane.xlu0 %6090
        %v6092 = vsel %vm305, %v5875, -inf
        %6093 = vmax.xlane.f32.xlu0 %v6092
        %v6094 = vpop.xlane.xlu0 %6093
        %v6095 = vsel %vm305, %v5876, -inf
        %6096 = vmax.xlane.f32.xlu0 %v6095
        %v6097 = vpop.xlane.xlu0 %6096
        %v6098 = vsel %vm305, %v5877, -inf
        %6099 = vmax.xlane.f32.xlu0 %v6098
        %v6100 = vpop.xlane.xlu0 %6099
        %v6101 = vsel %vm305, %v5878, -inf
        %6102 = vmax.xlane.f32.xlu0 %v6101
        %v6103 = vpop.xlane.xlu0 %6102
        %vm6104 = vcmask 359424
        %6105 = vst.msk [vmem:[#allocation5] sm:$0xff] %vm6104, 0.0
        %6106 = vst.msk [vmem:[#allocation5 + $0x8] sm:$0xff] %vm6104, 0.0
        %vm6107 = vcmask 357376
        %6108 = vst.msk [vmem:[#allocation5 + $0x10] sm:$0x3f] %vm6107, 0.0
        %v6141 = vlaneseq
        %v6142 = vand.u32 %v6141, 127
        %v6143 = vadd.s32 %v6142, 4294967293
        %v6144 = vlaneseq
        %v6145 = vshrl.u32 %v6144, 7
        %v6146 = vsub.s32 %v6143, %v6145
        %v6147 = vrot.slane %v5976, %v6146
        %v6148 = vadd.s32 %v6142, 4294967285
        %v6149 = vlaneseq
        %v6150 = vshrl.u32 %v6149, 7
        %v6151 = vsub.s32 %v6148, %v6150
        %v6152 = vrot.slane %v5977, %v6151
        %vm6153 = vcmask 154712
        %v6154 = vsel %vm6153, %v6152, %v6147
        %v6155 = vlaneseq
        %v6156 = vshrl.u32 %v6155, 7
        %v6157 = vsub.s32 %v6143, %v6156
        %v6158 = vrot.slane %v5978, %v6157
        %v6159 = vlaneseq
        %v6160 = vshrl.u32 %v6159, 7
        %v6161 = vsub.s32 %v6148, %v6160
        %v6162 = vrot.slane %v5979, %v6161
        %v6163 = vsel %vm6153, %v6162, %v6158
        %v6164 = vlaneseq
        %v6165 = vshrl.u32 %v6164, 7
        %v6166 = vsub.s32 %v6143, %v6165
        %v6167 = vrot.slane %v5980, %v6166
        %v6168 = vlaneseq
        %v6169 = vshrl.u32 %v6168, 7
        %v6170 = vsub.s32 %v6148, %v6169
        %v6171 = vrot.slane %v5981, %v6170
        %v6172 = vsel %vm6153, %v6171, %v6167
        %v6173 = vlaneseq
        %v6174 = vshrl.u32 %v6173, 7
        %v6175 = vsub.s32 %v6143, %v6174
        %v6176 = vrot.slane %v5982, %v6175
        %v6177 = vlaneseq
        %v6178 = vshrl.u32 %v6177, 7
        %v6179 = vsub.s32 %v6148, %v6178
        %v6180 = vrot.slane %v5983, %v6179
        %v6181 = vsel %vm6153, %v6180, %v6176
        %v6182 = vlaneseq
        %v6183 = vshrl.u32 %v6182, 7
        %v6184 = vsub.s32 %v6143, %v6183
        %v6185 = vrot.slane %v5984, %v6184
        %v6186 = vlaneseq
        %v6187 = vshrl.u32 %v6186, 7
        %v6188 = vsub.s32 %v6148, %v6187
        %v6189 = vrot.slane %v5985, %v6188
        %v6190 = vsel %vm6153, %v6189, %v6185
        %v6191 = vlaneseq
        %v6192 = vshrl.u32 %v6191, 7
        %v6193 = vsub.s32 %v6143, %v6192
        %v6194 = vrot.slane %v5986, %v6193
        %v6195 = vlaneseq
        %v6196 = vshrl.u32 %v6195, 7
        %v6197 = vsub.s32 %v6148, %v6196
        %v6198 = vrot.slane %v5987, %v6197
        %v6199 = vsel %vm6153, %v6198, %v6194
        %v6200 = vlaneseq
        %v6201 = vshrl.u32 %v6200, 7
        %v6202 = vsub.s32 %v6143, %v6201
        %v6203 = vrot.slane %v5988, %v6202
        %v6204 = vlaneseq
        %v6205 = vshrl.u32 %v6204, 7
        %v6206 = vsub.s32 %v6148, %v6205
        %v6207 = vrot.slane %v5989, %v6206
        %v6208 = vsel %vm6153, %v6207, %v6203
        %v6209 = vlaneseq
        %v6210 = vshrl.u32 %v6209, 7
        %v6211 = vsub.s32 %v6143, %v6210
        %v6212 = vrot.slane %v5990, %v6211
        %v6213 = vlaneseq
        %v6214 = vshrl.u32 %v6213, 7
        %v6215 = vsub.s32 %v6148, %v6214
        %v6216 = vrot.slane %v5991, %v6215
        %v6217 = vsel %vm6153, %v6216, %v6212
        %v6218 = vlaneseq
        %v6219 = vshrl.u32 %v6218, 7
        %v6220 = vsub.s32 %v6143, %v6219
        %v6221 = vrot.slane %v5992, %v6220
        %v6222 = vlaneseq
        %v6223 = vshrl.u32 %v6222, 7
        %v6224 = vsub.s32 %v6148, %v6223
        %v6225 = vrot.slane %v5993, %v6224
        %v6226 = vsel %vm6153, %v6225, %v6221
        %v6227 = vlaneseq
        %v6228 = vshrl.u32 %v6227, 7
        %v6229 = vsub.s32 %v6143, %v6228
        %v6230 = vrot.slane %v5994, %v6229
        %v6231 = vlaneseq
        %v6232 = vshrl.u32 %v6231, 7
        %v6233 = vsub.s32 %v6148, %v6232
        %v6234 = vrot.slane %v5995, %v6233
        %v6235 = vsel %vm6153, %v6234, %v6230
        %v6236 = vlaneseq
        %v6237 = vshrl.u32 %v6236, 7
        %v6238 = vsub.s32 %v6143, %v6237
        %v6239 = vrot.slane %v5996, %v6238
        %v6240 = vlaneseq
        %v6241 = vshrl.u32 %v6240, 7
        %v6242 = vsub.s32 %v6148, %v6241
        %v6243 = vrot.slane %v5997, %v6242
        %v6244 = vsel %vm6153, %v6243, %v6239
        %v6245 = vlaneseq
        %v6246 = vshrl.u32 %v6245, 7
        %v6247 = vsub.s32 %v6143, %v6246
        %v6248 = vrot.slane %v5998, %v6247
        %v6249 = vlaneseq
        %v6250 = vshrl.u32 %v6249, 7
        %v6251 = vsub.s32 %v6148, %v6250
        %v6252 = vrot.slane %v5999, %v6251
        %v6253 = vsel %vm6153, %v6252, %v6248
        %v6254 = vlaneseq
        %v6255 = vshrl.u32 %v6254, 7
        %v6256 = vsub.s32 %v6143, %v6255
        %v6257 = vrot.slane %v6000, %v6256
        %v6258 = vlaneseq
        %v6259 = vshrl.u32 %v6258, 7
        %v6260 = vsub.s32 %v6148, %v6259
        %v6261 = vrot.slane %v6001, %v6260
        %v6262 = vsel %vm6153, %v6261, %v6257
        %v6263 = vlaneseq
        %v6264 = vshrl.u32 %v6263, 7
        %v6265 = vsub.s32 %v6143, %v6264
        %v6266 = vrot.slane %v6002, %v6265
        %v6267 = vlaneseq
        %v6268 = vshrl.u32 %v6267, 7
        %v6269 = vsub.s32 %v6148, %v6268
        %v6270 = vrot.slane %v6003, %v6269
        %v6271 = vsel %vm6153, %v6270, %v6266
        %v6272 = vlaneseq
        %v6273 = vshrl.u32 %v6272, 7
        %v6274 = vsub.s32 %v6143, %v6273
        %v6275 = vrot.slane %v6004, %v6274
        %v6276 = vlaneseq
        %v6277 = vshrl.u32 %v6276, 7
        %v6278 = vsub.s32 %v6148, %v6277
        %v6279 = vrot.slane %v6005, %v6278
        %v6280 = vsel %vm6153, %v6279, %v6275
        %v6281 = vlaneseq
        %v6282 = vshrl.u32 %v6281, 7
        %v6283 = vsub.s32 %v6143, %v6282
        %v6284 = vrot.slane %v6006, %v6283
        %v6285 = vlaneseq
        %v6286 = vshrl.u32 %v6285, 7
        %v6287 = vsub.s32 %v6148, %v6286
        %v6288 = vrot.slane %v6007, %v6287
        %v6289 = vsel %vm6153, %v6288, %v6284
        %vm6290 = vcmask 1041409
        %v6291 = vsel %vm6290, %v6163, %v6154
        %vm6292 = vcmask 1042434
        %v6293 = vsel %vm6292, %v6172, %v6291
        %vm6294 = vcmask 1043459
        %v6295 = vsel %vm6294, %v6181, %v6293
        %vm6296 = vcmask 1044484
        %v6297 = vsel %vm6296, %v6190, %v6295
        %vm6298 = vcmask 1045509
        %v6299 = vsel %vm6298, %v6199, %v6297
        %vm6300 = vcmask 1046534
        %v6301 = vsel %vm6300, %v6208, %v6299
        %vm6302 = vcmask 1047559
        %v6303 = vsel %vm6302, %v6217, %v6301
        %v6304 = vsel %vm6290, %v6235, %v6226
        %v6305 = vsel %vm6292, %v6244, %v6304
        %v6306 = vsel %vm6294, %v6253, %v6305
        %v6307 = vsel %vm6296, %v6262, %v6306
        %v6308 = vsel %vm6298, %v6271, %v6307
        %v6309 = vsel %vm6300, %v6280, %v6308
        %v6310 = vsel %vm6302, %v6289, %v6309
        %vm6313 = vcmask 154648
        %6314 = vst.msk [vmem:[#allocation5 + $0x3] sm:$0xff] %vm6313, %v6303
        %6315 = vst.msk [vmem:[#allocation5 + $0xb] sm:$0xff] %vm6313, %v6310
        %v6348 = vadd.s32 %v6142, 4294967271
        %v6349 = vlaneseq
        %v6350 = vshrl.u32 %v6349, 7
        %v6351 = vsub.s32 %v6348, %v6350
        %v6352 = vrot.slane %v6010, %v6351
        %v6353 = vadd.s32 %v6142, 4294967263
        %v6354 = vlaneseq
        %v6355 = vshrl.u32 %v6354, 7
        %v6356 = vsub.s32 %v6353, %v6355
        %v6357 = vrot.slane %v6013, %v6356
        %vm6358 = vcmask 335112
        %v6359 = vsel %vm6358, %v6357, %v6352
        %v6360 = vlaneseq
        %v6361 = vshrl.u32 %v6360, 7
        %v6362 = vsub.s32 %v6348, %v6361
        %v6363 = vrot.slane %v6016, %v6362
        %v6364 = vlaneseq
        %v6365 = vshrl.u32 %v6364, 7
        %v6366 = vsub.s32 %v6353, %v6365
        %v6367 = vrot.slane %v6019, %v6366
        %v6368 = vsel %vm6358, %v6367, %v6363
        %v6369 = vlaneseq
        %v6370 = vshrl.u32 %v6369, 7
        %v6371 = vsub.s32 %v6348, %v6370
        %v6372 = vrot.slane %v6022, %v6371
        %v6373 = vlaneseq
        %v6374 = vshrl.u32 %v6373, 7
        %v6375 = vsub.s32 %v6353, %v6374
        %v6376 = vrot.slane %v6025, %v6375
        %v6377 = vsel %vm6358, %v6376, %v6372
        %v6378 = vlaneseq
        %v6379 = vshrl.u32 %v6378, 7
        %v6380 = vsub.s32 %v6348, %v6379
        %v6381 = vrot.slane %v6028, %v6380
        %v6382 = vlaneseq
        %v6383 = vshrl.u32 %v6382, 7
        %v6384 = vsub.s32 %v6353, %v6383
        %v6385 = vrot.slane %v6031, %v6384
        %v6386 = vsel %vm6358, %v6385, %v6381
        %v6387 = vlaneseq
        %v6388 = vshrl.u32 %v6387, 7
        %v6389 = vsub.s32 %v6348, %v6388
        %v6390 = vrot.slane %v6034, %v6389
        %v6391 = vlaneseq
        %v6392 = vshrl.u32 %v6391, 7
        %v6393 = vsub.s32 %v6353, %v6392
        %v6394 = vrot.slane %v6037, %v6393
        %v6395 = vsel %vm6358, %v6394, %v6390
        %v6396 = vlaneseq
        %v6397 = vshrl.u32 %v6396, 7
        %v6398 = vsub.s32 %v6348, %v6397
        %v6399 = vrot.slane %v6040, %v6398
        %v6400 = vlaneseq
        %v6401 = vshrl.u32 %v6400, 7
        %v6402 = vsub.s32 %v6353, %v6401
        %v6403 = vrot.slane %v6043, %v6402
        %v6404 = vsel %vm6358, %v6403, %v6399
        %v6405 = vlaneseq
        %v6406 = vshrl.u32 %v6405, 7
        %v6407 = vsub.s32 %v6348, %v6406
        %v6408 = vrot.slane %v6046, %v6407
        %v6409 = vlaneseq
        %v6410 = vshrl.u32 %v6409, 7
        %v6411 = vsub.s32 %v6353, %v6410
        %v6412 = vrot.slane %v6049, %v6411
        %v6413 = vsel %vm6358, %v6412, %v6408
        %v6414 = vlaneseq
        %v6415 = vshrl.u32 %v6414, 7
        %v6416 = vsub.s32 %v6348, %v6415
        %v6417 = vrot.slane %v6052, %v6416
        %v6418 = vlaneseq
        %v6419 = vshrl.u32 %v6418, 7
        %v6420 = vsub.s32 %v6353, %v6419
        %v6421 = vrot.slane %v6055, %v6420
        %v6422 = vsel %vm6358, %v6421, %v6417
        %v6423 = vlaneseq
        %v6424 = vshrl.u32 %v6423, 7
        %v6425 = vsub.s32 %v6348, %v6424
        %v6426 = vrot.slane %v6058, %v6425
        %v6427 = vlaneseq
        %v6428 = vshrl.u32 %v6427, 7
        %v6429 = vsub.s32 %v6353, %v6428
        %v6430 = vrot.slane %v6061, %v6429
        %v6431 = vsel %vm6358, %v6430, %v6426
        %v6432 = vlaneseq
        %v6433 = vshrl.u32 %v6432, 7
        %v6434 = vsub.s32 %v6348, %v6433
        %v6435 = vrot.slane %v6064, %v6434
        %v6436 = vlaneseq
        %v6437 = vshrl.u32 %v6436, 7
        %v6438 = vsub.s32 %v6353, %v6437
        %v6439 = vrot.slane %v6067, %v6438
        %v6440 = vsel %vm6358, %v6439, %v6435
        %v6441 = vlaneseq
        %v6442 = vshrl.u32 %v6441, 7
        %v6443 = vsub.s32 %v6348, %v6442
        %v6444 = vrot.slane %v6070, %v6443
        %v6445 = vlaneseq
        %v6446 = vshrl.u32 %v6445, 7
        %v6447 = vsub.s32 %v6353, %v6446
        %v6448 = vrot.slane %v6073, %v6447
        %v6449 = vsel %vm6358, %v6448, %v6444
        %v6450 = vlaneseq
        %v6451 = vshrl.u32 %v6450, 7
        %v6452 = vsub.s32 %v6348, %v6451
        %v6453 = vrot.slane %v6076, %v6452
        %v6454 = vlaneseq
        %v6455 = vshrl.u32 %v6454, 7
        %v6456 = vsub.s32 %v6353, %v6455
        %v6457 = vrot.slane %v6079, %v6456
        %v6458 = vsel %vm6358, %v6457, %v6453
        %v6459 = vlaneseq
        %v6460 = vshrl.u32 %v6459, 7
        %v6461 = vsub.s32 %v6348, %v6460
        %v6462 = vrot.slane %v6082, %v6461
        %v6463 = vlaneseq
        %v6464 = vshrl.u32 %v6463, 7
        %v6465 = vsub.s32 %v6353, %v6464
        %v6466 = vrot.slane %v6085, %v6465
        %v6467 = vsel %vm6358, %v6466, %v6462
        %v6468 = vlaneseq
        %v6469 = vshrl.u32 %v6468, 7
        %v6470 = vsub.s32 %v6348, %v6469
        %v6471 = vrot.slane %v6088, %v6470
        %v6472 = vlaneseq
        %v6473 = vshrl.u32 %v6472, 7
        %v6474 = vsub.s32 %v6353, %v6473
        %v6475 = vrot.slane %v6091, %v6474
        %v6476 = vsel %vm6358, %v6475, %v6471
        %v6477 = vlaneseq
        %v6478 = vshrl.u32 %v6477, 7
        %v6479 = vsub.s32 %v6348, %v6478
        %v6480 = vrot.slane %v6094, %v6479
        %v6481 = vlaneseq
        %v6482 = vshrl.u32 %v6481, 7
        %v6483 = vsub.s32 %v6353, %v6482
        %v6484 = vrot.slane %v6097, %v6483
        %v6485 = vsel %vm6358, %v6484, %v6480
        %v6486 = vlaneseq
        %v6487 = vshrl.u32 %v6486, 7
        %v6488 = vsub.s32 %v6348, %v6487
        %v6489 = vrot.slane %v6100, %v6488
        %v6490 = vlaneseq
        %v6491 = vshrl.u32 %v6490, 7
        %v6492 = vsub.s32 %v6353, %v6491
        %v6493 = vrot.slane %v6103, %v6492
        %v6494 = vsel %vm6358, %v6493, %v6489
        %v6495 = vsel %vm6290, %v6368, %v6359
        %v6496 = vsel %vm6292, %v6377, %v6495
        %v6497 = vsel %vm6294, %v6386, %v6496
        %v6498 = vsel %vm6296, %v6395, %v6497
        %v6499 = vsel %vm6298, %v6404, %v6498
        %v6500 = vsel %vm6300, %v6413, %v6499
        %v6501 = vsel %vm6302, %v6422, %v6500
        %v6502 = vsel %vm6290, %v6440, %v6431
        %v6503 = vsel %vm6292, %v6449, %v6502
        %v6504 = vsel %vm6294, %v6458, %v6503
        %v6505 = vsel %vm6296, %v6467, %v6504
        %v6506 = vsel %vm6298, %v6476, %v6505
        %v6507 = vsel %vm6300, %v6485, %v6506
        %v6508 = vsel %vm6302, %v6494, %v6507
        %vm6511 = vcmask 335048
        %6512 = vst.msk [vmem:[#allocation5 + $0x3] sm:$0xff] %vm6511, %v6501
        %6513 = vst.msk [vmem:[#allocation5 + $0xb] sm:$0xff] %vm6511, %v6508
        %v6514 = vld [vmem:[#allocation5] sm:$0xff]
        %v6515 = vld [vmem:[#allocation5 + $0x8] sm:$0xff]
        %v6516 = vld [vmem:[%s7] sm:$0xff]
        %v6517 = vld [vmem:[%s7 + $0x8] sm:$0xff]
        %v6518 = vld [vmem:[%s7 + $0x10] sm:$0xff]
        %v6519 = vld [vmem:[%s7 + $0x18] sm:$0xff]
        %v6520 = vld [vmem:[%s7 + $0x20] sm:$0xff]
        %v6521 = vld [vmem:[%s7 + $0x28] sm:$0xf]
        %v6522 = vld [vmem:[#allocation5 + $0x1] sm:$0xff]
        %v6523 = vld [vmem:[#allocation5 + $0x9] sm:$0xff]
        %s6524 = scalar_lea.vmem %s7, 48
        %v6525 = vld [vmem:[%s6524] sm:$0xff]
        %v6526 = vld [vmem:[%s6524 + $0x8] sm:$0xff]
        %v6527 = vld [vmem:[%s6524 + $0x10] sm:$0xff]
        %v6528 = vld [vmem:[%s6524 + $0x18] sm:$0xff]
        %v6529 = vld [vmem:[%s6524 + $0x20] sm:$0xff]
        %v6530 = vld [vmem:[%s6524 + $0x28] sm:$0xf]
        %v6532 = vsel %vm6104, %v6522, 0
        %v6535 = vsel %vm6104, %v6523, 0
        %vm6537 = vcmask 1043456
        %v6539 = vsel %vm6537, %v6530, 0
        %6541 = vmatprep.subr.mxu0 0.0
        %6542 = vmatpush1.msra.mxu0 0.0
        %6543 = vmatprep.subr.mxu0 0.0
        %6544 = vmatpush1.msra.mxu0 0.0
        %6545 = vmatprep.subr.mxu0 0.0
        %6546 = vmatpush1.msra.mxu0 0.0
        %6547 = vmatprep.subr.mxu0 0.0
        %6548 = vmatpush1.msra.mxu0 0.0
        %6549 = vmatprep.subr.mxu0 0.0
        %6550 = vmatpush1.msra.mxu0 0.0
        %6551 = vmatprep.subr.mxu0 0.0
        %6552 = vmatpush1.msra.mxu0 0.0
        %6553 = vmatprep.subr.mxu0 0.0
        %6554 = vmatpush1.msra.mxu0 0.0
        %6555 = vmatprep.subr.mxu0 0.0
        %6556 = vmatpush1.msra.mxu0 0.0
        %6557 = vmatprep.subr.mxu0 0.0
        %6558 = vmatpush1.msra.mxu0 0.0
        %6559 = vmatprep.subr.mxu0 0.0
        %6560 = vmatpush1.msra.mxu0 0.0
        %6561 = vmatprep.subr.mxu0 0.0
        %6562 = vmatpush1.msra.mxu0 %v6539
        %6563 = vmatprep.subr.mxu0 0.0
        %6564 = vmatpush1.msra.mxu0 %v6529
        %6565 = vmatprep.subr.mxu0 0.0
        %6566 = vmatpush1.msra.mxu0 %v6528
        %6567 = vmatprep.subr.mxu0 0.0
        %6568 = vmatpush1.msra.mxu0 %v6527
        %6569 = vmatprep.subr.mxu0 0.0
        %6570 = vmatpush1.msra.mxu0 %v6526
        %6571 = vmatprep.subr.mxu0 0.0
        %6572 = vmatpush1.msra.mxu0 %v6525
        %6573 = vmatprep.subr.mxu0 0.0
        %6574 = vmatpush2.msra.mxu0 0.0
        %6575 = vmatprep.subr.mxu0 0.0
        %6576 = vmatpush2.msra.mxu0 0.0
        %6577 = vmatprep.subr.mxu0 0.0
        %6578 = vmatpush2.msra.mxu0 0.0
        %6579 = vmatprep.subr.mxu0 0.0
        %6580 = vmatpush2.msra.mxu0 0.0
        %6581 = vmatprep.subr.mxu0 0.0
        %6582 = vmatpush2.msra.mxu0 0.0
        %6583 = vmatprep.subr.mxu0 0.0
        %6584 = vmatpush2.msra.mxu0 0.0
        %6585 = vmatprep.subr.mxu0 0.0
        %6586 = vmatpush2.msra.mxu0 0.0
        %6587 = vmatprep.subr.mxu0 0.0
        %6588 = vmatpush2.msra.mxu0 0.0
        %6589 = vmatprep.subr.mxu0 0.0
        %6590 = vmatpush2.msra.mxu0 0.0
        %6591 = vmatprep.subr.mxu0 0.0
        %6592 = vmatpush2.msra.mxu0 0.0
        %6593 = vmatprep.subr.mxu0 0.0
        %6594 = vmatpush2.msra.mxu0 0.0
        %6595 = vmatprep.subr.mxu0 0.0
        %6596 = vmatpush2.msra.mxu0 0.0
        %6597 = vmatprep.subr.mxu0 0.0
        %6598 = vmatpush2.msra.mxu0 0.0
        %6599 = vmatprep.subr.mxu0 0.0
        %6600 = vmatpush2.msra.mxu0 0.0
        %6601 = vmatprep.subr.mxu0 0.0
        %6602 = vmatpush2.msra.mxu0 0.0
        %6603 = vmatprep.subr.mxu0 0.0
        %6604 = vmatpush2.msra.mxu0 0.0
        %6605 = vmatprep.mubr.f32.mxu0 0.0
        %6606 = vmatmul.mubr.f32.gmra.mxu0 %v6532
        %v6607 = vpop.f32.mrf.mxu0
        %v6608 = vadd.f32 0.0, %v6607
        %v6609 = vpop.f32.mrf.mxu0
        %6610 = vmatprep.mubr.f32.mxu0 0.0
        %6611 = vmatmul.mubr.f32.gmra.mxu0 %v6535
        %v6612 = vpop.f32.mrf.mxu0
        %v6613 = vadd.f32 0.0, %v6612
        %v6614 = vpop.f32.mrf.mxu0
        %6615 = vdwg.mxu0
        %v6617 = vsel %vm6104, %v6514, 0
        %v6620 = vsel %vm6104, %v6515, 0
        %v6623 = vsel %vm6537, %v6521, 0
        %6625 = vmatprep.subr.mxu0 0.0
        %6626 = vmatpush1.msra.mxu0 0.0
        %6627 = vmatprep.subr.mxu0 0.0
        %6628 = vmatpush1.msra.mxu0 0.0
        %6629 = vmatprep.subr.mxu0 0.0
        %6630 = vmatpush1.msra.mxu0 0.0
        %6631 = vmatprep.subr.mxu0 0.0
        %6632 = vmatpush1.msra.mxu0 0.0
        %6633 = vmatprep.subr.mxu0 0.0
        %6634 = vmatpush1.msra.mxu0 0.0
        %6635 = vmatprep.subr.mxu0 0.0
        %6636 = vmatpush1.msra.mxu0 0.0
        %6637 = vmatprep.subr.mxu0 0.0
        %6638 = vmatpush1.msra.mxu0 0.0
        %6639 = vmatprep.subr.mxu0 0.0
        %6640 = vmatpush1.msra.mxu0 0.0
        %6641 = vmatprep.subr.mxu0 0.0
        %6642 = vmatpush1.msra.mxu0 0.0
        %6643 = vmatprep.subr.mxu0 0.0
        %6644 = vmatpush1.msra.mxu0 0.0
        %6645 = vmatprep.subr.mxu0 0.0
        %6646 = vmatpush1.msra.mxu0 %v6623
        %6647 = vmatprep.subr.mxu0 0.0
        %6648 = vmatpush1.msra.mxu0 %v6520
        %6649 = vmatprep.subr.mxu0 0.0
        %6650 = vmatpush1.msra.mxu0 %v6519
        %6651 = vmatprep.subr.mxu0 0.0
        %6652 = vmatpush1.msra.mxu0 %v6518
        %6653 = vmatprep.subr.mxu0 0.0
        %6654 = vmatpush1.msra.mxu0 %v6517
        %6655 = vmatprep.subr.mxu0 0.0
        %6656 = vmatpush1.msra.mxu0 %v6516
        %6657 = vmatprep.subr.mxu0 0.0
        %6658 = vmatpush2.msra.mxu0 0.0
        %6659 = vmatprep.subr.mxu0 0.0
        %6660 = vmatpush2.msra.mxu0 0.0
        %6661 = vmatprep.subr.mxu0 0.0
        %6662 = vmatpush2.msra.mxu0 0.0
        %6663 = vmatprep.subr.mxu0 0.0
        %6664 = vmatpush2.msra.mxu0 0.0
        %6665 = vmatprep.subr.mxu0 0.0
        %6666 = vmatpush2.msra.mxu0 0.0
        %6667 = vmatprep.subr.mxu0 0.0
        %6668 = vmatpush2.msra.mxu0 0.0
        %6669 = vmatprep.subr.mxu0 0.0
        %6670 = vmatpush2.msra.mxu0 0.0
        %6671 = vmatprep.subr.mxu0 0.0
        %6672 = vmatpush2.msra.mxu0 0.0
        %6673 = vmatprep.subr.mxu0 0.0
        %6674 = vmatpush2.msra.mxu0 0.0
        %6675 = vmatprep.subr.mxu0 0.0
        %6676 = vmatpush2.msra.mxu0 0.0
        %6677 = vmatprep.subr.mxu0 0.0
        %6678 = vmatpush2.msra.mxu0 0.0
        %6679 = vmatprep.subr.mxu0 0.0
        %6680 = vmatpush2.msra.mxu0 0.0
        %6681 = vmatprep.subr.mxu0 0.0
        %6682 = vmatpush2.msra.mxu0 0.0
        %6683 = vmatprep.subr.mxu0 0.0
        %6684 = vmatpush2.msra.mxu0 0.0
        %6685 = vmatprep.subr.mxu0 0.0
        %6686 = vmatpush2.msra.mxu0 0.0
        %6687 = vmatprep.subr.mxu0 0.0
        %6688 = vmatpush2.msra.mxu0 0.0
        %6689 = vmatprep.mubr.f32.mxu0 0.0
        %6690 = vmatmul.mubr.f32.gmra.mxu0 %v6617
        %v6691 = vpop.f32.mrf.mxu0
        %v6692 = vadd.f32 %v6608, %v6691
        %v6693 = vpop.f32.mrf.mxu0
        %6694 = vmatprep.mubr.f32.mxu0 0.0
        %6695 = vmatmul.mubr.f32.gmra.mxu0 %v6620
        %v6696 = vpop.f32.mrf.mxu0
        %v6697 = vadd.f32 %v6613, %v6696
        %v6698 = vpop.f32.mrf.mxu0
        %6699 = vdwg.mxu0
        %v6700 = vld [vmem:[#allocation5 + $0x2] sm:$0xff]
        %v6701 = vld [vmem:[#allocation5 + $0xa] sm:$0xff]
        %s6702 = scalar_lea.vmem %s7, 96
        %v6703 = vld [vmem:[%s6702] sm:$0xff]
        %v6704 = vld [vmem:[%s6702 + $0x8] sm:$0xff]
        %v6705 = vld [vmem:[%s6702 + $0x10] sm:$0xff]
        %v6706 = vld [vmem:[%s6702 + $0x18] sm:$0xff]
        %v6707 = vld [vmem:[%s6702 + $0x20] sm:$0xff]
        %v6708 = vld [vmem:[%s6702 + $0x28] sm:$0xf]
        %v6710 = vsel %vm6104, %v6700, 0
        %v6713 = vsel %vm6104, %v6701, 0
        %v6716 = vsel %vm6537, %v6708, 0
        %6718 = vmatprep.subr.mxu0 0.0
        %6719 = vmatpush1.msra.mxu0 0.0
        %6720 = vmatprep.subr.mxu0 0.0
        %6721 = vmatpush1.msra.mxu0 0.0
        %6722 = vmatprep.subr.mxu0 0.0
        %6723 = vmatpush1.msra.mxu0 0.0
        %6724 = vmatprep.subr.mxu0 0.0
        %6725 = vmatpush1.msra.mxu0 0.0
        %6726 = vmatprep.subr.mxu0 0.0
        %6727 = vmatpush1.msra.mxu0 0.0
        %6728 = vmatprep.subr.mxu0 0.0
        %6729 = vmatpush1.msra.mxu0 0.0
        %6730 = vmatprep.subr.mxu0 0.0
        %6731 = vmatpush1.msra.mxu0 0.0
        %6732 = vmatprep.subr.mxu0 0.0
        %6733 = vmatpush1.msra.mxu0 0.0
        %6734 = vmatprep.subr.mxu0 0.0
        %6735 = vmatpush1.msra.mxu0 0.0
        %6736 = vmatprep.subr.mxu0 0.0
        %6737 = vmatpush1.msra.mxu0 0.0
        %6738 = vmatprep.subr.mxu0 0.0
        %6739 = vmatpush1.msra.mxu0 %v6716
        %6740 = vmatprep.subr.mxu0 0.0
        %6741 = vmatpush1.msra.mxu0 %v6707
        %6742 = vmatprep.subr.mxu0 0.0
        %6743 = vmatpush1.msra.mxu0 %v6706
        %6744 = vmatprep.subr.mxu0 0.0
        %6745 = vmatpush1.msra.mxu0 %v6705
        %6746 = vmatprep.subr.mxu0 0.0
        %6747 = vmatpush1.msra.mxu0 %v6704
        %6748 = vmatprep.subr.mxu0 0.0
        %6749 = vmatpush1.msra.mxu0 %v6703
        %6750 = vmatprep.subr.mxu0 0.0
        %6751 = vmatpush2.msra.mxu0 0.0
        %6752 = vmatprep.subr.mxu0 0.0
        %6753 = vmatpush2.msra.mxu0 0.0
        %6754 = vmatprep.subr.mxu0 0.0
        %6755 = vmatpush2.msra.mxu0 0.0
        %6756 = vmatprep.subr.mxu0 0.0
        %6757 = vmatpush2.msra.mxu0 0.0
        %6758 = vmatprep.subr.mxu0 0.0
        %6759 = vmatpush2.msra.mxu0 0.0
        %6760 = vmatprep.subr.mxu0 0.0
        %6761 = vmatpush2.msra.mxu0 0.0
        %6762 = vmatprep.subr.mxu0 0.0
        %6763 = vmatpush2.msra.mxu0 0.0
        %6764 = vmatprep.subr.mxu0 0.0
        %6765 = vmatpush2.msra.mxu0 0.0
        %6766 = vmatprep.subr.mxu0 0.0
        %6767 = vmatpush2.msra.mxu0 0.0
        %6768 = vmatprep.subr.mxu0 0.0
        %6769 = vmatpush2.msra.mxu0 0.0
        %6770 = vmatprep.subr.mxu0 0.0
        %6771 = vmatpush2.msra.mxu0 0.0
        %6772 = vmatprep.subr.mxu0 0.0
        %6773 = vmatpush2.msra.mxu0 0.0
        %6774 = vmatprep.subr.mxu0 0.0
        %6775 = vmatpush2.msra.mxu0 0.0
        %6776 = vmatprep.subr.mxu0 0.0
        %6777 = vmatpush2.msra.mxu0 0.0
        %6778 = vmatprep.subr.mxu0 0.0
        %6779 = vmatpush2.msra.mxu0 0.0
        %6780 = vmatprep.subr.mxu0 0.0
        %6781 = vmatpush2.msra.mxu0 0.0
        %6782 = vmatprep.mubr.f32.mxu0 0.0
        %6783 = vmatmul.mubr.f32.gmra.mxu0 %v6710
        %v6784 = vpop.f32.mrf.mxu0
        %v6785 = vadd.f32 0.0, %v6784
        %v6786 = vpop.f32.mrf.mxu0
        %6787 = vmatprep.mubr.f32.mxu0 0.0
        %6788 = vmatmul.mubr.f32.gmra.mxu0 %v6713
        %v6789 = vpop.f32.mrf.mxu0
        %v6790 = vadd.f32 0.0, %v6789
        %v6791 = vpop.f32.mrf.mxu0
        %6792 = vdwg.mxu0
        %v6793 = vadd.f32 %v6692, %v6785
        %v6794 = vadd.f32 %v6697, %v6790
        %v6795 = vld [vmem:[#allocation5 + $0x3] sm:$0xff]
        %v6796 = vld [vmem:[#allocation5 + $0xb] sm:$0xff]
        %s6797 = scalar_lea.vmem %s7, 144
        %v6798 = vld [vmem:[%s6797] sm:$0xff]
        %v6799 = vld [vmem:[%s6797 + $0x8] sm:$0xff]
        %v6800 = vld [vmem:[%s6797 + $0x10] sm:$0xff]
        %v6801 = vld [vmem:[%s6797 + $0x18] sm:$0xff]
        %v6802 = vld [vmem:[%s6797 + $0x20] sm:$0xff]
        %v6803 = vld [vmem:[%s6797 + $0x28] sm:$0xf]
        %v6805 = vsel %vm6104, %v6795, 0
        %v6808 = vsel %vm6104, %v6796, 0
        %v6811 = vsel %vm6537, %v6803, 0
        %6813 = vmatprep.subr.mxu0 0.0
        %6814 = vmatpush1.msra.mxu0 0.0
        %6815 = vmatprep.subr.mxu0 0.0
        %6816 = vmatpush1.msra.mxu0 0.0
        %6817 = vmatprep.subr.mxu0 0.0
        %6818 = vmatpush1.msra.mxu0 0.0
        %6819 = vmatprep.subr.mxu0 0.0
        %6820 = vmatpush1.msra.mxu0 0.0
        %6821 = vmatprep.subr.mxu0 0.0
        %6822 = vmatpush1.msra.mxu0 0.0
        %6823 = vmatprep.subr.mxu0 0.0
        %6824 = vmatpush1.msra.mxu0 0.0
        %6825 = vmatprep.subr.mxu0 0.0
        %6826 = vmatpush1.msra.mxu0 0.0
        %6827 = vmatprep.subr.mxu0 0.0
        %6828 = vmatpush1.msra.mxu0 0.0
        %6829 = vmatprep.subr.mxu0 0.0
        %6830 = vmatpush1.msra.mxu0 0.0
        %6831 = vmatprep.subr.mxu0 0.0
        %6832 = vmatpush1.msra.mxu0 0.0
        %6833 = vmatprep.subr.mxu0 0.0
        %6834 = vmatpush1.msra.mxu0 %v6811
        %6835 = vmatprep.subr.mxu0 0.0
        %6836 = vmatpush1.msra.mxu0 %v6802
        %6837 = vmatprep.subr.mxu0 0.0
        %6838 = vmatpush1.msra.mxu0 %v6801
        %6839 = vmatprep.subr.mxu0 0.0
        %6840 = vmatpush1.msra.mxu0 %v6800
        %6841 = vmatprep.subr.mxu0 0.0
        %6842 = vmatpush1.msra.mxu0 %v6799
        %6843 = vmatprep.subr.mxu0 0.0
        %6844 = vmatpush1.msra.mxu0 %v6798
        %6845 = vmatprep.subr.mxu0 0.0
        %6846 = vmatpush2.msra.mxu0 0.0
        %6847 = vmatprep.subr.mxu0 0.0
        %6848 = vmatpush2.msra.mxu0 0.0
        %6849 = vmatprep.subr.mxu0 0.0
        %6850 = vmatpush2.msra.mxu0 0.0
        %6851 = vmatprep.subr.mxu0 0.0
        %6852 = vmatpush2.msra.mxu0 0.0
        %6853 = vmatprep.subr.mxu0 0.0
        %6854 = vmatpush2.msra.mxu0 0.0
        %6855 = vmatprep.subr.mxu0 0.0
        %6856 = vmatpush2.msra.mxu0 0.0
        %6857 = vmatprep.subr.mxu0 0.0
        %6858 = vmatpush2.msra.mxu0 0.0
        %6859 = vmatprep.subr.mxu0 0.0
        %6860 = vmatpush2.msra.mxu0 0.0
        %6861 = vmatprep.subr.mxu0 0.0
        %6862 = vmatpush2.msra.mxu0 0.0
        %6863 = vmatprep.subr.mxu0 0.0
        %6864 = vmatpush2.msra.mxu0 0.0
        %6865 = vmatprep.subr.mxu0 0.0
        %6866 = vmatpush2.msra.mxu0 0.0
        %6867 = vmatprep.subr.mxu0 0.0
        %6868 = vmatpush2.msra.mxu0 0.0
        %6869 = vmatprep.subr.mxu0 0.0
        %6870 = vmatpush2.msra.mxu0 0.0
        %6871 = vmatprep.subr.mxu0 0.0
        %6872 = vmatpush2.msra.mxu0 0.0
        %6873 = vmatprep.subr.mxu0 0.0
        %6874 = vmatpush2.msra.mxu0 0.0
        %6875 = vmatprep.subr.mxu0 0.0
        %6876 = vmatpush2.msra.mxu0 0.0
        %6877 = vmatprep.mubr.f32.mxu0 0.0
        %6878 = vmatmul.mubr.f32.gmra.mxu0 %v6805
        %v6879 = vpop.f32.mrf.mxu0
        %v6880 = vadd.f32 0.0, %v6879
        %v6881 = vpop.f32.mrf.mxu0
        %6882 = vmatprep.mubr.f32.mxu0 0.0
        %6883 = vmatmul.mubr.f32.gmra.mxu0 %v6808
        %v6884 = vpop.f32.mrf.mxu0
        %v6885 = vadd.f32 0.0, %v6884
        %v6886 = vpop.f32.mrf.mxu0
        %6887 = vdwg.mxu0
        %v6888 = vadd.f32 %v6793, %v6880
        %v6889 = vadd.f32 %v6794, %v6885
        %v6890 = vld [vmem:[#allocation5 + $0x4] sm:$0xff]
        %v6891 = vld [vmem:[#allocation5 + $0xc] sm:$0xff]
        %s6892 = scalar_lea.vmem %s7, 192
        %v6893 = vld [vmem:[%s6892] sm:$0xff]
        %v6894 = vld [vmem:[%s6892 + $0x8] sm:$0xff]
        %v6895 = vld [vmem:[%s6892 + $0x10] sm:$0xff]
        %v6896 = vld [vmem:[%s6892 + $0x18] sm:$0xff]
        %v6897 = vld [vmem:[%s6892 + $0x20] sm:$0xff]
        %v6898 = vld [vmem:[%s6892 + $0x28] sm:$0xf]
        %v6900 = vsel %vm6104, %v6890, 0
        %v6903 = vsel %vm6104, %v6891, 0
        %v6906 = vsel %vm6537, %v6898, 0
        %6908 = vmatprep.subr.mxu0 0.0
        %6909 = vmatpush1.msra.mxu0 0.0
        %6910 = vmatprep.subr.mxu0 0.0
        %6911 = vmatpush1.msra.mxu0 0.0
        %6912 = vmatprep.subr.mxu0 0.0
        %6913 = vmatpush1.msra.mxu0 0.0
        %6914 = vmatprep.subr.mxu0 0.0
        %6915 = vmatpush1.msra.mxu0 0.0
        %6916 = vmatprep.subr.mxu0 0.0
        %6917 = vmatpush1.msra.mxu0 0.0
        %6918 = vmatprep.subr.mxu0 0.0
        %6919 = vmatpush1.msra.mxu0 0.0
        %6920 = vmatprep.subr.mxu0 0.0
        %6921 = vmatpush1.msra.mxu0 0.0
        %6922 = vmatprep.subr.mxu0 0.0
        %6923 = vmatpush1.msra.mxu0 0.0
        %6924 = vmatprep.subr.mxu0 0.0
        %6925 = vmatpush1.msra.mxu0 0.0
        %6926 = vmatprep.subr.mxu0 0.0
        %6927 = vmatpush1.msra.mxu0 0.0
        %6928 = vmatprep.subr.mxu0 0.0
        %6929 = vmatpush1.msra.mxu0 %v6906
        %6930 = vmatprep.subr.mxu0 0.0
        %6931 = vmatpush1.msra.mxu0 %v6897
        %6932 = vmatprep.subr.mxu0 0.0
        %6933 = vmatpush1.msra.mxu0 %v6896
        %6934 = vmatprep.subr.mxu0 0.0
        %6935 = vmatpush1.msra.mxu0 %v6895
        %6936 = vmatprep.subr.mxu0 0.0
        %6937 = vmatpush1.msra.mxu0 %v6894
        %6938 = vmatprep.subr.mxu0 0.0
        %6939 = vmatpush1.msra.mxu0 %v6893
        %6940 = vmatprep.subr.mxu0 0.0
        %6941 = vmatpush2.msra.mxu0 0.0
        %6942 = vmatprep.subr.mxu0 0.0
        %6943 = vmatpush2.msra.mxu0 0.0
        %6944 = vmatprep.subr.mxu0 0.0
        %6945 = vmatpush2.msra.mxu0 0.0
        %6946 = vmatprep.subr.mxu0 0.0
        %6947 = vmatpush2.msra.mxu0 0.0
        %6948 = vmatprep.subr.mxu0 0.0
        %6949 = vmatpush2.msra.mxu0 0.0
        %6950 = vmatprep.subr.mxu0 0.0
        %6951 = vmatpush2.msra.mxu0 0.0
        %6952 = vmatprep.subr.mxu0 0.0
        %6953 = vmatpush2.msra.mxu0 0.0
        %6954 = vmatprep.subr.mxu0 0.0
        %6955 = vmatpush2.msra.mxu0 0.0
        %6956 = vmatprep.subr.mxu0 0.0
        %6957 = vmatpush2.msra.mxu0 0.0
        %6958 = vmatprep.subr.mxu0 0.0
        %6959 = vmatpush2.msra.mxu0 0.0
        %6960 = vmatprep.subr.mxu0 0.0
        %6961 = vmatpush2.msra.mxu0 0.0
        %6962 = vmatprep.subr.mxu0 0.0
        %6963 = vmatpush2.msra.mxu0 0.0
        %6964 = vmatprep.subr.mxu0 0.0
        %6965 = vmatpush2.msra.mxu0 0.0
        %6966 = vmatprep.subr.mxu0 0.0
        %6967 = vmatpush2.msra.mxu0 0.0
        %6968 = vmatprep.subr.mxu0 0.0
        %6969 = vmatpush2.msra.mxu0 0.0
        %6970 = vmatprep.subr.mxu0 0.0
        %6971 = vmatpush2.msra.mxu0 0.0
        %6972 = vmatprep.mubr.f32.mxu0 0.0
        %6973 = vmatmul.mubr.f32.gmra.mxu0 %v6900
        %v6974 = vpop.f32.mrf.mxu0
        %v6975 = vadd.f32 0.0, %v6974
        %v6976 = vpop.f32.mrf.mxu0
        %6977 = vmatprep.mubr.f32.mxu0 0.0
        %6978 = vmatmul.mubr.f32.gmra.mxu0 %v6903
        %v6979 = vpop.f32.mrf.mxu0
        %v6980 = vadd.f32 0.0, %v6979
        %v6981 = vpop.f32.mrf.mxu0
        %6982 = vdwg.mxu0
        %v6983 = vadd.f32 %v6888, %v6975
        %v6984 = vadd.f32 %v6889, %v6980
        %v6985 = vld [vmem:[#allocation5 + $0x5] sm:$0xff]
        %v6986 = vld [vmem:[#allocation5 + $0xd] sm:$0xff]
        %s6987 = scalar_lea.vmem %s7, 240
        %v6988 = vld [vmem:[%s6987] sm:$0xff]
        %v6989 = vld [vmem:[%s6987 + $0x8] sm:$0xff]
        %v6990 = vld [vmem:[%s6987 + $0x10] sm:$0xff]
        %v6991 = vld [vmem:[%s6987 + $0x18] sm:$0xff]
        %v6992 = vld [vmem:[%s6987 + $0x20] sm:$0xff]
        %v6993 = vld [vmem:[%s6987 + $0x28] sm:$0xf]
        %v6995 = vsel %vm6104, %v6985, 0
        %v6998 = vsel %vm6104, %v6986, 0
        %v7001 = vsel %vm6537, %v6993, 0
        %7003 = vmatprep.subr.mxu0 0.0
        %7004 = vmatpush1.msra.mxu0 0.0
        %7005 = vmatprep.subr.mxu0 0.0
        %7006 = vmatpush1.msra.mxu0 0.0
        %7007 = vmatprep.subr.mxu0 0.0
        %7008 = vmatpush1.msra.mxu0 0.0
        %7009 = vmatprep.subr.mxu0 0.0
        %7010 = vmatpush1.msra.mxu0 0.0
        %7011 = vmatprep.subr.mxu0 0.0
        %7012 = vmatpush1.msra.mxu0 0.0
        %7013 = vmatprep.subr.mxu0 0.0
        %7014 = vmatpush1.msra.mxu0 0.0
        %7015 = vmatprep.subr.mxu0 0.0
        %7016 = vmatpush1.msra.mxu0 0.0
        %7017 = vmatprep.subr.mxu0 0.0
        %7018 = vmatpush1.msra.mxu0 0.0
        %7019 = vmatprep.subr.mxu0 0.0
        %7020 = vmatpush1.msra.mxu0 0.0
        %7021 = vmatprep.subr.mxu0 0.0
        %7022 = vmatpush1.msra.mxu0 0.0
        %7023 = vmatprep.subr.mxu0 0.0
        %7024 = vmatpush1.msra.mxu0 %v7001
        %7025 = vmatprep.subr.mxu0 0.0
        %7026 = vmatpush1.msra.mxu0 %v6992
        %7027 = vmatprep.subr.mxu0 0.0
        %7028 = vmatpush1.msra.mxu0 %v6991
        %7029 = vmatprep.subr.mxu0 0.0
        %7030 = vmatpush1.msra.mxu0 %v6990
        %7031 = vmatprep.subr.mxu0 0.0
        %7032 = vmatpush1.msra.mxu0 %v6989
        %7033 = vmatprep.subr.mxu0 0.0
        %7034 = vmatpush1.msra.mxu0 %v6988
        %7035 = vmatprep.subr.mxu0 0.0
        %7036 = vmatpush2.msra.mxu0 0.0
        %7037 = vmatprep.subr.mxu0 0.0
        %7038 = vmatpush2.msra.mxu0 0.0
        %7039 = vmatprep.subr.mxu0 0.0
        %7040 = vmatpush2.msra.mxu0 0.0
        %7041 = vmatprep.subr.mxu0 0.0
        %7042 = vmatpush2.msra.mxu0 0.0
        %7043 = vmatprep.subr.mxu0 0.0
        %7044 = vmatpush2.msra.mxu0 0.0
        %7045 = vmatprep.subr.mxu0 0.0
        %7046 = vmatpush2.msra.mxu0 0.0
        %7047 = vmatprep.subr.mxu0 0.0
        %7048 = vmatpush2.msra.mxu0 0.0
        %7049 = vmatprep.subr.mxu0 0.0
        %7050 = vmatpush2.msra.mxu0 0.0
        %7051 = vmatprep.subr.mxu0 0.0
        %7052 = vmatpush2.msra.mxu0 0.0
        %7053 = vmatprep.subr.mxu0 0.0
        %7054 = vmatpush2.msra.mxu0 0.0
        %7055 = vmatprep.subr.mxu0 0.0
        %7056 = vmatpush2.msra.mxu0 0.0
        %7057 = vmatprep.subr.mxu0 0.0
        %7058 = vmatpush2.msra.mxu0 0.0
        %7059 = vmatprep.subr.mxu0 0.0
        %7060 = vmatpush2.msra.mxu0 0.0
        %7061 = vmatprep.subr.mxu0 0.0
        %7062 = vmatpush2.msra.mxu0 0.0
        %7063 = vmatprep.subr.mxu0 0.0
        %7064 = vmatpush2.msra.mxu0 0.0
        %7065 = vmatprep.subr.mxu0 0.0
        %7066 = vmatpush2.msra.mxu0 0.0
        %7067 = vmatprep.mubr.f32.mxu0 0.0
        %7068 = vmatmul.mubr.f32.gmra.mxu0 %v6995
        %v7069 = vpop.f32.mrf.mxu0
        %v7070 = vadd.f32 0.0, %v7069
        %v7071 = vpop.f32.mrf.mxu0
        %7072 = vmatprep.mubr.f32.mxu0 0.0
        %7073 = vmatmul.mubr.f32.gmra.mxu0 %v6998
        %v7074 = vpop.f32.mrf.mxu0
        %v7075 = vadd.f32 0.0, %v7074
        %v7076 = vpop.f32.mrf.mxu0
        %7077 = vdwg.mxu0
        %v7078 = vadd.f32 %v6983, %v7070
        %v7079 = vadd.f32 %v6984, %v7075
        %v7080 = vld [vmem:[#allocation5 + $0x6] sm:$0xff]
        %v7081 = vld [vmem:[#allocation5 + $0xe] sm:$0xff]
        %s7082 = scalar_lea.vmem %s7, 288
        %v7083 = vld [vmem:[%s7082] sm:$0xff]
        %v7084 = vld [vmem:[%s7082 + $0x8] sm:$0xff]
        %v7085 = vld [vmem:[%s7082 + $0x10] sm:$0xff]
        %v7086 = vld [vmem:[%s7082 + $0x18] sm:$0xff]
        %v7087 = vld [vmem:[%s7082 + $0x20] sm:$0xff]
        %v7088 = vld [vmem:[%s7082 + $0x28] sm:$0xf]
        %v7090 = vsel %vm6104, %v7080, 0
        %v7093 = vsel %vm6104, %v7081, 0
        %v7096 = vsel %vm6537, %v7088, 0
        %7098 = vmatprep.subr.mxu0 0.0
        %7099 = vmatpush1.msra.mxu0 0.0
        %7100 = vmatprep.subr.mxu0 0.0
        %7101 = vmatpush1.msra.mxu0 0.0
        %7102 = vmatprep.subr.mxu0 0.0
        %7103 = vmatpush1.msra.mxu0 0.0
        %7104 = vmatprep.subr.mxu0 0.0
        %7105 = vmatpush1.msra.mxu0 0.0
        %7106 = vmatprep.subr.mxu0 0.0
        %7107 = vmatpush1.msra.mxu0 0.0
        %7108 = vmatprep.subr.mxu0 0.0
        %7109 = vmatpush1.msra.mxu0 0.0
        %7110 = vmatprep.subr.mxu0 0.0
        %7111 = vmatpush1.msra.mxu0 0.0
        %7112 = vmatprep.subr.mxu0 0.0
        %7113 = vmatpush1.msra.mxu0 0.0
        %7114 = vmatprep.subr.mxu0 0.0
        %7115 = vmatpush1.msra.mxu0 0.0
        %7116 = vmatprep.subr.mxu0 0.0
        %7117 = vmatpush1.msra.mxu0 0.0
        %7118 = vmatprep.subr.mxu0 0.0
        %7119 = vmatpush1.msra.mxu0 %v7096
        %7120 = vmatprep.subr.mxu0 0.0
        %7121 = vmatpush1.msra.mxu0 %v7087
        %7122 = vmatprep.subr.mxu0 0.0
        %7123 = vmatpush1.msra.mxu0 %v7086
        %7124 = vmatprep.subr.mxu0 0.0
        %7125 = vmatpush1.msra.mxu0 %v7085
        %7126 = vmatprep.subr.mxu0 0.0
        %7127 = vmatpush1.msra.mxu0 %v7084
        %7128 = vmatprep.subr.mxu0 0.0
        %7129 = vmatpush1.msra.mxu0 %v7083
        %7130 = vmatprep.subr.mxu0 0.0
        %7131 = vmatpush2.msra.mxu0 0.0
        %7132 = vmatprep.subr.mxu0 0.0
        %7133 = vmatpush2.msra.mxu0 0.0
        %7134 = vmatprep.subr.mxu0 0.0
        %7135 = vmatpush2.msra.mxu0 0.0
        %7136 = vmatprep.subr.mxu0 0.0
        %7137 = vmatpush2.msra.mxu0 0.0
        %7138 = vmatprep.subr.mxu0 0.0
        %7139 = vmatpush2.msra.mxu0 0.0
        %7140 = vmatprep.subr.mxu0 0.0
        %7141 = vmatpush2.msra.mxu0 0.0
        %7142 = vmatprep.subr.mxu0 0.0
        %7143 = vmatpush2.msra.mxu0 0.0
        %7144 = vmatprep.subr.mxu0 0.0
        %7145 = vmatpush2.msra.mxu0 0.0
        %7146 = vmatprep.subr.mxu0 0.0
        %7147 = vmatpush2.msra.mxu0 0.0
        %7148 = vmatprep.subr.mxu0 0.0
        %7149 = vmatpush2.msra.mxu0 0.0
        %7150 = vmatprep.subr.mxu0 0.0
        %7151 = vmatpush2.msra.mxu0 0.0
        %7152 = vmatprep.subr.mxu0 0.0
        %7153 = vmatpush2.msra.mxu0 0.0
        %7154 = vmatprep.subr.mxu0 0.0
        %7155 = vmatpush2.msra.mxu0 0.0
        %7156 = vmatprep.subr.mxu0 0.0
        %7157 = vmatpush2.msra.mxu0 0.0
        %7158 = vmatprep.subr.mxu0 0.0
        %7159 = vmatpush2.msra.mxu0 0.0
        %7160 = vmatprep.subr.mxu0 0.0
        %7161 = vmatpush2.msra.mxu0 0.0
        %7162 = vmatprep.mubr.f32.mxu0 0.0
        %7163 = vmatmul.mubr.f32.gmra.mxu0 %v7090
        %v7164 = vpop.f32.mrf.mxu0
        %v7165 = vadd.f32 0.0, %v7164
        %v7166 = vpop.f32.mrf.mxu0
        %7167 = vmatprep.mubr.f32.mxu0 0.0
        %7168 = vmatmul.mubr.f32.gmra.mxu0 %v7093
        %v7169 = vpop.f32.mrf.mxu0
        %v7170 = vadd.f32 0.0, %v7169
        %v7171 = vpop.f32.mrf.mxu0
        %7172 = vdwg.mxu0
        %v7173 = vadd.f32 %v7078, %v7165
        %v7174 = vadd.f32 %v7079, %v7170
        %v7175 = vxor.u32 %v7173, 2147483648
        %v7176 = vxor.u32 %v7174, 2147483648
        %v7177 = vmul.f32 %v7175, 1.442695
        %v7178 = vpow.pop %v7177
        %v7179 = vmul.f32 %v7176, 1.442695
        %v7180 = vpow.pop %v7179
        %v7181 = vadd.f32 %v7178, 1.0
        %v7182 = vadd.f32 %v7180, 1.0
        %v7183 = vrcp.pop %v7181
        %v7184 = vmul.f32 1.0, %v7183
        %v7185 = vrcp.pop %v7182
        %v7186 = vmul.f32 1.0, %v7185
        %v7187 = vld [vmem:[#allocation4] sm:$0xff]
        %v7188 = vld [vmem:[#allocation4 + $0x8] sm:$0xff]
        %v7189 = vld [vmem:[#allocation4 + $0x10] sm:$0xff]
        %v7190 = vld [vmem:[#allocation4 + $0x18] sm:$0xff]
        %v7191 = vld [vmem:[#allocation4 + $0x20] sm:$0xff]
        %v7192 = vld [vmem:[#allocation4 + $0x28] sm:$0xff]
        %v7193 = vld [vmem:[#allocation4 + $0x30] sm:$0xff]
        %v7194 = vld [vmem:[#allocation4 + $0x38] sm:$0xff]
        %v7195 = vld [vmem:[#allocation4 + $0x40] sm:$0xff]
        %v7196 = vld [vmem:[#allocation4 + $0x48] sm:$0xff]
        %v7197 = vld [vmem:[#allocation4 + $0x50] sm:$0xff]
        %v7198 = vld [vmem:[#allocation4 + $0x58] sm:$0xff]
        %v7199 = vld [vmem:[#allocation4 + $0x60] sm:$0xff]
        %v7200 = vld [vmem:[#allocation4 + $0x68] sm:$0xff]
        %v7201 = vld [vmem:[#allocation4 + $0x70] sm:$0xff]
        %v7202 = vld [vmem:[#allocation4 + $0x78] sm:$0xff]
        %v7203 = vld [vmem:[#allocation4 + $0x80] sm:$0xff]
        %v7204 = vld [vmem:[#allocation4 + $0x88] sm:$0xff]
        %v7205 = vld [vmem:[#allocation4 + $0x90] sm:$0xff]
        %v7206 = vld [vmem:[#allocation4 + $0x98] sm:$0xff]
        %v7207 = vld [vmem:[#allocation4 + $0xa0] sm:$0xff]
        %v7208 = vld [vmem:[#allocation4 + $0xa8] sm:$0xff]
        %v7209 = vld [vmem:[#allocation4 + $0xb0] sm:$0xff]
        %v7210 = vld [vmem:[#allocation4 + $0xb8] sm:$0xff]
        %v7211 = vld [vmem:[#allocation4 + $0xc0] sm:$0xff]
        %v7212 = vld [vmem:[#allocation4 + $0xc8] sm:$0xff]
        %v7213 = vld [vmem:[#allocation4 + $0xd0] sm:$0xff]
        %v7214 = vld [vmem:[#allocation4 + $0xd8] sm:$0xff]
        %v7215 = vld [vmem:[#allocation4 + $0xe0] sm:$0xff]
        %v7216 = vld [vmem:[#allocation4 + $0xe8] sm:$0xff]
        %v7217 = vld [vmem:[#allocation4 + $0xf0] sm:$0xff]
        %v7218 = vld [vmem:[#allocation4 + $0xf8] sm:$0xff]
        %v7219 = vlaneseq
        %v7220 = vshrl.u32 %v7219, 7
        %v7221 = vsub.s32 0, %v7220
        %v7222 = vrot.slane %v7184, %v7221
        %7224 = vbcast.lane.b32.xlu0 %v7222, 256
        %v7225 = vpop.permute.xlu0 %7224
        %s7227 = sor.u32 256, 8
        %7228 = vbcast.lane.b32.xlu0 %v7222, %s7227
        %v7229 = vpop.permute.xlu0 %7228
        %v7230 = vlaneseq
        %v7231 = vshrl.u32 %v7230, 7
        %v7232 = vsub.s32 1, %v7231
        %v7233 = vrot.slane %v7184, %v7232
        %7235 = vbcast.lane.b32.xlu0 %v7233, 256
        %v7236 = vpop.permute.xlu0 %7235
        %s7238 = sor.u32 256, 8
        %7239 = vbcast.lane.b32.xlu0 %v7233, %s7238
        %v7240 = vpop.permute.xlu0 %7239
        %v7241 = vlaneseq
        %v7242 = vshrl.u32 %v7241, 7
        %v7243 = vsub.s32 2, %v7242
        %v7244 = vrot.slane %v7184, %v7243
        %7246 = vbcast.lane.b32.xlu0 %v7244, 256
        %v7247 = vpop.permute.xlu0 %7246
        %s7249 = sor.u32 256, 8
        %7250 = vbcast.lane.b32.xlu0 %v7244, %s7249
        %v7251 = vpop.permute.xlu0 %7250
        %v7252 = vlaneseq
        %v7253 = vshrl.u32 %v7252, 7
        %v7254 = vsub.s32 3, %v7253
        %v7255 = vrot.slane %v7184, %v7254
        %7257 = vbcast.lane.b32.xlu0 %v7255, 256
        %v7258 = vpop.permute.xlu0 %7257
        %s7260 = sor.u32 256, 8
        %7261 = vbcast.lane.b32.xlu0 %v7255, %s7260
        %v7262 = vpop.permute.xlu0 %7261
        %v7263 = vlaneseq
        %v7264 = vshrl.u32 %v7263, 7
        %v7265 = vsub.s32 4, %v7264
        %v7266 = vrot.slane %v7184, %v7265
        %7268 = vbcast.lane.b32.xlu0 %v7266, 256
        %v7269 = vpop.permute.xlu0 %7268
        %s7271 = sor.u32 256, 8
        %7272 = vbcast.lane.b32.xlu0 %v7266, %s7271
        %v7273 = vpop.permute.xlu0 %7272
        %v7274 = vlaneseq
        %v7275 = vshrl.u32 %v7274, 7
        %v7276 = vsub.s32 5, %v7275
        %v7277 = vrot.slane %v7184, %v7276
        %7279 = vbcast.lane.b32.xlu0 %v7277, 256
        %v7280 = vpop.permute.xlu0 %7279
        %s7282 = sor.u32 256, 8
        %7283 = vbcast.lane.b32.xlu0 %v7277, %s7282
        %v7284 = vpop.permute.xlu0 %7283
        %v7285 = vlaneseq
        %v7286 = vshrl.u32 %v7285, 7
        %v7287 = vsub.s32 6, %v7286
        %v7288 = vrot.slane %v7184, %v7287
        %7290 = vbcast.lane.b32.xlu0 %v7288, 256
        %v7291 = vpop.permute.xlu0 %7290
        %s7293 = sor.u32 256, 8
        %7294 = vbcast.lane.b32.xlu0 %v7288, %s7293
        %v7295 = vpop.permute.xlu0 %7294
        %v7296 = vlaneseq
        %v7297 = vshrl.u32 %v7296, 7
        %v7298 = vsub.s32 7, %v7297
        %v7299 = vrot.slane %v7184, %v7298
        %7301 = vbcast.lane.b32.xlu0 %v7299, 256
        %v7302 = vpop.permute.xlu0 %7301
        %s7304 = sor.u32 256, 8
        %7305 = vbcast.lane.b32.xlu0 %v7299, %s7304
        %v7306 = vpop.permute.xlu0 %7305
        %v7307 = vlaneseq
        %v7308 = vshrl.u32 %v7307, 7
        %v7309 = vsub.s32 0, %v7308
        %v7310 = vrot.slane %v7186, %v7309
        %7312 = vbcast.lane.b32.xlu0 %v7310, 256
        %v7313 = vpop.permute.xlu0 %7312
        %s7315 = sor.u32 256, 8
        %7316 = vbcast.lane.b32.xlu0 %v7310, %s7315
        %v7317 = vpop.permute.xlu0 %7316
        %v7318 = vlaneseq
        %v7319 = vshrl.u32 %v7318, 7
        %v7320 = vsub.s32 1, %v7319
        %v7321 = vrot.slane %v7186, %v7320
        %7323 = vbcast.lane.b32.xlu0 %v7321, 256
        %v7324 = vpop.permute.xlu0 %7323
        %s7326 = sor.u32 256, 8
        %7327 = vbcast.lane.b32.xlu0 %v7321, %s7326
        %v7328 = vpop.permute.xlu0 %7327
        %v7329 = vlaneseq
        %v7330 = vshrl.u32 %v7329, 7
        %v7331 = vsub.s32 2, %v7330
        %v7332 = vrot.slane %v7186, %v7331
        %7334 = vbcast.lane.b32.xlu0 %v7332, 256
        %v7335 = vpop.permute.xlu0 %7334
        %s7337 = sor.u32 256, 8
        %7338 = vbcast.lane.b32.xlu0 %v7332, %s7337
        %v7339 = vpop.permute.xlu0 %7338
        %v7340 = vlaneseq
        %v7341 = vshrl.u32 %v7340, 7
        %v7342 = vsub.s32 3, %v7341
        %v7343 = vrot.slane %v7186, %v7342
        %7345 = vbcast.lane.b32.xlu0 %v7343, 256
        %v7346 = vpop.permute.xlu0 %7345
        %s7348 = sor.u32 256, 8
        %7349 = vbcast.lane.b32.xlu0 %v7343, %s7348
        %v7350 = vpop.permute.xlu0 %7349
        %v7351 = vlaneseq
        %v7352 = vshrl.u32 %v7351, 7
        %v7353 = vsub.s32 4, %v7352
        %v7354 = vrot.slane %v7186, %v7353
        %7356 = vbcast.lane.b32.xlu0 %v7354, 256
        %v7357 = vpop.permute.xlu0 %7356
        %s7359 = sor.u32 256, 8
        %7360 = vbcast.lane.b32.xlu0 %v7354, %s7359
        %v7361 = vpop.permute.xlu0 %7360
        %v7362 = vlaneseq
        %v7363 = vshrl.u32 %v7362, 7
        %v7364 = vsub.s32 5, %v7363
        %v7365 = vrot.slane %v7186, %v7364
        %7367 = vbcast.lane.b32.xlu0 %v7365, 256
        %v7368 = vpop.permute.xlu0 %7367
        %s7370 = sor.u32 256, 8
        %7371 = vbcast.lane.b32.xlu0 %v7365, %s7370
        %v7372 = vpop.permute.xlu0 %7371
        %v7373 = vlaneseq
        %v7374 = vshrl.u32 %v7373, 7
        %v7375 = vsub.s32 6, %v7374
        %v7376 = vrot.slane %v7186, %v7375
        %7378 = vbcast.lane.b32.xlu0 %v7376, 256
        %v7379 = vpop.permute.xlu0 %7378
        %s7381 = sor.u32 256, 8
        %7382 = vbcast.lane.b32.xlu0 %v7376, %s7381
        %v7383 = vpop.permute.xlu0 %7382
        %v7384 = vlaneseq
        %v7385 = vshrl.u32 %v7384, 7
        %v7386 = vsub.s32 7, %v7385
        %v7387 = vrot.slane %v7186, %v7386
        %7389 = vbcast.lane.b32.xlu0 %v7387, 256
        %v7390 = vpop.permute.xlu0 %7389
        %s7392 = sor.u32 256, 8
        %7393 = vbcast.lane.b32.xlu0 %v7387, %s7392
        %v7394 = vpop.permute.xlu0 %7393
        %v7395 = vmul.f32 %v7187, %v7225
        %v7396 = vmul.f32 %v7188, %v7229
        %v7397 = vmul.f32 %v7189, %v7236
        %v7398 = vmul.f32 %v7190, %v7240
        %v7399 = vmul.f32 %v7191, %v7247
        %v7400 = vmul.f32 %v7192, %v7251
        %v7401 = vmul.f32 %v7193, %v7258
        %v7402 = vmul.f32 %v7194, %v7262
        %v7403 = vmul.f32 %v7195, %v7269
        %v7404 = vmul.f32 %v7196, %v7273
        %v7405 = vmul.f32 %v7197, %v7280
        %v7406 = vmul.f32 %v7198, %v7284
        %v7407 = vmul.f32 %v7199, %v7291
        %v7408 = vmul.f32 %v7200, %v7295
        %v7409 = vmul.f32 %v7201, %v7302
        %v7410 = vmul.f32 %v7202, %v7306
        %v7411 = vmul.f32 %v7203, %v7313
        %v7412 = vmul.f32 %v7204, %v7317
        %v7413 = vmul.f32 %v7205, %v7324
        %v7414 = vmul.f32 %v7206, %v7328
        %v7415 = vmul.f32 %v7207, %v7335
        %v7416 = vmul.f32 %v7208, %v7339
        %v7417 = vmul.f32 %v7209, %v7346
        %v7418 = vmul.f32 %v7210, %v7350
        %v7419 = vmul.f32 %v7211, %v7357
        %v7420 = vmul.f32 %v7212, %v7361
        %v7421 = vmul.f32 %v7213, %v7368
        %v7422 = vmul.f32 %v7214, %v7372
        %v7423 = vmul.f32 %v7215, %v7379
        %v7424 = vmul.f32 %v7216, %v7383
        %v7425 = vmul.f32 %v7217, %v7390
        %v7426 = vmul.f32 %v7218, %v7394
        %v7427 = vld [vmem:[%s303] sm:$0xff]
        %v7428 = vld [vmem:[%s303 + $0x8] sm:$0xff]
        %v7429 = vld [vmem:[%s303 + $0x10] sm:$0xff]
        %v7430 = vld [vmem:[%s303 + $0x18] sm:$0xff]
        %v7431 = vld [vmem:[%s303 + $0x20] sm:$0xff]
        %v7432 = vld [vmem:[%s303 + $0x28] sm:$0xff]
        %v7433 = vld [vmem:[%s303 + $0x30] sm:$0xff]
        %v7434 = vld [vmem:[%s303 + $0x38] sm:$0xff]
        %v7435 = vld [vmem:[%s303 + $0x40] sm:$0xff]
        %v7436 = vld [vmem:[%s303 + $0x48] sm:$0xff]
        %v7437 = vld [vmem:[%s303 + $0x50] sm:$0xff]
        %v7438 = vld [vmem:[%s303 + $0x58] sm:$0xff]
        %v7439 = vld [vmem:[%s303 + $0x60] sm:$0xff]
        %v7440 = vld [vmem:[%s303 + $0x68] sm:$0xff]
        %v7441 = vld [vmem:[%s303 + $0x70] sm:$0xff]
        %v7442 = vld [vmem:[%s303 + $0x78] sm:$0xff]
        %v7443 = vld [vmem:[%s303 + $0x80] sm:$0xff]
        %v7444 = vld [vmem:[%s303 + $0x88] sm:$0xff]
        %v7445 = vld [vmem:[%s303 + $0x90] sm:$0xff]
        %v7446 = vld [vmem:[%s303 + $0x98] sm:$0xff]
        %v7447 = vld [vmem:[%s303 + $0xa0] sm:$0xff]
        %v7448 = vld [vmem:[%s303 + $0xa8] sm:$0xff]
        %v7449 = vld [vmem:[%s303 + $0xb0] sm:$0xff]
        %v7450 = vld [vmem:[%s303 + $0xb8] sm:$0xff]
        %v7451 = vld [vmem:[%s303 + $0xc0] sm:$0xff]
        %v7452 = vld [vmem:[%s303 + $0xc8] sm:$0xff]
        %v7453 = vld [vmem:[%s303 + $0xd0] sm:$0xff]
        %v7454 = vld [vmem:[%s303 + $0xd8] sm:$0xff]
        %v7455 = vld [vmem:[%s303 + $0xe0] sm:$0xff]
        %v7456 = vld [vmem:[%s303 + $0xe8] sm:$0xff]
        %v7457 = vld [vmem:[%s303 + $0xf0] sm:$0xff]
        %v7458 = vld [vmem:[%s303 + $0xf8] sm:$0xff]
        %v7459 = vadd.f32 %v7395, %v7427
        %v7460 = vadd.f32 %v7396, %v7428
        %v7461 = vadd.f32 %v7397, %v7429
        %v7462 = vadd.f32 %v7398, %v7430
        %v7463 = vadd.f32 %v7399, %v7431
        %v7464 = vadd.f32 %v7400, %v7432
        %v7465 = vadd.f32 %v7401, %v7433
        %v7466 = vadd.f32 %v7402, %v7434
        %v7467 = vadd.f32 %v7403, %v7435
        %v7468 = vadd.f32 %v7404, %v7436
        %v7469 = vadd.f32 %v7405, %v7437
        %v7470 = vadd.f32 %v7406, %v7438
        %v7471 = vadd.f32 %v7407, %v7439
        %v7472 = vadd.f32 %v7408, %v7440
        %v7473 = vadd.f32 %v7409, %v7441
        %v7474 = vadd.f32 %v7410, %v7442
        %v7475 = vadd.f32 %v7411, %v7443
        %v7476 = vadd.f32 %v7412, %v7444
        %v7477 = vadd.f32 %v7413, %v7445
        %v7478 = vadd.f32 %v7414, %v7446
        %v7479 = vadd.f32 %v7415, %v7447
        %v7480 = vadd.f32 %v7416, %v7448
        %v7481 = vadd.f32 %v7417, %v7449
        %v7482 = vadd.f32 %v7418, %v7450
        %v7483 = vadd.f32 %v7419, %v7451
        %v7484 = vadd.f32 %v7420, %v7452
        %v7485 = vadd.f32 %v7421, %v7453
        %v7486 = vadd.f32 %v7422, %v7454
        %v7487 = vadd.f32 %v7423, %v7455
        %v7488 = vadd.f32 %v7424, %v7456
        %v7489 = vadd.f32 %v7425, %v7457
        %v7490 = vadd.f32 %v7426, %v7458
        %v7491 = vmax.f32 %v7459, 0.0
        %v7492 = vmax.f32 %v7460, 0.0
        %v7493 = vmax.f32 %v7461, 0.0
        %v7494 = vmax.f32 %v7462, 0.0
        %v7495 = vmax.f32 %v7463, 0.0
        %v7496 = vmax.f32 %v7464, 0.0
        %v7497 = vmax.f32 %v7465, 0.0
        %v7498 = vmax.f32 %v7466, 0.0
        %v7499 = vmax.f32 %v7467, 0.0
        %v7500 = vmax.f32 %v7468, 0.0
        %v7501 = vmax.f32 %v7469, 0.0
        %v7502 = vmax.f32 %v7470, 0.0
        %v7503 = vmax.f32 %v7471, 0.0
        %v7504 = vmax.f32 %v7472, 0.0
        %v7505 = vmax.f32 %v7473, 0.0
        %v7506 = vmax.f32 %v7474, 0.0
        %v7507 = vmax.f32 %v7475, 0.0
        %v7508 = vmax.f32 %v7476, 0.0
        %v7509 = vmax.f32 %v7477, 0.0
        %v7510 = vmax.f32 %v7478, 0.0
        %v7511 = vmax.f32 %v7479, 0.0
        %v7512 = vmax.f32 %v7480, 0.0
        %v7513 = vmax.f32 %v7481, 0.0
        %v7514 = vmax.f32 %v7482, 0.0
        %v7515 = vmax.f32 %v7483, 0.0
        %v7516 = vmax.f32 %v7484, 0.0
        %v7517 = vmax.f32 %v7485, 0.0
        %v7518 = vmax.f32 %v7486, 0.0
        %v7519 = vmax.f32 %v7487, 0.0
        %v7520 = vmax.f32 %v7488, 0.0
        %v7521 = vmax.f32 %v7489, 0.0
        %v7522 = vmax.f32 %v7490, 0.0
        %7523 = vst.msk [vmem:[%s298] sm:$0xff] %vm305, %v7491
        %7524 = vst.msk [vmem:[%s298 + $0x8] sm:$0xff] %vm305, %v7492
        %7525 = vst.msk [vmem:[%s298 + $0x10] sm:$0xff] %vm305, %v7493
        %7526 = vst.msk [vmem:[%s298 + $0x18] sm:$0xff] %vm305, %v7494
        %7527 = vst.msk [vmem:[%s298 + $0x20] sm:$0xff] %vm305, %v7495
        %7528 = vst.msk [vmem:[%s298 + $0x28] sm:$0xff] %vm305, %v7496
        %7529 = vst.msk [vmem:[%s298 + $0x30] sm:$0xff] %vm305, %v7497
        %7530 = vst.msk [vmem:[%s298 + $0x38] sm:$0xff] %vm305, %v7498
        %7531 = vst.msk [vmem:[%s298 + $0x40] sm:$0xff] %vm305, %v7499
        %7532 = vst.msk [vmem:[%s298 + $0x48] sm:$0xff] %vm305, %v7500
        %7533 = vst.msk [vmem:[%s298 + $0x50] sm:$0xff] %vm305, %v7501
        %7534 = vst.msk [vmem:[%s298 + $0x58] sm:$0xff] %vm305, %v7502
        %7535 = vst.msk [vmem:[%s298 + $0x60] sm:$0xff] %vm305, %v7503
        %7536 = vst.msk [vmem:[%s298 + $0x68] sm:$0xff] %vm305, %v7504
        %7537 = vst.msk [vmem:[%s298 + $0x70] sm:$0xff] %vm305, %v7505
        %7538 = vst.msk [vmem:[%s298 + $0x78] sm:$0xff] %vm305, %v7506
        %7539 = vst.msk [vmem:[%s298 + $0x80] sm:$0xff] %vm305, %v7507
        %7540 = vst.msk [vmem:[%s298 + $0x88] sm:$0xff] %vm305, %v7508
        %7541 = vst.msk [vmem:[%s298 + $0x90] sm:$0xff] %vm305, %v7509
        %7542 = vst.msk [vmem:[%s298 + $0x98] sm:$0xff] %vm305, %v7510
        %7543 = vst.msk [vmem:[%s298 + $0xa0] sm:$0xff] %vm305, %v7511
        %7544 = vst.msk [vmem:[%s298 + $0xa8] sm:$0xff] %vm305, %v7512
        %7545 = vst.msk [vmem:[%s298 + $0xb0] sm:$0xff] %vm305, %v7513
        %7546 = vst.msk [vmem:[%s298 + $0xb8] sm:$0xff] %vm305, %v7514
        %7547 = vst.msk [vmem:[%s298 + $0xc0] sm:$0xff] %vm305, %v7515
        %7548 = vst.msk [vmem:[%s298 + $0xc8] sm:$0xff] %vm305, %v7516
        %7549 = vst.msk [vmem:[%s298 + $0xd0] sm:$0xff] %vm305, %v7517
        %7550 = vst.msk [vmem:[%s298 + $0xd8] sm:$0xff] %vm305, %v7518
        %7551 = vst.msk [vmem:[%s298 + $0xe0] sm:$0xff] %vm305, %v7519
        %7552 = vst.msk [vmem:[%s298 + $0xe8] sm:$0xff] %vm305, %v7520
        %7553 = vst.msk [vmem:[%s298 + $0xf0] sm:$0xff] %vm305, %v7521
        %7554 = vst.msk [vmem:[%s298 + $0xf8] sm:$0xff] %vm305, %v7522
        %s7555 = sand.u32 %s203, 1
        %s7556 = scalar_lea.sflag [#allocation7], %s7555
        %s7557 = sand.u32 %s203, 1
        %s7558 = smul.addr %s7557, 256
        %s7559 = scalar_lea.vmem [#allocation6], %s7558
        // Predicated region
        $region53: #{block1_forward.1} parent=51 // pred_check
          %p7560 = pneg %p213
        $region54: #{block1_forward.1} parent=51 // pred_check_branch
          %7562 = sbr.rel (%p7560) target = $region56
        $region55: #{block1_forward.1} parent=51 // pred_region
          %s7564 = ssub.s32 4096, 4096
          %7565 = vsyncadd %s7556, %s7564
          %s7566 = smul.addr %s22, 32
          %s7567 = smul.addr %s7566, 128
          %s7568 = scalar_lea.hbm %s8, %s7567
          %s7569 = sshll.u32 %s7559, 4
          %s7570 = int_to_ptr.vmem [resolvable:$true] %s7569
          %7575 = dma.vmem_to_hbm [thread:$0]  %s7570, 4096, %s7568, %s7556, 128, 128, 8
        $region56: #{block1_forward.1} parent=51 // pred_fallthru
          _
      $region52: #{block1_forward.1} parent=5 // pred_fallthru
        _
      %p7576 = scmp.le.s32.totalorder 2, %s17
      // Predicated region
      $region57: #{block1_forward.1} parent=5 // pred_check
        %p7577 = pneg %p7576
      $region58: #{block1_forward.1} parent=5 // pred_check_branch
        %7579 = sbr.rel (%p7577) target = $region60
      $region59: #{block1_forward.1} parent=5 // pred_region
        %s7580 = ssub.s32 %s17, 2
        // Predicated region
        $region61: #{block1_forward.1} parent=59 // pred_check
          %p7581 = pneg %p219
        $region62: #{block1_forward.1} parent=59 // pred_check_branch
          %7583 = sbr.rel (%p7581) target = $region64
        $region63: #{block1_forward.1} parent=59 // pred_region
          %s7584 = sand.u32 %s204, 1
          %s7585 = scalar_lea.sflag [#allocation7], %s7584
          %s7586 = sand.u32 %s204, 1
          %s7587 = smul.addr %s7586, 256
          %s7588 = scalar_lea.vmem [#allocation6], %s7587
          %7589 = dma.done %s7585, 4096
        $region64: #{block1_forward.1} parent=59 // pred_fallthru
          _
      $region60: #{block1_forward.1} parent=5 // pred_fallthru
        _
    $region6: #{block1_forward.1} parent=1 // loop_footer
      %s21 = sadd.s32 1, %s17
    $region7: #{block1_forward.1} parent=1 // loop_footer_branch
      %16 = sbr.rel target = $region3
    $region8: #{block1_forward.1} parent=1 // loop_exit
      _
    %7590 = vsyncpa [#allocation7], 1
    %s7591 = scalar_lea.sflag [#allocation7], 1
    %7592 = vsyncpa %s7591, 1

</llo_original>
